<compile_context>
chip_gen: v7x
topology: tpu7x:2x2x1
jax: 0.10.0
libtpu: 0.0.40
codegen_flags: <defaults>
</compile_context>

<pallas_src>
import functools

import jax
import jax.numpy as jnp
from jax.experimental import pallas as pl
from jax.experimental.pallas import tpu as pltpu


def _round_up(a, m):
    return (a + m - 1) // m * m


# ------------------------------ Pallas kernel -------------------------------

def _bottleneck_kernel(x_ref, mask_ref, w1_ref, b1_ref, w2_ref, b2_ref,
                       w3_ref, b3_ref, o_ref, h1p_ref, slab_ref, *,
                       W, pad_rows):
    """One fused Bottleneck tile; rows are flattened H*W pixels of whole images."""
    TM = x_ref.shape[0]
    planes = w1_ref.shape[1]

    x = x_ref[...]                                      # (TM, Cin) bf16 (residual)

    # ---- conv1 (1x1) + bn1 + relu ------------------------------------------
    h1 = jnp.dot(x, w1_ref[...], preferred_element_type=jnp.float32)
    h1 = jnp.maximum(h1 + b1_ref[...], 0.0).astype(jnp.bfloat16)   # (TM, P) bf16

    # ---- conv2 (3x3, pad=1) + bn2 + relu -----------------------------------
    # Write h1 between two zero pads in a bf16 VMEM scratch; the 9 taps are
    # then plain shifted reads.  pad_rows is a multiple of 16 so the center
    # and dy=+-1 taps (offsets of +-W) stay sublane-aligned when W%16==0;
    # only dx=+-1 taps need a one-row shift.
    zero_pad = jnp.zeros((pad_rows, planes), jnp.bfloat16)
    h1p_ref[:pad_rows, :] = zero_pad
    h1p_ref[pad_rows + TM:, :] = zero_pad
    h1p_ref[pad_rows:pad_rows + TM, :] = h1

    mask = mask_ref[...]                                # (TM, 9) bf16 of 0/1
    t = 0
    for dy in (-1, 0, 1):
        for dx in (-1, 0, 1):
            start = pad_rows + dy * W + dx              # static, >= 0
            tap = h1p_ref[start:start + TM, :]          # (TM, P) bf16
            if not (dy == 0 and dx == 0):               # center tap always valid
                tap = tap * mask[:, t:t + 1]
            slab_ref[:, t * planes:(t + 1) * planes] = tap
            t += 1

    h2 = jnp.dot(slab_ref[...], w2_ref[...],            # single wide-K = 9*planes
                 preferred_element_type=jnp.float32)
    h2 = jnp.maximum(h2 + b2_ref[...], 0.0).astype(jnp.bfloat16)   # (TM, P)

    # ---- conv3 (1x1) + bn3 + residual + relu --------------------------------
    y = jnp.dot(h2, w3_ref[...], preferred_element_type=jnp.float32)
    y = y + b3_ref[...] + x.astype(jnp.float32)         # residual add in f32
    o_ref[...] = jnp.maximum(y, 0.0).astype(o_ref.dtype)


# -------------------------------- helpers ------------------------------------

def _fold_bn(gamma, beta, mean, var, eps=1e-5):
    scale = gamma / jnp.sqrt(var + eps)
    return scale, beta - mean * scale


def _border_mask(H, W, imgs_per_tile):
    """(TM, 9) bf16 mask: 1 where tap (dy,dx) stays inside the image."""
    hh = jnp.arange(H)
    ww = jnp.arange(W)
    cols = []
    for dy in (-1, 0, 1):
        for dx in (-1, 0, 1):
            vh = (hh + dy >= 0) & (hh + dy < H)
            vw = (ww + dx >= 0) & (ww + dx < W)
            cols.append((vh[:, None] & vw[None, :]).astype(jnp.bfloat16))
    m = jnp.stack(cols, axis=-1).reshape(H * W, 9)
    return jnp.tile(m, (imgs_per_tile, 1))


def _pick_vmem_limit():
    """Chip-aware scoped-VMEM budget: ~75% of physical, capped at 96 MiB.
    v5e/v6e (128 MiB phys) -> 96 MiB; v7x (64 MiB phys) -> 48 MiB."""
    try:
        cap = int(pltpu.get_tpu_info().vmem_capacity_bytes)
    except Exception:
        cap = 64 * 1024 * 1024          # conservative fallback (v7x physical)
    return int(min(96 * 1024 * 1024, cap * 3 // 4))


def _auto_images_per_tile(N, H, W, in_ch, planes, vmem_limit, max_rows=4096):
    """Largest images_per_tile dividing N with rows%8==0, rows<=max_rows and a
    rough VMEM estimate within half of the budget."""
    hw = H * W
    cout = 4 * planes

    def est(tm):
        return (2 * tm * in_ch * 2          # x tile, bf16, double-buffered
                + 2 * tm * cout * 4         # out tile, f32, double-buffered
                + tm * 9 * planes * 2       # im2col slab scratch, bf16
                + tm * planes * 2           # padded-h1 scratch, bf16
                + 3 * tm * planes * 4)      # h1/h2/accumulator temporaries

    cands = [i for i in range(1, N + 1) if N % i == 0 and (i * hw) % 8 == 0]
    assert cands, "some divisor of N times H*W must be a multiple of 8"
    pick = cands[0]
    for i in cands:
        tm = i * hw
        if tm <= max_rows and est(tm) <= vmem_limit // 2:
            pick = i
    return pick


# -------------------------------- wrappers ------------------------------------

def bottleneck_forward_flat(x2d, params, H, W, *, images_per_tile=None,
                            vmem_limit_bytes=None):
    """Fused Bottleneck on an NHWC-flattened activation.

    x2d: (N*H*W, Cin) activation (channels on lanes).  Returns (N*H*W, 4*planes)
    float32.  Keep activations in this layout across chained blocks so the
    NCHW<->NHWC transposes are hoisted out of the per-block path.
    """
    # TODO(synk): stride>1 / downsample branch and training-mode BatchNorm
    #             (batch statistics + running-stat update) are not implemented.
    rows, Cin = x2d.shape
    planes = params["w1"].shape[1]
    Cout = 4 * planes
    assert Cin == Cout, "identity residual requires inplanes == 4*planes"
    assert rows % (H * W) == 0
    N = rows // (H * W)

    if vmem_limit_bytes is None:
        vmem_limit_bytes = _pick_vmem_limit()
    if images_per_tile is None:
        images_per_tile = _auto_images_per_tile(N, H, W, Cin, planes,
                                                vmem_limit_bytes)
    assert N % images_per_tile == 0
    TM = images_per_tile * H * W
    assert TM % 8 == 0, "images_per_tile*H*W must be a multiple of 8"

    # Fold inference-mode BN scale into bf16 conv weights; biases stay f32.
    s1, b1 = _fold_bn(*params["bn1"])
    s2, b2 = _fold_bn(*params["bn2"])
    s3, b3 = _fold_bn(*params["bn3"])
    w1 = (params["w1"] * s1[None, :]).astype(jnp.bfloat16)               # (Cin, P)
    w2 = (params["w2"].reshape(9 * planes, planes) * s2[None, :]
          ).astype(jnp.bfloat16)                                         # (9P, P)
    w3 = (params["w3"] * s3[None, :]).astype(jnp.bfloat16)               # (P, Cout)
    b1 = b1[None, :].astype(jnp.float32)
    b2 = b2[None, :].astype(jnp.float32)
    b3 = b3[None, :].astype(jnp.float32)

    mask = _border_mask(H, W, images_per_tile)                           # (TM, 9) bf16
    x2d = x2d.astype(jnp.bfloat16)           # bf16 activation DMA (halves bytes)

    pad_rows = _round_up(W + 1, 16)          # bf16 sublane-tile aligned zero pad
    grid = (N // images_per_tile,)
    kernel = functools.partial(_bottleneck_kernel, W=W, pad_rows=pad_rows)
    const = lambda i: (0, 0)                 # constants stay VMEM-resident

    def const_spec(shape):
        # Single-buffer constant operands (their block never changes).
        try:
            return pl.BlockSpec(shape, const, pipeline_mode=pl.Buffered(1))
        except TypeError:
            return pl.BlockSpec(shape, const)

    out2d = pl.pallas_call(
        kernel,
        out_shape=jax.ShapeDtypeStruct((rows, Cout), jnp.float32),
        grid=grid,
        in_specs=[
            pl.BlockSpec((TM, Cin), lambda i: (i, 0)),    # x tile (also residual)
            const_spec((TM, 9)),                          # border mask
            const_spec((Cin, planes)),                    # w1 (bn1 folded)
            const_spec((1, planes)),                      # b1
            const_spec((9 * planes, planes)),             # w2 (bn2 folded)
            const_spec((1, planes)),                      # b2
            const_spec((planes, Cout)),                   # w3 (bn3 folded)
            const_spec((1, Cout)),                        # b3
        ],
        out_specs=pl.BlockSpec((TM, Cout), lambda i: (i, 0)),
        scratch_shapes=[
            pltpu.VMEM((TM + 2 * pad_rows, planes), jnp.bfloat16),  # padded h1
            pltpu.VMEM((TM, 9 * planes), jnp.bfloat16),             # im2col slab
        ],
        compiler_params=pltpu.CompilerParams(
            dimension_semantics=("parallel",),            # v7x: 2 TCs split tiles
            vmem_limit_bytes=vmem_limit_bytes),
    )(x2d, mask, w1, b1, w2, b2, w3, b3)
    return out2d
    # TODO(synk): for very small batch on v7x, add a second parallel grid axis
    #             splitting rows within an image (with a W-row halo) so both
    #             TensorCores stay busy.


def bottleneck_forward(x_nchw, params, *, images_per_tile=None):
    """NCHW convenience wrapper around bottleneck_forward_flat."""
    N, Cin, H, W = x_nchw.shape
    x2d = jnp.transpose(x_nchw, (0, 2, 3, 1)).reshape(N * H * W, Cin)
    out2d = bottleneck_forward_flat(x2d, params, H, W,
                                    images_per_tile=images_per_tile)
    out = out2d.reshape(N, H, W, -1)
    return jnp.transpose(out, (0, 3, 1, 2))


# --------------------------- pure-JAX reference ------------------------------

def _ref_forward(x_nchw, params, eps=1e-5):
    x = jnp.transpose(x_nchw, (0, 2, 3, 1))

    def conv(h, w_hwio, pad):
        return jax.lax.conv_general_dilated(
            h, w_hwio, window_strides=(1, 1), padding=pad,
            dimension_numbers=("NHWC", "HWIO", "NHWC"))

    def bn(h, p):
        g, b, m, v = p
        return (h - m) / jnp.sqrt(v + eps) * g + b

    h = jax.nn.relu(bn(conv(x, params["w1"][None, None], "VALID"), params["bn1"]))
    h = jax.nn.relu(bn(conv(h, params["w2"], [(1, 1), (1, 1)]), params["bn2"]))
    h = bn(conv(h, params["w3"][None, None], "VALID"), params["bn3"])
    out = jax.nn.relu(h + x)
    return jnp.transpose(out, (0, 3, 1, 2))


# ----------------------------------- main ------------------------------------

def _make_params(key, inplanes, planes):
    ks = jax.random.split(key, 6)

    def bn_params(k, c):
        k1, k2, k3, k4 = jax.random.split(k, 4)
        gamma = 1.0 + 0.1 * jax.random.normal(k1, (c,), jnp.float32)
        beta = 0.05 * jax.random.normal(k2, (c,), jnp.float32)
        mean = 0.1 * jax.random.normal(k3, (c,), jnp.float32)
        var = 0.5 + 0.5 * jnp.abs(jax.random.normal(k4, (c,), jnp.float32))
        return (gamma, beta, mean, var)

    return {
        "w1": 0.1 * jax.random.normal(ks[0], (inplanes, planes), jnp.float32),
        "w2": 0.1 * jax.random.normal(ks[1], (3, 3, planes, planes), jnp.float32),
        "w3": 0.1 * jax.random.normal(ks[2], (planes, 4 * planes), jnp.float32),
        "bn1": bn_params(ks[3], planes),
        "bn2": bn_params(ks[4], planes),
        "bn3": bn_params(ks[5], 4 * planes),
    }


if __name__ == "__main__":
    key = jax.random.PRNGKey(0)
    k_x, k_p = jax.random.split(key)

    N, planes, H, W = 2, 4, 16, 16
    inplanes = planes * 4  # stride=1, downsample=None => inplanes == planes*expansion

    x = jax.random.normal(k_x, (N, inplanes, H, W), jnp.float32)
    params = _make_params(k_p, inplanes, planes)

    out = jax.block_until_ready(jax.jit(bottleneck_forward)(x, params))
    ref = jax.block_until_ready(_ref_forward(x, params))

    err = float(jnp.max(jnp.abs(out - ref)))
    assert out.shape == (N, 4 * planes, H, W), out.shape
    # bf16 activation/weight streaming => inference-grade tolerance.
    assert err < 2e-2, f"max abs error {err}"
    print("KERNEL_OK")
</pallas_src>

<mosaic_0001>
module attributes {stable_mosaic.version = 11 : i64} {
  func.func @_bottleneck_kernel(%arg0: i32, %arg1: memref<512x16xbf16, #tpu.memory_space<vmem>>, %arg2: memref<512x9xbf16, #tpu.memory_space<vmem>>, %arg3: memref<16x4xbf16, #tpu.memory_space<vmem>>, %arg4: memref<1x4xf32, #tpu.memory_space<vmem>>, %arg5: memref<36x4xbf16, #tpu.memory_space<vmem>>, %arg6: memref<1x4xf32, #tpu.memory_space<vmem>>, %arg7: memref<4x16xbf16, #tpu.memory_space<vmem>>, %arg8: memref<1x16xf32, #tpu.memory_space<vmem>>, %arg9: memref<512x16xf32, #tpu.memory_space<vmem>>, %arg10: memref<576x4xbf16, #tpu.memory_space<vmem>>, %arg11: memref<512x36xbf16, #tpu.memory_space<vmem>>) attributes {dimension_semantics = [#tpu.dimension_semantics<parallel>], iteration_bounds = array<i64: 1>, scalar_prefetch = 0 : i64, scratch_operands = 2 : i64, tpu.core_type = #tpu.core_type<tc>, window_params = [{transform_indices = @transform_0, window_bounds = array<i64: 512, 16>}, {pipeline_mode = #tpu.pipeline_mode<synchronous>, transform_indices = @transform_1, window_bounds = array<i64: 512, 9>}, {pipeline_mode = #tpu.pipeline_mode<synchronous>, transform_indices = @transform_2, window_bounds = array<i64: 16, 4>}, {pipeline_mode = #tpu.pipeline_mode<synchronous>, transform_indices = @transform_3, window_bounds = array<i64: 1, 4>}, {pipeline_mode = #tpu.pipeline_mode<synchronous>, transform_indices = @transform_4, window_bounds = array<i64: 36, 4>}, {pipeline_mode = #tpu.pipeline_mode<synchronous>, transform_indices = @transform_5, window_bounds = array<i64: 1, 4>}, {pipeline_mode = #tpu.pipeline_mode<synchronous>, transform_indices = @transform_6, window_bounds = array<i64: 4, 16>}, {pipeline_mode = #tpu.pipeline_mode<synchronous>, transform_indices = @transform_7, window_bounds = array<i64: 1, 16>}, {transform_indices = @transform_8, window_bounds = array<i64: 512, 16>}]} {
    %c0 = arith.constant 0 : index
    %c0_0 = arith.constant 0 : index
    %0 = vector.load %arg1[%c0, %c0_0] : memref<512x16xbf16, #tpu.memory_space<vmem>>, vector<512x16xbf16>
    %c0_1 = arith.constant 0 : index
    %c0_2 = arith.constant 0 : index
    %1 = vector.load %arg3[%c0_1, %c0_2] : memref<16x4xbf16, #tpu.memory_space<vmem>>, vector<16x4xbf16>
    %cst = arith.constant dense<0.000000e+00> : vector<512x4xf32>
    %2 = tpu.matmul %0, %1, %cst {dimension_numbers = #tpu.dot_dimension_numbers<[1], [0], [0], [1], [0, 0, 1, 1], [], []>} : vector<512x16xbf16>, vector<16x4xbf16>, vector<512x4xf32> -> vector<512x4xf32>
    %c0_3 = arith.constant 0 : index
    %c0_4 = arith.constant 0 : index
    %3 = vector.load %arg4[%c0_3, %c0_4] : memref<1x4xf32, #tpu.memory_space<vmem>>, vector<1x4xf32>
    %4 = vector.broadcast %3 : vector<1x4xf32> to vector<512x4xf32>
    %5 = arith.addf %2, %4 : vector<512x4xf32>
    %cst_5 = arith.constant 0.000000e+00 : f32
    %6 = vector.broadcast %cst_5 : f32 to vector<512x4xf32>
    %7 = arith.maximumf %5, %6 : vector<512x4xf32>
    %8 = arith.truncf %7 : vector<512x4xf32> to vector<512x4xbf16>
    %cst_6 = arith.constant 0.000000e+00 : bf16
    %9 = vector.broadcast %cst_6 : bf16 to vector<32x4xbf16>
    %c0_7 = arith.constant 0 : index
    %c0_8 = arith.constant 0 : index
    %10 = vector.load %arg10[%c0_7, %c0_8] : memref<576x4xbf16, #tpu.memory_space<vmem>>, vector<32x4xbf16>
    tpu.vector_store %arg10[%c0_7, %c0_8], %9 {strides = array<i32>} : memref<576x4xbf16, #tpu.memory_space<vmem>>, vector<32x4xbf16>,
    %c544 = arith.constant 544 : index
    %c0_9 = arith.constant 0 : index
    %11 = vector.load %arg10[%c544, %c0_9] : memref<576x4xbf16, #tpu.memory_space<vmem>>, vector<32x4xbf16>
    tpu.vector_store %arg10[%c544, %c0_9], %9 {strides = array<i32>} : memref<576x4xbf16, #tpu.memory_space<vmem>>, vector<32x4xbf16>,
    %c32 = arith.constant 32 : index
    %c0_10 = arith.constant 0 : index
    %12 = vector.load %arg10[%c32, %c0_10] : memref<576x4xbf16, #tpu.memory_space<vmem>>, vector<512x4xbf16>
    tpu.vector_store %arg10[%c32, %c0_10], %8 {strides = array<i32>} : memref<576x4xbf16, #tpu.memory_space<vmem>>, vector<512x4xbf16>,
    %c0_11 = arith.constant 0 : index
    %c0_12 = arith.constant 0 : index
    %13 = vector.load %arg2[%c0_11, %c0_12] : memref<512x9xbf16, #tpu.memory_space<vmem>>, vector<512x9xbf16>
    %c15 = arith.constant 15 : index
    %c0_13 = arith.constant 0 : index
    %14 = vector.load %arg10[%c15, %c0_13] : memref<576x4xbf16, #tpu.memory_space<vmem>>, vector<512x4xbf16>
    %15 = vector.extract_strided_slice %13 {offsets = [0, 0], sizes = [512, 1], strides = [1, 1]} : vector<512x9xbf16> to vector<512x1xbf16>
    %16 = vector.broadcast %15 : vector<512x1xbf16> to vector<512x4xbf16>
    %17 = arith.mulf %14, %16 : vector<512x4xbf16>
    %c0_14 = arith.constant 0 : index
    %c0_15 = arith.constant 0 : index
    %18 = vector.load %arg11[%c0_14, %c0_15] : memref<512x36xbf16, #tpu.memory_space<vmem>>, vector<512x4xbf16>
    tpu.vector_store %arg11[%c0_14, %c0_15], %17 {strides = array<i32>} : memref<512x36xbf16, #tpu.memory_space<vmem>>, vector<512x4xbf16>,
    %c16 = arith.constant 16 : index
    %c0_16 = arith.constant 0 : index
    %19 = vector.load %arg10[%c16, %c0_16] : memref<576x4xbf16, #tpu.memory_space<vmem>>, vector<512x4xbf16>
    %20 = vector.extract_strided_slice %13 {offsets = [0, 1], sizes = [512, 1], strides = [1, 1]} : vector<512x9xbf16> to vector<512x1xbf16>
    %21 = vector.broadcast %20 : vector<512x1xbf16> to vector<512x4xbf16>
    %22 = arith.mulf %19, %21 : vector<512x4xbf16>
    %c0_17 = arith.constant 0 : index
    %c4 = arith.constant 4 : index
    %23 = vector.load %arg11[%c0_17, %c4] : memref<512x36xbf16, #tpu.memory_space<vmem>>, vector<512x4xbf16>
    tpu.vector_store %arg11[%c0_17, %c4], %22 {strides = array<i32>} : memref<512x36xbf16, #tpu.memory_space<vmem>>, vector<512x4xbf16>,
    %c17 = arith.constant 17 : index
    %c0_18 = arith.constant 0 : index
    %24 = vector.load %arg10[%c17, %c0_18] : memref<576x4xbf16, #tpu.memory_space<vmem>>, vector<512x4xbf16>
    %25 = vector.extract_strided_slice %13 {offsets = [0, 2], sizes = [512, 1], strides = [1, 1]} : vector<512x9xbf16> to vector<512x1xbf16>
    %26 = vector.broadcast %25 : vector<512x1xbf16> to vector<512x4xbf16>
    %27 = arith.mulf %24, %26 : vector<512x4xbf16>
    %c0_19 = arith.constant 0 : index
    %c8 = arith.constant 8 : index
    %28 = vector.load %arg11[%c0_19, %c8] : memref<512x36xbf16, #tpu.memory_space<vmem>>, vector<512x4xbf16>
    tpu.vector_store %arg11[%c0_19, %c8], %27 {strides = array<i32>} : memref<512x36xbf16, #tpu.memory_space<vmem>>, vector<512x4xbf16>,
    %c31 = arith.constant 31 : index
    %c0_20 = arith.constant 0 : index
    %29 = vector.load %arg10[%c31, %c0_20] : memref<576x4xbf16, #tpu.memory_space<vmem>>, vector<512x4xbf16>
    %30 = vector.extract_strided_slice %13 {offsets = [0, 3], sizes = [512, 1], strides = [1, 1]} : vector<512x9xbf16> to vector<512x1xbf16>
    %31 = vector.broadcast %30 : vector<512x1xbf16> to vector<512x4xbf16>
    %32 = arith.mulf %29, %31 : vector<512x4xbf16>
    %c0_21 = arith.constant 0 : index
    %c12 = arith.constant 12 : index
    %33 = vector.load %arg11[%c0_21, %c12] : memref<512x36xbf16, #tpu.memory_space<vmem>>, vector<512x4xbf16>
    tpu.vector_store %arg11[%c0_21, %c12], %32 {strides = array<i32>} : memref<512x36xbf16, #tpu.memory_space<vmem>>, vector<512x4xbf16>,
    %c32_22 = arith.constant 32 : index
    %c0_23 = arith.constant 0 : index
    %34 = vector.load %arg10[%c32_22, %c0_23] : memref<576x4xbf16, #tpu.memory_space<vmem>>, vector<512x4xbf16>
    %c0_24 = arith.constant 0 : index
    %c16_25 = arith.constant 16 : index
    %35 = vector.load %arg11[%c0_24, %c16_25] : memref<512x36xbf16, #tpu.memory_space<vmem>>, vector<512x4xbf16>
    tpu.vector_store %arg11[%c0_24, %c16_25], %34 {strides = array<i32>} : memref<512x36xbf16, #tpu.memory_space<vmem>>, vector<512x4xbf16>,
    %c33 = arith.constant 33 : index
    %c0_26 = arith.constant 0 : index
    %36 = vector.load %arg10[%c33, %c0_26] : memref<576x4xbf16, #tpu.memory_space<vmem>>, vector<512x4xbf16>
    %37 = vector.extract_strided_slice %13 {offsets = [0, 5], sizes = [512, 1], strides = [1, 1]} : vector<512x9xbf16> to vector<512x1xbf16>
    %38 = vector.broadcast %37 : vector<512x1xbf16> to vector<512x4xbf16>
    %39 = arith.mulf %36, %38 : vector<512x4xbf16>
    %c0_27 = arith.constant 0 : index
    %c20 = arith.constant 20 : index
    %40 = vector.load %arg11[%c0_27, %c20] : memref<512x36xbf16, #tpu.memory_space<vmem>>, vector<512x4xbf16>
    tpu.vector_store %arg11[%c0_27, %c20], %39 {strides = array<i32>} : memref<512x36xbf16, #tpu.memory_space<vmem>>, vector<512x4xbf16>,
    %c47 = arith.constant 47 : index
    %c0_28 = arith.constant 0 : index
    %41 = vector.load %arg10[%c47, %c0_28] : memref<576x4xbf16, #tpu.memory_space<vmem>>, vector<512x4xbf16>
    %42 = vector.extract_strided_slice %13 {offsets = [0, 6], sizes = [512, 1], strides = [1, 1]} : vector<512x9xbf16> to vector<512x1xbf16>
    %43 = vector.broadcast %42 : vector<512x1xbf16> to vector<512x4xbf16>
    %44 = arith.mulf %41, %43 : vector<512x4xbf16>
    %c0_29 = arith.constant 0 : index
    %c24 = arith.constant 24 : index
    %45 = vector.load %arg11[%c0_29, %c24] : memref<512x36xbf16, #tpu.memory_space<vmem>>, vector<512x4xbf16>
    tpu.vector_store %arg11[%c0_29, %c24], %44 {strides = array<i32>} : memref<512x36xbf16, #tpu.memory_space<vmem>>, vector<512x4xbf16>,
    %c48 = arith.constant 48 : index
    %c0_30 = arith.constant 0 : index
    %46 = vector.load %arg10[%c48, %c0_30] : memref<576x4xbf16, #tpu.memory_space<vmem>>, vector<512x4xbf16>
    %47 = vector.extract_strided_slice %13 {offsets = [0, 7], sizes = [512, 1], strides = [1, 1]} : vector<512x9xbf16> to vector<512x1xbf16>
    %48 = vector.broadcast %47 : vector<512x1xbf16> to vector<512x4xbf16>
    %49 = arith.mulf %46, %48 : vector<512x4xbf16>
    %c0_31 = arith.constant 0 : index
    %c28 = arith.constant 28 : index
    %50 = vector.load %arg11[%c0_31, %c28] : memref<512x36xbf16, #tpu.memory_space<vmem>>, vector<512x4xbf16>
    tpu.vector_store %arg11[%c0_31, %c28], %49 {strides = array<i32>} : memref<512x36xbf16, #tpu.memory_space<vmem>>, vector<512x4xbf16>,
    %c49 = arith.constant 49 : index
    %c0_32 = arith.constant 0 : index
    %51 = vector.load %arg10[%c49, %c0_32] : memref<576x4xbf16, #tpu.memory_space<vmem>>, vector<512x4xbf16>
    %52 = vector.extract_strided_slice %13 {offsets = [0, 8], sizes = [512, 1], strides = [1, 1]} : vector<512x9xbf16> to vector<512x1xbf16>
    %53 = vector.broadcast %52 : vector<512x1xbf16> to vector<512x4xbf16>
    %54 = arith.mulf %51, %53 : vector<512x4xbf16>
    %c0_33 = arith.constant 0 : index
    %c32_34 = arith.constant 32 : index
    %55 = vector.load %arg11[%c0_33, %c32_34] : memref<512x36xbf16, #tpu.memory_space<vmem>>, vector<512x4xbf16>
    tpu.vector_store %arg11[%c0_33, %c32_34], %54 {strides = array<i32>} : memref<512x36xbf16, #tpu.memory_space<vmem>>, vector<512x4xbf16>,
    %c0_35 = arith.constant 0 : index
    %c0_36 = arith.constant 0 : index
    %56 = vector.load %arg11[%c0_35, %c0_36] : memref<512x36xbf16, #tpu.memory_space<vmem>>, vector<512x36xbf16>
    %c0_37 = arith.constant 0 : index
    %c0_38 = arith.constant 0 : index
    %57 = vector.load %arg5[%c0_37, %c0_38] : memref<36x4xbf16, #tpu.memory_space<vmem>>, vector<36x4xbf16>
    %cst_39 = arith.constant dense<0.000000e+00> : vector<512x4xf32>
    %58 = tpu.matmul %56, %57, %cst_39 {dimension_numbers = #tpu.dot_dimension_numbers<[1], [0], [0], [1], [0, 0, 1, 1], [], []>} : vector<512x36xbf16>, vector<36x4xbf16>, vector<512x4xf32> -> vector<512x4xf32>
    %c0_40 = arith.constant 0 : index
    %c0_41 = arith.constant 0 : index
    %59 = vector.load %arg6[%c0_40, %c0_41] : memref<1x4xf32, #tpu.memory_space<vmem>>, vector<1x4xf32>
    %60 = vector.broadcast %59 : vector<1x4xf32> to vector<512x4xf32>
    %61 = arith.addf %58, %60 : vector<512x4xf32>
    %cst_42 = arith.constant 0.000000e+00 : f32
    %62 = vector.broadcast %cst_42 : f32 to vector<512x4xf32>
    %63 = arith.maximumf %61, %62 : vector<512x4xf32>
    %64 = arith.truncf %63 : vector<512x4xf32> to vector<512x4xbf16>
    %c0_43 = arith.constant 0 : index
    %c0_44 = arith.constant 0 : index
    %65 = vector.load %arg7[%c0_43, %c0_44] : memref<4x16xbf16, #tpu.memory_space<vmem>>, vector<4x16xbf16>
    %cst_45 = arith.constant dense<0.000000e+00> : vector<512x16xf32>
    %66 = tpu.matmul %64, %65, %cst_45 {dimension_numbers = #tpu.dot_dimension_numbers<[1], [0], [0], [1], [0, 0, 1, 1], [], []>} : vector<512x4xbf16>, vector<4x16xbf16>, vector<512x16xf32> -> vector<512x16xf32>
    %c0_46 = arith.constant 0 : index
    %c0_47 = arith.constant 0 : index
    %67 = vector.load %arg8[%c0_46, %c0_47] : memref<1x16xf32, #tpu.memory_space<vmem>>, vector<1x16xf32>
    %68 = vector.broadcast %67 : vector<1x16xf32> to vector<512x16xf32>
    %69 = arith.addf %66, %68 : vector<512x16xf32>
    %70 = arith.extf %0 : vector<512x16xbf16> to vector<512x16xf32>
    %71 = arith.addf %69, %70 : vector<512x16xf32>
    %cst_48 = arith.constant 0.000000e+00 : f32
    %72 = vector.broadcast %cst_48 : f32 to vector<512x16xf32>
    %73 = arith.maximumf %71, %72 : vector<512x16xf32>
    %c0_49 = arith.constant 0 : index
    %c0_50 = arith.constant 0 : index
    %74 = vector.load %arg9[%c0_49, %c0_50] : memref<512x16xf32, #tpu.memory_space<vmem>>, vector<512x16xf32>
    tpu.vector_store %arg9[%c0_49, %c0_50], %73 {strides = array<i32>} : memref<512x16xf32, #tpu.memory_space<vmem>>, vector<512x16xf32>,
    return
  }
  func.func @transform_0(%arg0: i32) -> (i32, i32) {
    %c0_i32 = arith.constant 0 : i32
    %c0_i32_0 = arith.constant 0 : i32
    return %arg0, %c0_i32 : i32, i32
  }
  func.func @transform_1(%arg0: i32) -> (i32, i32) {
    %c0_i32 = arith.constant 0 : i32
    %c0_i32_0 = arith.constant 0 : i32
    %c0_i32_1 = arith.constant 0 : i32
    return %c0_i32, %c0_i32_0 : i32, i32
  }
  func.func @transform_2(%arg0: i32) -> (i32, i32) {
    %c0_i32 = arith.constant 0 : i32
    %c0_i32_0 = arith.constant 0 : i32
    %c0_i32_1 = arith.constant 0 : i32
    return %c0_i32, %c0_i32_0 : i32, i32
  }
  func.func @transform_3(%arg0: i32) -> (i32, i32) {
    %c0_i32 = arith.constant 0 : i32
    %c0_i32_0 = arith.constant 0 : i32
    %c0_i32_1 = arith.constant 0 : i32
    return %c0_i32, %c0_i32_0 : i32, i32
  }
  func.func @transform_4(%arg0: i32) -> (i32, i32) {
    %c0_i32 = arith.constant 0 : i32
    %c0_i32_0 = arith.constant 0 : i32
    %c0_i32_1 = arith.constant 0 : i32
    return %c0_i32, %c0_i32_0 : i32, i32
  }
  func.func @transform_5(%arg0: i32) -> (i32, i32) {
    %c0_i32 = arith.constant 0 : i32
    %c0_i32_0 = arith.constant 0 : i32
    %c0_i32_1 = arith.constant 0 : i32
    return %c0_i32, %c0_i32_0 : i32, i32
  }
  func.func @transform_6(%arg0: i32) -> (i32, i32) {
    %c0_i32 = arith.constant 0 : i32
    %c0_i32_0 = arith.constant 0 : i32
    %c0_i32_1 = arith.constant 0 : i32
    return %c0_i32, %c0_i32_0 : i32, i32
  }
  func.func @transform_7(%arg0: i32) -> (i32, i32) {
    %c0_i32 = arith.constant 0 : i32
    %c0_i32_0 = arith.constant 0 : i32
    %c0_i32_1 = arith.constant 0 : i32
    return %c0_i32, %c0_i32_0 : i32, i32
  }
  func.func @transform_8(%arg0: i32) -> (i32, i32) {
    %c0_i32 = arith.constant 0 : i32
    %c0_i32_0 = arith.constant 0 : i32
    return %arg0, %c0_i32 : i32, i32
  }
}

</mosaic_0001>

<llo_original>
// kernel: bottleneck_forward.1
$region0: #{bottleneck_forward.1}
  #allocation0 [shape = 'u32[]', space=smem, size = 0x4, offset = 0x4, fixed_abs, tag = 'smem constant byte address 0x4 - core index']
  #allocation1 [shape = 'u32[144,128]{1,0:T(1,128)}', space=vmem, size = 0x12000, scoped, tag = 'internal scratch']
  #allocation2 [shape = 'bf16[576,4]{1,0:T(16,128)(2,1)}', space=vmem, size = 0x24000, scoped, tag = 'scratch operand']
  #allocation3 [shape = 'bf16[512,36]{1,0:T(16,128)(2,1)}', space=vmem, size = 0x20000, scoped, tag = 'scratch operand']
  %s0 = inlined_call_operand.vmem [shape: bf16[512,16], index: 0, kind: input, shape index: {}]
  %s1 = inlined_call_operand.vmem [shape: bf16[512,9], index: 1, kind: input, shape index: {}]
  %s2 = inlined_call_operand.vmem [shape: bf16[16,4], index: 2, kind: input, shape index: {}]
  %s3 = inlined_call_operand.vmem [shape: f32[1,4], index: 3, kind: input, shape index: {}]
  %s4 = inlined_call_operand.vmem [shape: bf16[36,4], index: 4, kind: input, shape index: {}]
  %s5 = inlined_call_operand.vmem [shape: f32[1,4], index: 5, kind: input, shape index: {}]
  %s6 = inlined_call_operand.vmem [shape: bf16[4,16], index: 6, kind: input, shape index: {}]
  %s7 = inlined_call_operand.vmem [shape: f32[1,16], index: 7, kind: input, shape index: {}]
  %s8 = inlined_call_operand.vmem [shape: f32[512,16], index: 8, kind: output, shape index: {}]
  %s9 = sld [smem:[#allocation0]]
  $region42: #{bottleneck_forward.1} parent=0
    _
  %s11 = ssub.s32 1, %s9
  %s12 = scalar_select 0, %s11, %s9
  // Predicated region
  $region2: #{bottleneck_forward.1} parent=0 // pred_check
    _
  $region3: #{bottleneck_forward.1} parent=0 // pred_check_branch
    %14 = sbr.rel (0) target = $region5
  $region4: #{bottleneck_forward.1} parent=0 // pred_region
    _
  $region5: #{bottleneck_forward.1} parent=0 // pred_fallthru
    _
  // Predicated region
  $region6: #{bottleneck_forward.1} parent=0 // pred_check
    _
  $region7: #{bottleneck_forward.1} parent=0 // pred_check_branch
    %16 = sbr.rel (0) target = $region9
  $region8: #{bottleneck_forward.1} parent=0 // pred_region
    _
  $region9: #{bottleneck_forward.1} parent=0 // pred_fallthru
    _
  // Predicated region
  $region10: #{bottleneck_forward.1} parent=0 // pred_check
    _
  $region11: #{bottleneck_forward.1} parent=0 // pred_check_branch
    %18 = sbr.rel (0) target = $region13
  $region12: #{bottleneck_forward.1} parent=0 // pred_region
    _
  $region13: #{bottleneck_forward.1} parent=0 // pred_fallthru
    _
  // Predicated region
  $region14: #{bottleneck_forward.1} parent=0 // pred_check
    _
  $region15: #{bottleneck_forward.1} parent=0 // pred_check_branch
    %20 = sbr.rel (0) target = $region17
  $region16: #{bottleneck_forward.1} parent=0 // pred_region
    _
  $region17: #{bottleneck_forward.1} parent=0 // pred_fallthru
    _
  // Predicated region
  $region18: #{bottleneck_forward.1} parent=0 // pred_check
    _
  $region19: #{bottleneck_forward.1} parent=0 // pred_check_branch
    %22 = sbr.rel (0) target = $region21
  $region20: #{bottleneck_forward.1} parent=0 // pred_region
    _
  $region21: #{bottleneck_forward.1} parent=0 // pred_fallthru
    _
  // Predicated region
  $region22: #{bottleneck_forward.1} parent=0 // pred_check
    _
  $region23: #{bottleneck_forward.1} parent=0 // pred_check_branch
    %24 = sbr.rel (0) target = $region25
  $region24: #{bottleneck_forward.1} parent=0 // pred_region
    _
  $region25: #{bottleneck_forward.1} parent=0 // pred_fallthru
    _
  // Predicated region
  $region26: #{bottleneck_forward.1} parent=0 // pred_check
    _
  $region27: #{bottleneck_forward.1} parent=0 // pred_check_branch
    %26 = sbr.rel (0) target = $region29
  $region28: #{bottleneck_forward.1} parent=0 // pred_region
    _
  $region29: #{bottleneck_forward.1} parent=0 // pred_fallthru
    _
  // Predicated region
  $region30: #{bottleneck_forward.1} parent=0 // pred_check
    _
  $region31: #{bottleneck_forward.1} parent=0 // pred_check_branch
    %28 = sbr.rel (0) target = $region33
  $region32: #{bottleneck_forward.1} parent=0 // pred_region
    _
  $region33: #{bottleneck_forward.1} parent=0 // pred_fallthru
    _
  %v30 = vld [vmem:[%s0] sm:$0xf]
  %v31 = vld [vmem:[%s0 + $0x4] sm:$0xf]
  %v32 = vld [vmem:[%s0 + $0x8] sm:$0xf]
  %v33 = vld [vmem:[%s0 + $0xc] sm:$0xf]
  %v34 = vld [vmem:[%s0 + $0x10] sm:$0xf]
  %v35 = vld [vmem:[%s0 + $0x14] sm:$0xf]
  %v36 = vld [vmem:[%s0 + $0x18] sm:$0xf]
  %v37 = vld [vmem:[%s0 + $0x1c] sm:$0xf]
  %v38 = vld [vmem:[%s0 + $0x20] sm:$0xf]
  %v39 = vld [vmem:[%s0 + $0x24] sm:$0xf]
  %v40 = vld [vmem:[%s0 + $0x28] sm:$0xf]
  %v41 = vld [vmem:[%s0 + $0x2c] sm:$0xf]
  %v42 = vld [vmem:[%s0 + $0x30] sm:$0xf]
  %v43 = vld [vmem:[%s0 + $0x34] sm:$0xf]
  %v44 = vld [vmem:[%s0 + $0x38] sm:$0xf]
  %v45 = vld [vmem:[%s0 + $0x3c] sm:$0xf]
  %v46 = vld [vmem:[%s0 + $0x40] sm:$0xf]
  %v47 = vld [vmem:[%s0 + $0x44] sm:$0xf]
  %v48 = vld [vmem:[%s0 + $0x48] sm:$0xf]
  %v49 = vld [vmem:[%s0 + $0x4c] sm:$0xf]
  %v50 = vld [vmem:[%s0 + $0x50] sm:$0xf]
  %v51 = vld [vmem:[%s0 + $0x54] sm:$0xf]
  %v52 = vld [vmem:[%s0 + $0x58] sm:$0xf]
  %v53 = vld [vmem:[%s0 + $0x5c] sm:$0xf]
  %v54 = vld [vmem:[%s0 + $0x60] sm:$0xf]
  %v55 = vld [vmem:[%s0 + $0x64] sm:$0xf]
  %v56 = vld [vmem:[%s0 + $0x68] sm:$0xf]
  %v57 = vld [vmem:[%s0 + $0x6c] sm:$0xf]
  %v58 = vld [vmem:[%s0 + $0x70] sm:$0xf]
  %v59 = vld [vmem:[%s0 + $0x74] sm:$0xf]
  %v60 = vld [vmem:[%s0 + $0x78] sm:$0xf]
  %v61 = vld [vmem:[%s0 + $0x7c] sm:$0xf]
  %v62 = vld [vmem:[%s0 + $0x80] sm:$0xf]
  %v63 = vld [vmem:[%s0 + $0x84] sm:$0xf]
  %v64 = vld [vmem:[%s0 + $0x88] sm:$0xf]
  %v65 = vld [vmem:[%s0 + $0x8c] sm:$0xf]
  %v66 = vld [vmem:[%s0 + $0x90] sm:$0xf]
  %v67 = vld [vmem:[%s0 + $0x94] sm:$0xf]
  %v68 = vld [vmem:[%s0 + $0x98] sm:$0xf]
  %v69 = vld [vmem:[%s0 + $0x9c] sm:$0xf]
  %v70 = vld [vmem:[%s0 + $0xa0] sm:$0xf]
  %v71 = vld [vmem:[%s0 + $0xa4] sm:$0xf]
  %v72 = vld [vmem:[%s0 + $0xa8] sm:$0xf]
  %v73 = vld [vmem:[%s0 + $0xac] sm:$0xf]
  %v74 = vld [vmem:[%s0 + $0xb0] sm:$0xf]
  %v75 = vld [vmem:[%s0 + $0xb4] sm:$0xf]
  %v76 = vld [vmem:[%s0 + $0xb8] sm:$0xf]
  %v77 = vld [vmem:[%s0 + $0xbc] sm:$0xf]
  %v78 = vld [vmem:[%s0 + $0xc0] sm:$0xf]
  %v79 = vld [vmem:[%s0 + $0xc4] sm:$0xf]
  %v80 = vld [vmem:[%s0 + $0xc8] sm:$0xf]
  %v81 = vld [vmem:[%s0 + $0xcc] sm:$0xf]
  %v82 = vld [vmem:[%s0 + $0xd0] sm:$0xf]
  %v83 = vld [vmem:[%s0 + $0xd4] sm:$0xf]
  %v84 = vld [vmem:[%s0 + $0xd8] sm:$0xf]
  %v85 = vld [vmem:[%s0 + $0xdc] sm:$0xf]
  %v86 = vld [vmem:[%s0 + $0xe0] sm:$0xf]
  %v87 = vld [vmem:[%s0 + $0xe4] sm:$0xf]
  %v88 = vld [vmem:[%s0 + $0xe8] sm:$0xf]
  %v89 = vld [vmem:[%s0 + $0xec] sm:$0xf]
  %v90 = vld [vmem:[%s0 + $0xf0] sm:$0xf]
  %v91 = vld [vmem:[%s0 + $0xf4] sm:$0xf]
  %v92 = vld [vmem:[%s0 + $0xf8] sm:$0xf]
  %v93 = vld [vmem:[%s0 + $0xfc] sm:$0xf]
  %v94 = vld [vmem:[%s2] sm:$0xf]
  %v95 = vld [vmem:[%s2 + $0x4] sm:$0xf]
  %v96 = vld [vmem:[%s3] sm:$0x1]
  %v98 = vlaneseq
  %v99 = vshrl.u32 %v98, 7
  %v100 = vsub.s32 0, %v99
  %v101 = vrot.slane %v96, %v100
  %v167 = vunpack.c.l.b16 %v30
  %v168 = vunpack.c.l.b16 %v31
  %v169 = vunpack.c.l.b16 %v32
  %v170 = vunpack.c.l.b16 %v33
  %v171 = vunpack.c.l.b16 %v34
  %v172 = vunpack.c.l.b16 %v35
  %v173 = vunpack.c.l.b16 %v36
  %v174 = vunpack.c.l.b16 %v37
  %v175 = vunpack.c.l.b16 %v38
  %v176 = vunpack.c.l.b16 %v39
  %v177 = vunpack.c.l.b16 %v40
  %v178 = vunpack.c.l.b16 %v41
  %v179 = vunpack.c.l.b16 %v42
  %v180 = vunpack.c.l.b16 %v43
  %v181 = vunpack.c.l.b16 %v44
  %v182 = vunpack.c.l.b16 %v45
  %v183 = vunpack.c.l.b16 %v46
  %v184 = vunpack.c.l.b16 %v47
  %v185 = vunpack.c.l.b16 %v48
  %v186 = vunpack.c.l.b16 %v49
  %v187 = vunpack.c.l.b16 %v50
  %v188 = vunpack.c.l.b16 %v51
  %v189 = vunpack.c.l.b16 %v52
  %v190 = vunpack.c.l.b16 %v53
  %v191 = vunpack.c.l.b16 %v54
  %v192 = vunpack.c.l.b16 %v55
  %v193 = vunpack.c.l.b16 %v56
  %v194 = vunpack.c.l.b16 %v57
  %v195 = vunpack.c.l.b16 %v58
  %v196 = vunpack.c.l.b16 %v59
  %v197 = vunpack.c.l.b16 %v60
  %v198 = vunpack.c.l.b16 %v61
  %v199 = vunpack.c.l.b16 %v62
  %v200 = vunpack.c.l.b16 %v63
  %v201 = vunpack.c.l.b16 %v64
  %v202 = vunpack.c.l.b16 %v65
  %v203 = vunpack.c.l.b16 %v66
  %v204 = vunpack.c.l.b16 %v67
  %v205 = vunpack.c.l.b16 %v68
  %v206 = vunpack.c.l.b16 %v69
  %v207 = vunpack.c.l.b16 %v70
  %v208 = vunpack.c.l.b16 %v71
  %v209 = vunpack.c.l.b16 %v72
  %v210 = vunpack.c.l.b16 %v73
  %v211 = vunpack.c.l.b16 %v74
  %v212 = vunpack.c.l.b16 %v75
  %v213 = vunpack.c.l.b16 %v76
  %v214 = vunpack.c.l.b16 %v77
  %v215 = vunpack.c.l.b16 %v78
  %v216 = vunpack.c.l.b16 %v79
  %v217 = vunpack.c.l.b16 %v80
  %v218 = vunpack.c.l.b16 %v81
  %v219 = vunpack.c.l.b16 %v82
  %v220 = vunpack.c.l.b16 %v83
  %v221 = vunpack.c.l.b16 %v84
  %v222 = vunpack.c.l.b16 %v85
  %v223 = vunpack.c.l.b16 %v86
  %v224 = vunpack.c.l.b16 %v87
  %v225 = vunpack.c.l.b16 %v88
  %v226 = vunpack.c.l.b16 %v89
  %v227 = vunpack.c.l.b16 %v90
  %v228 = vunpack.c.l.b16 %v91
  %v229 = vunpack.c.l.b16 %v92
  %v230 = vunpack.c.l.b16 %v93
  %v231 = vpack.c.b16 %v168, %v167
  %v232 = vpack.c.b16 %v170, %v169
  %v233 = vpack.c.b16 %v172, %v171
  %v234 = vpack.c.b16 %v174, %v173
  %v235 = vpack.c.b16 %v176, %v175
  %v236 = vpack.c.b16 %v178, %v177
  %v237 = vpack.c.b16 %v180, %v179
  %v238 = vpack.c.b16 %v182, %v181
  %v239 = vpack.c.b16 %v184, %v183
  %v240 = vpack.c.b16 %v186, %v185
  %v241 = vpack.c.b16 %v188, %v187
  %v242 = vpack.c.b16 %v190, %v189
  %v243 = vpack.c.b16 %v192, %v191
  %v244 = vpack.c.b16 %v194, %v193
  %v245 = vpack.c.b16 %v196, %v195
  %v246 = vpack.c.b16 %v198, %v197
  %v247 = vpack.c.b16 %v200, %v199
  %v248 = vpack.c.b16 %v202, %v201
  %v249 = vpack.c.b16 %v204, %v203
  %v250 = vpack.c.b16 %v206, %v205
  %v251 = vpack.c.b16 %v208, %v207
  %v252 = vpack.c.b16 %v210, %v209
  %v253 = vpack.c.b16 %v212, %v211
  %v254 = vpack.c.b16 %v214, %v213
  %v255 = vpack.c.b16 %v216, %v215
  %v256 = vpack.c.b16 %v218, %v217
  %v257 = vpack.c.b16 %v220, %v219
  %v258 = vpack.c.b16 %v222, %v221
  %v259 = vpack.c.b16 %v224, %v223
  %v260 = vpack.c.b16 %v226, %v225
  %v261 = vpack.c.b16 %v228, %v227
  %v262 = vpack.c.b16 %v230, %v229
  %v265 = vunpack.c.l.b16 %v94
  %v266 = vunpack.c.l.b16 %v95
  %v267 = vpack.c.b16 %v266, %v265
  %vm269 = vcmask 130048
  %v271 = vsel %vm269, %v231, 0
  %v274 = vsel %vm269, %v232, 0
  %v277 = vsel %vm269, %v233, 0
  %v280 = vsel %vm269, %v234, 0
  %v283 = vsel %vm269, %v235, 0
  %v286 = vsel %vm269, %v236, 0
  %v289 = vsel %vm269, %v237, 0
  %v292 = vsel %vm269, %v238, 0
  %v295 = vsel %vm269, %v239, 0
  %v298 = vsel %vm269, %v240, 0
  %v301 = vsel %vm269, %v241, 0
  %v304 = vsel %vm269, %v242, 0
  %v307 = vsel %vm269, %v243, 0
  %v310 = vsel %vm269, %v244, 0
  %v313 = vsel %vm269, %v245, 0
  %v316 = vsel %vm269, %v246, 0
  %v319 = vsel %vm269, %v247, 0
  %v322 = vsel %vm269, %v248, 0
  %v325 = vsel %vm269, %v249, 0
  %v328 = vsel %vm269, %v250, 0
  %v331 = vsel %vm269, %v251, 0
  %v334 = vsel %vm269, %v252, 0
  %v337 = vsel %vm269, %v253, 0
  %v340 = vsel %vm269, %v254, 0
  %v343 = vsel %vm269, %v255, 0
  %v346 = vsel %vm269, %v256, 0
  %v349 = vsel %vm269, %v257, 0
  %v352 = vsel %vm269, %v258, 0
  %v355 = vsel %vm269, %v259, 0
  %v358 = vsel %vm269, %v260, 0
  %v361 = vsel %vm269, %v261, 0
  %v364 = vsel %vm269, %v262, 0
  %366 = vmatprep.subr.bf16.mxu0 0
  %367 = vmatpush1.bf16.msra.mxu0 %v267
  %368 = vmatprep.subr.bf16.mxu0 0
  %369 = vmatpush1.bf16.msra.mxu0 0
  %370 = vmatprep.subr.bf16.mxu0 0
  %371 = vmatpush1.bf16.msra.mxu0 0
  %372 = vmatprep.subr.bf16.mxu0 0
  %373 = vmatpush1.bf16.msra.mxu0 0
  %374 = vmatprep.subr.bf16.mxu0 0
  %375 = vmatpush1.bf16.msra.mxu0 0
  %376 = vmatprep.subr.bf16.mxu0 0
  %377 = vmatpush1.bf16.msra.mxu0 0
  %378 = vmatprep.subr.bf16.mxu0 0
  %379 = vmatpush1.bf16.msra.mxu0 0
  %380 = vmatprep.subr.bf16.mxu0 0
  %381 = vmatpush1.bf16.msra.mxu0 0
  %382 = vmatprep.subr.bf16.mxu0 0
  %383 = vmatpush1.bf16.msra.mxu0 0
  %384 = vmatprep.subr.bf16.mxu0 0
  %385 = vmatpush1.bf16.msra.mxu0 0
  %386 = vmatprep.subr.bf16.mxu0 0
  %387 = vmatpush1.bf16.msra.mxu0 0
  %388 = vmatprep.subr.bf16.mxu0 0
  %389 = vmatpush1.bf16.msra.mxu0 0
  %390 = vmatprep.subr.bf16.mxu0 0
  %391 = vmatpush1.bf16.msra.mxu0 0
  %392 = vmatprep.subr.bf16.mxu0 0
  %393 = vmatpush1.bf16.msra.mxu0 0
  %394 = vmatprep.subr.bf16.mxu0 0
  %395 = vmatpush1.bf16.msra.mxu0 0
  %396 = vmatprep.subr.bf16.mxu0 0
  %397 = vmatpush1.bf16.msra.mxu0 0
  %398 = vmatprep.mubr.bf16.mxu0 0
  %399 = vmatmul.mubr.bf16.gmra.mrb[0].mxu0 %v271
  %v400 = vpop.f32.mrb[0].mxu0
  %v401 = vadd.f32 %v101, %v400
  %v402 = vpop.f32.mrb[0].mxu0
  %v403 = vpop.f32.mrb[0].mxu0
  %v404 = vadd.f32 %v101, %v403
  %v405 = vpop.f32.mrb[0].mxu0
  %406 = vmatprep.mubr.bf16.mxu0 0
  %407 = vmatmul.mubr.bf16.gmra.mrb[0].mxu0 %v274
  %v408 = vpop.f32.mrb[0].mxu0
  %v409 = vadd.f32 %v101, %v408
  %v410 = vpop.f32.mrb[0].mxu0
  %v411 = vpop.f32.mrb[0].mxu0
  %v412 = vadd.f32 %v101, %v411
  %v413 = vpop.f32.mrb[0].mxu0
  %414 = vmatprep.mubr.bf16.mxu0 0
  %415 = vmatmul.mubr.bf16.gmra.mrb[0].mxu0 %v277
  %v416 = vpop.f32.mrb[0].mxu0
  %v417 = vadd.f32 %v101, %v416
  %v418 = vpop.f32.mrb[0].mxu0
  %v419 = vpop.f32.mrb[0].mxu0
  %v420 = vadd.f32 %v101, %v419
  %v421 = vpop.f32.mrb[0].mxu0
  %422 = vmatprep.mubr.bf16.mxu0 0
  %423 = vmatmul.mubr.bf16.gmra.mrb[0].mxu0 %v280
  %v424 = vpop.f32.mrb[0].mxu0
  %v425 = vadd.f32 %v101, %v424
  %v426 = vpop.f32.mrb[0].mxu0
  %v427 = vpop.f32.mrb[0].mxu0
  %v428 = vadd.f32 %v101, %v427
  %v429 = vpop.f32.mrb[0].mxu0
  %430 = vmatprep.mubr.bf16.mxu0 0
  %431 = vmatmul.mubr.bf16.gmra.mrb[0].mxu0 %v283
  %v432 = vpop.f32.mrb[0].mxu0
  %v433 = vadd.f32 %v101, %v432
  %v434 = vpop.f32.mrb[0].mxu0
  %v435 = vpop.f32.mrb[0].mxu0
  %v436 = vadd.f32 %v101, %v435
  %v437 = vpop.f32.mrb[0].mxu0
  %438 = vmatprep.mubr.bf16.mxu0 0
  %439 = vmatmul.mubr.bf16.gmra.mrb[0].mxu0 %v286
  %v440 = vpop.f32.mrb[0].mxu0
  %v441 = vadd.f32 %v101, %v440
  %v442 = vpop.f32.mrb[0].mxu0
  %v443 = vpop.f32.mrb[0].mxu0
  %v444 = vadd.f32 %v101, %v443
  %v445 = vpop.f32.mrb[0].mxu0
  %446 = vmatprep.mubr.bf16.mxu0 0
  %447 = vmatmul.mubr.bf16.gmra.mrb[0].mxu0 %v289
  %v448 = vpop.f32.mrb[0].mxu0
  %v449 = vadd.f32 %v101, %v448
  %v450 = vpop.f32.mrb[0].mxu0
  %v451 = vpop.f32.mrb[0].mxu0
  %v452 = vadd.f32 %v101, %v451
  %v453 = vpop.f32.mrb[0].mxu0
  %454 = vmatprep.mubr.bf16.mxu0 0
  %455 = vmatmul.mubr.bf16.gmra.mrb[0].mxu0 %v292
  %v456 = vpop.f32.mrb[0].mxu0
  %v457 = vadd.f32 %v101, %v456
  %v458 = vpop.f32.mrb[0].mxu0
  %v459 = vpop.f32.mrb[0].mxu0
  %v460 = vadd.f32 %v101, %v459
  %v461 = vpop.f32.mrb[0].mxu0
  %462 = vmatprep.mubr.bf16.mxu0 0
  %463 = vmatmul.mubr.bf16.gmra.mrb[0].mxu0 %v295
  %v464 = vpop.f32.mrb[0].mxu0
  %v465 = vadd.f32 %v101, %v464
  %v466 = vpop.f32.mrb[0].mxu0
  %v467 = vpop.f32.mrb[0].mxu0
  %v468 = vadd.f32 %v101, %v467
  %v469 = vpop.f32.mrb[0].mxu0
  %470 = vmatprep.mubr.bf16.mxu0 0
  %471 = vmatmul.mubr.bf16.gmra.mrb[0].mxu0 %v298
  %v472 = vpop.f32.mrb[0].mxu0
  %v473 = vadd.f32 %v101, %v472
  %v474 = vpop.f32.mrb[0].mxu0
  %v475 = vpop.f32.mrb[0].mxu0
  %v476 = vadd.f32 %v101, %v475
  %v477 = vpop.f32.mrb[0].mxu0
  %478 = vmatprep.mubr.bf16.mxu0 0
  %479 = vmatmul.mubr.bf16.gmra.mrb[0].mxu0 %v301
  %v480 = vpop.f32.mrb[0].mxu0
  %v481 = vadd.f32 %v101, %v480
  %v482 = vpop.f32.mrb[0].mxu0
  %v483 = vpop.f32.mrb[0].mxu0
  %v484 = vadd.f32 %v101, %v483
  %v485 = vpop.f32.mrb[0].mxu0
  %486 = vmatprep.mubr.bf16.mxu0 0
  %487 = vmatmul.mubr.bf16.gmra.mrb[0].mxu0 %v304
  %v488 = vpop.f32.mrb[0].mxu0
  %v489 = vadd.f32 %v101, %v488
  %v490 = vpop.f32.mrb[0].mxu0
  %v491 = vpop.f32.mrb[0].mxu0
  %v492 = vadd.f32 %v101, %v491
  %v493 = vpop.f32.mrb[0].mxu0
  %494 = vmatprep.mubr.bf16.mxu0 0
  %495 = vmatmul.mubr.bf16.gmra.mrb[0].mxu0 %v307
  %v496 = vpop.f32.mrb[0].mxu0
  %v497 = vadd.f32 %v101, %v496
  %v498 = vpop.f32.mrb[0].mxu0
  %v499 = vpop.f32.mrb[0].mxu0
  %v500 = vadd.f32 %v101, %v499
  %v501 = vpop.f32.mrb[0].mxu0
  %502 = vmatprep.mubr.bf16.mxu0 0
  %503 = vmatmul.mubr.bf16.gmra.mrb[0].mxu0 %v310
  %v504 = vpop.f32.mrb[0].mxu0
  %v505 = vadd.f32 %v101, %v504
  %v506 = vpop.f32.mrb[0].mxu0
  %v507 = vpop.f32.mrb[0].mxu0
  %v508 = vadd.f32 %v101, %v507
  %v509 = vpop.f32.mrb[0].mxu0
  %510 = vmatprep.mubr.bf16.mxu0 0
  %511 = vmatmul.mubr.bf16.gmra.mrb[0].mxu0 %v313
  %v512 = vpop.f32.mrb[0].mxu0
  %v513 = vadd.f32 %v101, %v512
  %v514 = vpop.f32.mrb[0].mxu0
  %v515 = vpop.f32.mrb[0].mxu0
  %v516 = vadd.f32 %v101, %v515
  %v517 = vpop.f32.mrb[0].mxu0
  %518 = vmatprep.mubr.bf16.mxu0 0
  %519 = vmatmul.mubr.bf16.gmra.mrb[0].mxu0 %v316
  %v520 = vpop.f32.mrb[0].mxu0
  %v521 = vadd.f32 %v101, %v520
  %v522 = vpop.f32.mrb[0].mxu0
  %v523 = vpop.f32.mrb[0].mxu0
  %v524 = vadd.f32 %v101, %v523
  %v525 = vpop.f32.mrb[0].mxu0
  %526 = vmatprep.mubr.bf16.mxu0 0
  %527 = vmatmul.mubr.bf16.gmra.mrb[0].mxu0 %v319
  %v528 = vpop.f32.mrb[0].mxu0
  %v529 = vadd.f32 %v101, %v528
  %v530 = vpop.f32.mrb[0].mxu0
  %v531 = vpop.f32.mrb[0].mxu0
  %v532 = vadd.f32 %v101, %v531
  %v533 = vpop.f32.mrb[0].mxu0
  %534 = vmatprep.mubr.bf16.mxu0 0
  %535 = vmatmul.mubr.bf16.gmra.mrb[0].mxu0 %v322
  %v536 = vpop.f32.mrb[0].mxu0
  %v537 = vadd.f32 %v101, %v536
  %v538 = vpop.f32.mrb[0].mxu0
  %v539 = vpop.f32.mrb[0].mxu0
  %v540 = vadd.f32 %v101, %v539
  %v541 = vpop.f32.mrb[0].mxu0
  %542 = vmatprep.mubr.bf16.mxu0 0
  %543 = vmatmul.mubr.bf16.gmra.mrb[0].mxu0 %v325
  %v544 = vpop.f32.mrb[0].mxu0
  %v545 = vadd.f32 %v101, %v544
  %v546 = vpop.f32.mrb[0].mxu0
  %v547 = vpop.f32.mrb[0].mxu0
  %v548 = vadd.f32 %v101, %v547
  %v549 = vpop.f32.mrb[0].mxu0
  %550 = vmatprep.mubr.bf16.mxu0 0
  %551 = vmatmul.mubr.bf16.gmra.mrb[0].mxu0 %v328
  %v552 = vpop.f32.mrb[0].mxu0
  %v553 = vadd.f32 %v101, %v552
  %v554 = vpop.f32.mrb[0].mxu0
  %v555 = vpop.f32.mrb[0].mxu0
  %v556 = vadd.f32 %v101, %v555
  %v557 = vpop.f32.mrb[0].mxu0
  %558 = vmatprep.mubr.bf16.mxu0 0
  %559 = vmatmul.mubr.bf16.gmra.mrb[0].mxu0 %v331
  %v560 = vpop.f32.mrb[0].mxu0
  %v561 = vadd.f32 %v101, %v560
  %v562 = vpop.f32.mrb[0].mxu0
  %v563 = vpop.f32.mrb[0].mxu0
  %v564 = vadd.f32 %v101, %v563
  %v565 = vpop.f32.mrb[0].mxu0
  %566 = vmatprep.mubr.bf16.mxu0 0
  %567 = vmatmul.mubr.bf16.gmra.mrb[0].mxu0 %v334
  %v568 = vpop.f32.mrb[0].mxu0
  %v569 = vadd.f32 %v101, %v568
  %v570 = vpop.f32.mrb[0].mxu0
  %v571 = vpop.f32.mrb[0].mxu0
  %v572 = vadd.f32 %v101, %v571
  %v573 = vpop.f32.mrb[0].mxu0
  %574 = vmatprep.mubr.bf16.mxu0 0
  %575 = vmatmul.mubr.bf16.gmra.mrb[0].mxu0 %v337
  %v576 = vpop.f32.mrb[0].mxu0
  %v577 = vadd.f32 %v101, %v576
  %v578 = vpop.f32.mrb[0].mxu0
  %v579 = vpop.f32.mrb[0].mxu0
  %v580 = vadd.f32 %v101, %v579
  %v581 = vpop.f32.mrb[0].mxu0
  %582 = vmatprep.mubr.bf16.mxu0 0
  %583 = vmatmul.mubr.bf16.gmra.mrb[0].mxu0 %v340
  %v584 = vpop.f32.mrb[0].mxu0
  %v585 = vadd.f32 %v101, %v584
  %v586 = vpop.f32.mrb[0].mxu0
  %v587 = vpop.f32.mrb[0].mxu0
  %v588 = vadd.f32 %v101, %v587
  %v589 = vpop.f32.mrb[0].mxu0
  %590 = vmatprep.mubr.bf16.mxu0 0
  %591 = vmatmul.mubr.bf16.gmra.mrb[0].mxu0 %v343
  %v592 = vpop.f32.mrb[0].mxu0
  %v593 = vadd.f32 %v101, %v592
  %v594 = vpop.f32.mrb[0].mxu0
  %v595 = vpop.f32.mrb[0].mxu0
  %v596 = vadd.f32 %v101, %v595
  %v597 = vpop.f32.mrb[0].mxu0
  %598 = vmatprep.mubr.bf16.mxu0 0
  %599 = vmatmul.mubr.bf16.gmra.mrb[0].mxu0 %v346
  %v600 = vpop.f32.mrb[0].mxu0
  %v601 = vadd.f32 %v101, %v600
  %v602 = vpop.f32.mrb[0].mxu0
  %v603 = vpop.f32.mrb[0].mxu0
  %v604 = vadd.f32 %v101, %v603
  %v605 = vpop.f32.mrb[0].mxu0
  %606 = vmatprep.mubr.bf16.mxu0 0
  %607 = vmatmul.mubr.bf16.gmra.mrb[0].mxu0 %v349
  %v608 = vpop.f32.mrb[0].mxu0
  %v609 = vadd.f32 %v101, %v608
  %v610 = vpop.f32.mrb[0].mxu0
  %v611 = vpop.f32.mrb[0].mxu0
  %v612 = vadd.f32 %v101, %v611
  %v613 = vpop.f32.mrb[0].mxu0
  %614 = vmatprep.mubr.bf16.mxu0 0
  %615 = vmatmul.mubr.bf16.gmra.mrb[0].mxu0 %v352
  %v616 = vpop.f32.mrb[0].mxu0
  %v617 = vadd.f32 %v101, %v616
  %v618 = vpop.f32.mrb[0].mxu0
  %v619 = vpop.f32.mrb[0].mxu0
  %v620 = vadd.f32 %v101, %v619
  %v621 = vpop.f32.mrb[0].mxu0
  %622 = vmatprep.mubr.bf16.mxu0 0
  %623 = vmatmul.mubr.bf16.gmra.mrb[0].mxu0 %v355
  %v624 = vpop.f32.mrb[0].mxu0
  %v625 = vadd.f32 %v101, %v624
  %v626 = vpop.f32.mrb[0].mxu0
  %v627 = vpop.f32.mrb[0].mxu0
  %v628 = vadd.f32 %v101, %v627
  %v629 = vpop.f32.mrb[0].mxu0
  %630 = vmatprep.mubr.bf16.mxu0 0
  %631 = vmatmul.mubr.bf16.gmra.mrb[0].mxu0 %v358
  %v632 = vpop.f32.mrb[0].mxu0
  %v633 = vadd.f32 %v101, %v632
  %v634 = vpop.f32.mrb[0].mxu0
  %v635 = vpop.f32.mrb[0].mxu0
  %v636 = vadd.f32 %v101, %v635
  %v637 = vpop.f32.mrb[0].mxu0
  %638 = vmatprep.mubr.bf16.mxu0 0
  %639 = vmatmul.mubr.bf16.gmra.mrb[0].mxu0 %v361
  %v640 = vpop.f32.mrb[0].mxu0
  %v641 = vadd.f32 %v101, %v640
  %v642 = vpop.f32.mrb[0].mxu0
  %v643 = vpop.f32.mrb[0].mxu0
  %v644 = vadd.f32 %v101, %v643
  %v645 = vpop.f32.mrb[0].mxu0
  %646 = vmatprep.mubr.bf16.mxu0 0
  %647 = vmatmul.mubr.bf16.gmra.mrb[0].mxu0 %v364
  %v648 = vpop.f32.mrb[0].mxu0
  %v649 = vadd.f32 %v101, %v648
  %v650 = vpop.f32.mrb[0].mxu0
  %v651 = vpop.f32.mrb[0].mxu0
  %v652 = vadd.f32 %v101, %v651
  %v653 = vpop.f32.mrb[0].mxu0
  %654 = vdwg.mxu0
  %v655 = vmax.f32 %v401, 0.0
  %v656 = vmax.f32 %v404, 0.0
  %v657 = vmax.f32 %v409, 0.0
  %v658 = vmax.f32 %v412, 0.0
  %v659 = vmax.f32 %v417, 0.0
  %v660 = vmax.f32 %v420, 0.0
  %v661 = vmax.f32 %v425, 0.0
  %v662 = vmax.f32 %v428, 0.0
  %v663 = vmax.f32 %v433, 0.0
  %v664 = vmax.f32 %v436, 0.0
  %v665 = vmax.f32 %v441, 0.0
  %v666 = vmax.f32 %v444, 0.0
  %v667 = vmax.f32 %v449, 0.0
  %v668 = vmax.f32 %v452, 0.0
  %v669 = vmax.f32 %v457, 0.0
  %v670 = vmax.f32 %v460, 0.0
  %v671 = vmax.f32 %v465, 0.0
  %v672 = vmax.f32 %v468, 0.0
  %v673 = vmax.f32 %v473, 0.0
  %v674 = vmax.f32 %v476, 0.0
  %v675 = vmax.f32 %v481, 0.0
  %v676 = vmax.f32 %v484, 0.0
  %v677 = vmax.f32 %v489, 0.0
  %v678 = vmax.f32 %v492, 0.0
  %v679 = vmax.f32 %v497, 0.0
  %v680 = vmax.f32 %v500, 0.0
  %v681 = vmax.f32 %v505, 0.0
  %v682 = vmax.f32 %v508, 0.0
  %v683 = vmax.f32 %v513, 0.0
  %v684 = vmax.f32 %v516, 0.0
  %v685 = vmax.f32 %v521, 0.0
  %v686 = vmax.f32 %v524, 0.0
  %v687 = vmax.f32 %v529, 0.0
  %v688 = vmax.f32 %v532, 0.0
  %v689 = vmax.f32 %v537, 0.0
  %v690 = vmax.f32 %v540, 0.0
  %v691 = vmax.f32 %v545, 0.0
  %v692 = vmax.f32 %v548, 0.0
  %v693 = vmax.f32 %v553, 0.0
  %v694 = vmax.f32 %v556, 0.0
  %v695 = vmax.f32 %v561, 0.0
  %v696 = vmax.f32 %v564, 0.0
  %v697 = vmax.f32 %v569, 0.0
  %v698 = vmax.f32 %v572, 0.0
  %v699 = vmax.f32 %v577, 0.0
  %v700 = vmax.f32 %v580, 0.0
  %v701 = vmax.f32 %v585, 0.0
  %v702 = vmax.f32 %v588, 0.0
  %v703 = vmax.f32 %v593, 0.0
  %v704 = vmax.f32 %v596, 0.0
  %v705 = vmax.f32 %v601, 0.0
  %v706 = vmax.f32 %v604, 0.0
  %v707 = vmax.f32 %v609, 0.0
  %v708 = vmax.f32 %v612, 0.0
  %v709 = vmax.f32 %v617, 0.0
  %v710 = vmax.f32 %v620, 0.0
  %v711 = vmax.f32 %v625, 0.0
  %v712 = vmax.f32 %v628, 0.0
  %v713 = vmax.f32 %v633, 0.0
  %v714 = vmax.f32 %v636, 0.0
  %v715 = vmax.f32 %v641, 0.0
  %v716 = vmax.f32 %v644, 0.0
  %v717 = vmax.f32 %v649, 0.0
  %v718 = vmax.f32 %v652, 0.0
  %v719 = vpack.c.bf16 %v656, %v655
  %v720 = vpack.c.bf16 %v658, %v657
  %v721 = vpack.c.bf16 %v660, %v659
  %v722 = vpack.c.bf16 %v662, %v661
  %v723 = vpack.c.bf16 %v664, %v663
  %v724 = vpack.c.bf16 %v666, %v665
  %v725 = vpack.c.bf16 %v668, %v667
  %v726 = vpack.c.bf16 %v670, %v669
  %v727 = vpack.c.bf16 %v672, %v671
  %v728 = vpack.c.bf16 %v674, %v673
  %v729 = vpack.c.bf16 %v676, %v675
  %v730 = vpack.c.bf16 %v678, %v677
  %v731 = vpack.c.bf16 %v680, %v679
  %v732 = vpack.c.bf16 %v682, %v681
  %v733 = vpack.c.bf16 %v684, %v683
  %v734 = vpack.c.bf16 %v686, %v685
  %v735 = vpack.c.bf16 %v688, %v687
  %v736 = vpack.c.bf16 %v690, %v689
  %v737 = vpack.c.bf16 %v692, %v691
  %v738 = vpack.c.bf16 %v694, %v693
  %v739 = vpack.c.bf16 %v696, %v695
  %v740 = vpack.c.bf16 %v698, %v697
  %v741 = vpack.c.bf16 %v700, %v699
  %v742 = vpack.c.bf16 %v702, %v701
  %v743 = vpack.c.bf16 %v704, %v703
  %v744 = vpack.c.bf16 %v706, %v705
  %v745 = vpack.c.bf16 %v708, %v707
  %v746 = vpack.c.bf16 %v710, %v709
  %v747 = vpack.c.bf16 %v712, %v711
  %v748 = vpack.c.bf16 %v714, %v713
  %v749 = vpack.c.bf16 %v716, %v715
  %v750 = vpack.c.bf16 %v718, %v717
  %vm751 = vcmask 31744
  %752 = vst.msk [vmem:[#allocation2] sm:$0xff] %vm751, 0
  %753 = vst.msk [vmem:[#allocation2 + $0x8] sm:$0xff] %vm751, 0
  %754 = vst.msk [vmem:[#allocation2 + $0x110] sm:$0xff] %vm751, 0
  %755 = vst.msk [vmem:[#allocation2 + $0x118] sm:$0xff] %vm751, 0
  %756 = vst.msk [vmem:[#allocation2 + $0x10] sm:$0xff] %vm751, %v719
  %757 = vst.msk [vmem:[#allocation2 + $0x18] sm:$0xff] %vm751, %v720
  %758 = vst.msk [vmem:[#allocation2 + $0x20] sm:$0xff] %vm751, %v721
  %759 = vst.msk [vmem:[#allocation2 + $0x28] sm:$0xff] %vm751, %v722
  %760 = vst.msk [vmem:[#allocation2 + $0x30] sm:$0xff] %vm751, %v723
  %761 = vst.msk [vmem:[#allocation2 + $0x38] sm:$0xff] %vm751, %v724
  %762 = vst.msk [vmem:[#allocation2 + $0x40] sm:$0xff] %vm751, %v725
  %763 = vst.msk [vmem:[#allocation2 + $0x48] sm:$0xff] %vm751, %v726
  %764 = vst.msk [vmem:[#allocation2 + $0x50] sm:$0xff] %vm751, %v727
  %765 = vst.msk [vmem:[#allocation2 + $0x58] sm:$0xff] %vm751, %v728
  %766 = vst.msk [vmem:[#allocation2 + $0x60] sm:$0xff] %vm751, %v729
  %767 = vst.msk [vmem:[#allocation2 + $0x68] sm:$0xff] %vm751, %v730
  %768 = vst.msk [vmem:[#allocation2 + $0x70] sm:$0xff] %vm751, %v731
  %769 = vst.msk [vmem:[#allocation2 + $0x78] sm:$0xff] %vm751, %v732
  %770 = vst.msk [vmem:[#allocation2 + $0x80] sm:$0xff] %vm751, %v733
  %771 = vst.msk [vmem:[#allocation2 + $0x88] sm:$0xff] %vm751, %v734
  %772 = vst.msk [vmem:[#allocation2 + $0x90] sm:$0xff] %vm751, %v735
  %773 = vst.msk [vmem:[#allocation2 + $0x98] sm:$0xff] %vm751, %v736
  %774 = vst.msk [vmem:[#allocation2 + $0xa0] sm:$0xff] %vm751, %v737
  %775 = vst.msk [vmem:[#allocation2 + $0xa8] sm:$0xff] %vm751, %v738
  %776 = vst.msk [vmem:[#allocation2 + $0xb0] sm:$0xff] %vm751, %v739
  %777 = vst.msk [vmem:[#allocation2 + $0xb8] sm:$0xff] %vm751, %v740
  %778 = vst.msk [vmem:[#allocation2 + $0xc0] sm:$0xff] %vm751, %v741
  %779 = vst.msk [vmem:[#allocation2 + $0xc8] sm:$0xff] %vm751, %v742
  %780 = vst.msk [vmem:[#allocation2 + $0xd0] sm:$0xff] %vm751, %v743
  %781 = vst.msk [vmem:[#allocation2 + $0xd8] sm:$0xff] %vm751, %v744
  %782 = vst.msk [vmem:[#allocation2 + $0xe0] sm:$0xff] %vm751, %v745
  %783 = vst.msk [vmem:[#allocation2 + $0xe8] sm:$0xff] %vm751, %v746
  %784 = vst.msk [vmem:[#allocation2 + $0xf0] sm:$0xff] %vm751, %v747
  %785 = vst.msk [vmem:[#allocation2 + $0xf8] sm:$0xff] %vm751, %v748
  %786 = vst.msk [vmem:[#allocation2 + $0x100] sm:$0xff] %vm751, %v749
  %787 = vst.msk [vmem:[#allocation2 + $0x108] sm:$0xff] %vm751, %v750
  %v788 = vld [vmem:[%s1] sm:$0xf]
  %v789 = vld [vmem:[%s1 + $0x4] sm:$0xf]
  %v790 = vld [vmem:[%s1 + $0x8] sm:$0xf]
  %v791 = vld [vmem:[%s1 + $0xc] sm:$0xf]
  %v792 = vld [vmem:[%s1 + $0x10] sm:$0xf]
  %v793 = vld [vmem:[%s1 + $0x14] sm:$0xf]
  %v794 = vld [vmem:[%s1 + $0x18] sm:$0xf]
  %v795 = vld [vmem:[%s1 + $0x1c] sm:$0xf]
  %v796 = vld [vmem:[%s1 + $0x20] sm:$0xf]
  %v797 = vld [vmem:[%s1 + $0x24] sm:$0xf]
  %v798 = vld [vmem:[%s1 + $0x28] sm:$0xf]
  %v799 = vld [vmem:[%s1 + $0x2c] sm:$0xf]
  %v800 = vld [vmem:[%s1 + $0x30] sm:$0xf]
  %v801 = vld [vmem:[%s1 + $0x34] sm:$0xf]
  %v802 = vld [vmem:[%s1 + $0x38] sm:$0xf]
  %v803 = vld [vmem:[%s1 + $0x3c] sm:$0xf]
  %v804 = vld [vmem:[%s1 + $0x40] sm:$0xf]
  %v805 = vld [vmem:[%s1 + $0x44] sm:$0xf]
  %v806 = vld [vmem:[%s1 + $0x48] sm:$0xf]
  %v807 = vld [vmem:[%s1 + $0x4c] sm:$0xf]
  %v808 = vld [vmem:[%s1 + $0x50] sm:$0xf]
  %v809 = vld [vmem:[%s1 + $0x54] sm:$0xf]
  %v810 = vld [vmem:[%s1 + $0x58] sm:$0xf]
  %v811 = vld [vmem:[%s1 + $0x5c] sm:$0xf]
  %v812 = vld [vmem:[%s1 + $0x60] sm:$0xf]
  %v813 = vld [vmem:[%s1 + $0x64] sm:$0xf]
  %v814 = vld [vmem:[%s1 + $0x68] sm:$0xf]
  %v815 = vld [vmem:[%s1 + $0x6c] sm:$0xf]
  %v816 = vld [vmem:[%s1 + $0x70] sm:$0xf]
  %v817 = vld [vmem:[%s1 + $0x74] sm:$0xf]
  %v818 = vld [vmem:[%s1 + $0x78] sm:$0xf]
  %v819 = vld [vmem:[%s1 + $0x7c] sm:$0xf]
  %v820 = vld [vmem:[%s1 + $0x80] sm:$0xf]
  %v821 = vld [vmem:[%s1 + $0x84] sm:$0xf]
  %v822 = vld [vmem:[%s1 + $0x88] sm:$0xf]
  %v823 = vld [vmem:[%s1 + $0x8c] sm:$0xf]
  %v824 = vld [vmem:[%s1 + $0x90] sm:$0xf]
  %v825 = vld [vmem:[%s1 + $0x94] sm:$0xf]
  %v826 = vld [vmem:[%s1 + $0x98] sm:$0xf]
  %v827 = vld [vmem:[%s1 + $0x9c] sm:$0xf]
  %v828 = vld [vmem:[%s1 + $0xa0] sm:$0xf]
  %v829 = vld [vmem:[%s1 + $0xa4] sm:$0xf]
  %v830 = vld [vmem:[%s1 + $0xa8] sm:$0xf]
  %v831 = vld [vmem:[%s1 + $0xac] sm:$0xf]
  %v832 = vld [vmem:[%s1 + $0xb0] sm:$0xf]
  %v833 = vld [vmem:[%s1 + $0xb4] sm:$0xf]
  %v834 = vld [vmem:[%s1 + $0xb8] sm:$0xf]
  %v835 = vld [vmem:[%s1 + $0xbc] sm:$0xf]
  %v836 = vld [vmem:[%s1 + $0xc0] sm:$0xf]
  %v837 = vld [vmem:[%s1 + $0xc4] sm:$0xf]
  %v838 = vld [vmem:[%s1 + $0xc8] sm:$0xf]
  %v839 = vld [vmem:[%s1 + $0xcc] sm:$0xf]
  %v840 = vld [vmem:[%s1 + $0xd0] sm:$0xf]
  %v841 = vld [vmem:[%s1 + $0xd4] sm:$0xf]
  %v842 = vld [vmem:[%s1 + $0xd8] sm:$0xf]
  %v843 = vld [vmem:[%s1 + $0xdc] sm:$0xf]
  %v844 = vld [vmem:[%s1 + $0xe0] sm:$0xf]
  %v845 = vld [vmem:[%s1 + $0xe4] sm:$0xf]
  %v846 = vld [vmem:[%s1 + $0xe8] sm:$0xf]
  %v847 = vld [vmem:[%s1 + $0xec] sm:$0xf]
  %v848 = vld [vmem:[%s1 + $0xf0] sm:$0xf]
  %v849 = vld [vmem:[%s1 + $0xf4] sm:$0xf]
  %v850 = vld [vmem:[%s1 + $0xf8] sm:$0xf]
  %v851 = vld [vmem:[%s1 + $0xfc] sm:$0xf]
  %v852 = vld [vmem:[#allocation2] sm:$0x80]
  %v853 = vld [vmem:[#allocation2 + $0x8] sm:$0xff]
  %v854 = vld [vmem:[#allocation2 + $0x10] sm:$0xff]
  %v855 = vld [vmem:[#allocation2 + $0x18] sm:$0xff]
  %v856 = vld [vmem:[#allocation2 + $0x20] sm:$0xff]
  %v857 = vld [vmem:[#allocation2 + $0x28] sm:$0xff]
  %v858 = vld [vmem:[#allocation2 + $0x30] sm:$0xff]
  %v859 = vld [vmem:[#allocation2 + $0x38] sm:$0xff]
  %v860 = vld [vmem:[#allocation2 + $0x40] sm:$0xff]
  %v861 = vld [vmem:[#allocation2 + $0x48] sm:$0xff]
  %v862 = vld [vmem:[#allocation2 + $0x50] sm:$0xff]
  %v863 = vld [vmem:[#allocation2 + $0x58] sm:$0xff]
  %v864 = vld [vmem:[#allocation2 + $0x60] sm:$0xff]
  %v865 = vld [vmem:[#allocation2 + $0x68] sm:$0xff]
  %v866 = vld [vmem:[#allocation2 + $0x70] sm:$0xff]
  %v867 = vld [vmem:[#allocation2 + $0x78] sm:$0xff]
  %v868 = vld [vmem:[#allocation2 + $0x80] sm:$0xff]
  %v869 = vld [vmem:[#allocation2 + $0x88] sm:$0xff]
  %v870 = vld [vmem:[#allocation2 + $0x90] sm:$0xff]
  %v871 = vld [vmem:[#allocation2 + $0x98] sm:$0xff]
  %v872 = vld [vmem:[#allocation2 + $0xa0] sm:$0xff]
  %v873 = vld [vmem:[#allocation2 + $0xa8] sm:$0xff]
  %v874 = vld [vmem:[#allocation2 + $0xb0] sm:$0xff]
  %v875 = vld [vmem:[#allocation2 + $0xb8] sm:$0xff]
  %v876 = vld [vmem:[#allocation2 + $0xc0] sm:$0xff]
  %v877 = vld [vmem:[#allocation2 + $0xc8] sm:$0xff]
  %v878 = vld [vmem:[#allocation2 + $0xd0] sm:$0xff]
  %v879 = vld [vmem:[#allocation2 + $0xd8] sm:$0xff]
  %v880 = vld [vmem:[#allocation2 + $0xe0] sm:$0xff]
  %v881 = vld [vmem:[#allocation2 + $0xe8] sm:$0xff]
  %v882 = vld [vmem:[#allocation2 + $0xf0] sm:$0xff]
  %v883 = vld [vmem:[#allocation2 + $0xf8] sm:$0xff]
  %v884 = vld [vmem:[#allocation2 + $0x100] sm:$0xff]
  %886 = vset.pattern.permute.xlu0 0
  %887 = vperm.xlu0 %886, %v788
  %v888 = vpop.permute.xlu0 %887
  %v891 = vunpack.c.l.s4 839922192
  %v892 = vunpack.c.0.s8 %v891
  %v893 = vlaneseq
  %v894 = vshrl.u32 %v893, 7
  %v895 = vsub.s32 %v892, %v894
  %v896 = vrot.slane %v888, %v895
  %898 = vset.pattern.permute.xlu0 0
  %899 = vperm.xlu0 %898, %v789
  %v900 = vpop.permute.xlu0 %899
  %v903 = vunpack.c.l.s4 839922192
  %v904 = vunpack.c.0.s8 %v903
  %v905 = vlaneseq
  %v906 = vshrl.u32 %v905, 7
  %v907 = vsub.s32 %v904, %v906
  %v908 = vrot.slane %v900, %v907
  %910 = vset.pattern.permute.xlu0 0
  %911 = vperm.xlu0 %910, %v790
  %v912 = vpop.permute.xlu0 %911
  %v915 = vunpack.c.l.s4 839922192
  %v916 = vunpack.c.0.s8 %v915
  %v917 = vlaneseq
  %v918 = vshrl.u32 %v917, 7
  %v919 = vsub.s32 %v916, %v918
  %v920 = vrot.slane %v912, %v919
  %922 = vset.pattern.permute.xlu0 0
  %923 = vperm.xlu0 %922, %v791
  %v924 = vpop.permute.xlu0 %923
  %v927 = vunpack.c.l.s4 839922192
  %v928 = vunpack.c.0.s8 %v927
  %v929 = vlaneseq
  %v930 = vshrl.u32 %v929, 7
  %v931 = vsub.s32 %v928, %v930
  %v932 = vrot.slane %v924, %v931
  %934 = vset.pattern.permute.xlu0 0
  %935 = vperm.xlu0 %934, %v792
  %v936 = vpop.permute.xlu0 %935
  %v939 = vunpack.c.l.s4 839922192
  %v940 = vunpack.c.0.s8 %v939
  %v941 = vlaneseq
  %v942 = vshrl.u32 %v941, 7
  %v943 = vsub.s32 %v940, %v942
  %v944 = vrot.slane %v936, %v943
  %946 = vset.pattern.permute.xlu0 0
  %947 = vperm.xlu0 %946, %v793
  %v948 = vpop.permute.xlu0 %947
  %v951 = vunpack.c.l.s4 839922192
  %v952 = vunpack.c.0.s8 %v951
  %v953 = vlaneseq
  %v954 = vshrl.u32 %v953, 7
  %v955 = vsub.s32 %v952, %v954
  %v956 = vrot.slane %v948, %v955
  %958 = vset.pattern.permute.xlu0 0
  %959 = vperm.xlu0 %958, %v794
  %v960 = vpop.permute.xlu0 %959
  %v963 = vunpack.c.l.s4 839922192
  %v964 = vunpack.c.0.s8 %v963
  %v965 = vlaneseq
  %v966 = vshrl.u32 %v965, 7
  %v967 = vsub.s32 %v964, %v966
  %v968 = vrot.slane %v960, %v967
  %970 = vset.pattern.permute.xlu0 0
  %971 = vperm.xlu0 %970, %v795
  %v972 = vpop.permute.xlu0 %971
  %v975 = vunpack.c.l.s4 839922192
  %v976 = vunpack.c.0.s8 %v975
  %v977 = vlaneseq
  %v978 = vshrl.u32 %v977, 7
  %v979 = vsub.s32 %v976, %v978
  %v980 = vrot.slane %v972, %v979
  %982 = vset.pattern.permute.xlu0 0
  %983 = vperm.xlu0 %982, %v796
  %v984 = vpop.permute.xlu0 %983
  %v987 = vunpack.c.l.s4 839922192
  %v988 = vunpack.c.0.s8 %v987
  %v989 = vlaneseq
  %v990 = vshrl.u32 %v989, 7
  %v991 = vsub.s32 %v988, %v990
  %v992 = vrot.slane %v984, %v991
  %994 = vset.pattern.permute.xlu0 0
  %995 = vperm.xlu0 %994, %v797
  %v996 = vpop.permute.xlu0 %995
  %v999 = vunpack.c.l.s4 839922192
  %v1000 = vunpack.c.0.s8 %v999
  %v1001 = vlaneseq
  %v1002 = vshrl.u32 %v1001, 7
  %v1003 = vsub.s32 %v1000, %v1002
  %v1004 = vrot.slane %v996, %v1003
  %1006 = vset.pattern.permute.xlu0 0
  %1007 = vperm.xlu0 %1006, %v798
  %v1008 = vpop.permute.xlu0 %1007
  %v1011 = vunpack.c.l.s4 839922192
  %v1012 = vunpack.c.0.s8 %v1011
  %v1013 = vlaneseq
  %v1014 = vshrl.u32 %v1013, 7
  %v1015 = vsub.s32 %v1012, %v1014
  %v1016 = vrot.slane %v1008, %v1015
  %1018 = vset.pattern.permute.xlu0 0
  %1019 = vperm.xlu0 %1018, %v799
  %v1020 = vpop.permute.xlu0 %1019
  %v1023 = vunpack.c.l.s4 839922192
  %v1024 = vunpack.c.0.s8 %v1023
  %v1025 = vlaneseq
  %v1026 = vshrl.u32 %v1025, 7
  %v1027 = vsub.s32 %v1024, %v1026
  %v1028 = vrot.slane %v1020, %v1027
  %1030 = vset.pattern.permute.xlu0 0
  %1031 = vperm.xlu0 %1030, %v800
  %v1032 = vpop.permute.xlu0 %1031
  %v1035 = vunpack.c.l.s4 839922192
  %v1036 = vunpack.c.0.s8 %v1035
  %v1037 = vlaneseq
  %v1038 = vshrl.u32 %v1037, 7
  %v1039 = vsub.s32 %v1036, %v1038
  %v1040 = vrot.slane %v1032, %v1039
  %1042 = vset.pattern.permute.xlu0 0
  %1043 = vperm.xlu0 %1042, %v801
  %v1044 = vpop.permute.xlu0 %1043
  %v1047 = vunpack.c.l.s4 839922192
  %v1048 = vunpack.c.0.s8 %v1047
  %v1049 = vlaneseq
  %v1050 = vshrl.u32 %v1049, 7
  %v1051 = vsub.s32 %v1048, %v1050
  %v1052 = vrot.slane %v1044, %v1051
  %1054 = vset.pattern.permute.xlu0 0
  %1055 = vperm.xlu0 %1054, %v802
  %v1056 = vpop.permute.xlu0 %1055
  %v1059 = vunpack.c.l.s4 839922192
  %v1060 = vunpack.c.0.s8 %v1059
  %v1061 = vlaneseq
  %v1062 = vshrl.u32 %v1061, 7
  %v1063 = vsub.s32 %v1060, %v1062
  %v1064 = vrot.slane %v1056, %v1063
  %1066 = vset.pattern.permute.xlu0 0
  %1067 = vperm.xlu0 %1066, %v803
  %v1068 = vpop.permute.xlu0 %1067
  %v1071 = vunpack.c.l.s4 839922192
  %v1072 = vunpack.c.0.s8 %v1071
  %v1073 = vlaneseq
  %v1074 = vshrl.u32 %v1073, 7
  %v1075 = vsub.s32 %v1072, %v1074
  %v1076 = vrot.slane %v1068, %v1075
  %1078 = vset.pattern.permute.xlu0 0
  %1079 = vperm.xlu0 %1078, %v804
  %v1080 = vpop.permute.xlu0 %1079
  %v1083 = vunpack.c.l.s4 839922192
  %v1084 = vunpack.c.0.s8 %v1083
  %v1085 = vlaneseq
  %v1086 = vshrl.u32 %v1085, 7
  %v1087 = vsub.s32 %v1084, %v1086
  %v1088 = vrot.slane %v1080, %v1087
  %1090 = vset.pattern.permute.xlu0 0
  %1091 = vperm.xlu0 %1090, %v805
  %v1092 = vpop.permute.xlu0 %1091
  %v1095 = vunpack.c.l.s4 839922192
  %v1096 = vunpack.c.0.s8 %v1095
  %v1097 = vlaneseq
  %v1098 = vshrl.u32 %v1097, 7
  %v1099 = vsub.s32 %v1096, %v1098
  %v1100 = vrot.slane %v1092, %v1099
  %1102 = vset.pattern.permute.xlu0 0
  %1103 = vperm.xlu0 %1102, %v806
  %v1104 = vpop.permute.xlu0 %1103
  %v1107 = vunpack.c.l.s4 839922192
  %v1108 = vunpack.c.0.s8 %v1107
  %v1109 = vlaneseq
  %v1110 = vshrl.u32 %v1109, 7
  %v1111 = vsub.s32 %v1108, %v1110
  %v1112 = vrot.slane %v1104, %v1111
  %1114 = vset.pattern.permute.xlu0 0
  %1115 = vperm.xlu0 %1114, %v807
  %v1116 = vpop.permute.xlu0 %1115
  %v1119 = vunpack.c.l.s4 839922192
  %v1120 = vunpack.c.0.s8 %v1119
  %v1121 = vlaneseq
  %v1122 = vshrl.u32 %v1121, 7
  %v1123 = vsub.s32 %v1120, %v1122
  %v1124 = vrot.slane %v1116, %v1123
  %1126 = vset.pattern.permute.xlu0 0
  %1127 = vperm.xlu0 %1126, %v808
  %v1128 = vpop.permute.xlu0 %1127
  %v1131 = vunpack.c.l.s4 839922192
  %v1132 = vunpack.c.0.s8 %v1131
  %v1133 = vlaneseq
  %v1134 = vshrl.u32 %v1133, 7
  %v1135 = vsub.s32 %v1132, %v1134
  %v1136 = vrot.slane %v1128, %v1135
  %1138 = vset.pattern.permute.xlu0 0
  %1139 = vperm.xlu0 %1138, %v809
  %v1140 = vpop.permute.xlu0 %1139
  %v1143 = vunpack.c.l.s4 839922192
  %v1144 = vunpack.c.0.s8 %v1143
  %v1145 = vlaneseq
  %v1146 = vshrl.u32 %v1145, 7
  %v1147 = vsub.s32 %v1144, %v1146
  %v1148 = vrot.slane %v1140, %v1147
  %1150 = vset.pattern.permute.xlu0 0
  %1151 = vperm.xlu0 %1150, %v810
  %v1152 = vpop.permute.xlu0 %1151
  %v1155 = vunpack.c.l.s4 839922192
  %v1156 = vunpack.c.0.s8 %v1155
  %v1157 = vlaneseq
  %v1158 = vshrl.u32 %v1157, 7
  %v1159 = vsub.s32 %v1156, %v1158
  %v1160 = vrot.slane %v1152, %v1159
  %1162 = vset.pattern.permute.xlu0 0
  %1163 = vperm.xlu0 %1162, %v811
  %v1164 = vpop.permute.xlu0 %1163
  %v1167 = vunpack.c.l.s4 839922192
  %v1168 = vunpack.c.0.s8 %v1167
  %v1169 = vlaneseq
  %v1170 = vshrl.u32 %v1169, 7
  %v1171 = vsub.s32 %v1168, %v1170
  %v1172 = vrot.slane %v1164, %v1171
  %1174 = vset.pattern.permute.xlu0 0
  %1175 = vperm.xlu0 %1174, %v812
  %v1176 = vpop.permute.xlu0 %1175
  %v1179 = vunpack.c.l.s4 839922192
  %v1180 = vunpack.c.0.s8 %v1179
  %v1181 = vlaneseq
  %v1182 = vshrl.u32 %v1181, 7
  %v1183 = vsub.s32 %v1180, %v1182
  %v1184 = vrot.slane %v1176, %v1183
  %1186 = vset.pattern.permute.xlu0 0
  %1187 = vperm.xlu0 %1186, %v813
  %v1188 = vpop.permute.xlu0 %1187
  %v1191 = vunpack.c.l.s4 839922192
  %v1192 = vunpack.c.0.s8 %v1191
  %v1193 = vlaneseq
  %v1194 = vshrl.u32 %v1193, 7
  %v1195 = vsub.s32 %v1192, %v1194
  %v1196 = vrot.slane %v1188, %v1195
  %1198 = vset.pattern.permute.xlu0 0
  %1199 = vperm.xlu0 %1198, %v814
  %v1200 = vpop.permute.xlu0 %1199
  %v1203 = vunpack.c.l.s4 839922192
  %v1204 = vunpack.c.0.s8 %v1203
  %v1205 = vlaneseq
  %v1206 = vshrl.u32 %v1205, 7
  %v1207 = vsub.s32 %v1204, %v1206
  %v1208 = vrot.slane %v1200, %v1207
  %1210 = vset.pattern.permute.xlu0 0
  %1211 = vperm.xlu0 %1210, %v815
  %v1212 = vpop.permute.xlu0 %1211
  %v1215 = vunpack.c.l.s4 839922192
  %v1216 = vunpack.c.0.s8 %v1215
  %v1217 = vlaneseq
  %v1218 = vshrl.u32 %v1217, 7
  %v1219 = vsub.s32 %v1216, %v1218
  %v1220 = vrot.slane %v1212, %v1219
  %1222 = vset.pattern.permute.xlu0 0
  %1223 = vperm.xlu0 %1222, %v816
  %v1224 = vpop.permute.xlu0 %1223
  %v1227 = vunpack.c.l.s4 839922192
  %v1228 = vunpack.c.0.s8 %v1227
  %v1229 = vlaneseq
  %v1230 = vshrl.u32 %v1229, 7
  %v1231 = vsub.s32 %v1228, %v1230
  %v1232 = vrot.slane %v1224, %v1231
  %1234 = vset.pattern.permute.xlu0 0
  %1235 = vperm.xlu0 %1234, %v817
  %v1236 = vpop.permute.xlu0 %1235
  %v1239 = vunpack.c.l.s4 839922192
  %v1240 = vunpack.c.0.s8 %v1239
  %v1241 = vlaneseq
  %v1242 = vshrl.u32 %v1241, 7
  %v1243 = vsub.s32 %v1240, %v1242
  %v1244 = vrot.slane %v1236, %v1243
  %1246 = vset.pattern.permute.xlu0 0
  %1247 = vperm.xlu0 %1246, %v818
  %v1248 = vpop.permute.xlu0 %1247
  %v1251 = vunpack.c.l.s4 839922192
  %v1252 = vunpack.c.0.s8 %v1251
  %v1253 = vlaneseq
  %v1254 = vshrl.u32 %v1253, 7
  %v1255 = vsub.s32 %v1252, %v1254
  %v1256 = vrot.slane %v1248, %v1255
  %1258 = vset.pattern.permute.xlu0 0
  %1259 = vperm.xlu0 %1258, %v819
  %v1260 = vpop.permute.xlu0 %1259
  %v1263 = vunpack.c.l.s4 839922192
  %v1264 = vunpack.c.0.s8 %v1263
  %v1265 = vlaneseq
  %v1266 = vshrl.u32 %v1265, 7
  %v1267 = vsub.s32 %v1264, %v1266
  %v1268 = vrot.slane %v1260, %v1267
  %1270 = vset.pattern.permute.xlu0 0
  %1271 = vperm.xlu0 %1270, %v820
  %v1272 = vpop.permute.xlu0 %1271
  %v1275 = vunpack.c.l.s4 839922192
  %v1276 = vunpack.c.0.s8 %v1275
  %v1277 = vlaneseq
  %v1278 = vshrl.u32 %v1277, 7
  %v1279 = vsub.s32 %v1276, %v1278
  %v1280 = vrot.slane %v1272, %v1279
  %1282 = vset.pattern.permute.xlu0 0
  %1283 = vperm.xlu0 %1282, %v821
  %v1284 = vpop.permute.xlu0 %1283
  %v1287 = vunpack.c.l.s4 839922192
  %v1288 = vunpack.c.0.s8 %v1287
  %v1289 = vlaneseq
  %v1290 = vshrl.u32 %v1289, 7
  %v1291 = vsub.s32 %v1288, %v1290
  %v1292 = vrot.slane %v1284, %v1291
  %1294 = vset.pattern.permute.xlu0 0
  %1295 = vperm.xlu0 %1294, %v822
  %v1296 = vpop.permute.xlu0 %1295
  %v1299 = vunpack.c.l.s4 839922192
  %v1300 = vunpack.c.0.s8 %v1299
  %v1301 = vlaneseq
  %v1302 = vshrl.u32 %v1301, 7
  %v1303 = vsub.s32 %v1300, %v1302
  %v1304 = vrot.slane %v1296, %v1303
  %1306 = vset.pattern.permute.xlu0 0
  %1307 = vperm.xlu0 %1306, %v823
  %v1308 = vpop.permute.xlu0 %1307
  %v1311 = vunpack.c.l.s4 839922192
  %v1312 = vunpack.c.0.s8 %v1311
  %v1313 = vlaneseq
  %v1314 = vshrl.u32 %v1313, 7
  %v1315 = vsub.s32 %v1312, %v1314
  %v1316 = vrot.slane %v1308, %v1315
  %1318 = vset.pattern.permute.xlu0 0
  %1319 = vperm.xlu0 %1318, %v824
  %v1320 = vpop.permute.xlu0 %1319
  %v1323 = vunpack.c.l.s4 839922192
  %v1324 = vunpack.c.0.s8 %v1323
  %v1325 = vlaneseq
  %v1326 = vshrl.u32 %v1325, 7
  %v1327 = vsub.s32 %v1324, %v1326
  %v1328 = vrot.slane %v1320, %v1327
  %1330 = vset.pattern.permute.xlu0 0
  %1331 = vperm.xlu0 %1330, %v825
  %v1332 = vpop.permute.xlu0 %1331
  %v1335 = vunpack.c.l.s4 839922192
  %v1336 = vunpack.c.0.s8 %v1335
  %v1337 = vlaneseq
  %v1338 = vshrl.u32 %v1337, 7
  %v1339 = vsub.s32 %v1336, %v1338
  %v1340 = vrot.slane %v1332, %v1339
  %1342 = vset.pattern.permute.xlu0 0
  %1343 = vperm.xlu0 %1342, %v826
  %v1344 = vpop.permute.xlu0 %1343
  %v1347 = vunpack.c.l.s4 839922192
  %v1348 = vunpack.c.0.s8 %v1347
  %v1349 = vlaneseq
  %v1350 = vshrl.u32 %v1349, 7
  %v1351 = vsub.s32 %v1348, %v1350
  %v1352 = vrot.slane %v1344, %v1351
  %1354 = vset.pattern.permute.xlu0 0
  %1355 = vperm.xlu0 %1354, %v827
  %v1356 = vpop.permute.xlu0 %1355
  %v1359 = vunpack.c.l.s4 839922192
  %v1360 = vunpack.c.0.s8 %v1359
  %v1361 = vlaneseq
  %v1362 = vshrl.u32 %v1361, 7
  %v1363 = vsub.s32 %v1360, %v1362
  %v1364 = vrot.slane %v1356, %v1363
  %1366 = vset.pattern.permute.xlu0 0
  %1367 = vperm.xlu0 %1366, %v828
  %v1368 = vpop.permute.xlu0 %1367
  %v1371 = vunpack.c.l.s4 839922192
  %v1372 = vunpack.c.0.s8 %v1371
  %v1373 = vlaneseq
  %v1374 = vshrl.u32 %v1373, 7
  %v1375 = vsub.s32 %v1372, %v1374
  %v1376 = vrot.slane %v1368, %v1375
  %1378 = vset.pattern.permute.xlu0 0
  %1379 = vperm.xlu0 %1378, %v829
  %v1380 = vpop.permute.xlu0 %1379
  %v1383 = vunpack.c.l.s4 839922192
  %v1384 = vunpack.c.0.s8 %v1383
  %v1385 = vlaneseq
  %v1386 = vshrl.u32 %v1385, 7
  %v1387 = vsub.s32 %v1384, %v1386
  %v1388 = vrot.slane %v1380, %v1387
  %1390 = vset.pattern.permute.xlu0 0
  %1391 = vperm.xlu0 %1390, %v830
  %v1392 = vpop.permute.xlu0 %1391
  %v1395 = vunpack.c.l.s4 839922192
  %v1396 = vunpack.c.0.s8 %v1395
  %v1397 = vlaneseq
  %v1398 = vshrl.u32 %v1397, 7
  %v1399 = vsub.s32 %v1396, %v1398
  %v1400 = vrot.slane %v1392, %v1399
  %1402 = vset.pattern.permute.xlu0 0
  %1403 = vperm.xlu0 %1402, %v831
  %v1404 = vpop.permute.xlu0 %1403
  %v1407 = vunpack.c.l.s4 839922192
  %v1408 = vunpack.c.0.s8 %v1407
  %v1409 = vlaneseq
  %v1410 = vshrl.u32 %v1409, 7
  %v1411 = vsub.s32 %v1408, %v1410
  %v1412 = vrot.slane %v1404, %v1411
  %1414 = vset.pattern.permute.xlu0 0
  %1415 = vperm.xlu0 %1414, %v832
  %v1416 = vpop.permute.xlu0 %1415
  %v1419 = vunpack.c.l.s4 839922192
  %v1420 = vunpack.c.0.s8 %v1419
  %v1421 = vlaneseq
  %v1422 = vshrl.u32 %v1421, 7
  %v1423 = vsub.s32 %v1420, %v1422
  %v1424 = vrot.slane %v1416, %v1423
  %1426 = vset.pattern.permute.xlu0 0
  %1427 = vperm.xlu0 %1426, %v833
  %v1428 = vpop.permute.xlu0 %1427
  %v1431 = vunpack.c.l.s4 839922192
  %v1432 = vunpack.c.0.s8 %v1431
  %v1433 = vlaneseq
  %v1434 = vshrl.u32 %v1433, 7
  %v1435 = vsub.s32 %v1432, %v1434
  %v1436 = vrot.slane %v1428, %v1435
  %1438 = vset.pattern.permute.xlu0 0
  %1439 = vperm.xlu0 %1438, %v834
  %v1440 = vpop.permute.xlu0 %1439
  %v1443 = vunpack.c.l.s4 839922192
  %v1444 = vunpack.c.0.s8 %v1443
  %v1445 = vlaneseq
  %v1446 = vshrl.u32 %v1445, 7
  %v1447 = vsub.s32 %v1444, %v1446
  %v1448 = vrot.slane %v1440, %v1447
  %1450 = vset.pattern.permute.xlu0 0
  %1451 = vperm.xlu0 %1450, %v835
  %v1452 = vpop.permute.xlu0 %1451
  %v1455 = vunpack.c.l.s4 839922192
  %v1456 = vunpack.c.0.s8 %v1455
  %v1457 = vlaneseq
  %v1458 = vshrl.u32 %v1457, 7
  %v1459 = vsub.s32 %v1456, %v1458
  %v1460 = vrot.slane %v1452, %v1459
  %1462 = vset.pattern.permute.xlu0 0
  %1463 = vperm.xlu0 %1462, %v836
  %v1464 = vpop.permute.xlu0 %1463
  %v1467 = vunpack.c.l.s4 839922192
  %v1468 = vunpack.c.0.s8 %v1467
  %v1469 = vlaneseq
  %v1470 = vshrl.u32 %v1469, 7
  %v1471 = vsub.s32 %v1468, %v1470
  %v1472 = vrot.slane %v1464, %v1471
  %1474 = vset.pattern.permute.xlu0 0
  %1475 = vperm.xlu0 %1474, %v837
  %v1476 = vpop.permute.xlu0 %1475
  %v1479 = vunpack.c.l.s4 839922192
  %v1480 = vunpack.c.0.s8 %v1479
  %v1481 = vlaneseq
  %v1482 = vshrl.u32 %v1481, 7
  %v1483 = vsub.s32 %v1480, %v1482
  %v1484 = vrot.slane %v1476, %v1483
  %1486 = vset.pattern.permute.xlu0 0
  %1487 = vperm.xlu0 %1486, %v838
  %v1488 = vpop.permute.xlu0 %1487
  %v1491 = vunpack.c.l.s4 839922192
  %v1492 = vunpack.c.0.s8 %v1491
  %v1493 = vlaneseq
  %v1494 = vshrl.u32 %v1493, 7
  %v1495 = vsub.s32 %v1492, %v1494
  %v1496 = vrot.slane %v1488, %v1495
  %1498 = vset.pattern.permute.xlu0 0
  %1499 = vperm.xlu0 %1498, %v839
  %v1500 = vpop.permute.xlu0 %1499
  %v1503 = vunpack.c.l.s4 839922192
  %v1504 = vunpack.c.0.s8 %v1503
  %v1505 = vlaneseq
  %v1506 = vshrl.u32 %v1505, 7
  %v1507 = vsub.s32 %v1504, %v1506
  %v1508 = vrot.slane %v1500, %v1507
  %1510 = vset.pattern.permute.xlu0 0
  %1511 = vperm.xlu0 %1510, %v840
  %v1512 = vpop.permute.xlu0 %1511
  %v1515 = vunpack.c.l.s4 839922192
  %v1516 = vunpack.c.0.s8 %v1515
  %v1517 = vlaneseq
  %v1518 = vshrl.u32 %v1517, 7
  %v1519 = vsub.s32 %v1516, %v1518
  %v1520 = vrot.slane %v1512, %v1519
  %1522 = vset.pattern.permute.xlu0 0
  %1523 = vperm.xlu0 %1522, %v841
  %v1524 = vpop.permute.xlu0 %1523
  %v1527 = vunpack.c.l.s4 839922192
  %v1528 = vunpack.c.0.s8 %v1527
  %v1529 = vlaneseq
  %v1530 = vshrl.u32 %v1529, 7
  %v1531 = vsub.s32 %v1528, %v1530
  %v1532 = vrot.slane %v1524, %v1531
  %1534 = vset.pattern.permute.xlu0 0
  %1535 = vperm.xlu0 %1534, %v842
  %v1536 = vpop.permute.xlu0 %1535
  %v1539 = vunpack.c.l.s4 839922192
  %v1540 = vunpack.c.0.s8 %v1539
  %v1541 = vlaneseq
  %v1542 = vshrl.u32 %v1541, 7
  %v1543 = vsub.s32 %v1540, %v1542
  %v1544 = vrot.slane %v1536, %v1543
  %1546 = vset.pattern.permute.xlu0 0
  %1547 = vperm.xlu0 %1546, %v843
  %v1548 = vpop.permute.xlu0 %1547
  %v1551 = vunpack.c.l.s4 839922192
  %v1552 = vunpack.c.0.s8 %v1551
  %v1553 = vlaneseq
  %v1554 = vshrl.u32 %v1553, 7
  %v1555 = vsub.s32 %v1552, %v1554
  %v1556 = vrot.slane %v1548, %v1555
  %1558 = vset.pattern.permute.xlu0 0
  %1559 = vperm.xlu0 %1558, %v844
  %v1560 = vpop.permute.xlu0 %1559
  %v1563 = vunpack.c.l.s4 839922192
  %v1564 = vunpack.c.0.s8 %v1563
  %v1565 = vlaneseq
  %v1566 = vshrl.u32 %v1565, 7
  %v1567 = vsub.s32 %v1564, %v1566
  %v1568 = vrot.slane %v1560, %v1567
  %1570 = vset.pattern.permute.xlu0 0
  %1571 = vperm.xlu0 %1570, %v845
  %v1572 = vpop.permute.xlu0 %1571
  %v1575 = vunpack.c.l.s4 839922192
  %v1576 = vunpack.c.0.s8 %v1575
  %v1577 = vlaneseq
  %v1578 = vshrl.u32 %v1577, 7
  %v1579 = vsub.s32 %v1576, %v1578
  %v1580 = vrot.slane %v1572, %v1579
  %1582 = vset.pattern.permute.xlu0 0
  %1583 = vperm.xlu0 %1582, %v846
  %v1584 = vpop.permute.xlu0 %1583
  %v1587 = vunpack.c.l.s4 839922192
  %v1588 = vunpack.c.0.s8 %v1587
  %v1589 = vlaneseq
  %v1590 = vshrl.u32 %v1589, 7
  %v1591 = vsub.s32 %v1588, %v1590
  %v1592 = vrot.slane %v1584, %v1591
  %1594 = vset.pattern.permute.xlu0 0
  %1595 = vperm.xlu0 %1594, %v847
  %v1596 = vpop.permute.xlu0 %1595
  %v1599 = vunpack.c.l.s4 839922192
  %v1600 = vunpack.c.0.s8 %v1599
  %v1601 = vlaneseq
  %v1602 = vshrl.u32 %v1601, 7
  %v1603 = vsub.s32 %v1600, %v1602
  %v1604 = vrot.slane %v1596, %v1603
  %1606 = vset.pattern.permute.xlu0 0
  %1607 = vperm.xlu0 %1606, %v848
  %v1608 = vpop.permute.xlu0 %1607
  %v1611 = vunpack.c.l.s4 839922192
  %v1612 = vunpack.c.0.s8 %v1611
  %v1613 = vlaneseq
  %v1614 = vshrl.u32 %v1613, 7
  %v1615 = vsub.s32 %v1612, %v1614
  %v1616 = vrot.slane %v1608, %v1615
  %1618 = vset.pattern.permute.xlu0 0
  %1619 = vperm.xlu0 %1618, %v849
  %v1620 = vpop.permute.xlu0 %1619
  %v1623 = vunpack.c.l.s4 839922192
  %v1624 = vunpack.c.0.s8 %v1623
  %v1625 = vlaneseq
  %v1626 = vshrl.u32 %v1625, 7
  %v1627 = vsub.s32 %v1624, %v1626
  %v1628 = vrot.slane %v1620, %v1627
  %1630 = vset.pattern.permute.xlu0 0
  %1631 = vperm.xlu0 %1630, %v850
  %v1632 = vpop.permute.xlu0 %1631
  %v1635 = vunpack.c.l.s4 839922192
  %v1636 = vunpack.c.0.s8 %v1635
  %v1637 = vlaneseq
  %v1638 = vshrl.u32 %v1637, 7
  %v1639 = vsub.s32 %v1636, %v1638
  %v1640 = vrot.slane %v1632, %v1639
  %1642 = vset.pattern.permute.xlu0 0
  %1643 = vperm.xlu0 %1642, %v851
  %v1644 = vpop.permute.xlu0 %1643
  %v1647 = vunpack.c.l.s4 839922192
  %v1648 = vunpack.c.0.s8 %v1647
  %v1649 = vlaneseq
  %v1650 = vshrl.u32 %v1649, 7
  %v1651 = vsub.s32 %v1648, %v1650
  %v1652 = vrot.slane %v1644, %v1651
  %v1717 = vunpack.c.l.b16 %v896
  %v1718 = vunpack.c.l.b16 %v908
  %v1719 = vunpack.c.l.b16 %v920
  %v1720 = vunpack.c.l.b16 %v932
  %v1721 = vunpack.c.l.b16 %v944
  %v1722 = vunpack.c.l.b16 %v956
  %v1723 = vunpack.c.l.b16 %v968
  %v1724 = vunpack.c.l.b16 %v980
  %v1725 = vunpack.c.l.b16 %v992
  %v1726 = vunpack.c.l.b16 %v1004
  %v1727 = vunpack.c.l.b16 %v1016
  %v1728 = vunpack.c.l.b16 %v1028
  %v1729 = vunpack.c.l.b16 %v1040
  %v1730 = vunpack.c.l.b16 %v1052
  %v1731 = vunpack.c.l.b16 %v1064
  %v1732 = vunpack.c.l.b16 %v1076
  %v1733 = vunpack.c.l.b16 %v1088
  %v1734 = vunpack.c.l.b16 %v1100
  %v1735 = vunpack.c.l.b16 %v1112
  %v1736 = vunpack.c.l.b16 %v1124
  %v1737 = vunpack.c.l.b16 %v1136
  %v1738 = vunpack.c.l.b16 %v1148
  %v1739 = vunpack.c.l.b16 %v1160
  %v1740 = vunpack.c.l.b16 %v1172
  %v1741 = vunpack.c.l.b16 %v1184
  %v1742 = vunpack.c.l.b16 %v1196
  %v1743 = vunpack.c.l.b16 %v1208
  %v1744 = vunpack.c.l.b16 %v1220
  %v1745 = vunpack.c.l.b16 %v1232
  %v1746 = vunpack.c.l.b16 %v1244
  %v1747 = vunpack.c.l.b16 %v1256
  %v1748 = vunpack.c.l.b16 %v1268
  %v1749 = vunpack.c.l.b16 %v1280
  %v1750 = vunpack.c.l.b16 %v1292
  %v1751 = vunpack.c.l.b16 %v1304
  %v1752 = vunpack.c.l.b16 %v1316
  %v1753 = vunpack.c.l.b16 %v1328
  %v1754 = vunpack.c.l.b16 %v1340
  %v1755 = vunpack.c.l.b16 %v1352
  %v1756 = vunpack.c.l.b16 %v1364
  %v1757 = vunpack.c.l.b16 %v1376
  %v1758 = vunpack.c.l.b16 %v1388
  %v1759 = vunpack.c.l.b16 %v1400
  %v1760 = vunpack.c.l.b16 %v1412
  %v1761 = vunpack.c.l.b16 %v1424
  %v1762 = vunpack.c.l.b16 %v1436
  %v1763 = vunpack.c.l.b16 %v1448
  %v1764 = vunpack.c.l.b16 %v1460
  %v1765 = vunpack.c.l.b16 %v1472
  %v1766 = vunpack.c.l.b16 %v1484
  %v1767 = vunpack.c.l.b16 %v1496
  %v1768 = vunpack.c.l.b16 %v1508
  %v1769 = vunpack.c.l.b16 %v1520
  %v1770 = vunpack.c.l.b16 %v1532
  %v1771 = vunpack.c.l.b16 %v1544
  %v1772 = vunpack.c.l.b16 %v1556
  %v1773 = vunpack.c.l.b16 %v1568
  %v1774 = vunpack.c.l.b16 %v1580
  %v1775 = vunpack.c.l.b16 %v1592
  %v1776 = vunpack.c.l.b16 %v1604
  %v1777 = vunpack.c.l.b16 %v1616
  %v1778 = vunpack.c.l.b16 %v1628
  %v1779 = vunpack.c.l.b16 %v1640
  %v1780 = vunpack.c.l.b16 %v1652
  %v1781 = vpack.c.b16 %v1718, %v1717
  %v1782 = vpack.c.b16 %v1720, %v1719
  %v1783 = vpack.c.b16 %v1722, %v1721
  %v1784 = vpack.c.b16 %v1724, %v1723
  %v1785 = vpack.c.b16 %v1726, %v1725
  %v1786 = vpack.c.b16 %v1728, %v1727
  %v1787 = vpack.c.b16 %v1730, %v1729
  %v1788 = vpack.c.b16 %v1732, %v1731
  %v1789 = vpack.c.b16 %v1734, %v1733
  %v1790 = vpack.c.b16 %v1736, %v1735
  %v1791 = vpack.c.b16 %v1738, %v1737
  %v1792 = vpack.c.b16 %v1740, %v1739
  %v1793 = vpack.c.b16 %v1742, %v1741
  %v1794 = vpack.c.b16 %v1744, %v1743
  %v1795 = vpack.c.b16 %v1746, %v1745
  %v1796 = vpack.c.b16 %v1748, %v1747
  %v1797 = vpack.c.b16 %v1750, %v1749
  %v1798 = vpack.c.b16 %v1752, %v1751
  %v1799 = vpack.c.b16 %v1754, %v1753
  %v1800 = vpack.c.b16 %v1756, %v1755
  %v1801 = vpack.c.b16 %v1758, %v1757
  %v1802 = vpack.c.b16 %v1760, %v1759
  %v1803 = vpack.c.b16 %v1762, %v1761
  %v1804 = vpack.c.b16 %v1764, %v1763
  %v1805 = vpack.c.b16 %v1766, %v1765
  %v1806 = vpack.c.b16 %v1768, %v1767
  %v1807 = vpack.c.b16 %v1770, %v1769
  %v1808 = vpack.c.b16 %v1772, %v1771
  %v1809 = vpack.c.b16 %v1774, %v1773
  %v1810 = vpack.c.b16 %v1776, %v1775
  %v1811 = vpack.c.b16 %v1778, %v1777
  %v1812 = vpack.c.b16 %v1780, %v1779
  %vm1813 = vsmask.f32 7424
  %v1815 = vshll.u32 %v1781, 16
  %v1817 = vrot.slane %v1815, 1
  %v1818 = vshrl.u32 %v1781, 16
  %v1820 = vor.u32 %v1818, %v1817
  %v1822 = vshll.u32 %v1782, 16
  %v1824 = vrot.slane %v1822, 1
  %v1825 = vsel %vm1813, %v1820, %v1824
  %v1826 = vshrl.u32 %v1782, 16
  %v1828 = vor.u32 %v1826, %v1824
  %v1830 = vshll.u32 %v1783, 16
  %v1832 = vrot.slane %v1830, 1
  %v1833 = vsel %vm1813, %v1828, %v1832
  %v1834 = vshrl.u32 %v1783, 16
  %v1836 = vor.u32 %v1834, %v1832
  %v1838 = vshll.u32 %v1784, 16
  %v1840 = vrot.slane %v1838, 1
  %v1841 = vsel %vm1813, %v1836, %v1840
  %v1842 = vshrl.u32 %v1784, 16
  %v1844 = vor.u32 %v1842, %v1840
  %v1846 = vshll.u32 %v1785, 16
  %v1848 = vrot.slane %v1846, 1
  %v1849 = vsel %vm1813, %v1844, %v1848
  %v1850 = vshrl.u32 %v1785, 16
  %v1852 = vor.u32 %v1850, %v1848
  %v1854 = vshll.u32 %v1786, 16
  %v1856 = vrot.slane %v1854, 1
  %v1857 = vsel %vm1813, %v1852, %v1856
  %v1858 = vshrl.u32 %v1786, 16
  %v1860 = vor.u32 %v1858, %v1856
  %v1862 = vshll.u32 %v1787, 16
  %v1864 = vrot.slane %v1862, 1
  %v1865 = vsel %vm1813, %v1860, %v1864
  %v1866 = vshrl.u32 %v1787, 16
  %v1868 = vor.u32 %v1866, %v1864
  %v1870 = vshll.u32 %v1788, 16
  %v1872 = vrot.slane %v1870, 1
  %v1873 = vsel %vm1813, %v1868, %v1872
  %v1874 = vshrl.u32 %v1788, 16
  %v1876 = vor.u32 %v1874, %v1872
  %v1878 = vshll.u32 %v1789, 16
  %v1880 = vrot.slane %v1878, 1
  %v1881 = vsel %vm1813, %v1876, %v1880
  %v1882 = vshrl.u32 %v1789, 16
  %v1884 = vor.u32 %v1882, %v1880
  %v1886 = vshll.u32 %v1790, 16
  %v1888 = vrot.slane %v1886, 1
  %v1889 = vsel %vm1813, %v1884, %v1888
  %v1890 = vshrl.u32 %v1790, 16
  %v1892 = vor.u32 %v1890, %v1888
  %v1894 = vshll.u32 %v1791, 16
  %v1896 = vrot.slane %v1894, 1
  %v1897 = vsel %vm1813, %v1892, %v1896
  %v1898 = vshrl.u32 %v1791, 16
  %v1900 = vor.u32 %v1898, %v1896
  %v1902 = vshll.u32 %v1792, 16
  %v1904 = vrot.slane %v1902, 1
  %v1905 = vsel %vm1813, %v1900, %v1904
  %v1906 = vshrl.u32 %v1792, 16
  %v1908 = vor.u32 %v1906, %v1904
  %v1910 = vshll.u32 %v1793, 16
  %v1912 = vrot.slane %v1910, 1
  %v1913 = vsel %vm1813, %v1908, %v1912
  %v1914 = vshrl.u32 %v1793, 16
  %v1916 = vor.u32 %v1914, %v1912
  %v1918 = vshll.u32 %v1794, 16
  %v1920 = vrot.slane %v1918, 1
  %v1921 = vsel %vm1813, %v1916, %v1920
  %v1922 = vshrl.u32 %v1794, 16
  %v1924 = vor.u32 %v1922, %v1920
  %v1926 = vshll.u32 %v1795, 16
  %v1928 = vrot.slane %v1926, 1
  %v1929 = vsel %vm1813, %v1924, %v1928
  %v1930 = vshrl.u32 %v1795, 16
  %v1932 = vor.u32 %v1930, %v1928
  %v1934 = vshll.u32 %v1796, 16
  %v1936 = vrot.slane %v1934, 1
  %v1937 = vsel %vm1813, %v1932, %v1936
  %v1938 = vshrl.u32 %v1796, 16
  %v1940 = vor.u32 %v1938, %v1936
  %v1942 = vshll.u32 %v1797, 16
  %v1944 = vrot.slane %v1942, 1
  %v1945 = vsel %vm1813, %v1940, %v1944
  %v1946 = vshrl.u32 %v1797, 16
  %v1948 = vor.u32 %v1946, %v1944
  %v1950 = vshll.u32 %v1798, 16
  %v1952 = vrot.slane %v1950, 1
  %v1953 = vsel %vm1813, %v1948, %v1952
  %v1954 = vshrl.u32 %v1798, 16
  %v1956 = vor.u32 %v1954, %v1952
  %v1958 = vshll.u32 %v1799, 16
  %v1960 = vrot.slane %v1958, 1
  %v1961 = vsel %vm1813, %v1956, %v1960
  %v1962 = vshrl.u32 %v1799, 16
  %v1964 = vor.u32 %v1962, %v1960
  %v1966 = vshll.u32 %v1800, 16
  %v1968 = vrot.slane %v1966, 1
  %v1969 = vsel %vm1813, %v1964, %v1968
  %v1970 = vshrl.u32 %v1800, 16
  %v1972 = vor.u32 %v1970, %v1968
  %v1974 = vshll.u32 %v1801, 16
  %v1976 = vrot.slane %v1974, 1
  %v1977 = vsel %vm1813, %v1972, %v1976
  %v1978 = vshrl.u32 %v1801, 16
  %v1980 = vor.u32 %v1978, %v1976
  %v1982 = vshll.u32 %v1802, 16
  %v1984 = vrot.slane %v1982, 1
  %v1985 = vsel %vm1813, %v1980, %v1984
  %v1986 = vshrl.u32 %v1802, 16
  %v1988 = vor.u32 %v1986, %v1984
  %v1990 = vshll.u32 %v1803, 16
  %v1992 = vrot.slane %v1990, 1
  %v1993 = vsel %vm1813, %v1988, %v1992
  %v1994 = vshrl.u32 %v1803, 16
  %v1996 = vor.u32 %v1994, %v1992
  %v1998 = vshll.u32 %v1804, 16
  %v2000 = vrot.slane %v1998, 1
  %v2001 = vsel %vm1813, %v1996, %v2000
  %v2002 = vshrl.u32 %v1804, 16
  %v2004 = vor.u32 %v2002, %v2000
  %v2006 = vshll.u32 %v1805, 16
  %v2008 = vrot.slane %v2006, 1
  %v2009 = vsel %vm1813, %v2004, %v2008
  %v2010 = vshrl.u32 %v1805, 16
  %v2012 = vor.u32 %v2010, %v2008
  %v2014 = vshll.u32 %v1806, 16
  %v2016 = vrot.slane %v2014, 1
  %v2017 = vsel %vm1813, %v2012, %v2016
  %v2018 = vshrl.u32 %v1806, 16
  %v2020 = vor.u32 %v2018, %v2016
  %v2022 = vshll.u32 %v1807, 16
  %v2024 = vrot.slane %v2022, 1
  %v2025 = vsel %vm1813, %v2020, %v2024
  %v2026 = vshrl.u32 %v1807, 16
  %v2028 = vor.u32 %v2026, %v2024
  %v2030 = vshll.u32 %v1808, 16
  %v2032 = vrot.slane %v2030, 1
  %v2033 = vsel %vm1813, %v2028, %v2032
  %v2034 = vshrl.u32 %v1808, 16
  %v2036 = vor.u32 %v2034, %v2032
  %v2038 = vshll.u32 %v1809, 16
  %v2040 = vrot.slane %v2038, 1
  %v2041 = vsel %vm1813, %v2036, %v2040
  %v2042 = vshrl.u32 %v1809, 16
  %v2044 = vor.u32 %v2042, %v2040
  %v2046 = vshll.u32 %v1810, 16
  %v2048 = vrot.slane %v2046, 1
  %v2049 = vsel %vm1813, %v2044, %v2048
  %v2050 = vshrl.u32 %v1810, 16
  %v2052 = vor.u32 %v2050, %v2048
  %v2054 = vshll.u32 %v1811, 16
  %v2056 = vrot.slane %v2054, 1
  %v2057 = vsel %vm1813, %v2052, %v2056
  %v2058 = vshrl.u32 %v1811, 16
  %v2060 = vor.u32 %v2058, %v2056
  %v2062 = vshll.u32 %v1812, 16
  %v2064 = vrot.slane %v2062, 1
  %v2065 = vsel %vm1813, %v2060, %v2064
  %v2066 = vshrl.u32 %v1812, 16
  %v2068 = vor.u32 %v2066, %v2064
  %v2102 = vmul.bf16 %v852, %v1817
  %v2103 = vmul.bf16 %v853, %v1825
  %v2104 = vmul.bf16 %v854, %v1833
  %v2105 = vmul.bf16 %v855, %v1841
  %v2106 = vmul.bf16 %v856, %v1849
  %v2107 = vmul.bf16 %v857, %v1857
  %v2108 = vmul.bf16 %v858, %v1865
  %v2109 = vmul.bf16 %v859, %v1873
  %v2110 = vmul.bf16 %v860, %v1881
  %v2111 = vmul.bf16 %v861, %v1889
  %v2112 = vmul.bf16 %v862, %v1897
  %v2113 = vmul.bf16 %v863, %v1905
  %v2114 = vmul.bf16 %v864, %v1913
  %v2115 = vmul.bf16 %v865, %v1921
  %v2116 = vmul.bf16 %v866, %v1929
  %v2117 = vmul.bf16 %v867, %v1937
  %v2118 = vmul.bf16 %v868, %v1945
  %v2119 = vmul.bf16 %v869, %v1953
  %v2120 = vmul.bf16 %v870, %v1961
  %v2121 = vmul.bf16 %v871, %v1969
  %v2122 = vmul.bf16 %v872, %v1977
  %v2123 = vmul.bf16 %v873, %v1985
  %v2124 = vmul.bf16 %v874, %v1993
  %v2125 = vmul.bf16 %v875, %v2001
  %v2126 = vmul.bf16 %v876, %v2009
  %v2127 = vmul.bf16 %v877, %v2017
  %v2128 = vmul.bf16 %v878, %v2025
  %v2129 = vmul.bf16 %v879, %v2033
  %v2130 = vmul.bf16 %v880, %v2041
  %v2131 = vmul.bf16 %v881, %v2049
  %v2132 = vmul.bf16 %v882, %v2057
  %v2133 = vmul.bf16 %v883, %v2065
  %v2134 = vmul.bf16 %v884, %v2068
  %vm2135 = vsmask.f32 256
  %v2137 = vshrl.u32 %v2102, 16
  %v2139 = vrot.slane %v2137, 7
  %v2141 = vshrl.u32 %v2103, 16
  %v2143 = vrot.slane %v2141, 7
  %v2144 = vshll.u32 %v2103, 16
  %v2146 = vor.u32 %v2143, %v2144
  %v2147 = vsel %vm2135, %v2139, %v2146
  %v2149 = vshrl.u32 %v2104, 16
  %v2151 = vrot.slane %v2149, 7
  %v2152 = vshll.u32 %v2104, 16
  %v2154 = vor.u32 %v2151, %v2152
  %v2155 = vsel %vm2135, %v2143, %v2154
  %v2157 = vshrl.u32 %v2105, 16
  %v2159 = vrot.slane %v2157, 7
  %v2160 = vshll.u32 %v2105, 16
  %v2162 = vor.u32 %v2159, %v2160
  %v2163 = vsel %vm2135, %v2151, %v2162
  %v2165 = vshrl.u32 %v2106, 16
  %v2167 = vrot.slane %v2165, 7
  %v2168 = vshll.u32 %v2106, 16
  %v2170 = vor.u32 %v2167, %v2168
  %v2171 = vsel %vm2135, %v2159, %v2170
  %v2173 = vshrl.u32 %v2107, 16
  %v2175 = vrot.slane %v2173, 7
  %v2176 = vshll.u32 %v2107, 16
  %v2178 = vor.u32 %v2175, %v2176
  %v2179 = vsel %vm2135, %v2167, %v2178
  %v2181 = vshrl.u32 %v2108, 16
  %v2183 = vrot.slane %v2181, 7
  %v2184 = vshll.u32 %v2108, 16
  %v2186 = vor.u32 %v2183, %v2184
  %v2187 = vsel %vm2135, %v2175, %v2186
  %v2189 = vshrl.u32 %v2109, 16
  %v2191 = vrot.slane %v2189, 7
  %v2192 = vshll.u32 %v2109, 16
  %v2194 = vor.u32 %v2191, %v2192
  %v2195 = vsel %vm2135, %v2183, %v2194
  %v2197 = vshrl.u32 %v2110, 16
  %v2199 = vrot.slane %v2197, 7
  %v2200 = vshll.u32 %v2110, 16
  %v2202 = vor.u32 %v2199, %v2200
  %v2203 = vsel %vm2135, %v2191, %v2202
  %v2205 = vshrl.u32 %v2111, 16
  %v2207 = vrot.slane %v2205, 7
  %v2208 = vshll.u32 %v2111, 16
  %v2210 = vor.u32 %v2207, %v2208
  %v2211 = vsel %vm2135, %v2199, %v2210
  %v2213 = vshrl.u32 %v2112, 16
  %v2215 = vrot.slane %v2213, 7
  %v2216 = vshll.u32 %v2112, 16
  %v2218 = vor.u32 %v2215, %v2216
  %v2219 = vsel %vm2135, %v2207, %v2218
  %v2221 = vshrl.u32 %v2113, 16
  %v2223 = vrot.slane %v2221, 7
  %v2224 = vshll.u32 %v2113, 16
  %v2226 = vor.u32 %v2223, %v2224
  %v2227 = vsel %vm2135, %v2215, %v2226
  %v2229 = vshrl.u32 %v2114, 16
  %v2231 = vrot.slane %v2229, 7
  %v2232 = vshll.u32 %v2114, 16
  %v2234 = vor.u32 %v2231, %v2232
  %v2235 = vsel %vm2135, %v2223, %v2234
  %v2237 = vshrl.u32 %v2115, 16
  %v2239 = vrot.slane %v2237, 7
  %v2240 = vshll.u32 %v2115, 16
  %v2242 = vor.u32 %v2239, %v2240
  %v2243 = vsel %vm2135, %v2231, %v2242
  %v2245 = vshrl.u32 %v2116, 16
  %v2247 = vrot.slane %v2245, 7
  %v2248 = vshll.u32 %v2116, 16
  %v2250 = vor.u32 %v2247, %v2248
  %v2251 = vsel %vm2135, %v2239, %v2250
  %v2253 = vshrl.u32 %v2117, 16
  %v2255 = vrot.slane %v2253, 7
  %v2256 = vshll.u32 %v2117, 16
  %v2258 = vor.u32 %v2255, %v2256
  %v2259 = vsel %vm2135, %v2247, %v2258
  %v2261 = vshrl.u32 %v2118, 16
  %v2263 = vrot.slane %v2261, 7
  %v2264 = vshll.u32 %v2118, 16
  %v2266 = vor.u32 %v2263, %v2264
  %v2267 = vsel %vm2135, %v2255, %v2266
  %v2269 = vshrl.u32 %v2119, 16
  %v2271 = vrot.slane %v2269, 7
  %v2272 = vshll.u32 %v2119, 16
  %v2274 = vor.u32 %v2271, %v2272
  %v2275 = vsel %vm2135, %v2263, %v2274
  %v2277 = vshrl.u32 %v2120, 16
  %v2279 = vrot.slane %v2277, 7
  %v2280 = vshll.u32 %v2120, 16
  %v2282 = vor.u32 %v2279, %v2280
  %v2283 = vsel %vm2135, %v2271, %v2282
  %v2285 = vshrl.u32 %v2121, 16
  %v2287 = vrot.slane %v2285, 7
  %v2288 = vshll.u32 %v2121, 16
  %v2290 = vor.u32 %v2287, %v2288
  %v2291 = vsel %vm2135, %v2279, %v2290
  %v2293 = vshrl.u32 %v2122, 16
  %v2295 = vrot.slane %v2293, 7
  %v2296 = vshll.u32 %v2122, 16
  %v2298 = vor.u32 %v2295, %v2296
  %v2299 = vsel %vm2135, %v2287, %v2298
  %v2301 = vshrl.u32 %v2123, 16
  %v2303 = vrot.slane %v2301, 7
  %v2304 = vshll.u32 %v2123, 16
  %v2306 = vor.u32 %v2303, %v2304
  %v2307 = vsel %vm2135, %v2295, %v2306
  %v2309 = vshrl.u32 %v2124, 16
  %v2311 = vrot.slane %v2309, 7
  %v2312 = vshll.u32 %v2124, 16
  %v2314 = vor.u32 %v2311, %v2312
  %v2315 = vsel %vm2135, %v2303, %v2314
  %v2317 = vshrl.u32 %v2125, 16
  %v2319 = vrot.slane %v2317, 7
  %v2320 = vshll.u32 %v2125, 16
  %v2322 = vor.u32 %v2319, %v2320
  %v2323 = vsel %vm2135, %v2311, %v2322
  %v2325 = vshrl.u32 %v2126, 16
  %v2327 = vrot.slane %v2325, 7
  %v2328 = vshll.u32 %v2126, 16
  %v2330 = vor.u32 %v2327, %v2328
  %v2331 = vsel %vm2135, %v2319, %v2330
  %v2333 = vshrl.u32 %v2127, 16
  %v2335 = vrot.slane %v2333, 7
  %v2336 = vshll.u32 %v2127, 16
  %v2338 = vor.u32 %v2335, %v2336
  %v2339 = vsel %vm2135, %v2327, %v2338
  %v2341 = vshrl.u32 %v2128, 16
  %v2343 = vrot.slane %v2341, 7
  %v2344 = vshll.u32 %v2128, 16
  %v2346 = vor.u32 %v2343, %v2344
  %v2347 = vsel %vm2135, %v2335, %v2346
  %v2349 = vshrl.u32 %v2129, 16
  %v2351 = vrot.slane %v2349, 7
  %v2352 = vshll.u32 %v2129, 16
  %v2354 = vor.u32 %v2351, %v2352
  %v2355 = vsel %vm2135, %v2343, %v2354
  %v2357 = vshrl.u32 %v2130, 16
  %v2359 = vrot.slane %v2357, 7
  %v2360 = vshll.u32 %v2130, 16
  %v2362 = vor.u32 %v2359, %v2360
  %v2363 = vsel %vm2135, %v2351, %v2362
  %v2365 = vshrl.u32 %v2131, 16
  %v2367 = vrot.slane %v2365, 7
  %v2368 = vshll.u32 %v2131, 16
  %v2370 = vor.u32 %v2367, %v2368
  %v2371 = vsel %vm2135, %v2359, %v2370
  %v2373 = vshrl.u32 %v2132, 16
  %v2375 = vrot.slane %v2373, 7
  %v2376 = vshll.u32 %v2132, 16
  %v2378 = vor.u32 %v2375, %v2376
  %v2379 = vsel %vm2135, %v2367, %v2378
  %v2381 = vshrl.u32 %v2133, 16
  %v2383 = vrot.slane %v2381, 7
  %v2384 = vshll.u32 %v2133, 16
  %v2386 = vor.u32 %v2383, %v2384
  %v2387 = vsel %vm2135, %v2375, %v2386
  %v2389 = vshrl.u32 %v2134, 16
  %v2391 = vrot.slane %v2389, 7
  %v2392 = vshll.u32 %v2134, 16
  %v2394 = vor.u32 %v2391, %v2392
  %v2395 = vsel %vm2135, %v2383, %v2394
  %2428 = vst.msk [vmem:[#allocation3] sm:$0xff] %vm751, %v2147
  %2429 = vst.msk [vmem:[#allocation3 + $0x8] sm:$0xff] %vm751, %v2155
  %2430 = vst.msk [vmem:[#allocation3 + $0x10] sm:$0xff] %vm751, %v2163
  %2431 = vst.msk [vmem:[#allocation3 + $0x18] sm:$0xff] %vm751, %v2171
  %2432 = vst.msk [vmem:[#allocation3 + $0x20] sm:$0xff] %vm751, %v2179
  %2433 = vst.msk [vmem:[#allocation3 + $0x28] sm:$0xff] %vm751, %v2187
  %2434 = vst.msk [vmem:[#allocation3 + $0x30] sm:$0xff] %vm751, %v2195
  %2435 = vst.msk [vmem:[#allocation3 + $0x38] sm:$0xff] %vm751, %v2203
  %2436 = vst.msk [vmem:[#allocation3 + $0x40] sm:$0xff] %vm751, %v2211
  %2437 = vst.msk [vmem:[#allocation3 + $0x48] sm:$0xff] %vm751, %v2219
  %2438 = vst.msk [vmem:[#allocation3 + $0x50] sm:$0xff] %vm751, %v2227
  %2439 = vst.msk [vmem:[#allocation3 + $0x58] sm:$0xff] %vm751, %v2235
  %2440 = vst.msk [vmem:[#allocation3 + $0x60] sm:$0xff] %vm751, %v2243
  %2441 = vst.msk [vmem:[#allocation3 + $0x68] sm:$0xff] %vm751, %v2251
  %2442 = vst.msk [vmem:[#allocation3 + $0x70] sm:$0xff] %vm751, %v2259
  %2443 = vst.msk [vmem:[#allocation3 + $0x78] sm:$0xff] %vm751, %v2267
  %2444 = vst.msk [vmem:[#allocation3 + $0x80] sm:$0xff] %vm751, %v2275
  %2445 = vst.msk [vmem:[#allocation3 + $0x88] sm:$0xff] %vm751, %v2283
  %2446 = vst.msk [vmem:[#allocation3 + $0x90] sm:$0xff] %vm751, %v2291
  %2447 = vst.msk [vmem:[#allocation3 + $0x98] sm:$0xff] %vm751, %v2299
  %2448 = vst.msk [vmem:[#allocation3 + $0xa0] sm:$0xff] %vm751, %v2307
  %2449 = vst.msk [vmem:[#allocation3 + $0xa8] sm:$0xff] %vm751, %v2315
  %2450 = vst.msk [vmem:[#allocation3 + $0xb0] sm:$0xff] %vm751, %v2323
  %2451 = vst.msk [vmem:[#allocation3 + $0xb8] sm:$0xff] %vm751, %v2331
  %2452 = vst.msk [vmem:[#allocation3 + $0xc0] sm:$0xff] %vm751, %v2339
  %2453 = vst.msk [vmem:[#allocation3 + $0xc8] sm:$0xff] %vm751, %v2347
  %2454 = vst.msk [vmem:[#allocation3 + $0xd0] sm:$0xff] %vm751, %v2355
  %2455 = vst.msk [vmem:[#allocation3 + $0xd8] sm:$0xff] %vm751, %v2363
  %2456 = vst.msk [vmem:[#allocation3 + $0xe0] sm:$0xff] %vm751, %v2371
  %2457 = vst.msk [vmem:[#allocation3 + $0xe8] sm:$0xff] %vm751, %v2379
  %2458 = vst.msk [vmem:[#allocation3 + $0xf0] sm:$0xff] %vm751, %v2387
  %2459 = vst.msk [vmem:[#allocation3 + $0xf8] sm:$0xff] %vm751, %v2395
  %v2460 = vld [vmem:[#allocation2 + $0x8] sm:$0xff]
  %v2461 = vld [vmem:[#allocation2 + $0x10] sm:$0xff]
  %v2462 = vld [vmem:[#allocation2 + $0x18] sm:$0xff]
  %v2463 = vld [vmem:[#allocation2 + $0x20] sm:$0xff]
  %v2464 = vld [vmem:[#allocation2 + $0x28] sm:$0xff]
  %v2465 = vld [vmem:[#allocation2 + $0x30] sm:$0xff]
  %v2466 = vld [vmem:[#allocation2 + $0x38] sm:$0xff]
  %v2467 = vld [vmem:[#allocation2 + $0x40] sm:$0xff]
  %v2468 = vld [vmem:[#allocation2 + $0x48] sm:$0xff]
  %v2469 = vld [vmem:[#allocation2 + $0x50] sm:$0xff]
  %v2470 = vld [vmem:[#allocation2 + $0x58] sm:$0xff]
  %v2471 = vld [vmem:[#allocation2 + $0x60] sm:$0xff]
  %v2472 = vld [vmem:[#allocation2 + $0x68] sm:$0xff]
  %v2473 = vld [vmem:[#allocation2 + $0x70] sm:$0xff]
  %v2474 = vld [vmem:[#allocation2 + $0x78] sm:$0xff]
  %v2475 = vld [vmem:[#allocation2 + $0x80] sm:$0xff]
  %v2476 = vld [vmem:[#allocation2 + $0x88] sm:$0xff]
  %v2477 = vld [vmem:[#allocation2 + $0x90] sm:$0xff]
  %v2478 = vld [vmem:[#allocation2 + $0x98] sm:$0xff]
  %v2479 = vld [vmem:[#allocation2 + $0xa0] sm:$0xff]
  %v2480 = vld [vmem:[#allocation2 + $0xa8] sm:$0xff]
  %v2481 = vld [vmem:[#allocation2 + $0xb0] sm:$0xff]
  %v2482 = vld [vmem:[#allocation2 + $0xb8] sm:$0xff]
  %v2483 = vld [vmem:[#allocation2 + $0xc0] sm:$0xff]
  %v2484 = vld [vmem:[#allocation2 + $0xc8] sm:$0xff]
  %v2485 = vld [vmem:[#allocation2 + $0xd0] sm:$0xff]
  %v2486 = vld [vmem:[#allocation2 + $0xd8] sm:$0xff]
  %v2487 = vld [vmem:[#allocation2 + $0xe0] sm:$0xff]
  %v2488 = vld [vmem:[#allocation2 + $0xe8] sm:$0xff]
  %v2489 = vld [vmem:[#allocation2 + $0xf0] sm:$0xff]
  %v2490 = vld [vmem:[#allocation2 + $0xf8] sm:$0xff]
  %v2491 = vld [vmem:[#allocation2 + $0x100] sm:$0xff]
  %2492 = vset.pattern.permute.xlu0 1
  %2493 = vperm.xlu0 %2492, %v788
  %v2494 = vpop.permute.xlu0 %2493
  %v2497 = vunpack.c.l.s4 839922192
  %v2498 = vunpack.c.0.s8 %v2497
  %v2499 = vlaneseq
  %v2500 = vshrl.u32 %v2499, 7
  %v2501 = vsub.s32 %v2498, %v2500
  %v2502 = vrot.slane %v2494, %v2501
  %2503 = vset.pattern.permute.xlu0 1
  %2504 = vperm.xlu0 %2503, %v789
  %v2505 = vpop.permute.xlu0 %2504
  %v2508 = vunpack.c.l.s4 839922192
  %v2509 = vunpack.c.0.s8 %v2508
  %v2510 = vlaneseq
  %v2511 = vshrl.u32 %v2510, 7
  %v2512 = vsub.s32 %v2509, %v2511
  %v2513 = vrot.slane %v2505, %v2512
  %2514 = vset.pattern.permute.xlu0 1
  %2515 = vperm.xlu0 %2514, %v790
  %v2516 = vpop.permute.xlu0 %2515
  %v2519 = vunpack.c.l.s4 839922192
  %v2520 = vunpack.c.0.s8 %v2519
  %v2521 = vlaneseq
  %v2522 = vshrl.u32 %v2521, 7
  %v2523 = vsub.s32 %v2520, %v2522
  %v2524 = vrot.slane %v2516, %v2523
  %2525 = vset.pattern.permute.xlu0 1
  %2526 = vperm.xlu0 %2525, %v791
  %v2527 = vpop.permute.xlu0 %2526
  %v2530 = vunpack.c.l.s4 839922192
  %v2531 = vunpack.c.0.s8 %v2530
  %v2532 = vlaneseq
  %v2533 = vshrl.u32 %v2532, 7
  %v2534 = vsub.s32 %v2531, %v2533
  %v2535 = vrot.slane %v2527, %v2534
  %2536 = vset.pattern.permute.xlu0 1
  %2537 = vperm.xlu0 %2536, %v792
  %v2538 = vpop.permute.xlu0 %2537
  %v2541 = vunpack.c.l.s4 839922192
  %v2542 = vunpack.c.0.s8 %v2541
  %v2543 = vlaneseq
  %v2544 = vshrl.u32 %v2543, 7
  %v2545 = vsub.s32 %v2542, %v2544
  %v2546 = vrot.slane %v2538, %v2545
  %2547 = vset.pattern.permute.xlu0 1
  %2548 = vperm.xlu0 %2547, %v793
  %v2549 = vpop.permute.xlu0 %2548
  %v2552 = vunpack.c.l.s4 839922192
  %v2553 = vunpack.c.0.s8 %v2552
  %v2554 = vlaneseq
  %v2555 = vshrl.u32 %v2554, 7
  %v2556 = vsub.s32 %v2553, %v2555
  %v2557 = vrot.slane %v2549, %v2556
  %2558 = vset.pattern.permute.xlu0 1
  %2559 = vperm.xlu0 %2558, %v794
  %v2560 = vpop.permute.xlu0 %2559
  %v2563 = vunpack.c.l.s4 839922192
  %v2564 = vunpack.c.0.s8 %v2563
  %v2565 = vlaneseq
  %v2566 = vshrl.u32 %v2565, 7
  %v2567 = vsub.s32 %v2564, %v2566
  %v2568 = vrot.slane %v2560, %v2567
  %2569 = vset.pattern.permute.xlu0 1
  %2570 = vperm.xlu0 %2569, %v795
  %v2571 = vpop.permute.xlu0 %2570
  %v2574 = vunpack.c.l.s4 839922192
  %v2575 = vunpack.c.0.s8 %v2574
  %v2576 = vlaneseq
  %v2577 = vshrl.u32 %v2576, 7
  %v2578 = vsub.s32 %v2575, %v2577
  %v2579 = vrot.slane %v2571, %v2578
  %2580 = vset.pattern.permute.xlu0 1
  %2581 = vperm.xlu0 %2580, %v796
  %v2582 = vpop.permute.xlu0 %2581
  %v2585 = vunpack.c.l.s4 839922192
  %v2586 = vunpack.c.0.s8 %v2585
  %v2587 = vlaneseq
  %v2588 = vshrl.u32 %v2587, 7
  %v2589 = vsub.s32 %v2586, %v2588
  %v2590 = vrot.slane %v2582, %v2589
  %2591 = vset.pattern.permute.xlu0 1
  %2592 = vperm.xlu0 %2591, %v797
  %v2593 = vpop.permute.xlu0 %2592
  %v2596 = vunpack.c.l.s4 839922192
  %v2597 = vunpack.c.0.s8 %v2596
  %v2598 = vlaneseq
  %v2599 = vshrl.u32 %v2598, 7
  %v2600 = vsub.s32 %v2597, %v2599
  %v2601 = vrot.slane %v2593, %v2600
  %2602 = vset.pattern.permute.xlu0 1
  %2603 = vperm.xlu0 %2602, %v798
  %v2604 = vpop.permute.xlu0 %2603
  %v2607 = vunpack.c.l.s4 839922192
  %v2608 = vunpack.c.0.s8 %v2607
  %v2609 = vlaneseq
  %v2610 = vshrl.u32 %v2609, 7
  %v2611 = vsub.s32 %v2608, %v2610
  %v2612 = vrot.slane %v2604, %v2611
  %2613 = vset.pattern.permute.xlu0 1
  %2614 = vperm.xlu0 %2613, %v799
  %v2615 = vpop.permute.xlu0 %2614
  %v2618 = vunpack.c.l.s4 839922192
  %v2619 = vunpack.c.0.s8 %v2618
  %v2620 = vlaneseq
  %v2621 = vshrl.u32 %v2620, 7
  %v2622 = vsub.s32 %v2619, %v2621
  %v2623 = vrot.slane %v2615, %v2622
  %2624 = vset.pattern.permute.xlu0 1
  %2625 = vperm.xlu0 %2624, %v800
  %v2626 = vpop.permute.xlu0 %2625
  %v2629 = vunpack.c.l.s4 839922192
  %v2630 = vunpack.c.0.s8 %v2629
  %v2631 = vlaneseq
  %v2632 = vshrl.u32 %v2631, 7
  %v2633 = vsub.s32 %v2630, %v2632
  %v2634 = vrot.slane %v2626, %v2633
  %2635 = vset.pattern.permute.xlu0 1
  %2636 = vperm.xlu0 %2635, %v801
  %v2637 = vpop.permute.xlu0 %2636
  %v2640 = vunpack.c.l.s4 839922192
  %v2641 = vunpack.c.0.s8 %v2640
  %v2642 = vlaneseq
  %v2643 = vshrl.u32 %v2642, 7
  %v2644 = vsub.s32 %v2641, %v2643
  %v2645 = vrot.slane %v2637, %v2644
  %2646 = vset.pattern.permute.xlu0 1
  %2647 = vperm.xlu0 %2646, %v802
  %v2648 = vpop.permute.xlu0 %2647
  %v2651 = vunpack.c.l.s4 839922192
  %v2652 = vunpack.c.0.s8 %v2651
  %v2653 = vlaneseq
  %v2654 = vshrl.u32 %v2653, 7
  %v2655 = vsub.s32 %v2652, %v2654
  %v2656 = vrot.slane %v2648, %v2655
  %2657 = vset.pattern.permute.xlu0 1
  %2658 = vperm.xlu0 %2657, %v803
  %v2659 = vpop.permute.xlu0 %2658
  %v2662 = vunpack.c.l.s4 839922192
  %v2663 = vunpack.c.0.s8 %v2662
  %v2664 = vlaneseq
  %v2665 = vshrl.u32 %v2664, 7
  %v2666 = vsub.s32 %v2663, %v2665
  %v2667 = vrot.slane %v2659, %v2666
  %2668 = vset.pattern.permute.xlu0 1
  %2669 = vperm.xlu0 %2668, %v804
  %v2670 = vpop.permute.xlu0 %2669
  %v2673 = vunpack.c.l.s4 839922192
  %v2674 = vunpack.c.0.s8 %v2673
  %v2675 = vlaneseq
  %v2676 = vshrl.u32 %v2675, 7
  %v2677 = vsub.s32 %v2674, %v2676
  %v2678 = vrot.slane %v2670, %v2677
  %2679 = vset.pattern.permute.xlu0 1
  %2680 = vperm.xlu0 %2679, %v805
  %v2681 = vpop.permute.xlu0 %2680
  %v2684 = vunpack.c.l.s4 839922192
  %v2685 = vunpack.c.0.s8 %v2684
  %v2686 = vlaneseq
  %v2687 = vshrl.u32 %v2686, 7
  %v2688 = vsub.s32 %v2685, %v2687
  %v2689 = vrot.slane %v2681, %v2688
  %2690 = vset.pattern.permute.xlu0 1
  %2691 = vperm.xlu0 %2690, %v806
  %v2692 = vpop.permute.xlu0 %2691
  %v2695 = vunpack.c.l.s4 839922192
  %v2696 = vunpack.c.0.s8 %v2695
  %v2697 = vlaneseq
  %v2698 = vshrl.u32 %v2697, 7
  %v2699 = vsub.s32 %v2696, %v2698
  %v2700 = vrot.slane %v2692, %v2699
  %2701 = vset.pattern.permute.xlu0 1
  %2702 = vperm.xlu0 %2701, %v807
  %v2703 = vpop.permute.xlu0 %2702
  %v2706 = vunpack.c.l.s4 839922192
  %v2707 = vunpack.c.0.s8 %v2706
  %v2708 = vlaneseq
  %v2709 = vshrl.u32 %v2708, 7
  %v2710 = vsub.s32 %v2707, %v2709
  %v2711 = vrot.slane %v2703, %v2710
  %2712 = vset.pattern.permute.xlu0 1
  %2713 = vperm.xlu0 %2712, %v808
  %v2714 = vpop.permute.xlu0 %2713
  %v2717 = vunpack.c.l.s4 839922192
  %v2718 = vunpack.c.0.s8 %v2717
  %v2719 = vlaneseq
  %v2720 = vshrl.u32 %v2719, 7
  %v2721 = vsub.s32 %v2718, %v2720
  %v2722 = vrot.slane %v2714, %v2721
  %2723 = vset.pattern.permute.xlu0 1
  %2724 = vperm.xlu0 %2723, %v809
  %v2725 = vpop.permute.xlu0 %2724
  %v2728 = vunpack.c.l.s4 839922192
  %v2729 = vunpack.c.0.s8 %v2728
  %v2730 = vlaneseq
  %v2731 = vshrl.u32 %v2730, 7
  %v2732 = vsub.s32 %v2729, %v2731
  %v2733 = vrot.slane %v2725, %v2732
  %2734 = vset.pattern.permute.xlu0 1
  %2735 = vperm.xlu0 %2734, %v810
  %v2736 = vpop.permute.xlu0 %2735
  %v2739 = vunpack.c.l.s4 839922192
  %v2740 = vunpack.c.0.s8 %v2739
  %v2741 = vlaneseq
  %v2742 = vshrl.u32 %v2741, 7
  %v2743 = vsub.s32 %v2740, %v2742
  %v2744 = vrot.slane %v2736, %v2743
  %2745 = vset.pattern.permute.xlu0 1
  %2746 = vperm.xlu0 %2745, %v811
  %v2747 = vpop.permute.xlu0 %2746
  %v2750 = vunpack.c.l.s4 839922192
  %v2751 = vunpack.c.0.s8 %v2750
  %v2752 = vlaneseq
  %v2753 = vshrl.u32 %v2752, 7
  %v2754 = vsub.s32 %v2751, %v2753
  %v2755 = vrot.slane %v2747, %v2754
  %2756 = vset.pattern.permute.xlu0 1
  %2757 = vperm.xlu0 %2756, %v812
  %v2758 = vpop.permute.xlu0 %2757
  %v2761 = vunpack.c.l.s4 839922192
  %v2762 = vunpack.c.0.s8 %v2761
  %v2763 = vlaneseq
  %v2764 = vshrl.u32 %v2763, 7
  %v2765 = vsub.s32 %v2762, %v2764
  %v2766 = vrot.slane %v2758, %v2765
  %2767 = vset.pattern.permute.xlu0 1
  %2768 = vperm.xlu0 %2767, %v813
  %v2769 = vpop.permute.xlu0 %2768
  %v2772 = vunpack.c.l.s4 839922192
  %v2773 = vunpack.c.0.s8 %v2772
  %v2774 = vlaneseq
  %v2775 = vshrl.u32 %v2774, 7
  %v2776 = vsub.s32 %v2773, %v2775
  %v2777 = vrot.slane %v2769, %v2776
  %2778 = vset.pattern.permute.xlu0 1
  %2779 = vperm.xlu0 %2778, %v814
  %v2780 = vpop.permute.xlu0 %2779
  %v2783 = vunpack.c.l.s4 839922192
  %v2784 = vunpack.c.0.s8 %v2783
  %v2785 = vlaneseq
  %v2786 = vshrl.u32 %v2785, 7
  %v2787 = vsub.s32 %v2784, %v2786
  %v2788 = vrot.slane %v2780, %v2787
  %2789 = vset.pattern.permute.xlu0 1
  %2790 = vperm.xlu0 %2789, %v815
  %v2791 = vpop.permute.xlu0 %2790
  %v2794 = vunpack.c.l.s4 839922192
  %v2795 = vunpack.c.0.s8 %v2794
  %v2796 = vlaneseq
  %v2797 = vshrl.u32 %v2796, 7
  %v2798 = vsub.s32 %v2795, %v2797
  %v2799 = vrot.slane %v2791, %v2798
  %2800 = vset.pattern.permute.xlu0 1
  %2801 = vperm.xlu0 %2800, %v816
  %v2802 = vpop.permute.xlu0 %2801
  %v2805 = vunpack.c.l.s4 839922192
  %v2806 = vunpack.c.0.s8 %v2805
  %v2807 = vlaneseq
  %v2808 = vshrl.u32 %v2807, 7
  %v2809 = vsub.s32 %v2806, %v2808
  %v2810 = vrot.slane %v2802, %v2809
  %2811 = vset.pattern.permute.xlu0 1
  %2812 = vperm.xlu0 %2811, %v817
  %v2813 = vpop.permute.xlu0 %2812
  %v2816 = vunpack.c.l.s4 839922192
  %v2817 = vunpack.c.0.s8 %v2816
  %v2818 = vlaneseq
  %v2819 = vshrl.u32 %v2818, 7
  %v2820 = vsub.s32 %v2817, %v2819
  %v2821 = vrot.slane %v2813, %v2820
  %2822 = vset.pattern.permute.xlu0 1
  %2823 = vperm.xlu0 %2822, %v818
  %v2824 = vpop.permute.xlu0 %2823
  %v2827 = vunpack.c.l.s4 839922192
  %v2828 = vunpack.c.0.s8 %v2827
  %v2829 = vlaneseq
  %v2830 = vshrl.u32 %v2829, 7
  %v2831 = vsub.s32 %v2828, %v2830
  %v2832 = vrot.slane %v2824, %v2831
  %2833 = vset.pattern.permute.xlu0 1
  %2834 = vperm.xlu0 %2833, %v819
  %v2835 = vpop.permute.xlu0 %2834
  %v2838 = vunpack.c.l.s4 839922192
  %v2839 = vunpack.c.0.s8 %v2838
  %v2840 = vlaneseq
  %v2841 = vshrl.u32 %v2840, 7
  %v2842 = vsub.s32 %v2839, %v2841
  %v2843 = vrot.slane %v2835, %v2842
  %2844 = vset.pattern.permute.xlu0 1
  %2845 = vperm.xlu0 %2844, %v820
  %v2846 = vpop.permute.xlu0 %2845
  %v2849 = vunpack.c.l.s4 839922192
  %v2850 = vunpack.c.0.s8 %v2849
  %v2851 = vlaneseq
  %v2852 = vshrl.u32 %v2851, 7
  %v2853 = vsub.s32 %v2850, %v2852
  %v2854 = vrot.slane %v2846, %v2853
  %2855 = vset.pattern.permute.xlu0 1
  %2856 = vperm.xlu0 %2855, %v821
  %v2857 = vpop.permute.xlu0 %2856
  %v2860 = vunpack.c.l.s4 839922192
  %v2861 = vunpack.c.0.s8 %v2860
  %v2862 = vlaneseq
  %v2863 = vshrl.u32 %v2862, 7
  %v2864 = vsub.s32 %v2861, %v2863
  %v2865 = vrot.slane %v2857, %v2864
  %2866 = vset.pattern.permute.xlu0 1
  %2867 = vperm.xlu0 %2866, %v822
  %v2868 = vpop.permute.xlu0 %2867
  %v2871 = vunpack.c.l.s4 839922192
  %v2872 = vunpack.c.0.s8 %v2871
  %v2873 = vlaneseq
  %v2874 = vshrl.u32 %v2873, 7
  %v2875 = vsub.s32 %v2872, %v2874
  %v2876 = vrot.slane %v2868, %v2875
  %2877 = vset.pattern.permute.xlu0 1
  %2878 = vperm.xlu0 %2877, %v823
  %v2879 = vpop.permute.xlu0 %2878
  %v2882 = vunpack.c.l.s4 839922192
  %v2883 = vunpack.c.0.s8 %v2882
  %v2884 = vlaneseq
  %v2885 = vshrl.u32 %v2884, 7
  %v2886 = vsub.s32 %v2883, %v2885
  %v2887 = vrot.slane %v2879, %v2886
  %2888 = vset.pattern.permute.xlu0 1
  %2889 = vperm.xlu0 %2888, %v824
  %v2890 = vpop.permute.xlu0 %2889
  %v2893 = vunpack.c.l.s4 839922192
  %v2894 = vunpack.c.0.s8 %v2893
  %v2895 = vlaneseq
  %v2896 = vshrl.u32 %v2895, 7
  %v2897 = vsub.s32 %v2894, %v2896
  %v2898 = vrot.slane %v2890, %v2897
  %2899 = vset.pattern.permute.xlu0 1
  %2900 = vperm.xlu0 %2899, %v825
  %v2901 = vpop.permute.xlu0 %2900
  %v2904 = vunpack.c.l.s4 839922192
  %v2905 = vunpack.c.0.s8 %v2904
  %v2906 = vlaneseq
  %v2907 = vshrl.u32 %v2906, 7
  %v2908 = vsub.s32 %v2905, %v2907
  %v2909 = vrot.slane %v2901, %v2908
  %2910 = vset.pattern.permute.xlu0 1
  %2911 = vperm.xlu0 %2910, %v826
  %v2912 = vpop.permute.xlu0 %2911
  %v2915 = vunpack.c.l.s4 839922192
  %v2916 = vunpack.c.0.s8 %v2915
  %v2917 = vlaneseq
  %v2918 = vshrl.u32 %v2917, 7
  %v2919 = vsub.s32 %v2916, %v2918
  %v2920 = vrot.slane %v2912, %v2919
  %2921 = vset.pattern.permute.xlu0 1
  %2922 = vperm.xlu0 %2921, %v827
  %v2923 = vpop.permute.xlu0 %2922
  %v2926 = vunpack.c.l.s4 839922192
  %v2927 = vunpack.c.0.s8 %v2926
  %v2928 = vlaneseq
  %v2929 = vshrl.u32 %v2928, 7
  %v2930 = vsub.s32 %v2927, %v2929
  %v2931 = vrot.slane %v2923, %v2930
  %2932 = vset.pattern.permute.xlu0 1
  %2933 = vperm.xlu0 %2932, %v828
  %v2934 = vpop.permute.xlu0 %2933
  %v2937 = vunpack.c.l.s4 839922192
  %v2938 = vunpack.c.0.s8 %v2937
  %v2939 = vlaneseq
  %v2940 = vshrl.u32 %v2939, 7
  %v2941 = vsub.s32 %v2938, %v2940
  %v2942 = vrot.slane %v2934, %v2941
  %2943 = vset.pattern.permute.xlu0 1
  %2944 = vperm.xlu0 %2943, %v829
  %v2945 = vpop.permute.xlu0 %2944
  %v2948 = vunpack.c.l.s4 839922192
  %v2949 = vunpack.c.0.s8 %v2948
  %v2950 = vlaneseq
  %v2951 = vshrl.u32 %v2950, 7
  %v2952 = vsub.s32 %v2949, %v2951
  %v2953 = vrot.slane %v2945, %v2952
  %2954 = vset.pattern.permute.xlu0 1
  %2955 = vperm.xlu0 %2954, %v830
  %v2956 = vpop.permute.xlu0 %2955
  %v2959 = vunpack.c.l.s4 839922192
  %v2960 = vunpack.c.0.s8 %v2959
  %v2961 = vlaneseq
  %v2962 = vshrl.u32 %v2961, 7
  %v2963 = vsub.s32 %v2960, %v2962
  %v2964 = vrot.slane %v2956, %v2963
  %2965 = vset.pattern.permute.xlu0 1
  %2966 = vperm.xlu0 %2965, %v831
  %v2967 = vpop.permute.xlu0 %2966
  %v2970 = vunpack.c.l.s4 839922192
  %v2971 = vunpack.c.0.s8 %v2970
  %v2972 = vlaneseq
  %v2973 = vshrl.u32 %v2972, 7
  %v2974 = vsub.s32 %v2971, %v2973
  %v2975 = vrot.slane %v2967, %v2974
  %2976 = vset.pattern.permute.xlu0 1
  %2977 = vperm.xlu0 %2976, %v832
  %v2978 = vpop.permute.xlu0 %2977
  %v2981 = vunpack.c.l.s4 839922192
  %v2982 = vunpack.c.0.s8 %v2981
  %v2983 = vlaneseq
  %v2984 = vshrl.u32 %v2983, 7
  %v2985 = vsub.s32 %v2982, %v2984
  %v2986 = vrot.slane %v2978, %v2985
  %2987 = vset.pattern.permute.xlu0 1
  %2988 = vperm.xlu0 %2987, %v833
  %v2989 = vpop.permute.xlu0 %2988
  %v2992 = vunpack.c.l.s4 839922192
  %v2993 = vunpack.c.0.s8 %v2992
  %v2994 = vlaneseq
  %v2995 = vshrl.u32 %v2994, 7
  %v2996 = vsub.s32 %v2993, %v2995
  %v2997 = vrot.slane %v2989, %v2996
  %2998 = vset.pattern.permute.xlu0 1
  %2999 = vperm.xlu0 %2998, %v834
  %v3000 = vpop.permute.xlu0 %2999
  %v3003 = vunpack.c.l.s4 839922192
  %v3004 = vunpack.c.0.s8 %v3003
  %v3005 = vlaneseq
  %v3006 = vshrl.u32 %v3005, 7
  %v3007 = vsub.s32 %v3004, %v3006
  %v3008 = vrot.slane %v3000, %v3007
  %3009 = vset.pattern.permute.xlu0 1
  %3010 = vperm.xlu0 %3009, %v835
  %v3011 = vpop.permute.xlu0 %3010
  %v3014 = vunpack.c.l.s4 839922192
  %v3015 = vunpack.c.0.s8 %v3014
  %v3016 = vlaneseq
  %v3017 = vshrl.u32 %v3016, 7
  %v3018 = vsub.s32 %v3015, %v3017
  %v3019 = vrot.slane %v3011, %v3018
  %3020 = vset.pattern.permute.xlu0 1
  %3021 = vperm.xlu0 %3020, %v836
  %v3022 = vpop.permute.xlu0 %3021
  %v3025 = vunpack.c.l.s4 839922192
  %v3026 = vunpack.c.0.s8 %v3025
  %v3027 = vlaneseq
  %v3028 = vshrl.u32 %v3027, 7
  %v3029 = vsub.s32 %v3026, %v3028
  %v3030 = vrot.slane %v3022, %v3029
  %3031 = vset.pattern.permute.xlu0 1
  %3032 = vperm.xlu0 %3031, %v837
  %v3033 = vpop.permute.xlu0 %3032
  %v3036 = vunpack.c.l.s4 839922192
  %v3037 = vunpack.c.0.s8 %v3036
  %v3038 = vlaneseq
  %v3039 = vshrl.u32 %v3038, 7
  %v3040 = vsub.s32 %v3037, %v3039
  %v3041 = vrot.slane %v3033, %v3040
  %3042 = vset.pattern.permute.xlu0 1
  %3043 = vperm.xlu0 %3042, %v838
  %v3044 = vpop.permute.xlu0 %3043
  %v3047 = vunpack.c.l.s4 839922192
  %v3048 = vunpack.c.0.s8 %v3047
  %v3049 = vlaneseq
  %v3050 = vshrl.u32 %v3049, 7
  %v3051 = vsub.s32 %v3048, %v3050
  %v3052 = vrot.slane %v3044, %v3051
  %3053 = vset.pattern.permute.xlu0 1
  %3054 = vperm.xlu0 %3053, %v839
  %v3055 = vpop.permute.xlu0 %3054
  %v3058 = vunpack.c.l.s4 839922192
  %v3059 = vunpack.c.0.s8 %v3058
  %v3060 = vlaneseq
  %v3061 = vshrl.u32 %v3060, 7
  %v3062 = vsub.s32 %v3059, %v3061
  %v3063 = vrot.slane %v3055, %v3062
  %3064 = vset.pattern.permute.xlu0 1
  %3065 = vperm.xlu0 %3064, %v840
  %v3066 = vpop.permute.xlu0 %3065
  %v3069 = vunpack.c.l.s4 839922192
  %v3070 = vunpack.c.0.s8 %v3069
  %v3071 = vlaneseq
  %v3072 = vshrl.u32 %v3071, 7
  %v3073 = vsub.s32 %v3070, %v3072
  %v3074 = vrot.slane %v3066, %v3073
  %3075 = vset.pattern.permute.xlu0 1
  %3076 = vperm.xlu0 %3075, %v841
  %v3077 = vpop.permute.xlu0 %3076
  %v3080 = vunpack.c.l.s4 839922192
  %v3081 = vunpack.c.0.s8 %v3080
  %v3082 = vlaneseq
  %v3083 = vshrl.u32 %v3082, 7
  %v3084 = vsub.s32 %v3081, %v3083
  %v3085 = vrot.slane %v3077, %v3084
  %3086 = vset.pattern.permute.xlu0 1
  %3087 = vperm.xlu0 %3086, %v842
  %v3088 = vpop.permute.xlu0 %3087
  %v3091 = vunpack.c.l.s4 839922192
  %v3092 = vunpack.c.0.s8 %v3091
  %v3093 = vlaneseq
  %v3094 = vshrl.u32 %v3093, 7
  %v3095 = vsub.s32 %v3092, %v3094
  %v3096 = vrot.slane %v3088, %v3095
  %3097 = vset.pattern.permute.xlu0 1
  %3098 = vperm.xlu0 %3097, %v843
  %v3099 = vpop.permute.xlu0 %3098
  %v3102 = vunpack.c.l.s4 839922192
  %v3103 = vunpack.c.0.s8 %v3102
  %v3104 = vlaneseq
  %v3105 = vshrl.u32 %v3104, 7
  %v3106 = vsub.s32 %v3103, %v3105
  %v3107 = vrot.slane %v3099, %v3106
  %3108 = vset.pattern.permute.xlu0 1
  %3109 = vperm.xlu0 %3108, %v844
  %v3110 = vpop.permute.xlu0 %3109
  %v3113 = vunpack.c.l.s4 839922192
  %v3114 = vunpack.c.0.s8 %v3113
  %v3115 = vlaneseq
  %v3116 = vshrl.u32 %v3115, 7
  %v3117 = vsub.s32 %v3114, %v3116
  %v3118 = vrot.slane %v3110, %v3117
  %3119 = vset.pattern.permute.xlu0 1
  %3120 = vperm.xlu0 %3119, %v845
  %v3121 = vpop.permute.xlu0 %3120
  %v3124 = vunpack.c.l.s4 839922192
  %v3125 = vunpack.c.0.s8 %v3124
  %v3126 = vlaneseq
  %v3127 = vshrl.u32 %v3126, 7
  %v3128 = vsub.s32 %v3125, %v3127
  %v3129 = vrot.slane %v3121, %v3128
  %3130 = vset.pattern.permute.xlu0 1
  %3131 = vperm.xlu0 %3130, %v846
  %v3132 = vpop.permute.xlu0 %3131
  %v3135 = vunpack.c.l.s4 839922192
  %v3136 = vunpack.c.0.s8 %v3135
  %v3137 = vlaneseq
  %v3138 = vshrl.u32 %v3137, 7
  %v3139 = vsub.s32 %v3136, %v3138
  %v3140 = vrot.slane %v3132, %v3139
  %3141 = vset.pattern.permute.xlu0 1
  %3142 = vperm.xlu0 %3141, %v847
  %v3143 = vpop.permute.xlu0 %3142
  %v3146 = vunpack.c.l.s4 839922192
  %v3147 = vunpack.c.0.s8 %v3146
  %v3148 = vlaneseq
  %v3149 = vshrl.u32 %v3148, 7
  %v3150 = vsub.s32 %v3147, %v3149
  %v3151 = vrot.slane %v3143, %v3150
  %3152 = vset.pattern.permute.xlu0 1
  %3153 = vperm.xlu0 %3152, %v848
  %v3154 = vpop.permute.xlu0 %3153
  %v3157 = vunpack.c.l.s4 839922192
  %v3158 = vunpack.c.0.s8 %v3157
  %v3159 = vlaneseq
  %v3160 = vshrl.u32 %v3159, 7
  %v3161 = vsub.s32 %v3158, %v3160
  %v3162 = vrot.slane %v3154, %v3161
  %3163 = vset.pattern.permute.xlu0 1
  %3164 = vperm.xlu0 %3163, %v849
  %v3165 = vpop.permute.xlu0 %3164
  %v3168 = vunpack.c.l.s4 839922192
  %v3169 = vunpack.c.0.s8 %v3168
  %v3170 = vlaneseq
  %v3171 = vshrl.u32 %v3170, 7
  %v3172 = vsub.s32 %v3169, %v3171
  %v3173 = vrot.slane %v3165, %v3172
  %3174 = vset.pattern.permute.xlu0 1
  %3175 = vperm.xlu0 %3174, %v850
  %v3176 = vpop.permute.xlu0 %3175
  %v3179 = vunpack.c.l.s4 839922192
  %v3180 = vunpack.c.0.s8 %v3179
  %v3181 = vlaneseq
  %v3182 = vshrl.u32 %v3181, 7
  %v3183 = vsub.s32 %v3180, %v3182
  %v3184 = vrot.slane %v3176, %v3183
  %3185 = vset.pattern.permute.xlu0 1
  %3186 = vperm.xlu0 %3185, %v851
  %v3187 = vpop.permute.xlu0 %3186
  %v3190 = vunpack.c.l.s4 839922192
  %v3191 = vunpack.c.0.s8 %v3190
  %v3192 = vlaneseq
  %v3193 = vshrl.u32 %v3192, 7
  %v3194 = vsub.s32 %v3191, %v3193
  %v3195 = vrot.slane %v3187, %v3194
  %v3260 = vunpack.c.l.b16 %v2502
  %v3261 = vunpack.c.l.b16 %v2513
  %v3262 = vunpack.c.l.b16 %v2524
  %v3263 = vunpack.c.l.b16 %v2535
  %v3264 = vunpack.c.l.b16 %v2546
  %v3265 = vunpack.c.l.b16 %v2557
  %v3266 = vunpack.c.l.b16 %v2568
  %v3267 = vunpack.c.l.b16 %v2579
  %v3268 = vunpack.c.l.b16 %v2590
  %v3269 = vunpack.c.l.b16 %v2601
  %v3270 = vunpack.c.l.b16 %v2612
  %v3271 = vunpack.c.l.b16 %v2623
  %v3272 = vunpack.c.l.b16 %v2634
  %v3273 = vunpack.c.l.b16 %v2645
  %v3274 = vunpack.c.l.b16 %v2656
  %v3275 = vunpack.c.l.b16 %v2667
  %v3276 = vunpack.c.l.b16 %v2678
  %v3277 = vunpack.c.l.b16 %v2689
  %v3278 = vunpack.c.l.b16 %v2700
  %v3279 = vunpack.c.l.b16 %v2711
  %v3280 = vunpack.c.l.b16 %v2722
  %v3281 = vunpack.c.l.b16 %v2733
  %v3282 = vunpack.c.l.b16 %v2744
  %v3283 = vunpack.c.l.b16 %v2755
  %v3284 = vunpack.c.l.b16 %v2766
  %v3285 = vunpack.c.l.b16 %v2777
  %v3286 = vunpack.c.l.b16 %v2788
  %v3287 = vunpack.c.l.b16 %v2799
  %v3288 = vunpack.c.l.b16 %v2810
  %v3289 = vunpack.c.l.b16 %v2821
  %v3290 = vunpack.c.l.b16 %v2832
  %v3291 = vunpack.c.l.b16 %v2843
  %v3292 = vunpack.c.l.b16 %v2854
  %v3293 = vunpack.c.l.b16 %v2865
  %v3294 = vunpack.c.l.b16 %v2876
  %v3295 = vunpack.c.l.b16 %v2887
  %v3296 = vunpack.c.l.b16 %v2898
  %v3297 = vunpack.c.l.b16 %v2909
  %v3298 = vunpack.c.l.b16 %v2920
  %v3299 = vunpack.c.l.b16 %v2931
  %v3300 = vunpack.c.l.b16 %v2942
  %v3301 = vunpack.c.l.b16 %v2953
  %v3302 = vunpack.c.l.b16 %v2964
  %v3303 = vunpack.c.l.b16 %v2975
  %v3304 = vunpack.c.l.b16 %v2986
  %v3305 = vunpack.c.l.b16 %v2997
  %v3306 = vunpack.c.l.b16 %v3008
  %v3307 = vunpack.c.l.b16 %v3019
  %v3308 = vunpack.c.l.b16 %v3030
  %v3309 = vunpack.c.l.b16 %v3041
  %v3310 = vunpack.c.l.b16 %v3052
  %v3311 = vunpack.c.l.b16 %v3063
  %v3312 = vunpack.c.l.b16 %v3074
  %v3313 = vunpack.c.l.b16 %v3085
  %v3314 = vunpack.c.l.b16 %v3096
  %v3315 = vunpack.c.l.b16 %v3107
  %v3316 = vunpack.c.l.b16 %v3118
  %v3317 = vunpack.c.l.b16 %v3129
  %v3318 = vunpack.c.l.b16 %v3140
  %v3319 = vunpack.c.l.b16 %v3151
  %v3320 = vunpack.c.l.b16 %v3162
  %v3321 = vunpack.c.l.b16 %v3173
  %v3322 = vunpack.c.l.b16 %v3184
  %v3323 = vunpack.c.l.b16 %v3195
  %v3324 = vpack.c.b16 %v3261, %v3260
  %v3325 = vpack.c.b16 %v3263, %v3262
  %v3326 = vpack.c.b16 %v3265, %v3264
  %v3327 = vpack.c.b16 %v3267, %v3266
  %v3328 = vpack.c.b16 %v3269, %v3268
  %v3329 = vpack.c.b16 %v3271, %v3270
  %v3330 = vpack.c.b16 %v3273, %v3272
  %v3331 = vpack.c.b16 %v3275, %v3274
  %v3332 = vpack.c.b16 %v3277, %v3276
  %v3333 = vpack.c.b16 %v3279, %v3278
  %v3334 = vpack.c.b16 %v3281, %v3280
  %v3335 = vpack.c.b16 %v3283, %v3282
  %v3336 = vpack.c.b16 %v3285, %v3284
  %v3337 = vpack.c.b16 %v3287, %v3286
  %v3338 = vpack.c.b16 %v3289, %v3288
  %v3339 = vpack.c.b16 %v3291, %v3290
  %v3340 = vpack.c.b16 %v3293, %v3292
  %v3341 = vpack.c.b16 %v3295, %v3294
  %v3342 = vpack.c.b16 %v3297, %v3296
  %v3343 = vpack.c.b16 %v3299, %v3298
  %v3344 = vpack.c.b16 %v3301, %v3300
  %v3345 = vpack.c.b16 %v3303, %v3302
  %v3346 = vpack.c.b16 %v3305, %v3304
  %v3347 = vpack.c.b16 %v3307, %v3306
  %v3348 = vpack.c.b16 %v3309, %v3308
  %v3349 = vpack.c.b16 %v3311, %v3310
  %v3350 = vpack.c.b16 %v3313, %v3312
  %v3351 = vpack.c.b16 %v3315, %v3314
  %v3352 = vpack.c.b16 %v3317, %v3316
  %v3353 = vpack.c.b16 %v3319, %v3318
  %v3354 = vpack.c.b16 %v3321, %v3320
  %v3355 = vpack.c.b16 %v3323, %v3322
  %v3388 = vmul.bf16 %v2460, %v3324
  %v3389 = vmul.bf16 %v2461, %v3325
  %v3390 = vmul.bf16 %v2462, %v3326
  %v3391 = vmul.bf16 %v2463, %v3327
  %v3392 = vmul.bf16 %v2464, %v3328
  %v3393 = vmul.bf16 %v2465, %v3329
  %v3394 = vmul.bf16 %v2466, %v3330
  %v3395 = vmul.bf16 %v2467, %v3331
  %v3396 = vmul.bf16 %v2468, %v3332
  %v3397 = vmul.bf16 %v2469, %v3333
  %v3398 = vmul.bf16 %v2470, %v3334
  %v3399 = vmul.bf16 %v2471, %v3335
  %v3400 = vmul.bf16 %v2472, %v3336
  %v3401 = vmul.bf16 %v2473, %v3337
  %v3402 = vmul.bf16 %v2474, %v3338
  %v3403 = vmul.bf16 %v2475, %v3339
  %v3404 = vmul.bf16 %v2476, %v3340
  %v3405 = vmul.bf16 %v2477, %v3341
  %v3406 = vmul.bf16 %v2478, %v3342
  %v3407 = vmul.bf16 %v2479, %v3343
  %v3408 = vmul.bf16 %v2480, %v3344
  %v3409 = vmul.bf16 %v2481, %v3345
  %v3410 = vmul.bf16 %v2482, %v3346
  %v3411 = vmul.bf16 %v2483, %v3347
  %v3412 = vmul.bf16 %v2484, %v3348
  %v3413 = vmul.bf16 %v2485, %v3349
  %v3414 = vmul.bf16 %v2486, %v3350
  %v3415 = vmul.bf16 %v2487, %v3351
  %v3416 = vmul.bf16 %v2488, %v3352
  %v3417 = vmul.bf16 %v2489, %v3353
  %v3418 = vmul.bf16 %v2490, %v3354
  %v3419 = vmul.bf16 %v2491, %v3355
  %3452 = vrot.lane.b32.xlu0 %v3388, 4
  %v3453 = vpop.permute.xlu0 %3452
  %3454 = vrot.lane.b32.xlu0 %v3389, 4
  %v3455 = vpop.permute.xlu0 %3454
  %3456 = vrot.lane.b32.xlu0 %v3390, 4
  %v3457 = vpop.permute.xlu0 %3456
  %3458 = vrot.lane.b32.xlu0 %v3391, 4
  %v3459 = vpop.permute.xlu0 %3458
  %3460 = vrot.lane.b32.xlu0 %v3392, 4
  %v3461 = vpop.permute.xlu0 %3460
  %3462 = vrot.lane.b32.xlu0 %v3393, 4
  %v3463 = vpop.permute.xlu0 %3462
  %3464 = vrot.lane.b32.xlu0 %v3394, 4
  %v3465 = vpop.permute.xlu0 %3464
  %3466 = vrot.lane.b32.xlu0 %v3395, 4
  %v3467 = vpop.permute.xlu0 %3466
  %3468 = vrot.lane.b32.xlu0 %v3396, 4
  %v3469 = vpop.permute.xlu0 %3468
  %3470 = vrot.lane.b32.xlu0 %v3397, 4
  %v3471 = vpop.permute.xlu0 %3470
  %3472 = vrot.lane.b32.xlu0 %v3398, 4
  %v3473 = vpop.permute.xlu0 %3472
  %3474 = vrot.lane.b32.xlu0 %v3399, 4
  %v3475 = vpop.permute.xlu0 %3474
  %3476 = vrot.lane.b32.xlu0 %v3400, 4
  %v3477 = vpop.permute.xlu0 %3476
  %3478 = vrot.lane.b32.xlu0 %v3401, 4
  %v3479 = vpop.permute.xlu0 %3478
  %3480 = vrot.lane.b32.xlu0 %v3402, 4
  %v3481 = vpop.permute.xlu0 %3480
  %3482 = vrot.lane.b32.xlu0 %v3403, 4
  %v3483 = vpop.permute.xlu0 %3482
  %3484 = vrot.lane.b32.xlu0 %v3404, 4
  %v3485 = vpop.permute.xlu0 %3484
  %3486 = vrot.lane.b32.xlu0 %v3405, 4
  %v3487 = vpop.permute.xlu0 %3486
  %3488 = vrot.lane.b32.xlu0 %v3406, 4
  %v3489 = vpop.permute.xlu0 %3488
  %3490 = vrot.lane.b32.xlu0 %v3407, 4
  %v3491 = vpop.permute.xlu0 %3490
  %3492 = vrot.lane.b32.xlu0 %v3408, 4
  %v3493 = vpop.permute.xlu0 %3492
  %3494 = vrot.lane.b32.xlu0 %v3409, 4
  %v3495 = vpop.permute.xlu0 %3494
  %3496 = vrot.lane.b32.xlu0 %v3410, 4
  %v3497 = vpop.permute.xlu0 %3496
  %3498 = vrot.lane.b32.xlu0 %v3411, 4
  %v3499 = vpop.permute.xlu0 %3498
  %3500 = vrot.lane.b32.xlu0 %v3412, 4
  %v3501 = vpop.permute.xlu0 %3500
  %3502 = vrot.lane.b32.xlu0 %v3413, 4
  %v3503 = vpop.permute.xlu0 %3502
  %3504 = vrot.lane.b32.xlu0 %v3414, 4
  %v3505 = vpop.permute.xlu0 %3504
  %3506 = vrot.lane.b32.xlu0 %v3415, 4
  %v3507 = vpop.permute.xlu0 %3506
  %3508 = vrot.lane.b32.xlu0 %v3416, 4
  %v3509 = vpop.permute.xlu0 %3508
  %3510 = vrot.lane.b32.xlu0 %v3417, 4
  %v3511 = vpop.permute.xlu0 %3510
  %3512 = vrot.lane.b32.xlu0 %v3418, 4
  %v3513 = vpop.permute.xlu0 %3512
  %3514 = vrot.lane.b32.xlu0 %v3419, 4
  %v3515 = vpop.permute.xlu0 %3514
  %vm3548 = vcmask 64544
  %3549 = vst.msk [vmem:[#allocation3] sm:$0xff] %vm3548, %v3453
  %3550 = vst.msk [vmem:[#allocation3 + $0x8] sm:$0xff] %vm3548, %v3455
  %3551 = vst.msk [vmem:[#allocation3 + $0x10] sm:$0xff] %vm3548, %v3457
  %3552 = vst.msk [vmem:[#allocation3 + $0x18] sm:$0xff] %vm3548, %v3459
  %3553 = vst.msk [vmem:[#allocation3 + $0x20] sm:$0xff] %vm3548, %v3461
  %3554 = vst.msk [vmem:[#allocation3 + $0x28] sm:$0xff] %vm3548, %v3463
  %3555 = vst.msk [vmem:[#allocation3 + $0x30] sm:$0xff] %vm3548, %v3465
  %3556 = vst.msk [vmem:[#allocation3 + $0x38] sm:$0xff] %vm3548, %v3467
  %3557 = vst.msk [vmem:[#allocation3 + $0x40] sm:$0xff] %vm3548, %v3469
  %3558 = vst.msk [vmem:[#allocation3 + $0x48] sm:$0xff] %vm3548, %v3471
  %3559 = vst.msk [vmem:[#allocation3 + $0x50] sm:$0xff] %vm3548, %v3473
  %3560 = vst.msk [vmem:[#allocation3 + $0x58] sm:$0xff] %vm3548, %v3475
  %3561 = vst.msk [vmem:[#allocation3 + $0x60] sm:$0xff] %vm3548, %v3477
  %3562 = vst.msk [vmem:[#allocation3 + $0x68] sm:$0xff] %vm3548, %v3479
  %3563 = vst.msk [vmem:[#allocation3 + $0x70] sm:$0xff] %vm3548, %v3481
  %3564 = vst.msk [vmem:[#allocation3 + $0x78] sm:$0xff] %vm3548, %v3483
  %3565 = vst.msk [vmem:[#allocation3 + $0x80] sm:$0xff] %vm3548, %v3485
  %3566 = vst.msk [vmem:[#allocation3 + $0x88] sm:$0xff] %vm3548, %v3487
  %3567 = vst.msk [vmem:[#allocation3 + $0x90] sm:$0xff] %vm3548, %v3489
  %3568 = vst.msk [vmem:[#allocation3 + $0x98] sm:$0xff] %vm3548, %v3491
  %3569 = vst.msk [vmem:[#allocation3 + $0xa0] sm:$0xff] %vm3548, %v3493
  %3570 = vst.msk [vmem:[#allocation3 + $0xa8] sm:$0xff] %vm3548, %v3495
  %3571 = vst.msk [vmem:[#allocation3 + $0xb0] sm:$0xff] %vm3548, %v3497
  %3572 = vst.msk [vmem:[#allocation3 + $0xb8] sm:$0xff] %vm3548, %v3499
  %3573 = vst.msk [vmem:[#allocation3 + $0xc0] sm:$0xff] %vm3548, %v3501
  %3574 = vst.msk [vmem:[#allocation3 + $0xc8] sm:$0xff] %vm3548, %v3503
  %3575 = vst.msk [vmem:[#allocation3 + $0xd0] sm:$0xff] %vm3548, %v3505
  %3576 = vst.msk [vmem:[#allocation3 + $0xd8] sm:$0xff] %vm3548, %v3507
  %3577 = vst.msk [vmem:[#allocation3 + $0xe0] sm:$0xff] %vm3548, %v3509
  %3578 = vst.msk [vmem:[#allocation3 + $0xe8] sm:$0xff] %vm3548, %v3511
  %3579 = vst.msk [vmem:[#allocation3 + $0xf0] sm:$0xff] %vm3548, %v3513
  %3580 = vst.msk [vmem:[#allocation3 + $0xf8] sm:$0xff] %vm3548, %v3515
  %v3581 = vld [vmem:[#allocation2 + $0x8] sm:$0xff]
  %v3582 = vld [vmem:[#allocation2 + $0x10] sm:$0xff]
  %v3583 = vld [vmem:[#allocation2 + $0x18] sm:$0xff]
  %v3584 = vld [vmem:[#allocation2 + $0x20] sm:$0xff]
  %v3585 = vld [vmem:[#allocation2 + $0x28] sm:$0xff]
  %v3586 = vld [vmem:[#allocation2 + $0x30] sm:$0xff]
  %v3587 = vld [vmem:[#allocation2 + $0x38] sm:$0xff]
  %v3588 = vld [vmem:[#allocation2 + $0x40] sm:$0xff]
  %v3589 = vld [vmem:[#allocation2 + $0x48] sm:$0xff]
  %v3590 = vld [vmem:[#allocation2 + $0x50] sm:$0xff]
  %v3591 = vld [vmem:[#allocation2 + $0x58] sm:$0xff]
  %v3592 = vld [vmem:[#allocation2 + $0x60] sm:$0xff]
  %v3593 = vld [vmem:[#allocation2 + $0x68] sm:$0xff]
  %v3594 = vld [vmem:[#allocation2 + $0x70] sm:$0xff]
  %v3595 = vld [vmem:[#allocation2 + $0x78] sm:$0xff]
  %v3596 = vld [vmem:[#allocation2 + $0x80] sm:$0xff]
  %v3597 = vld [vmem:[#allocation2 + $0x88] sm:$0xff]
  %v3598 = vld [vmem:[#allocation2 + $0x90] sm:$0xff]
  %v3599 = vld [vmem:[#allocation2 + $0x98] sm:$0xff]
  %v3600 = vld [vmem:[#allocation2 + $0xa0] sm:$0xff]
  %v3601 = vld [vmem:[#allocation2 + $0xa8] sm:$0xff]
  %v3602 = vld [vmem:[#allocation2 + $0xb0] sm:$0xff]
  %v3603 = vld [vmem:[#allocation2 + $0xb8] sm:$0xff]
  %v3604 = vld [vmem:[#allocation2 + $0xc0] sm:$0xff]
  %v3605 = vld [vmem:[#allocation2 + $0xc8] sm:$0xff]
  %v3606 = vld [vmem:[#allocation2 + $0xd0] sm:$0xff]
  %v3607 = vld [vmem:[#allocation2 + $0xd8] sm:$0xff]
  %v3608 = vld [vmem:[#allocation2 + $0xe0] sm:$0xff]
  %v3609 = vld [vmem:[#allocation2 + $0xe8] sm:$0xff]
  %v3610 = vld [vmem:[#allocation2 + $0xf0] sm:$0xff]
  %v3611 = vld [vmem:[#allocation2 + $0xf8] sm:$0xff]
  %v3612 = vld [vmem:[#allocation2 + $0x100] sm:$0xff]
  %v3613 = vld [vmem:[#allocation2 + $0x108] sm:$0x1]
  %3614 = vset.pattern.permute.xlu0 2
  %3615 = vperm.xlu0 %3614, %v788
  %v3616 = vpop.permute.xlu0 %3615
  %v3619 = vunpack.c.l.s4 839922192
  %v3620 = vunpack.c.0.s8 %v3619
  %v3621 = vlaneseq
  %v3622 = vshrl.u32 %v3621, 7
  %v3623 = vsub.s32 %v3620, %v3622
  %v3624 = vrot.slane %v3616, %v3623
  %3625 = vset.pattern.permute.xlu0 2
  %3626 = vperm.xlu0 %3625, %v789
  %v3627 = vpop.permute.xlu0 %3626
  %v3630 = vunpack.c.l.s4 839922192
  %v3631 = vunpack.c.0.s8 %v3630
  %v3632 = vlaneseq
  %v3633 = vshrl.u32 %v3632, 7
  %v3634 = vsub.s32 %v3631, %v3633
  %v3635 = vrot.slane %v3627, %v3634
  %3636 = vset.pattern.permute.xlu0 2
  %3637 = vperm.xlu0 %3636, %v790
  %v3638 = vpop.permute.xlu0 %3637
  %v3641 = vunpack.c.l.s4 839922192
  %v3642 = vunpack.c.0.s8 %v3641
  %v3643 = vlaneseq
  %v3644 = vshrl.u32 %v3643, 7
  %v3645 = vsub.s32 %v3642, %v3644
  %v3646 = vrot.slane %v3638, %v3645
  %3647 = vset.pattern.permute.xlu0 2
  %3648 = vperm.xlu0 %3647, %v791
  %v3649 = vpop.permute.xlu0 %3648
  %v3652 = vunpack.c.l.s4 839922192
  %v3653 = vunpack.c.0.s8 %v3652
  %v3654 = vlaneseq
  %v3655 = vshrl.u32 %v3654, 7
  %v3656 = vsub.s32 %v3653, %v3655
  %v3657 = vrot.slane %v3649, %v3656
  %3658 = vset.pattern.permute.xlu0 2
  %3659 = vperm.xlu0 %3658, %v792
  %v3660 = vpop.permute.xlu0 %3659
  %v3663 = vunpack.c.l.s4 839922192
  %v3664 = vunpack.c.0.s8 %v3663
  %v3665 = vlaneseq
  %v3666 = vshrl.u32 %v3665, 7
  %v3667 = vsub.s32 %v3664, %v3666
  %v3668 = vrot.slane %v3660, %v3667
  %3669 = vset.pattern.permute.xlu0 2
  %3670 = vperm.xlu0 %3669, %v793
  %v3671 = vpop.permute.xlu0 %3670
  %v3674 = vunpack.c.l.s4 839922192
  %v3675 = vunpack.c.0.s8 %v3674
  %v3676 = vlaneseq
  %v3677 = vshrl.u32 %v3676, 7
  %v3678 = vsub.s32 %v3675, %v3677
  %v3679 = vrot.slane %v3671, %v3678
  %3680 = vset.pattern.permute.xlu0 2
  %3681 = vperm.xlu0 %3680, %v794
  %v3682 = vpop.permute.xlu0 %3681
  %v3685 = vunpack.c.l.s4 839922192
  %v3686 = vunpack.c.0.s8 %v3685
  %v3687 = vlaneseq
  %v3688 = vshrl.u32 %v3687, 7
  %v3689 = vsub.s32 %v3686, %v3688
  %v3690 = vrot.slane %v3682, %v3689
  %3691 = vset.pattern.permute.xlu0 2
  %3692 = vperm.xlu0 %3691, %v795
  %v3693 = vpop.permute.xlu0 %3692
  %v3696 = vunpack.c.l.s4 839922192
  %v3697 = vunpack.c.0.s8 %v3696
  %v3698 = vlaneseq
  %v3699 = vshrl.u32 %v3698, 7
  %v3700 = vsub.s32 %v3697, %v3699
  %v3701 = vrot.slane %v3693, %v3700
  %3702 = vset.pattern.permute.xlu0 2
  %3703 = vperm.xlu0 %3702, %v796
  %v3704 = vpop.permute.xlu0 %3703
  %v3707 = vunpack.c.l.s4 839922192
  %v3708 = vunpack.c.0.s8 %v3707
  %v3709 = vlaneseq
  %v3710 = vshrl.u32 %v3709, 7
  %v3711 = vsub.s32 %v3708, %v3710
  %v3712 = vrot.slane %v3704, %v3711
  %3713 = vset.pattern.permute.xlu0 2
  %3714 = vperm.xlu0 %3713, %v797
  %v3715 = vpop.permute.xlu0 %3714
  %v3718 = vunpack.c.l.s4 839922192
  %v3719 = vunpack.c.0.s8 %v3718
  %v3720 = vlaneseq
  %v3721 = vshrl.u32 %v3720, 7
  %v3722 = vsub.s32 %v3719, %v3721
  %v3723 = vrot.slane %v3715, %v3722
  %3724 = vset.pattern.permute.xlu0 2
  %3725 = vperm.xlu0 %3724, %v798
  %v3726 = vpop.permute.xlu0 %3725
  %v3729 = vunpack.c.l.s4 839922192
  %v3730 = vunpack.c.0.s8 %v3729
  %v3731 = vlaneseq
  %v3732 = vshrl.u32 %v3731, 7
  %v3733 = vsub.s32 %v3730, %v3732
  %v3734 = vrot.slane %v3726, %v3733
  %3735 = vset.pattern.permute.xlu0 2
  %3736 = vperm.xlu0 %3735, %v799
  %v3737 = vpop.permute.xlu0 %3736
  %v3740 = vunpack.c.l.s4 839922192
  %v3741 = vunpack.c.0.s8 %v3740
  %v3742 = vlaneseq
  %v3743 = vshrl.u32 %v3742, 7
  %v3744 = vsub.s32 %v3741, %v3743
  %v3745 = vrot.slane %v3737, %v3744
  %3746 = vset.pattern.permute.xlu0 2
  %3747 = vperm.xlu0 %3746, %v800
  %v3748 = vpop.permute.xlu0 %3747
  %v3751 = vunpack.c.l.s4 839922192
  %v3752 = vunpack.c.0.s8 %v3751
  %v3753 = vlaneseq
  %v3754 = vshrl.u32 %v3753, 7
  %v3755 = vsub.s32 %v3752, %v3754
  %v3756 = vrot.slane %v3748, %v3755
  %3757 = vset.pattern.permute.xlu0 2
  %3758 = vperm.xlu0 %3757, %v801
  %v3759 = vpop.permute.xlu0 %3758
  %v3762 = vunpack.c.l.s4 839922192
  %v3763 = vunpack.c.0.s8 %v3762
  %v3764 = vlaneseq
  %v3765 = vshrl.u32 %v3764, 7
  %v3766 = vsub.s32 %v3763, %v3765
  %v3767 = vrot.slane %v3759, %v3766
  %3768 = vset.pattern.permute.xlu0 2
  %3769 = vperm.xlu0 %3768, %v802
  %v3770 = vpop.permute.xlu0 %3769
  %v3773 = vunpack.c.l.s4 839922192
  %v3774 = vunpack.c.0.s8 %v3773
  %v3775 = vlaneseq
  %v3776 = vshrl.u32 %v3775, 7
  %v3777 = vsub.s32 %v3774, %v3776
  %v3778 = vrot.slane %v3770, %v3777
  %3779 = vset.pattern.permute.xlu0 2
  %3780 = vperm.xlu0 %3779, %v803
  %v3781 = vpop.permute.xlu0 %3780
  %v3784 = vunpack.c.l.s4 839922192
  %v3785 = vunpack.c.0.s8 %v3784
  %v3786 = vlaneseq
  %v3787 = vshrl.u32 %v3786, 7
  %v3788 = vsub.s32 %v3785, %v3787
  %v3789 = vrot.slane %v3781, %v3788
  %3790 = vset.pattern.permute.xlu0 2
  %3791 = vperm.xlu0 %3790, %v804
  %v3792 = vpop.permute.xlu0 %3791
  %v3795 = vunpack.c.l.s4 839922192
  %v3796 = vunpack.c.0.s8 %v3795
  %v3797 = vlaneseq
  %v3798 = vshrl.u32 %v3797, 7
  %v3799 = vsub.s32 %v3796, %v3798
  %v3800 = vrot.slane %v3792, %v3799
  %3801 = vset.pattern.permute.xlu0 2
  %3802 = vperm.xlu0 %3801, %v805
  %v3803 = vpop.permute.xlu0 %3802
  %v3806 = vunpack.c.l.s4 839922192
  %v3807 = vunpack.c.0.s8 %v3806
  %v3808 = vlaneseq
  %v3809 = vshrl.u32 %v3808, 7
  %v3810 = vsub.s32 %v3807, %v3809
  %v3811 = vrot.slane %v3803, %v3810
  %3812 = vset.pattern.permute.xlu0 2
  %3813 = vperm.xlu0 %3812, %v806
  %v3814 = vpop.permute.xlu0 %3813
  %v3817 = vunpack.c.l.s4 839922192
  %v3818 = vunpack.c.0.s8 %v3817
  %v3819 = vlaneseq
  %v3820 = vshrl.u32 %v3819, 7
  %v3821 = vsub.s32 %v3818, %v3820
  %v3822 = vrot.slane %v3814, %v3821
  %3823 = vset.pattern.permute.xlu0 2
  %3824 = vperm.xlu0 %3823, %v807
  %v3825 = vpop.permute.xlu0 %3824
  %v3828 = vunpack.c.l.s4 839922192
  %v3829 = vunpack.c.0.s8 %v3828
  %v3830 = vlaneseq
  %v3831 = vshrl.u32 %v3830, 7
  %v3832 = vsub.s32 %v3829, %v3831
  %v3833 = vrot.slane %v3825, %v3832
  %3834 = vset.pattern.permute.xlu0 2
  %3835 = vperm.xlu0 %3834, %v808
  %v3836 = vpop.permute.xlu0 %3835
  %v3839 = vunpack.c.l.s4 839922192
  %v3840 = vunpack.c.0.s8 %v3839
  %v3841 = vlaneseq
  %v3842 = vshrl.u32 %v3841, 7
  %v3843 = vsub.s32 %v3840, %v3842
  %v3844 = vrot.slane %v3836, %v3843
  %3845 = vset.pattern.permute.xlu0 2
  %3846 = vperm.xlu0 %3845, %v809
  %v3847 = vpop.permute.xlu0 %3846
  %v3850 = vunpack.c.l.s4 839922192
  %v3851 = vunpack.c.0.s8 %v3850
  %v3852 = vlaneseq
  %v3853 = vshrl.u32 %v3852, 7
  %v3854 = vsub.s32 %v3851, %v3853
  %v3855 = vrot.slane %v3847, %v3854
  %3856 = vset.pattern.permute.xlu0 2
  %3857 = vperm.xlu0 %3856, %v810
  %v3858 = vpop.permute.xlu0 %3857
  %v3861 = vunpack.c.l.s4 839922192
  %v3862 = vunpack.c.0.s8 %v3861
  %v3863 = vlaneseq
  %v3864 = vshrl.u32 %v3863, 7
  %v3865 = vsub.s32 %v3862, %v3864
  %v3866 = vrot.slane %v3858, %v3865
  %3867 = vset.pattern.permute.xlu0 2
  %3868 = vperm.xlu0 %3867, %v811
  %v3869 = vpop.permute.xlu0 %3868
  %v3872 = vunpack.c.l.s4 839922192
  %v3873 = vunpack.c.0.s8 %v3872
  %v3874 = vlaneseq
  %v3875 = vshrl.u32 %v3874, 7
  %v3876 = vsub.s32 %v3873, %v3875
  %v3877 = vrot.slane %v3869, %v3876
  %3878 = vset.pattern.permute.xlu0 2
  %3879 = vperm.xlu0 %3878, %v812
  %v3880 = vpop.permute.xlu0 %3879
  %v3883 = vunpack.c.l.s4 839922192
  %v3884 = vunpack.c.0.s8 %v3883
  %v3885 = vlaneseq
  %v3886 = vshrl.u32 %v3885, 7
  %v3887 = vsub.s32 %v3884, %v3886
  %v3888 = vrot.slane %v3880, %v3887
  %3889 = vset.pattern.permute.xlu0 2
  %3890 = vperm.xlu0 %3889, %v813
  %v3891 = vpop.permute.xlu0 %3890
  %v3894 = vunpack.c.l.s4 839922192
  %v3895 = vunpack.c.0.s8 %v3894
  %v3896 = vlaneseq
  %v3897 = vshrl.u32 %v3896, 7
  %v3898 = vsub.s32 %v3895, %v3897
  %v3899 = vrot.slane %v3891, %v3898
  %3900 = vset.pattern.permute.xlu0 2
  %3901 = vperm.xlu0 %3900, %v814
  %v3902 = vpop.permute.xlu0 %3901
  %v3905 = vunpack.c.l.s4 839922192
  %v3906 = vunpack.c.0.s8 %v3905
  %v3907 = vlaneseq
  %v3908 = vshrl.u32 %v3907, 7
  %v3909 = vsub.s32 %v3906, %v3908
  %v3910 = vrot.slane %v3902, %v3909
  %3911 = vset.pattern.permute.xlu0 2
  %3912 = vperm.xlu0 %3911, %v815
  %v3913 = vpop.permute.xlu0 %3912
  %v3916 = vunpack.c.l.s4 839922192
  %v3917 = vunpack.c.0.s8 %v3916
  %v3918 = vlaneseq
  %v3919 = vshrl.u32 %v3918, 7
  %v3920 = vsub.s32 %v3917, %v3919
  %v3921 = vrot.slane %v3913, %v3920
  %3922 = vset.pattern.permute.xlu0 2
  %3923 = vperm.xlu0 %3922, %v816
  %v3924 = vpop.permute.xlu0 %3923
  %v3927 = vunpack.c.l.s4 839922192
  %v3928 = vunpack.c.0.s8 %v3927
  %v3929 = vlaneseq
  %v3930 = vshrl.u32 %v3929, 7
  %v3931 = vsub.s32 %v3928, %v3930
  %v3932 = vrot.slane %v3924, %v3931
  %3933 = vset.pattern.permute.xlu0 2
  %3934 = vperm.xlu0 %3933, %v817
  %v3935 = vpop.permute.xlu0 %3934
  %v3938 = vunpack.c.l.s4 839922192
  %v3939 = vunpack.c.0.s8 %v3938
  %v3940 = vlaneseq
  %v3941 = vshrl.u32 %v3940, 7
  %v3942 = vsub.s32 %v3939, %v3941
  %v3943 = vrot.slane %v3935, %v3942
  %3944 = vset.pattern.permute.xlu0 2
  %3945 = vperm.xlu0 %3944, %v818
  %v3946 = vpop.permute.xlu0 %3945
  %v3949 = vunpack.c.l.s4 839922192
  %v3950 = vunpack.c.0.s8 %v3949
  %v3951 = vlaneseq
  %v3952 = vshrl.u32 %v3951, 7
  %v3953 = vsub.s32 %v3950, %v3952
  %v3954 = vrot.slane %v3946, %v3953
  %3955 = vset.pattern.permute.xlu0 2
  %3956 = vperm.xlu0 %3955, %v819
  %v3957 = vpop.permute.xlu0 %3956
  %v3960 = vunpack.c.l.s4 839922192
  %v3961 = vunpack.c.0.s8 %v3960
  %v3962 = vlaneseq
  %v3963 = vshrl.u32 %v3962, 7
  %v3964 = vsub.s32 %v3961, %v3963
  %v3965 = vrot.slane %v3957, %v3964
  %3966 = vset.pattern.permute.xlu0 2
  %3967 = vperm.xlu0 %3966, %v820
  %v3968 = vpop.permute.xlu0 %3967
  %v3971 = vunpack.c.l.s4 839922192
  %v3972 = vunpack.c.0.s8 %v3971
  %v3973 = vlaneseq
  %v3974 = vshrl.u32 %v3973, 7
  %v3975 = vsub.s32 %v3972, %v3974
  %v3976 = vrot.slane %v3968, %v3975
  %3977 = vset.pattern.permute.xlu0 2
  %3978 = vperm.xlu0 %3977, %v821
  %v3979 = vpop.permute.xlu0 %3978
  %v3982 = vunpack.c.l.s4 839922192
  %v3983 = vunpack.c.0.s8 %v3982
  %v3984 = vlaneseq
  %v3985 = vshrl.u32 %v3984, 7
  %v3986 = vsub.s32 %v3983, %v3985
  %v3987 = vrot.slane %v3979, %v3986
  %3988 = vset.pattern.permute.xlu0 2
  %3989 = vperm.xlu0 %3988, %v822
  %v3990 = vpop.permute.xlu0 %3989
  %v3993 = vunpack.c.l.s4 839922192
  %v3994 = vunpack.c.0.s8 %v3993
  %v3995 = vlaneseq
  %v3996 = vshrl.u32 %v3995, 7
  %v3997 = vsub.s32 %v3994, %v3996
  %v3998 = vrot.slane %v3990, %v3997
  %3999 = vset.pattern.permute.xlu0 2
  %4000 = vperm.xlu0 %3999, %v823
  %v4001 = vpop.permute.xlu0 %4000
  %v4004 = vunpack.c.l.s4 839922192
  %v4005 = vunpack.c.0.s8 %v4004
  %v4006 = vlaneseq
  %v4007 = vshrl.u32 %v4006, 7
  %v4008 = vsub.s32 %v4005, %v4007
  %v4009 = vrot.slane %v4001, %v4008
  %4010 = vset.pattern.permute.xlu0 2
  %4011 = vperm.xlu0 %4010, %v824
  %v4012 = vpop.permute.xlu0 %4011
  %v4015 = vunpack.c.l.s4 839922192
  %v4016 = vunpack.c.0.s8 %v4015
  %v4017 = vlaneseq
  %v4018 = vshrl.u32 %v4017, 7
  %v4019 = vsub.s32 %v4016, %v4018
  %v4020 = vrot.slane %v4012, %v4019
  %4021 = vset.pattern.permute.xlu0 2
  %4022 = vperm.xlu0 %4021, %v825
  %v4023 = vpop.permute.xlu0 %4022
  %v4026 = vunpack.c.l.s4 839922192
  %v4027 = vunpack.c.0.s8 %v4026
  %v4028 = vlaneseq
  %v4029 = vshrl.u32 %v4028, 7
  %v4030 = vsub.s32 %v4027, %v4029
  %v4031 = vrot.slane %v4023, %v4030
  %4032 = vset.pattern.permute.xlu0 2
  %4033 = vperm.xlu0 %4032, %v826
  %v4034 = vpop.permute.xlu0 %4033
  %v4037 = vunpack.c.l.s4 839922192
  %v4038 = vunpack.c.0.s8 %v4037
  %v4039 = vlaneseq
  %v4040 = vshrl.u32 %v4039, 7
  %v4041 = vsub.s32 %v4038, %v4040
  %v4042 = vrot.slane %v4034, %v4041
  %4043 = vset.pattern.permute.xlu0 2
  %4044 = vperm.xlu0 %4043, %v827
  %v4045 = vpop.permute.xlu0 %4044
  %v4048 = vunpack.c.l.s4 839922192
  %v4049 = vunpack.c.0.s8 %v4048
  %v4050 = vlaneseq
  %v4051 = vshrl.u32 %v4050, 7
  %v4052 = vsub.s32 %v4049, %v4051
  %v4053 = vrot.slane %v4045, %v4052
  %4054 = vset.pattern.permute.xlu0 2
  %4055 = vperm.xlu0 %4054, %v828
  %v4056 = vpop.permute.xlu0 %4055
  %v4059 = vunpack.c.l.s4 839922192
  %v4060 = vunpack.c.0.s8 %v4059
  %v4061 = vlaneseq
  %v4062 = vshrl.u32 %v4061, 7
  %v4063 = vsub.s32 %v4060, %v4062
  %v4064 = vrot.slane %v4056, %v4063
  %4065 = vset.pattern.permute.xlu0 2
  %4066 = vperm.xlu0 %4065, %v829
  %v4067 = vpop.permute.xlu0 %4066
  %v4070 = vunpack.c.l.s4 839922192
  %v4071 = vunpack.c.0.s8 %v4070
  %v4072 = vlaneseq
  %v4073 = vshrl.u32 %v4072, 7
  %v4074 = vsub.s32 %v4071, %v4073
  %v4075 = vrot.slane %v4067, %v4074
  %4076 = vset.pattern.permute.xlu0 2
  %4077 = vperm.xlu0 %4076, %v830
  %v4078 = vpop.permute.xlu0 %4077
  %v4081 = vunpack.c.l.s4 839922192
  %v4082 = vunpack.c.0.s8 %v4081
  %v4083 = vlaneseq
  %v4084 = vshrl.u32 %v4083, 7
  %v4085 = vsub.s32 %v4082, %v4084
  %v4086 = vrot.slane %v4078, %v4085
  %4087 = vset.pattern.permute.xlu0 2
  %4088 = vperm.xlu0 %4087, %v831
  %v4089 = vpop.permute.xlu0 %4088
  %v4092 = vunpack.c.l.s4 839922192
  %v4093 = vunpack.c.0.s8 %v4092
  %v4094 = vlaneseq
  %v4095 = vshrl.u32 %v4094, 7
  %v4096 = vsub.s32 %v4093, %v4095
  %v4097 = vrot.slane %v4089, %v4096
  %4098 = vset.pattern.permute.xlu0 2
  %4099 = vperm.xlu0 %4098, %v832
  %v4100 = vpop.permute.xlu0 %4099
  %v4103 = vunpack.c.l.s4 839922192
  %v4104 = vunpack.c.0.s8 %v4103
  %v4105 = vlaneseq
  %v4106 = vshrl.u32 %v4105, 7
  %v4107 = vsub.s32 %v4104, %v4106
  %v4108 = vrot.slane %v4100, %v4107
  %4109 = vset.pattern.permute.xlu0 2
  %4110 = vperm.xlu0 %4109, %v833
  %v4111 = vpop.permute.xlu0 %4110
  %v4114 = vunpack.c.l.s4 839922192
  %v4115 = vunpack.c.0.s8 %v4114
  %v4116 = vlaneseq
  %v4117 = vshrl.u32 %v4116, 7
  %v4118 = vsub.s32 %v4115, %v4117
  %v4119 = vrot.slane %v4111, %v4118
  %4120 = vset.pattern.permute.xlu0 2
  %4121 = vperm.xlu0 %4120, %v834
  %v4122 = vpop.permute.xlu0 %4121
  %v4125 = vunpack.c.l.s4 839922192
  %v4126 = vunpack.c.0.s8 %v4125
  %v4127 = vlaneseq
  %v4128 = vshrl.u32 %v4127, 7
  %v4129 = vsub.s32 %v4126, %v4128
  %v4130 = vrot.slane %v4122, %v4129
  %4131 = vset.pattern.permute.xlu0 2
  %4132 = vperm.xlu0 %4131, %v835
  %v4133 = vpop.permute.xlu0 %4132
  %v4136 = vunpack.c.l.s4 839922192
  %v4137 = vunpack.c.0.s8 %v4136
  %v4138 = vlaneseq
  %v4139 = vshrl.u32 %v4138, 7
  %v4140 = vsub.s32 %v4137, %v4139
  %v4141 = vrot.slane %v4133, %v4140
  %4142 = vset.pattern.permute.xlu0 2
  %4143 = vperm.xlu0 %4142, %v836
  %v4144 = vpop.permute.xlu0 %4143
  %v4147 = vunpack.c.l.s4 839922192
  %v4148 = vunpack.c.0.s8 %v4147
  %v4149 = vlaneseq
  %v4150 = vshrl.u32 %v4149, 7
  %v4151 = vsub.s32 %v4148, %v4150
  %v4152 = vrot.slane %v4144, %v4151
  %4153 = vset.pattern.permute.xlu0 2
  %4154 = vperm.xlu0 %4153, %v837
  %v4155 = vpop.permute.xlu0 %4154
  %v4158 = vunpack.c.l.s4 839922192
  %v4159 = vunpack.c.0.s8 %v4158
  %v4160 = vlaneseq
  %v4161 = vshrl.u32 %v4160, 7
  %v4162 = vsub.s32 %v4159, %v4161
  %v4163 = vrot.slane %v4155, %v4162
  %4164 = vset.pattern.permute.xlu0 2
  %4165 = vperm.xlu0 %4164, %v838
  %v4166 = vpop.permute.xlu0 %4165
  %v4169 = vunpack.c.l.s4 839922192
  %v4170 = vunpack.c.0.s8 %v4169
  %v4171 = vlaneseq
  %v4172 = vshrl.u32 %v4171, 7
  %v4173 = vsub.s32 %v4170, %v4172
  %v4174 = vrot.slane %v4166, %v4173
  %4175 = vset.pattern.permute.xlu0 2
  %4176 = vperm.xlu0 %4175, %v839
  %v4177 = vpop.permute.xlu0 %4176
  %v4180 = vunpack.c.l.s4 839922192
  %v4181 = vunpack.c.0.s8 %v4180
  %v4182 = vlaneseq
  %v4183 = vshrl.u32 %v4182, 7
  %v4184 = vsub.s32 %v4181, %v4183
  %v4185 = vrot.slane %v4177, %v4184
  %4186 = vset.pattern.permute.xlu0 2
  %4187 = vperm.xlu0 %4186, %v840
  %v4188 = vpop.permute.xlu0 %4187
  %v4191 = vunpack.c.l.s4 839922192
  %v4192 = vunpack.c.0.s8 %v4191
  %v4193 = vlaneseq
  %v4194 = vshrl.u32 %v4193, 7
  %v4195 = vsub.s32 %v4192, %v4194
  %v4196 = vrot.slane %v4188, %v4195
  %4197 = vset.pattern.permute.xlu0 2
  %4198 = vperm.xlu0 %4197, %v841
  %v4199 = vpop.permute.xlu0 %4198
  %v4202 = vunpack.c.l.s4 839922192
  %v4203 = vunpack.c.0.s8 %v4202
  %v4204 = vlaneseq
  %v4205 = vshrl.u32 %v4204, 7
  %v4206 = vsub.s32 %v4203, %v4205
  %v4207 = vrot.slane %v4199, %v4206
  %4208 = vset.pattern.permute.xlu0 2
  %4209 = vperm.xlu0 %4208, %v842
  %v4210 = vpop.permute.xlu0 %4209
  %v4213 = vunpack.c.l.s4 839922192
  %v4214 = vunpack.c.0.s8 %v4213
  %v4215 = vlaneseq
  %v4216 = vshrl.u32 %v4215, 7
  %v4217 = vsub.s32 %v4214, %v4216
  %v4218 = vrot.slane %v4210, %v4217
  %4219 = vset.pattern.permute.xlu0 2
  %4220 = vperm.xlu0 %4219, %v843
  %v4221 = vpop.permute.xlu0 %4220
  %v4224 = vunpack.c.l.s4 839922192
  %v4225 = vunpack.c.0.s8 %v4224
  %v4226 = vlaneseq
  %v4227 = vshrl.u32 %v4226, 7
  %v4228 = vsub.s32 %v4225, %v4227
  %v4229 = vrot.slane %v4221, %v4228
  %4230 = vset.pattern.permute.xlu0 2
  %4231 = vperm.xlu0 %4230, %v844
  %v4232 = vpop.permute.xlu0 %4231
  %v4235 = vunpack.c.l.s4 839922192
  %v4236 = vunpack.c.0.s8 %v4235
  %v4237 = vlaneseq
  %v4238 = vshrl.u32 %v4237, 7
  %v4239 = vsub.s32 %v4236, %v4238
  %v4240 = vrot.slane %v4232, %v4239
  %4241 = vset.pattern.permute.xlu0 2
  %4242 = vperm.xlu0 %4241, %v845
  %v4243 = vpop.permute.xlu0 %4242
  %v4246 = vunpack.c.l.s4 839922192
  %v4247 = vunpack.c.0.s8 %v4246
  %v4248 = vlaneseq
  %v4249 = vshrl.u32 %v4248, 7
  %v4250 = vsub.s32 %v4247, %v4249
  %v4251 = vrot.slane %v4243, %v4250
  %4252 = vset.pattern.permute.xlu0 2
  %4253 = vperm.xlu0 %4252, %v846
  %v4254 = vpop.permute.xlu0 %4253
  %v4257 = vunpack.c.l.s4 839922192
  %v4258 = vunpack.c.0.s8 %v4257
  %v4259 = vlaneseq
  %v4260 = vshrl.u32 %v4259, 7
  %v4261 = vsub.s32 %v4258, %v4260
  %v4262 = vrot.slane %v4254, %v4261
  %4263 = vset.pattern.permute.xlu0 2
  %4264 = vperm.xlu0 %4263, %v847
  %v4265 = vpop.permute.xlu0 %4264
  %v4268 = vunpack.c.l.s4 839922192
  %v4269 = vunpack.c.0.s8 %v4268
  %v4270 = vlaneseq
  %v4271 = vshrl.u32 %v4270, 7
  %v4272 = vsub.s32 %v4269, %v4271
  %v4273 = vrot.slane %v4265, %v4272
  %4274 = vset.pattern.permute.xlu0 2
  %4275 = vperm.xlu0 %4274, %v848
  %v4276 = vpop.permute.xlu0 %4275
  %v4279 = vunpack.c.l.s4 839922192
  %v4280 = vunpack.c.0.s8 %v4279
  %v4281 = vlaneseq
  %v4282 = vshrl.u32 %v4281, 7
  %v4283 = vsub.s32 %v4280, %v4282
  %v4284 = vrot.slane %v4276, %v4283
  %4285 = vset.pattern.permute.xlu0 2
  %4286 = vperm.xlu0 %4285, %v849
  %v4287 = vpop.permute.xlu0 %4286
  %v4290 = vunpack.c.l.s4 839922192
  %v4291 = vunpack.c.0.s8 %v4290
  %v4292 = vlaneseq
  %v4293 = vshrl.u32 %v4292, 7
  %v4294 = vsub.s32 %v4291, %v4293
  %v4295 = vrot.slane %v4287, %v4294
  %4296 = vset.pattern.permute.xlu0 2
  %4297 = vperm.xlu0 %4296, %v850
  %v4298 = vpop.permute.xlu0 %4297
  %v4301 = vunpack.c.l.s4 839922192
  %v4302 = vunpack.c.0.s8 %v4301
  %v4303 = vlaneseq
  %v4304 = vshrl.u32 %v4303, 7
  %v4305 = vsub.s32 %v4302, %v4304
  %v4306 = vrot.slane %v4298, %v4305
  %4307 = vset.pattern.permute.xlu0 2
  %4308 = vperm.xlu0 %4307, %v851
  %v4309 = vpop.permute.xlu0 %4308
  %v4312 = vunpack.c.l.s4 839922192
  %v4313 = vunpack.c.0.s8 %v4312
  %v4314 = vlaneseq
  %v4315 = vshrl.u32 %v4314, 7
  %v4316 = vsub.s32 %v4313, %v4315
  %v4317 = vrot.slane %v4309, %v4316
  %v4382 = vunpack.c.l.b16 %v3624
  %v4383 = vunpack.c.l.b16 %v3635
  %v4384 = vunpack.c.l.b16 %v3646
  %v4385 = vunpack.c.l.b16 %v3657
  %v4386 = vunpack.c.l.b16 %v3668
  %v4387 = vunpack.c.l.b16 %v3679
  %v4388 = vunpack.c.l.b16 %v3690
  %v4389 = vunpack.c.l.b16 %v3701
  %v4390 = vunpack.c.l.b16 %v3712
  %v4391 = vunpack.c.l.b16 %v3723
  %v4392 = vunpack.c.l.b16 %v3734
  %v4393 = vunpack.c.l.b16 %v3745
  %v4394 = vunpack.c.l.b16 %v3756
  %v4395 = vunpack.c.l.b16 %v3767
  %v4396 = vunpack.c.l.b16 %v3778
  %v4397 = vunpack.c.l.b16 %v3789
  %v4398 = vunpack.c.l.b16 %v3800
  %v4399 = vunpack.c.l.b16 %v3811
  %v4400 = vunpack.c.l.b16 %v3822
  %v4401 = vunpack.c.l.b16 %v3833
  %v4402 = vunpack.c.l.b16 %v3844
  %v4403 = vunpack.c.l.b16 %v3855
  %v4404 = vunpack.c.l.b16 %v3866
  %v4405 = vunpack.c.l.b16 %v3877
  %v4406 = vunpack.c.l.b16 %v3888
  %v4407 = vunpack.c.l.b16 %v3899
  %v4408 = vunpack.c.l.b16 %v3910
  %v4409 = vunpack.c.l.b16 %v3921
  %v4410 = vunpack.c.l.b16 %v3932
  %v4411 = vunpack.c.l.b16 %v3943
  %v4412 = vunpack.c.l.b16 %v3954
  %v4413 = vunpack.c.l.b16 %v3965
  %v4414 = vunpack.c.l.b16 %v3976
  %v4415 = vunpack.c.l.b16 %v3987
  %v4416 = vunpack.c.l.b16 %v3998
  %v4417 = vunpack.c.l.b16 %v4009
  %v4418 = vunpack.c.l.b16 %v4020
  %v4419 = vunpack.c.l.b16 %v4031
  %v4420 = vunpack.c.l.b16 %v4042
  %v4421 = vunpack.c.l.b16 %v4053
  %v4422 = vunpack.c.l.b16 %v4064
  %v4423 = vunpack.c.l.b16 %v4075
  %v4424 = vunpack.c.l.b16 %v4086
  %v4425 = vunpack.c.l.b16 %v4097
  %v4426 = vunpack.c.l.b16 %v4108
  %v4427 = vunpack.c.l.b16 %v4119
  %v4428 = vunpack.c.l.b16 %v4130
  %v4429 = vunpack.c.l.b16 %v4141
  %v4430 = vunpack.c.l.b16 %v4152
  %v4431 = vunpack.c.l.b16 %v4163
  %v4432 = vunpack.c.l.b16 %v4174
  %v4433 = vunpack.c.l.b16 %v4185
  %v4434 = vunpack.c.l.b16 %v4196
  %v4435 = vunpack.c.l.b16 %v4207
  %v4436 = vunpack.c.l.b16 %v4218
  %v4437 = vunpack.c.l.b16 %v4229
  %v4438 = vunpack.c.l.b16 %v4240
  %v4439 = vunpack.c.l.b16 %v4251
  %v4440 = vunpack.c.l.b16 %v4262
  %v4441 = vunpack.c.l.b16 %v4273
  %v4442 = vunpack.c.l.b16 %v4284
  %v4443 = vunpack.c.l.b16 %v4295
  %v4444 = vunpack.c.l.b16 %v4306
  %v4445 = vunpack.c.l.b16 %v4317
  %v4446 = vpack.c.b16 %v4383, %v4382
  %v4447 = vpack.c.b16 %v4385, %v4384
  %v4448 = vpack.c.b16 %v4387, %v4386
  %v4449 = vpack.c.b16 %v4389, %v4388
  %v4450 = vpack.c.b16 %v4391, %v4390
  %v4451 = vpack.c.b16 %v4393, %v4392
  %v4452 = vpack.c.b16 %v4395, %v4394
  %v4453 = vpack.c.b16 %v4397, %v4396
  %v4454 = vpack.c.b16 %v4399, %v4398
  %v4455 = vpack.c.b16 %v4401, %v4400
  %v4456 = vpack.c.b16 %v4403, %v4402
  %v4457 = vpack.c.b16 %v4405, %v4404
  %v4458 = vpack.c.b16 %v4407, %v4406
  %v4459 = vpack.c.b16 %v4409, %v4408
  %v4460 = vpack.c.b16 %v4411, %v4410
  %v4461 = vpack.c.b16 %v4413, %v4412
  %v4462 = vpack.c.b16 %v4415, %v4414
  %v4463 = vpack.c.b16 %v4417, %v4416
  %v4464 = vpack.c.b16 %v4419, %v4418
  %v4465 = vpack.c.b16 %v4421, %v4420
  %v4466 = vpack.c.b16 %v4423, %v4422
  %v4467 = vpack.c.b16 %v4425, %v4424
  %v4468 = vpack.c.b16 %v4427, %v4426
  %v4469 = vpack.c.b16 %v4429, %v4428
  %v4470 = vpack.c.b16 %v4431, %v4430
  %v4471 = vpack.c.b16 %v4433, %v4432
  %v4472 = vpack.c.b16 %v4435, %v4434
  %v4473 = vpack.c.b16 %v4437, %v4436
  %v4474 = vpack.c.b16 %v4439, %v4438
  %v4475 = vpack.c.b16 %v4441, %v4440
  %v4476 = vpack.c.b16 %v4443, %v4442
  %v4477 = vpack.c.b16 %v4445, %v4444
  %v4479 = vshrl.u32 %v4446, 16
  %v4481 = vrot.slane %v4479, 7
  %v4482 = vshll.u32 %v4446, 16
  %v4484 = vor.u32 %v4481, %v4482
  %v4486 = vshrl.u32 %v4447, 16
  %v4488 = vrot.slane %v4486, 7
  %v4489 = vshll.u32 %v4447, 16
  %v4491 = vor.u32 %v4488, %v4489
  %v4492 = vsel %vm2135, %v4481, %v4491
  %v4494 = vshrl.u32 %v4448, 16
  %v4496 = vrot.slane %v4494, 7
  %v4497 = vshll.u32 %v4448, 16
  %v4499 = vor.u32 %v4496, %v4497
  %v4500 = vsel %vm2135, %v4488, %v4499
  %v4502 = vshrl.u32 %v4449, 16
  %v4504 = vrot.slane %v4502, 7
  %v4505 = vshll.u32 %v4449, 16
  %v4507 = vor.u32 %v4504, %v4505
  %v4508 = vsel %vm2135, %v4496, %v4507
  %v4510 = vshrl.u32 %v4450, 16
  %v4512 = vrot.slane %v4510, 7
  %v4513 = vshll.u32 %v4450, 16
  %v4515 = vor.u32 %v4512, %v4513
  %v4516 = vsel %vm2135, %v4504, %v4515
  %v4518 = vshrl.u32 %v4451, 16
  %v4520 = vrot.slane %v4518, 7
  %v4521 = vshll.u32 %v4451, 16
  %v4523 = vor.u32 %v4520, %v4521
  %v4524 = vsel %vm2135, %v4512, %v4523
  %v4526 = vshrl.u32 %v4452, 16
  %v4528 = vrot.slane %v4526, 7
  %v4529 = vshll.u32 %v4452, 16
  %v4531 = vor.u32 %v4528, %v4529
  %v4532 = vsel %vm2135, %v4520, %v4531
  %v4534 = vshrl.u32 %v4453, 16
  %v4536 = vrot.slane %v4534, 7
  %v4537 = vshll.u32 %v4453, 16
  %v4539 = vor.u32 %v4536, %v4537
  %v4540 = vsel %vm2135, %v4528, %v4539
  %v4542 = vshrl.u32 %v4454, 16
  %v4544 = vrot.slane %v4542, 7
  %v4545 = vshll.u32 %v4454, 16
  %v4547 = vor.u32 %v4544, %v4545
  %v4548 = vsel %vm2135, %v4536, %v4547
  %v4550 = vshrl.u32 %v4455, 16
  %v4552 = vrot.slane %v4550, 7
  %v4553 = vshll.u32 %v4455, 16
  %v4555 = vor.u32 %v4552, %v4553
  %v4556 = vsel %vm2135, %v4544, %v4555
  %v4558 = vshrl.u32 %v4456, 16
  %v4560 = vrot.slane %v4558, 7
  %v4561 = vshll.u32 %v4456, 16
  %v4563 = vor.u32 %v4560, %v4561
  %v4564 = vsel %vm2135, %v4552, %v4563
  %v4566 = vshrl.u32 %v4457, 16
  %v4568 = vrot.slane %v4566, 7
  %v4569 = vshll.u32 %v4457, 16
  %v4571 = vor.u32 %v4568, %v4569
  %v4572 = vsel %vm2135, %v4560, %v4571
  %v4574 = vshrl.u32 %v4458, 16
  %v4576 = vrot.slane %v4574, 7
  %v4577 = vshll.u32 %v4458, 16
  %v4579 = vor.u32 %v4576, %v4577
  %v4580 = vsel %vm2135, %v4568, %v4579
  %v4582 = vshrl.u32 %v4459, 16
  %v4584 = vrot.slane %v4582, 7
  %v4585 = vshll.u32 %v4459, 16
  %v4587 = vor.u32 %v4584, %v4585
  %v4588 = vsel %vm2135, %v4576, %v4587
  %v4590 = vshrl.u32 %v4460, 16
  %v4592 = vrot.slane %v4590, 7
  %v4593 = vshll.u32 %v4460, 16
  %v4595 = vor.u32 %v4592, %v4593
  %v4596 = vsel %vm2135, %v4584, %v4595
  %v4598 = vshrl.u32 %v4461, 16
  %v4600 = vrot.slane %v4598, 7
  %v4601 = vshll.u32 %v4461, 16
  %v4603 = vor.u32 %v4600, %v4601
  %v4604 = vsel %vm2135, %v4592, %v4603
  %v4606 = vshrl.u32 %v4462, 16
  %v4608 = vrot.slane %v4606, 7
  %v4609 = vshll.u32 %v4462, 16
  %v4611 = vor.u32 %v4608, %v4609
  %v4612 = vsel %vm2135, %v4600, %v4611
  %v4614 = vshrl.u32 %v4463, 16
  %v4616 = vrot.slane %v4614, 7
  %v4617 = vshll.u32 %v4463, 16
  %v4619 = vor.u32 %v4616, %v4617
  %v4620 = vsel %vm2135, %v4608, %v4619
  %v4622 = vshrl.u32 %v4464, 16
  %v4624 = vrot.slane %v4622, 7
  %v4625 = vshll.u32 %v4464, 16
  %v4627 = vor.u32 %v4624, %v4625
  %v4628 = vsel %vm2135, %v4616, %v4627
  %v4630 = vshrl.u32 %v4465, 16
  %v4632 = vrot.slane %v4630, 7
  %v4633 = vshll.u32 %v4465, 16
  %v4635 = vor.u32 %v4632, %v4633
  %v4636 = vsel %vm2135, %v4624, %v4635
  %v4638 = vshrl.u32 %v4466, 16
  %v4640 = vrot.slane %v4638, 7
  %v4641 = vshll.u32 %v4466, 16
  %v4643 = vor.u32 %v4640, %v4641
  %v4644 = vsel %vm2135, %v4632, %v4643
  %v4646 = vshrl.u32 %v4467, 16
  %v4648 = vrot.slane %v4646, 7
  %v4649 = vshll.u32 %v4467, 16
  %v4651 = vor.u32 %v4648, %v4649
  %v4652 = vsel %vm2135, %v4640, %v4651
  %v4654 = vshrl.u32 %v4468, 16
  %v4656 = vrot.slane %v4654, 7
  %v4657 = vshll.u32 %v4468, 16
  %v4659 = vor.u32 %v4656, %v4657
  %v4660 = vsel %vm2135, %v4648, %v4659
  %v4662 = vshrl.u32 %v4469, 16
  %v4664 = vrot.slane %v4662, 7
  %v4665 = vshll.u32 %v4469, 16
  %v4667 = vor.u32 %v4664, %v4665
  %v4668 = vsel %vm2135, %v4656, %v4667
  %v4670 = vshrl.u32 %v4470, 16
  %v4672 = vrot.slane %v4670, 7
  %v4673 = vshll.u32 %v4470, 16
  %v4675 = vor.u32 %v4672, %v4673
  %v4676 = vsel %vm2135, %v4664, %v4675
  %v4678 = vshrl.u32 %v4471, 16
  %v4680 = vrot.slane %v4678, 7
  %v4681 = vshll.u32 %v4471, 16
  %v4683 = vor.u32 %v4680, %v4681
  %v4684 = vsel %vm2135, %v4672, %v4683
  %v4686 = vshrl.u32 %v4472, 16
  %v4688 = vrot.slane %v4686, 7
  %v4689 = vshll.u32 %v4472, 16
  %v4691 = vor.u32 %v4688, %v4689
  %v4692 = vsel %vm2135, %v4680, %v4691
  %v4694 = vshrl.u32 %v4473, 16
  %v4696 = vrot.slane %v4694, 7
  %v4697 = vshll.u32 %v4473, 16
  %v4699 = vor.u32 %v4696, %v4697
  %v4700 = vsel %vm2135, %v4688, %v4699
  %v4702 = vshrl.u32 %v4474, 16
  %v4704 = vrot.slane %v4702, 7
  %v4705 = vshll.u32 %v4474, 16
  %v4707 = vor.u32 %v4704, %v4705
  %v4708 = vsel %vm2135, %v4696, %v4707
  %v4710 = vshrl.u32 %v4475, 16
  %v4712 = vrot.slane %v4710, 7
  %v4713 = vshll.u32 %v4475, 16
  %v4715 = vor.u32 %v4712, %v4713
  %v4716 = vsel %vm2135, %v4704, %v4715
  %v4718 = vshrl.u32 %v4476, 16
  %v4720 = vrot.slane %v4718, 7
  %v4721 = vshll.u32 %v4476, 16
  %v4723 = vor.u32 %v4720, %v4721
  %v4724 = vsel %vm2135, %v4712, %v4723
  %v4726 = vshrl.u32 %v4477, 16
  %v4728 = vrot.slane %v4726, 7
  %v4729 = vshll.u32 %v4477, 16
  %v4731 = vor.u32 %v4728, %v4729
  %v4732 = vsel %vm2135, %v4720, %v4731
  %v4766 = vmul.bf16 %v3581, %v4484
  %v4767 = vmul.bf16 %v3582, %v4492
  %v4768 = vmul.bf16 %v3583, %v4500
  %v4769 = vmul.bf16 %v3584, %v4508
  %v4770 = vmul.bf16 %v3585, %v4516
  %v4771 = vmul.bf16 %v3586, %v4524
  %v4772 = vmul.bf16 %v3587, %v4532
  %v4773 = vmul.bf16 %v3588, %v4540
  %v4774 = vmul.bf16 %v3589, %v4548
  %v4775 = vmul.bf16 %v3590, %v4556
  %v4776 = vmul.bf16 %v3591, %v4564
  %v4777 = vmul.bf16 %v3592, %v4572
  %v4778 = vmul.bf16 %v3593, %v4580
  %v4779 = vmul.bf16 %v3594, %v4588
  %v4780 = vmul.bf16 %v3595, %v4596
  %v4781 = vmul.bf16 %v3596, %v4604
  %v4782 = vmul.bf16 %v3597, %v4612
  %v4783 = vmul.bf16 %v3598, %v4620
  %v4784 = vmul.bf16 %v3599, %v4628
  %v4785 = vmul.bf16 %v3600, %v4636
  %v4786 = vmul.bf16 %v3601, %v4644
  %v4787 = vmul.bf16 %v3602, %v4652
  %v4788 = vmul.bf16 %v3603, %v4660
  %v4789 = vmul.bf16 %v3604, %v4668
  %v4790 = vmul.bf16 %v3605, %v4676
  %v4791 = vmul.bf16 %v3606, %v4684
  %v4792 = vmul.bf16 %v3607, %v4692
  %v4793 = vmul.bf16 %v3608, %v4700
  %v4794 = vmul.bf16 %v3609, %v4708
  %v4795 = vmul.bf16 %v3610, %v4716
  %v4796 = vmul.bf16 %v3611, %v4724
  %v4797 = vmul.bf16 %v3612, %v4732
  %v4798 = vmul.bf16 %v3613, %v4728
  %v4800 = vshrl.u32 %v4766, 16
  %v4802 = vshll.u32 %v4766, 16
  %v4804 = vrot.slane %v4802, 1
  %v4805 = vor.u32 %v4800, %v4804
  %v4807 = vshll.u32 %v4767, 16
  %v4809 = vrot.slane %v4807, 1
  %v4810 = vsel %vm1813, %v4805, %v4809
  %v4811 = vshrl.u32 %v4767, 16
  %v4813 = vor.u32 %v4811, %v4809
  %v4815 = vshll.u32 %v4768, 16
  %v4817 = vrot.slane %v4815, 1
  %v4818 = vsel %vm1813, %v4813, %v4817
  %v4819 = vshrl.u32 %v4768, 16
  %v4821 = vor.u32 %v4819, %v4817
  %v4823 = vshll.u32 %v4769, 16
  %v4825 = vrot.slane %v4823, 1
  %v4826 = vsel %vm1813, %v4821, %v4825
  %v4827 = vshrl.u32 %v4769, 16
  %v4829 = vor.u32 %v4827, %v4825
  %v4831 = vshll.u32 %v4770, 16
  %v4833 = vrot.slane %v4831, 1
  %v4834 = vsel %vm1813, %v4829, %v4833
  %v4835 = vshrl.u32 %v4770, 16
  %v4837 = vor.u32 %v4835, %v4833
  %v4839 = vshll.u32 %v4771, 16
  %v4841 = vrot.slane %v4839, 1
  %v4842 = vsel %vm1813, %v4837, %v4841
  %v4843 = vshrl.u32 %v4771, 16
  %v4845 = vor.u32 %v4843, %v4841
  %v4847 = vshll.u32 %v4772, 16
  %v4849 = vrot.slane %v4847, 1
  %v4850 = vsel %vm1813, %v4845, %v4849
  %v4851 = vshrl.u32 %v4772, 16
  %v4853 = vor.u32 %v4851, %v4849
  %v4855 = vshll.u32 %v4773, 16
  %v4857 = vrot.slane %v4855, 1
  %v4858 = vsel %vm1813, %v4853, %v4857
  %v4859 = vshrl.u32 %v4773, 16
  %v4861 = vor.u32 %v4859, %v4857
  %v4863 = vshll.u32 %v4774, 16
  %v4865 = vrot.slane %v4863, 1
  %v4866 = vsel %vm1813, %v4861, %v4865
  %v4867 = vshrl.u32 %v4774, 16
  %v4869 = vor.u32 %v4867, %v4865
  %v4871 = vshll.u32 %v4775, 16
  %v4873 = vrot.slane %v4871, 1
  %v4874 = vsel %vm1813, %v4869, %v4873
  %v4875 = vshrl.u32 %v4775, 16
  %v4877 = vor.u32 %v4875, %v4873
  %v4879 = vshll.u32 %v4776, 16
  %v4881 = vrot.slane %v4879, 1
  %v4882 = vsel %vm1813, %v4877, %v4881
  %v4883 = vshrl.u32 %v4776, 16
  %v4885 = vor.u32 %v4883, %v4881
  %v4887 = vshll.u32 %v4777, 16
  %v4889 = vrot.slane %v4887, 1
  %v4890 = vsel %vm1813, %v4885, %v4889
  %v4891 = vshrl.u32 %v4777, 16
  %v4893 = vor.u32 %v4891, %v4889
  %v4895 = vshll.u32 %v4778, 16
  %v4897 = vrot.slane %v4895, 1
  %v4898 = vsel %vm1813, %v4893, %v4897
  %v4899 = vshrl.u32 %v4778, 16
  %v4901 = vor.u32 %v4899, %v4897
  %v4903 = vshll.u32 %v4779, 16
  %v4905 = vrot.slane %v4903, 1
  %v4906 = vsel %vm1813, %v4901, %v4905
  %v4907 = vshrl.u32 %v4779, 16
  %v4909 = vor.u32 %v4907, %v4905
  %v4911 = vshll.u32 %v4780, 16
  %v4913 = vrot.slane %v4911, 1
  %v4914 = vsel %vm1813, %v4909, %v4913
  %v4915 = vshrl.u32 %v4780, 16
  %v4917 = vor.u32 %v4915, %v4913
  %v4919 = vshll.u32 %v4781, 16
  %v4921 = vrot.slane %v4919, 1
  %v4922 = vsel %vm1813, %v4917, %v4921
  %v4923 = vshrl.u32 %v4781, 16
  %v4925 = vor.u32 %v4923, %v4921
  %v4927 = vshll.u32 %v4782, 16
  %v4929 = vrot.slane %v4927, 1
  %v4930 = vsel %vm1813, %v4925, %v4929
  %v4931 = vshrl.u32 %v4782, 16
  %v4933 = vor.u32 %v4931, %v4929
  %v4935 = vshll.u32 %v4783, 16
  %v4937 = vrot.slane %v4935, 1
  %v4938 = vsel %vm1813, %v4933, %v4937
  %v4939 = vshrl.u32 %v4783, 16
  %v4941 = vor.u32 %v4939, %v4937
  %v4943 = vshll.u32 %v4784, 16
  %v4945 = vrot.slane %v4943, 1
  %v4946 = vsel %vm1813, %v4941, %v4945
  %v4947 = vshrl.u32 %v4784, 16
  %v4949 = vor.u32 %v4947, %v4945
  %v4951 = vshll.u32 %v4785, 16
  %v4953 = vrot.slane %v4951, 1
  %v4954 = vsel %vm1813, %v4949, %v4953
  %v4955 = vshrl.u32 %v4785, 16
  %v4957 = vor.u32 %v4955, %v4953
  %v4959 = vshll.u32 %v4786, 16
  %v4961 = vrot.slane %v4959, 1
  %v4962 = vsel %vm1813, %v4957, %v4961
  %v4963 = vshrl.u32 %v4786, 16
  %v4965 = vor.u32 %v4963, %v4961
  %v4967 = vshll.u32 %v4787, 16
  %v4969 = vrot.slane %v4967, 1
  %v4970 = vsel %vm1813, %v4965, %v4969
  %v4971 = vshrl.u32 %v4787, 16
  %v4973 = vor.u32 %v4971, %v4969
  %v4975 = vshll.u32 %v4788, 16
  %v4977 = vrot.slane %v4975, 1
  %v4978 = vsel %vm1813, %v4973, %v4977
  %v4979 = vshrl.u32 %v4788, 16
  %v4981 = vor.u32 %v4979, %v4977
  %v4983 = vshll.u32 %v4789, 16
  %v4985 = vrot.slane %v4983, 1
  %v4986 = vsel %vm1813, %v4981, %v4985
  %v4987 = vshrl.u32 %v4789, 16
  %v4989 = vor.u32 %v4987, %v4985
  %v4991 = vshll.u32 %v4790, 16
  %v4993 = vrot.slane %v4991, 1
  %v4994 = vsel %vm1813, %v4989, %v4993
  %v4995 = vshrl.u32 %v4790, 16
  %v4997 = vor.u32 %v4995, %v4993
  %v4999 = vshll.u32 %v4791, 16
  %v5001 = vrot.slane %v4999, 1
  %v5002 = vsel %vm1813, %v4997, %v5001
  %v5003 = vshrl.u32 %v4791, 16
  %v5005 = vor.u32 %v5003, %v5001
  %v5007 = vshll.u32 %v4792, 16
  %v5009 = vrot.slane %v5007, 1
  %v5010 = vsel %vm1813, %v5005, %v5009
  %v5011 = vshrl.u32 %v4792, 16
  %v5013 = vor.u32 %v5011, %v5009
  %v5015 = vshll.u32 %v4793, 16
  %v5017 = vrot.slane %v5015, 1
  %v5018 = vsel %vm1813, %v5013, %v5017
  %v5019 = vshrl.u32 %v4793, 16
  %v5021 = vor.u32 %v5019, %v5017
  %v5023 = vshll.u32 %v4794, 16
  %v5025 = vrot.slane %v5023, 1
  %v5026 = vsel %vm1813, %v5021, %v5025
  %v5027 = vshrl.u32 %v4794, 16
  %v5029 = vor.u32 %v5027, %v5025
  %v5031 = vshll.u32 %v4795, 16
  %v5033 = vrot.slane %v5031, 1
  %v5034 = vsel %vm1813, %v5029, %v5033
  %v5035 = vshrl.u32 %v4795, 16
  %v5037 = vor.u32 %v5035, %v5033
  %v5039 = vshll.u32 %v4796, 16
  %v5041 = vrot.slane %v5039, 1
  %v5042 = vsel %vm1813, %v5037, %v5041
  %v5043 = vshrl.u32 %v4796, 16
  %v5045 = vor.u32 %v5043, %v5041
  %v5047 = vshll.u32 %v4797, 16
  %v5049 = vrot.slane %v5047, 1
  %v5050 = vsel %vm1813, %v5045, %v5049
  %v5051 = vshrl.u32 %v4797, 16
  %v5053 = vor.u32 %v5051, %v5049
  %v5055 = vshll.u32 %v4798, 16
  %v5057 = vrot.slane %v5055, 1
  %v5058 = vsel %vm1813, %v5053, %v5057
  %5059 = vrot.lane.b32.xlu0 %v4810, 8
  %v5060 = vpop.permute.xlu0 %5059
  %5061 = vrot.lane.b32.xlu0 %v4818, 8
  %v5062 = vpop.permute.xlu0 %5061
  %5063 = vrot.lane.b32.xlu0 %v4826, 8
  %v5064 = vpop.permute.xlu0 %5063
  %5065 = vrot.lane.b32.xlu0 %v4834, 8
  %v5066 = vpop.permute.xlu0 %5065
  %5067 = vrot.lane.b32.xlu0 %v4842, 8
  %v5068 = vpop.permute.xlu0 %5067
  %5069 = vrot.lane.b32.xlu0 %v4850, 8
  %v5070 = vpop.permute.xlu0 %5069
  %5071 = vrot.lane.b32.xlu0 %v4858, 8
  %v5072 = vpop.permute.xlu0 %5071
  %5073 = vrot.lane.b32.xlu0 %v4866, 8
  %v5074 = vpop.permute.xlu0 %5073
  %5075 = vrot.lane.b32.xlu0 %v4874, 8
  %v5076 = vpop.permute.xlu0 %5075
  %5077 = vrot.lane.b32.xlu0 %v4882, 8
  %v5078 = vpop.permute.xlu0 %5077
  %5079 = vrot.lane.b32.xlu0 %v4890, 8
  %v5080 = vpop.permute.xlu0 %5079
  %5081 = vrot.lane.b32.xlu0 %v4898, 8
  %v5082 = vpop.permute.xlu0 %5081
  %5083 = vrot.lane.b32.xlu0 %v4906, 8
  %v5084 = vpop.permute.xlu0 %5083
  %5085 = vrot.lane.b32.xlu0 %v4914, 8
  %v5086 = vpop.permute.xlu0 %5085
  %5087 = vrot.lane.b32.xlu0 %v4922, 8
  %v5088 = vpop.permute.xlu0 %5087
  %5089 = vrot.lane.b32.xlu0 %v4930, 8
  %v5090 = vpop.permute.xlu0 %5089
  %5091 = vrot.lane.b32.xlu0 %v4938, 8
  %v5092 = vpop.permute.xlu0 %5091
  %5093 = vrot.lane.b32.xlu0 %v4946, 8
  %v5094 = vpop.permute.xlu0 %5093
  %5095 = vrot.lane.b32.xlu0 %v4954, 8
  %v5096 = vpop.permute.xlu0 %5095
  %5097 = vrot.lane.b32.xlu0 %v4962, 8
  %v5098 = vpop.permute.xlu0 %5097
  %5099 = vrot.lane.b32.xlu0 %v4970, 8
  %v5100 = vpop.permute.xlu0 %5099
  %5101 = vrot.lane.b32.xlu0 %v4978, 8
  %v5102 = vpop.permute.xlu0 %5101
  %5103 = vrot.lane.b32.xlu0 %v4986, 8
  %v5104 = vpop.permute.xlu0 %5103
  %5105 = vrot.lane.b32.xlu0 %v4994, 8
  %v5106 = vpop.permute.xlu0 %5105
  %5107 = vrot.lane.b32.xlu0 %v5002, 8
  %v5108 = vpop.permute.xlu0 %5107
  %5109 = vrot.lane.b32.xlu0 %v5010, 8
  %v5110 = vpop.permute.xlu0 %5109
  %5111 = vrot.lane.b32.xlu0 %v5018, 8
  %v5112 = vpop.permute.xlu0 %5111
  %5113 = vrot.lane.b32.xlu0 %v5026, 8
  %v5114 = vpop.permute.xlu0 %5113
  %5115 = vrot.lane.b32.xlu0 %v5034, 8
  %v5116 = vpop.permute.xlu0 %5115
  %5117 = vrot.lane.b32.xlu0 %v5042, 8
  %v5118 = vpop.permute.xlu0 %5117
  %5119 = vrot.lane.b32.xlu0 %v5050, 8
  %v5120 = vpop.permute.xlu0 %5119
  %5121 = vrot.lane.b32.xlu0 %v5058, 8
  %v5122 = vpop.permute.xlu0 %5121
  %vm5155 = vcmask 97344
  %5156 = vst.msk [vmem:[#allocation3] sm:$0xff] %vm5155, %v5060
  %5157 = vst.msk [vmem:[#allocation3 + $0x8] sm:$0xff] %vm5155, %v5062
  %5158 = vst.msk [vmem:[#allocation3 + $0x10] sm:$0xff] %vm5155, %v5064
  %5159 = vst.msk [vmem:[#allocation3 + $0x18] sm:$0xff] %vm5155, %v5066
  %5160 = vst.msk [vmem:[#allocation3 + $0x20] sm:$0xff] %vm5155, %v5068
  %5161 = vst.msk [vmem:[#allocation3 + $0x28] sm:$0xff] %vm5155, %v5070
  %5162 = vst.msk [vmem:[#allocation3 + $0x30] sm:$0xff] %vm5155, %v5072
  %5163 = vst.msk [vmem:[#allocation3 + $0x38] sm:$0xff] %vm5155, %v5074
  %5164 = vst.msk [vmem:[#allocation3 + $0x40] sm:$0xff] %vm5155, %v5076
  %5165 = vst.msk [vmem:[#allocation3 + $0x48] sm:$0xff] %vm5155, %v5078
  %5166 = vst.msk [vmem:[#allocation3 + $0x50] sm:$0xff] %vm5155, %v5080
  %5167 = vst.msk [vmem:[#allocation3 + $0x58] sm:$0xff] %vm5155, %v5082
  %5168 = vst.msk [vmem:[#allocation3 + $0x60] sm:$0xff] %vm5155, %v5084
  %5169 = vst.msk [vmem:[#allocation3 + $0x68] sm:$0xff] %vm5155, %v5086
  %5170 = vst.msk [vmem:[#allocation3 + $0x70] sm:$0xff] %vm5155, %v5088
  %5171 = vst.msk [vmem:[#allocation3 + $0x78] sm:$0xff] %vm5155, %v5090
  %5172 = vst.msk [vmem:[#allocation3 + $0x80] sm:$0xff] %vm5155, %v5092
  %5173 = vst.msk [vmem:[#allocation3 + $0x88] sm:$0xff] %vm5155, %v5094
  %5174 = vst.msk [vmem:[#allocation3 + $0x90] sm:$0xff] %vm5155, %v5096
  %5175 = vst.msk [vmem:[#allocation3 + $0x98] sm:$0xff] %vm5155, %v5098
  %5176 = vst.msk [vmem:[#allocation3 + $0xa0] sm:$0xff] %vm5155, %v5100
  %5177 = vst.msk [vmem:[#allocation3 + $0xa8] sm:$0xff] %vm5155, %v5102
  %5178 = vst.msk [vmem:[#allocation3 + $0xb0] sm:$0xff] %vm5155, %v5104
  %5179 = vst.msk [vmem:[#allocation3 + $0xb8] sm:$0xff] %vm5155, %v5106
  %5180 = vst.msk [vmem:[#allocation3 + $0xc0] sm:$0xff] %vm5155, %v5108
  %5181 = vst.msk [vmem:[#allocation3 + $0xc8] sm:$0xff] %vm5155, %v5110
  %5182 = vst.msk [vmem:[#allocation3 + $0xd0] sm:$0xff] %vm5155, %v5112
  %5183 = vst.msk [vmem:[#allocation3 + $0xd8] sm:$0xff] %vm5155, %v5114
  %5184 = vst.msk [vmem:[#allocation3 + $0xe0] sm:$0xff] %vm5155, %v5116
  %5185 = vst.msk [vmem:[#allocation3 + $0xe8] sm:$0xff] %vm5155, %v5118
  %5186 = vst.msk [vmem:[#allocation3 + $0xf0] sm:$0xff] %vm5155, %v5120
  %5187 = vst.msk [vmem:[#allocation3 + $0xf8] sm:$0xff] %vm5155, %v5122
  %v5188 = vld [vmem:[#allocation2 + $0x8] sm:$0x80]
  %v5189 = vld [vmem:[#allocation2 + $0x10] sm:$0xff]
  %v5190 = vld [vmem:[#allocation2 + $0x18] sm:$0xff]
  %v5191 = vld [vmem:[#allocation2 + $0x20] sm:$0xff]
  %v5192 = vld [vmem:[#allocation2 + $0x28] sm:$0xff]
  %v5193 = vld [vmem:[#allocation2 + $0x30] sm:$0xff]
  %v5194 = vld [vmem:[#allocation2 + $0x38] sm:$0xff]
  %v5195 = vld [vmem:[#allocation2 + $0x40] sm:$0xff]
  %v5196 = vld [vmem:[#allocation2 + $0x48] sm:$0xff]
  %v5197 = vld [vmem:[#allocation2 + $0x50] sm:$0xff]
  %v5198 = vld [vmem:[#allocation2 + $0x58] sm:$0xff]
  %v5199 = vld [vmem:[#allocation2 + $0x60] sm:$0xff]
  %v5200 = vld [vmem:[#allocation2 + $0x68] sm:$0xff]
  %v5201 = vld [vmem:[#allocation2 + $0x70] sm:$0xff]
  %v5202 = vld [vmem:[#allocation2 + $0x78] sm:$0xff]
  %v5203 = vld [vmem:[#allocation2 + $0x80] sm:$0xff]
  %v5204 = vld [vmem:[#allocation2 + $0x88] sm:$0xff]
  %v5205 = vld [vmem:[#allocation2 + $0x90] sm:$0xff]
  %v5206 = vld [vmem:[#allocation2 + $0x98] sm:$0xff]
  %v5207 = vld [vmem:[#allocation2 + $0xa0] sm:$0xff]
  %v5208 = vld [vmem:[#allocation2 + $0xa8] sm:$0xff]
  %v5209 = vld [vmem:[#allocation2 + $0xb0] sm:$0xff]
  %v5210 = vld [vmem:[#allocation2 + $0xb8] sm:$0xff]
  %v5211 = vld [vmem:[#allocation2 + $0xc0] sm:$0xff]
  %v5212 = vld [vmem:[#allocation2 + $0xc8] sm:$0xff]
  %v5213 = vld [vmem:[#allocation2 + $0xd0] sm:$0xff]
  %v5214 = vld [vmem:[#allocation2 + $0xd8] sm:$0xff]
  %v5215 = vld [vmem:[#allocation2 + $0xe0] sm:$0xff]
  %v5216 = vld [vmem:[#allocation2 + $0xe8] sm:$0xff]
  %v5217 = vld [vmem:[#allocation2 + $0xf0] sm:$0xff]
  %v5218 = vld [vmem:[#allocation2 + $0xf8] sm:$0xff]
  %v5219 = vld [vmem:[#allocation2 + $0x100] sm:$0xff]
  %v5220 = vld [vmem:[#allocation2 + $0x108] sm:$0xff]
  %5221 = vset.pattern.permute.xlu0 3
  %5222 = vperm.xlu0 %5221, %v788
  %v5223 = vpop.permute.xlu0 %5222
  %v5226 = vunpack.c.l.s4 839922192
  %v5227 = vunpack.c.0.s8 %v5226
  %v5228 = vlaneseq
  %v5229 = vshrl.u32 %v5228, 7
  %v5230 = vsub.s32 %v5227, %v5229
  %v5231 = vrot.slane %v5223, %v5230
  %5232 = vset.pattern.permute.xlu0 3
  %5233 = vperm.xlu0 %5232, %v789
  %v5234 = vpop.permute.xlu0 %5233
  %v5237 = vunpack.c.l.s4 839922192
  %v5238 = vunpack.c.0.s8 %v5237
  %v5239 = vlaneseq
  %v5240 = vshrl.u32 %v5239, 7
  %v5241 = vsub.s32 %v5238, %v5240
  %v5242 = vrot.slane %v5234, %v5241
  %5243 = vset.pattern.permute.xlu0 3
  %5244 = vperm.xlu0 %5243, %v790
  %v5245 = vpop.permute.xlu0 %5244
  %v5248 = vunpack.c.l.s4 839922192
  %v5249 = vunpack.c.0.s8 %v5248
  %v5250 = vlaneseq
  %v5251 = vshrl.u32 %v5250, 7
  %v5252 = vsub.s32 %v5249, %v5251
  %v5253 = vrot.slane %v5245, %v5252
  %5254 = vset.pattern.permute.xlu0 3
  %5255 = vperm.xlu0 %5254, %v791
  %v5256 = vpop.permute.xlu0 %5255
  %v5259 = vunpack.c.l.s4 839922192
  %v5260 = vunpack.c.0.s8 %v5259
  %v5261 = vlaneseq
  %v5262 = vshrl.u32 %v5261, 7
  %v5263 = vsub.s32 %v5260, %v5262
  %v5264 = vrot.slane %v5256, %v5263
  %5265 = vset.pattern.permute.xlu0 3
  %5266 = vperm.xlu0 %5265, %v792
  %v5267 = vpop.permute.xlu0 %5266
  %v5270 = vunpack.c.l.s4 839922192
  %v5271 = vunpack.c.0.s8 %v5270
  %v5272 = vlaneseq
  %v5273 = vshrl.u32 %v5272, 7
  %v5274 = vsub.s32 %v5271, %v5273
  %v5275 = vrot.slane %v5267, %v5274
  %5276 = vset.pattern.permute.xlu0 3
  %5277 = vperm.xlu0 %5276, %v793
  %v5278 = vpop.permute.xlu0 %5277
  %v5281 = vunpack.c.l.s4 839922192
  %v5282 = vunpack.c.0.s8 %v5281
  %v5283 = vlaneseq
  %v5284 = vshrl.u32 %v5283, 7
  %v5285 = vsub.s32 %v5282, %v5284
  %v5286 = vrot.slane %v5278, %v5285
  %5287 = vset.pattern.permute.xlu0 3
  %5288 = vperm.xlu0 %5287, %v794
  %v5289 = vpop.permute.xlu0 %5288
  %v5292 = vunpack.c.l.s4 839922192
  %v5293 = vunpack.c.0.s8 %v5292
  %v5294 = vlaneseq
  %v5295 = vshrl.u32 %v5294, 7
  %v5296 = vsub.s32 %v5293, %v5295
  %v5297 = vrot.slane %v5289, %v5296
  %5298 = vset.pattern.permute.xlu0 3
  %5299 = vperm.xlu0 %5298, %v795
  %v5300 = vpop.permute.xlu0 %5299
  %v5303 = vunpack.c.l.s4 839922192
  %v5304 = vunpack.c.0.s8 %v5303
  %v5305 = vlaneseq
  %v5306 = vshrl.u32 %v5305, 7
  %v5307 = vsub.s32 %v5304, %v5306
  %v5308 = vrot.slane %v5300, %v5307
  %5309 = vset.pattern.permute.xlu0 3
  %5310 = vperm.xlu0 %5309, %v796
  %v5311 = vpop.permute.xlu0 %5310
  %v5314 = vunpack.c.l.s4 839922192
  %v5315 = vunpack.c.0.s8 %v5314
  %v5316 = vlaneseq
  %v5317 = vshrl.u32 %v5316, 7
  %v5318 = vsub.s32 %v5315, %v5317
  %v5319 = vrot.slane %v5311, %v5318
  %5320 = vset.pattern.permute.xlu0 3
  %5321 = vperm.xlu0 %5320, %v797
  %v5322 = vpop.permute.xlu0 %5321
  %v5325 = vunpack.c.l.s4 839922192
  %v5326 = vunpack.c.0.s8 %v5325
  %v5327 = vlaneseq
  %v5328 = vshrl.u32 %v5327, 7
  %v5329 = vsub.s32 %v5326, %v5328
  %v5330 = vrot.slane %v5322, %v5329
  %5331 = vset.pattern.permute.xlu0 3
  %5332 = vperm.xlu0 %5331, %v798
  %v5333 = vpop.permute.xlu0 %5332
  %v5336 = vunpack.c.l.s4 839922192
  %v5337 = vunpack.c.0.s8 %v5336
  %v5338 = vlaneseq
  %v5339 = vshrl.u32 %v5338, 7
  %v5340 = vsub.s32 %v5337, %v5339
  %v5341 = vrot.slane %v5333, %v5340
  %5342 = vset.pattern.permute.xlu0 3
  %5343 = vperm.xlu0 %5342, %v799
  %v5344 = vpop.permute.xlu0 %5343
  %v5347 = vunpack.c.l.s4 839922192
  %v5348 = vunpack.c.0.s8 %v5347
  %v5349 = vlaneseq
  %v5350 = vshrl.u32 %v5349, 7
  %v5351 = vsub.s32 %v5348, %v5350
  %v5352 = vrot.slane %v5344, %v5351
  %5353 = vset.pattern.permute.xlu0 3
  %5354 = vperm.xlu0 %5353, %v800
  %v5355 = vpop.permute.xlu0 %5354
  %v5358 = vunpack.c.l.s4 839922192
  %v5359 = vunpack.c.0.s8 %v5358
  %v5360 = vlaneseq
  %v5361 = vshrl.u32 %v5360, 7
  %v5362 = vsub.s32 %v5359, %v5361
  %v5363 = vrot.slane %v5355, %v5362
  %5364 = vset.pattern.permute.xlu0 3
  %5365 = vperm.xlu0 %5364, %v801
  %v5366 = vpop.permute.xlu0 %5365
  %v5369 = vunpack.c.l.s4 839922192
  %v5370 = vunpack.c.0.s8 %v5369
  %v5371 = vlaneseq
  %v5372 = vshrl.u32 %v5371, 7
  %v5373 = vsub.s32 %v5370, %v5372
  %v5374 = vrot.slane %v5366, %v5373
  %5375 = vset.pattern.permute.xlu0 3
  %5376 = vperm.xlu0 %5375, %v802
  %v5377 = vpop.permute.xlu0 %5376
  %v5380 = vunpack.c.l.s4 839922192
  %v5381 = vunpack.c.0.s8 %v5380
  %v5382 = vlaneseq
  %v5383 = vshrl.u32 %v5382, 7
  %v5384 = vsub.s32 %v5381, %v5383
  %v5385 = vrot.slane %v5377, %v5384
  %5386 = vset.pattern.permute.xlu0 3
  %5387 = vperm.xlu0 %5386, %v803
  %v5388 = vpop.permute.xlu0 %5387
  %v5391 = vunpack.c.l.s4 839922192
  %v5392 = vunpack.c.0.s8 %v5391
  %v5393 = vlaneseq
  %v5394 = vshrl.u32 %v5393, 7
  %v5395 = vsub.s32 %v5392, %v5394
  %v5396 = vrot.slane %v5388, %v5395
  %5397 = vset.pattern.permute.xlu0 3
  %5398 = vperm.xlu0 %5397, %v804
  %v5399 = vpop.permute.xlu0 %5398
  %v5402 = vunpack.c.l.s4 839922192
  %v5403 = vunpack.c.0.s8 %v5402
  %v5404 = vlaneseq
  %v5405 = vshrl.u32 %v5404, 7
  %v5406 = vsub.s32 %v5403, %v5405
  %v5407 = vrot.slane %v5399, %v5406
  %5408 = vset.pattern.permute.xlu0 3
  %5409 = vperm.xlu0 %5408, %v805
  %v5410 = vpop.permute.xlu0 %5409
  %v5413 = vunpack.c.l.s4 839922192
  %v5414 = vunpack.c.0.s8 %v5413
  %v5415 = vlaneseq
  %v5416 = vshrl.u32 %v5415, 7
  %v5417 = vsub.s32 %v5414, %v5416
  %v5418 = vrot.slane %v5410, %v5417
  %5419 = vset.pattern.permute.xlu0 3
  %5420 = vperm.xlu0 %5419, %v806
  %v5421 = vpop.permute.xlu0 %5420
  %v5424 = vunpack.c.l.s4 839922192
  %v5425 = vunpack.c.0.s8 %v5424
  %v5426 = vlaneseq
  %v5427 = vshrl.u32 %v5426, 7
  %v5428 = vsub.s32 %v5425, %v5427
  %v5429 = vrot.slane %v5421, %v5428
  %5430 = vset.pattern.permute.xlu0 3
  %5431 = vperm.xlu0 %5430, %v807
  %v5432 = vpop.permute.xlu0 %5431
  %v5435 = vunpack.c.l.s4 839922192
  %v5436 = vunpack.c.0.s8 %v5435
  %v5437 = vlaneseq
  %v5438 = vshrl.u32 %v5437, 7
  %v5439 = vsub.s32 %v5436, %v5438
  %v5440 = vrot.slane %v5432, %v5439
  %5441 = vset.pattern.permute.xlu0 3
  %5442 = vperm.xlu0 %5441, %v808
  %v5443 = vpop.permute.xlu0 %5442
  %v5446 = vunpack.c.l.s4 839922192
  %v5447 = vunpack.c.0.s8 %v5446
  %v5448 = vlaneseq
  %v5449 = vshrl.u32 %v5448, 7
  %v5450 = vsub.s32 %v5447, %v5449
  %v5451 = vrot.slane %v5443, %v5450
  %5452 = vset.pattern.permute.xlu0 3
  %5453 = vperm.xlu0 %5452, %v809
  %v5454 = vpop.permute.xlu0 %5453
  %v5457 = vunpack.c.l.s4 839922192
  %v5458 = vunpack.c.0.s8 %v5457
  %v5459 = vlaneseq
  %v5460 = vshrl.u32 %v5459, 7
  %v5461 = vsub.s32 %v5458, %v5460
  %v5462 = vrot.slane %v5454, %v5461
  %5463 = vset.pattern.permute.xlu0 3
  %5464 = vperm.xlu0 %5463, %v810
  %v5465 = vpop.permute.xlu0 %5464
  %v5468 = vunpack.c.l.s4 839922192
  %v5469 = vunpack.c.0.s8 %v5468
  %v5470 = vlaneseq
  %v5471 = vshrl.u32 %v5470, 7
  %v5472 = vsub.s32 %v5469, %v5471
  %v5473 = vrot.slane %v5465, %v5472
  %5474 = vset.pattern.permute.xlu0 3
  %5475 = vperm.xlu0 %5474, %v811
  %v5476 = vpop.permute.xlu0 %5475
  %v5479 = vunpack.c.l.s4 839922192
  %v5480 = vunpack.c.0.s8 %v5479
  %v5481 = vlaneseq
  %v5482 = vshrl.u32 %v5481, 7
  %v5483 = vsub.s32 %v5480, %v5482
  %v5484 = vrot.slane %v5476, %v5483
  %5485 = vset.pattern.permute.xlu0 3
  %5486 = vperm.xlu0 %5485, %v812
  %v5487 = vpop.permute.xlu0 %5486
  %v5490 = vunpack.c.l.s4 839922192
  %v5491 = vunpack.c.0.s8 %v5490
  %v5492 = vlaneseq
  %v5493 = vshrl.u32 %v5492, 7
  %v5494 = vsub.s32 %v5491, %v5493
  %v5495 = vrot.slane %v5487, %v5494
  %5496 = vset.pattern.permute.xlu0 3
  %5497 = vperm.xlu0 %5496, %v813
  %v5498 = vpop.permute.xlu0 %5497
  %v5501 = vunpack.c.l.s4 839922192
  %v5502 = vunpack.c.0.s8 %v5501
  %v5503 = vlaneseq
  %v5504 = vshrl.u32 %v5503, 7
  %v5505 = vsub.s32 %v5502, %v5504
  %v5506 = vrot.slane %v5498, %v5505
  %5507 = vset.pattern.permute.xlu0 3
  %5508 = vperm.xlu0 %5507, %v814
  %v5509 = vpop.permute.xlu0 %5508
  %v5512 = vunpack.c.l.s4 839922192
  %v5513 = vunpack.c.0.s8 %v5512
  %v5514 = vlaneseq
  %v5515 = vshrl.u32 %v5514, 7
  %v5516 = vsub.s32 %v5513, %v5515
  %v5517 = vrot.slane %v5509, %v5516
  %5518 = vset.pattern.permute.xlu0 3
  %5519 = vperm.xlu0 %5518, %v815
  %v5520 = vpop.permute.xlu0 %5519
  %v5523 = vunpack.c.l.s4 839922192
  %v5524 = vunpack.c.0.s8 %v5523
  %v5525 = vlaneseq
  %v5526 = vshrl.u32 %v5525, 7
  %v5527 = vsub.s32 %v5524, %v5526
  %v5528 = vrot.slane %v5520, %v5527
  %5529 = vset.pattern.permute.xlu0 3
  %5530 = vperm.xlu0 %5529, %v816
  %v5531 = vpop.permute.xlu0 %5530
  %v5534 = vunpack.c.l.s4 839922192
  %v5535 = vunpack.c.0.s8 %v5534
  %v5536 = vlaneseq
  %v5537 = vshrl.u32 %v5536, 7
  %v5538 = vsub.s32 %v5535, %v5537
  %v5539 = vrot.slane %v5531, %v5538
  %5540 = vset.pattern.permute.xlu0 3
  %5541 = vperm.xlu0 %5540, %v817
  %v5542 = vpop.permute.xlu0 %5541
  %v5545 = vunpack.c.l.s4 839922192
  %v5546 = vunpack.c.0.s8 %v5545
  %v5547 = vlaneseq
  %v5548 = vshrl.u32 %v5547, 7
  %v5549 = vsub.s32 %v5546, %v5548
  %v5550 = vrot.slane %v5542, %v5549
  %5551 = vset.pattern.permute.xlu0 3
  %5552 = vperm.xlu0 %5551, %v818
  %v5553 = vpop.permute.xlu0 %5552
  %v5556 = vunpack.c.l.s4 839922192
  %v5557 = vunpack.c.0.s8 %v5556
  %v5558 = vlaneseq
  %v5559 = vshrl.u32 %v5558, 7
  %v5560 = vsub.s32 %v5557, %v5559
  %v5561 = vrot.slane %v5553, %v5560
  %5562 = vset.pattern.permute.xlu0 3
  %5563 = vperm.xlu0 %5562, %v819
  %v5564 = vpop.permute.xlu0 %5563
  %v5567 = vunpack.c.l.s4 839922192
  %v5568 = vunpack.c.0.s8 %v5567
  %v5569 = vlaneseq
  %v5570 = vshrl.u32 %v5569, 7
  %v5571 = vsub.s32 %v5568, %v5570
  %v5572 = vrot.slane %v5564, %v5571
  %5573 = vset.pattern.permute.xlu0 3
  %5574 = vperm.xlu0 %5573, %v820
  %v5575 = vpop.permute.xlu0 %5574
  %v5578 = vunpack.c.l.s4 839922192
  %v5579 = vunpack.c.0.s8 %v5578
  %v5580 = vlaneseq
  %v5581 = vshrl.u32 %v5580, 7
  %v5582 = vsub.s32 %v5579, %v5581
  %v5583 = vrot.slane %v5575, %v5582
  %5584 = vset.pattern.permute.xlu0 3
  %5585 = vperm.xlu0 %5584, %v821
  %v5586 = vpop.permute.xlu0 %5585
  %v5589 = vunpack.c.l.s4 839922192
  %v5590 = vunpack.c.0.s8 %v5589
  %v5591 = vlaneseq
  %v5592 = vshrl.u32 %v5591, 7
  %v5593 = vsub.s32 %v5590, %v5592
  %v5594 = vrot.slane %v5586, %v5593
  %5595 = vset.pattern.permute.xlu0 3
  %5596 = vperm.xlu0 %5595, %v822
  %v5597 = vpop.permute.xlu0 %5596
  %v5600 = vunpack.c.l.s4 839922192
  %v5601 = vunpack.c.0.s8 %v5600
  %v5602 = vlaneseq
  %v5603 = vshrl.u32 %v5602, 7
  %v5604 = vsub.s32 %v5601, %v5603
  %v5605 = vrot.slane %v5597, %v5604
  %5606 = vset.pattern.permute.xlu0 3
  %5607 = vperm.xlu0 %5606, %v823
  %v5608 = vpop.permute.xlu0 %5607
  %v5611 = vunpack.c.l.s4 839922192
  %v5612 = vunpack.c.0.s8 %v5611
  %v5613 = vlaneseq
  %v5614 = vshrl.u32 %v5613, 7
  %v5615 = vsub.s32 %v5612, %v5614
  %v5616 = vrot.slane %v5608, %v5615
  %5617 = vset.pattern.permute.xlu0 3
  %5618 = vperm.xlu0 %5617, %v824
  %v5619 = vpop.permute.xlu0 %5618
  %v5622 = vunpack.c.l.s4 839922192
  %v5623 = vunpack.c.0.s8 %v5622
  %v5624 = vlaneseq
  %v5625 = vshrl.u32 %v5624, 7
  %v5626 = vsub.s32 %v5623, %v5625
  %v5627 = vrot.slane %v5619, %v5626
  %5628 = vset.pattern.permute.xlu0 3
  %5629 = vperm.xlu0 %5628, %v825
  %v5630 = vpop.permute.xlu0 %5629
  %v5633 = vunpack.c.l.s4 839922192
  %v5634 = vunpack.c.0.s8 %v5633
  %v5635 = vlaneseq
  %v5636 = vshrl.u32 %v5635, 7
  %v5637 = vsub.s32 %v5634, %v5636
  %v5638 = vrot.slane %v5630, %v5637
  %5639 = vset.pattern.permute.xlu0 3
  %5640 = vperm.xlu0 %5639, %v826
  %v5641 = vpop.permute.xlu0 %5640
  %v5644 = vunpack.c.l.s4 839922192
  %v5645 = vunpack.c.0.s8 %v5644
  %v5646 = vlaneseq
  %v5647 = vshrl.u32 %v5646, 7
  %v5648 = vsub.s32 %v5645, %v5647
  %v5649 = vrot.slane %v5641, %v5648
  %5650 = vset.pattern.permute.xlu0 3
  %5651 = vperm.xlu0 %5650, %v827
  %v5652 = vpop.permute.xlu0 %5651
  %v5655 = vunpack.c.l.s4 839922192
  %v5656 = vunpack.c.0.s8 %v5655
  %v5657 = vlaneseq
  %v5658 = vshrl.u32 %v5657, 7
  %v5659 = vsub.s32 %v5656, %v5658
  %v5660 = vrot.slane %v5652, %v5659
  %5661 = vset.pattern.permute.xlu0 3
  %5662 = vperm.xlu0 %5661, %v828
  %v5663 = vpop.permute.xlu0 %5662
  %v5666 = vunpack.c.l.s4 839922192
  %v5667 = vunpack.c.0.s8 %v5666
  %v5668 = vlaneseq
  %v5669 = vshrl.u32 %v5668, 7
  %v5670 = vsub.s32 %v5667, %v5669
  %v5671 = vrot.slane %v5663, %v5670
  %5672 = vset.pattern.permute.xlu0 3
  %5673 = vperm.xlu0 %5672, %v829
  %v5674 = vpop.permute.xlu0 %5673
  %v5677 = vunpack.c.l.s4 839922192
  %v5678 = vunpack.c.0.s8 %v5677
  %v5679 = vlaneseq
  %v5680 = vshrl.u32 %v5679, 7
  %v5681 = vsub.s32 %v5678, %v5680
  %v5682 = vrot.slane %v5674, %v5681
  %5683 = vset.pattern.permute.xlu0 3
  %5684 = vperm.xlu0 %5683, %v830
  %v5685 = vpop.permute.xlu0 %5684
  %v5688 = vunpack.c.l.s4 839922192
  %v5689 = vunpack.c.0.s8 %v5688
  %v5690 = vlaneseq
  %v5691 = vshrl.u32 %v5690, 7
  %v5692 = vsub.s32 %v5689, %v5691
  %v5693 = vrot.slane %v5685, %v5692
  %5694 = vset.pattern.permute.xlu0 3
  %5695 = vperm.xlu0 %5694, %v831
  %v5696 = vpop.permute.xlu0 %5695
  %v5699 = vunpack.c.l.s4 839922192
  %v5700 = vunpack.c.0.s8 %v5699
  %v5701 = vlaneseq
  %v5702 = vshrl.u32 %v5701, 7
  %v5703 = vsub.s32 %v5700, %v5702
  %v5704 = vrot.slane %v5696, %v5703
  %5705 = vset.pattern.permute.xlu0 3
  %5706 = vperm.xlu0 %5705, %v832
  %v5707 = vpop.permute.xlu0 %5706
  %v5710 = vunpack.c.l.s4 839922192
  %v5711 = vunpack.c.0.s8 %v5710
  %v5712 = vlaneseq
  %v5713 = vshrl.u32 %v5712, 7
  %v5714 = vsub.s32 %v5711, %v5713
  %v5715 = vrot.slane %v5707, %v5714
  %5716 = vset.pattern.permute.xlu0 3
  %5717 = vperm.xlu0 %5716, %v833
  %v5718 = vpop.permute.xlu0 %5717
  %v5721 = vunpack.c.l.s4 839922192
  %v5722 = vunpack.c.0.s8 %v5721
  %v5723 = vlaneseq
  %v5724 = vshrl.u32 %v5723, 7
  %v5725 = vsub.s32 %v5722, %v5724
  %v5726 = vrot.slane %v5718, %v5725
  %5727 = vset.pattern.permute.xlu0 3
  %5728 = vperm.xlu0 %5727, %v834
  %v5729 = vpop.permute.xlu0 %5728
  %v5732 = vunpack.c.l.s4 839922192
  %v5733 = vunpack.c.0.s8 %v5732
  %v5734 = vlaneseq
  %v5735 = vshrl.u32 %v5734, 7
  %v5736 = vsub.s32 %v5733, %v5735
  %v5737 = vrot.slane %v5729, %v5736
  %5738 = vset.pattern.permute.xlu0 3
  %5739 = vperm.xlu0 %5738, %v835
  %v5740 = vpop.permute.xlu0 %5739
  %v5743 = vunpack.c.l.s4 839922192
  %v5744 = vunpack.c.0.s8 %v5743
  %v5745 = vlaneseq
  %v5746 = vshrl.u32 %v5745, 7
  %v5747 = vsub.s32 %v5744, %v5746
  %v5748 = vrot.slane %v5740, %v5747
  %5749 = vset.pattern.permute.xlu0 3
  %5750 = vperm.xlu0 %5749, %v836
  %v5751 = vpop.permute.xlu0 %5750
  %v5754 = vunpack.c.l.s4 839922192
  %v5755 = vunpack.c.0.s8 %v5754
  %v5756 = vlaneseq
  %v5757 = vshrl.u32 %v5756, 7
  %v5758 = vsub.s32 %v5755, %v5757
  %v5759 = vrot.slane %v5751, %v5758
  %5760 = vset.pattern.permute.xlu0 3
  %5761 = vperm.xlu0 %5760, %v837
  %v5762 = vpop.permute.xlu0 %5761
  %v5765 = vunpack.c.l.s4 839922192
  %v5766 = vunpack.c.0.s8 %v5765
  %v5767 = vlaneseq
  %v5768 = vshrl.u32 %v5767, 7
  %v5769 = vsub.s32 %v5766, %v5768
  %v5770 = vrot.slane %v5762, %v5769
  %5771 = vset.pattern.permute.xlu0 3
  %5772 = vperm.xlu0 %5771, %v838
  %v5773 = vpop.permute.xlu0 %5772
  %v5776 = vunpack.c.l.s4 839922192
  %v5777 = vunpack.c.0.s8 %v5776
  %v5778 = vlaneseq
  %v5779 = vshrl.u32 %v5778, 7
  %v5780 = vsub.s32 %v5777, %v5779
  %v5781 = vrot.slane %v5773, %v5780
  %5782 = vset.pattern.permute.xlu0 3
  %5783 = vperm.xlu0 %5782, %v839
  %v5784 = vpop.permute.xlu0 %5783
  %v5787 = vunpack.c.l.s4 839922192
  %v5788 = vunpack.c.0.s8 %v5787
  %v5789 = vlaneseq
  %v5790 = vshrl.u32 %v5789, 7
  %v5791 = vsub.s32 %v5788, %v5790
  %v5792 = vrot.slane %v5784, %v5791
  %5793 = vset.pattern.permute.xlu0 3
  %5794 = vperm.xlu0 %5793, %v840
  %v5795 = vpop.permute.xlu0 %5794
  %v5798 = vunpack.c.l.s4 839922192
  %v5799 = vunpack.c.0.s8 %v5798
  %v5800 = vlaneseq
  %v5801 = vshrl.u32 %v5800, 7
  %v5802 = vsub.s32 %v5799, %v5801
  %v5803 = vrot.slane %v5795, %v5802
  %5804 = vset.pattern.permute.xlu0 3
  %5805 = vperm.xlu0 %5804, %v841
  %v5806 = vpop.permute.xlu0 %5805
  %v5809 = vunpack.c.l.s4 839922192
  %v5810 = vunpack.c.0.s8 %v5809
  %v5811 = vlaneseq
  %v5812 = vshrl.u32 %v5811, 7
  %v5813 = vsub.s32 %v5810, %v5812
  %v5814 = vrot.slane %v5806, %v5813
  %5815 = vset.pattern.permute.xlu0 3
  %5816 = vperm.xlu0 %5815, %v842
  %v5817 = vpop.permute.xlu0 %5816
  %v5820 = vunpack.c.l.s4 839922192
  %v5821 = vunpack.c.0.s8 %v5820
  %v5822 = vlaneseq
  %v5823 = vshrl.u32 %v5822, 7
  %v5824 = vsub.s32 %v5821, %v5823
  %v5825 = vrot.slane %v5817, %v5824
  %5826 = vset.pattern.permute.xlu0 3
  %5827 = vperm.xlu0 %5826, %v843
  %v5828 = vpop.permute.xlu0 %5827
  %v5831 = vunpack.c.l.s4 839922192
  %v5832 = vunpack.c.0.s8 %v5831
  %v5833 = vlaneseq
  %v5834 = vshrl.u32 %v5833, 7
  %v5835 = vsub.s32 %v5832, %v5834
  %v5836 = vrot.slane %v5828, %v5835
  %5837 = vset.pattern.permute.xlu0 3
  %5838 = vperm.xlu0 %5837, %v844
  %v5839 = vpop.permute.xlu0 %5838
  %v5842 = vunpack.c.l.s4 839922192
  %v5843 = vunpack.c.0.s8 %v5842
  %v5844 = vlaneseq
  %v5845 = vshrl.u32 %v5844, 7
  %v5846 = vsub.s32 %v5843, %v5845
  %v5847 = vrot.slane %v5839, %v5846
  %5848 = vset.pattern.permute.xlu0 3
  %5849 = vperm.xlu0 %5848, %v845
  %v5850 = vpop.permute.xlu0 %5849
  %v5853 = vunpack.c.l.s4 839922192
  %v5854 = vunpack.c.0.s8 %v5853
  %v5855 = vlaneseq
  %v5856 = vshrl.u32 %v5855, 7
  %v5857 = vsub.s32 %v5854, %v5856
  %v5858 = vrot.slane %v5850, %v5857
  %5859 = vset.pattern.permute.xlu0 3
  %5860 = vperm.xlu0 %5859, %v846
  %v5861 = vpop.permute.xlu0 %5860
  %v5864 = vunpack.c.l.s4 839922192
  %v5865 = vunpack.c.0.s8 %v5864
  %v5866 = vlaneseq
  %v5867 = vshrl.u32 %v5866, 7
  %v5868 = vsub.s32 %v5865, %v5867
  %v5869 = vrot.slane %v5861, %v5868
  %5870 = vset.pattern.permute.xlu0 3
  %5871 = vperm.xlu0 %5870, %v847
  %v5872 = vpop.permute.xlu0 %5871
  %v5875 = vunpack.c.l.s4 839922192
  %v5876 = vunpack.c.0.s8 %v5875
  %v5877 = vlaneseq
  %v5878 = vshrl.u32 %v5877, 7
  %v5879 = vsub.s32 %v5876, %v5878
  %v5880 = vrot.slane %v5872, %v5879
  %5881 = vset.pattern.permute.xlu0 3
  %5882 = vperm.xlu0 %5881, %v848
  %v5883 = vpop.permute.xlu0 %5882
  %v5886 = vunpack.c.l.s4 839922192
  %v5887 = vunpack.c.0.s8 %v5886
  %v5888 = vlaneseq
  %v5889 = vshrl.u32 %v5888, 7
  %v5890 = vsub.s32 %v5887, %v5889
  %v5891 = vrot.slane %v5883, %v5890
  %5892 = vset.pattern.permute.xlu0 3
  %5893 = vperm.xlu0 %5892, %v849
  %v5894 = vpop.permute.xlu0 %5893
  %v5897 = vunpack.c.l.s4 839922192
  %v5898 = vunpack.c.0.s8 %v5897
  %v5899 = vlaneseq
  %v5900 = vshrl.u32 %v5899, 7
  %v5901 = vsub.s32 %v5898, %v5900
  %v5902 = vrot.slane %v5894, %v5901
  %5903 = vset.pattern.permute.xlu0 3
  %5904 = vperm.xlu0 %5903, %v850
  %v5905 = vpop.permute.xlu0 %5904
  %v5908 = vunpack.c.l.s4 839922192
  %v5909 = vunpack.c.0.s8 %v5908
  %v5910 = vlaneseq
  %v5911 = vshrl.u32 %v5910, 7
  %v5912 = vsub.s32 %v5909, %v5911
  %v5913 = vrot.slane %v5905, %v5912
  %5914 = vset.pattern.permute.xlu0 3
  %5915 = vperm.xlu0 %5914, %v851
  %v5916 = vpop.permute.xlu0 %5915
  %v5919 = vunpack.c.l.s4 839922192
  %v5920 = vunpack.c.0.s8 %v5919
  %v5921 = vlaneseq
  %v5922 = vshrl.u32 %v5921, 7
  %v5923 = vsub.s32 %v5920, %v5922
  %v5924 = vrot.slane %v5916, %v5923
  %v5989 = vunpack.c.l.b16 %v5231
  %v5990 = vunpack.c.l.b16 %v5242
  %v5991 = vunpack.c.l.b16 %v5253
  %v5992 = vunpack.c.l.b16 %v5264
  %v5993 = vunpack.c.l.b16 %v5275
  %v5994 = vunpack.c.l.b16 %v5286
  %v5995 = vunpack.c.l.b16 %v5297
  %v5996 = vunpack.c.l.b16 %v5308
  %v5997 = vunpack.c.l.b16 %v5319
  %v5998 = vunpack.c.l.b16 %v5330
  %v5999 = vunpack.c.l.b16 %v5341
  %v6000 = vunpack.c.l.b16 %v5352
  %v6001 = vunpack.c.l.b16 %v5363
  %v6002 = vunpack.c.l.b16 %v5374
  %v6003 = vunpack.c.l.b16 %v5385
  %v6004 = vunpack.c.l.b16 %v5396
  %v6005 = vunpack.c.l.b16 %v5407
  %v6006 = vunpack.c.l.b16 %v5418
  %v6007 = vunpack.c.l.b16 %v5429
  %v6008 = vunpack.c.l.b16 %v5440
  %v6009 = vunpack.c.l.b16 %v5451
  %v6010 = vunpack.c.l.b16 %v5462
  %v6011 = vunpack.c.l.b16 %v5473
  %v6012 = vunpack.c.l.b16 %v5484
  %v6013 = vunpack.c.l.b16 %v5495
  %v6014 = vunpack.c.l.b16 %v5506
  %v6015 = vunpack.c.l.b16 %v5517
  %v6016 = vunpack.c.l.b16 %v5528
  %v6017 = vunpack.c.l.b16 %v5539
  %v6018 = vunpack.c.l.b16 %v5550
  %v6019 = vunpack.c.l.b16 %v5561
  %v6020 = vunpack.c.l.b16 %v5572
  %v6021 = vunpack.c.l.b16 %v5583
  %v6022 = vunpack.c.l.b16 %v5594
  %v6023 = vunpack.c.l.b16 %v5605
  %v6024 = vunpack.c.l.b16 %v5616
  %v6025 = vunpack.c.l.b16 %v5627
  %v6026 = vunpack.c.l.b16 %v5638
  %v6027 = vunpack.c.l.b16 %v5649
  %v6028 = vunpack.c.l.b16 %v5660
  %v6029 = vunpack.c.l.b16 %v5671
  %v6030 = vunpack.c.l.b16 %v5682
  %v6031 = vunpack.c.l.b16 %v5693
  %v6032 = vunpack.c.l.b16 %v5704
  %v6033 = vunpack.c.l.b16 %v5715
  %v6034 = vunpack.c.l.b16 %v5726
  %v6035 = vunpack.c.l.b16 %v5737
  %v6036 = vunpack.c.l.b16 %v5748
  %v6037 = vunpack.c.l.b16 %v5759
  %v6038 = vunpack.c.l.b16 %v5770
  %v6039 = vunpack.c.l.b16 %v5781
  %v6040 = vunpack.c.l.b16 %v5792
  %v6041 = vunpack.c.l.b16 %v5803
  %v6042 = vunpack.c.l.b16 %v5814
  %v6043 = vunpack.c.l.b16 %v5825
  %v6044 = vunpack.c.l.b16 %v5836
  %v6045 = vunpack.c.l.b16 %v5847
  %v6046 = vunpack.c.l.b16 %v5858
  %v6047 = vunpack.c.l.b16 %v5869
  %v6048 = vunpack.c.l.b16 %v5880
  %v6049 = vunpack.c.l.b16 %v5891
  %v6050 = vunpack.c.l.b16 %v5902
  %v6051 = vunpack.c.l.b16 %v5913
  %v6052 = vunpack.c.l.b16 %v5924
  %v6053 = vpack.c.b16 %v5990, %v5989
  %v6054 = vpack.c.b16 %v5992, %v5991
  %v6055 = vpack.c.b16 %v5994, %v5993
  %v6056 = vpack.c.b16 %v5996, %v5995
  %v6057 = vpack.c.b16 %v5998, %v5997
  %v6058 = vpack.c.b16 %v6000, %v5999
  %v6059 = vpack.c.b16 %v6002, %v6001
  %v6060 = vpack.c.b16 %v6004, %v6003
  %v6061 = vpack.c.b16 %v6006, %v6005
  %v6062 = vpack.c.b16 %v6008, %v6007
  %v6063 = vpack.c.b16 %v6010, %v6009
  %v6064 = vpack.c.b16 %v6012, %v6011
  %v6065 = vpack.c.b16 %v6014, %v6013
  %v6066 = vpack.c.b16 %v6016, %v6015
  %v6067 = vpack.c.b16 %v6018, %v6017
  %v6068 = vpack.c.b16 %v6020, %v6019
  %v6069 = vpack.c.b16 %v6022, %v6021
  %v6070 = vpack.c.b16 %v6024, %v6023
  %v6071 = vpack.c.b16 %v6026, %v6025
  %v6072 = vpack.c.b16 %v6028, %v6027
  %v6073 = vpack.c.b16 %v6030, %v6029
  %v6074 = vpack.c.b16 %v6032, %v6031
  %v6075 = vpack.c.b16 %v6034, %v6033
  %v6076 = vpack.c.b16 %v6036, %v6035
  %v6077 = vpack.c.b16 %v6038, %v6037
  %v6078 = vpack.c.b16 %v6040, %v6039
  %v6079 = vpack.c.b16 %v6042, %v6041
  %v6080 = vpack.c.b16 %v6044, %v6043
  %v6081 = vpack.c.b16 %v6046, %v6045
  %v6082 = vpack.c.b16 %v6048, %v6047
  %v6083 = vpack.c.b16 %v6050, %v6049
  %v6084 = vpack.c.b16 %v6052, %v6051
  %v6086 = vshll.u32 %v6053, 16
  %v6088 = vrot.slane %v6086, 1
  %v6089 = vshrl.u32 %v6053, 16
  %v6091 = vor.u32 %v6089, %v6088
  %v6093 = vshll.u32 %v6054, 16
  %v6095 = vrot.slane %v6093, 1
  %v6096 = vsel %vm1813, %v6091, %v6095
  %v6097 = vshrl.u32 %v6054, 16
  %v6099 = vor.u32 %v6097, %v6095
  %v6101 = vshll.u32 %v6055, 16
  %v6103 = vrot.slane %v6101, 1
  %v6104 = vsel %vm1813, %v6099, %v6103
  %v6105 = vshrl.u32 %v6055, 16
  %v6107 = vor.u32 %v6105, %v6103
  %v6109 = vshll.u32 %v6056, 16
  %v6111 = vrot.slane %v6109, 1
  %v6112 = vsel %vm1813, %v6107, %v6111
  %v6113 = vshrl.u32 %v6056, 16
  %v6115 = vor.u32 %v6113, %v6111
  %v6117 = vshll.u32 %v6057, 16
  %v6119 = vrot.slane %v6117, 1
  %v6120 = vsel %vm1813, %v6115, %v6119
  %v6121 = vshrl.u32 %v6057, 16
  %v6123 = vor.u32 %v6121, %v6119
  %v6125 = vshll.u32 %v6058, 16
  %v6127 = vrot.slane %v6125, 1
  %v6128 = vsel %vm1813, %v6123, %v6127
  %v6129 = vshrl.u32 %v6058, 16
  %v6131 = vor.u32 %v6129, %v6127
  %v6133 = vshll.u32 %v6059, 16
  %v6135 = vrot.slane %v6133, 1
  %v6136 = vsel %vm1813, %v6131, %v6135
  %v6137 = vshrl.u32 %v6059, 16
  %v6139 = vor.u32 %v6137, %v6135
  %v6141 = vshll.u32 %v6060, 16
  %v6143 = vrot.slane %v6141, 1
  %v6144 = vsel %vm1813, %v6139, %v6143
  %v6145 = vshrl.u32 %v6060, 16
  %v6147 = vor.u32 %v6145, %v6143
  %v6149 = vshll.u32 %v6061, 16
  %v6151 = vrot.slane %v6149, 1
  %v6152 = vsel %vm1813, %v6147, %v6151
  %v6153 = vshrl.u32 %v6061, 16
  %v6155 = vor.u32 %v6153, %v6151
  %v6157 = vshll.u32 %v6062, 16
  %v6159 = vrot.slane %v6157, 1
  %v6160 = vsel %vm1813, %v6155, %v6159
  %v6161 = vshrl.u32 %v6062, 16
  %v6163 = vor.u32 %v6161, %v6159
  %v6165 = vshll.u32 %v6063, 16
  %v6167 = vrot.slane %v6165, 1
  %v6168 = vsel %vm1813, %v6163, %v6167
  %v6169 = vshrl.u32 %v6063, 16
  %v6171 = vor.u32 %v6169, %v6167
  %v6173 = vshll.u32 %v6064, 16
  %v6175 = vrot.slane %v6173, 1
  %v6176 = vsel %vm1813, %v6171, %v6175
  %v6177 = vshrl.u32 %v6064, 16
  %v6179 = vor.u32 %v6177, %v6175
  %v6181 = vshll.u32 %v6065, 16
  %v6183 = vrot.slane %v6181, 1
  %v6184 = vsel %vm1813, %v6179, %v6183
  %v6185 = vshrl.u32 %v6065, 16
  %v6187 = vor.u32 %v6185, %v6183
  %v6189 = vshll.u32 %v6066, 16
  %v6191 = vrot.slane %v6189, 1
  %v6192 = vsel %vm1813, %v6187, %v6191
  %v6193 = vshrl.u32 %v6066, 16
  %v6195 = vor.u32 %v6193, %v6191
  %v6197 = vshll.u32 %v6067, 16
  %v6199 = vrot.slane %v6197, 1
  %v6200 = vsel %vm1813, %v6195, %v6199
  %v6201 = vshrl.u32 %v6067, 16
  %v6203 = vor.u32 %v6201, %v6199
  %v6205 = vshll.u32 %v6068, 16
  %v6207 = vrot.slane %v6205, 1
  %v6208 = vsel %vm1813, %v6203, %v6207
  %v6209 = vshrl.u32 %v6068, 16
  %v6211 = vor.u32 %v6209, %v6207
  %v6213 = vshll.u32 %v6069, 16
  %v6215 = vrot.slane %v6213, 1
  %v6216 = vsel %vm1813, %v6211, %v6215
  %v6217 = vshrl.u32 %v6069, 16
  %v6219 = vor.u32 %v6217, %v6215
  %v6221 = vshll.u32 %v6070, 16
  %v6223 = vrot.slane %v6221, 1
  %v6224 = vsel %vm1813, %v6219, %v6223
  %v6225 = vshrl.u32 %v6070, 16
  %v6227 = vor.u32 %v6225, %v6223
  %v6229 = vshll.u32 %v6071, 16
  %v6231 = vrot.slane %v6229, 1
  %v6232 = vsel %vm1813, %v6227, %v6231
  %v6233 = vshrl.u32 %v6071, 16
  %v6235 = vor.u32 %v6233, %v6231
  %v6237 = vshll.u32 %v6072, 16
  %v6239 = vrot.slane %v6237, 1
  %v6240 = vsel %vm1813, %v6235, %v6239
  %v6241 = vshrl.u32 %v6072, 16
  %v6243 = vor.u32 %v6241, %v6239
  %v6245 = vshll.u32 %v6073, 16
  %v6247 = vrot.slane %v6245, 1
  %v6248 = vsel %vm1813, %v6243, %v6247
  %v6249 = vshrl.u32 %v6073, 16
  %v6251 = vor.u32 %v6249, %v6247
  %v6253 = vshll.u32 %v6074, 16
  %v6255 = vrot.slane %v6253, 1
  %v6256 = vsel %vm1813, %v6251, %v6255
  %v6257 = vshrl.u32 %v6074, 16
  %v6259 = vor.u32 %v6257, %v6255
  %v6261 = vshll.u32 %v6075, 16
  %v6263 = vrot.slane %v6261, 1
  %v6264 = vsel %vm1813, %v6259, %v6263
  %v6265 = vshrl.u32 %v6075, 16
  %v6267 = vor.u32 %v6265, %v6263
  %v6269 = vshll.u32 %v6076, 16
  %v6271 = vrot.slane %v6269, 1
  %v6272 = vsel %vm1813, %v6267, %v6271
  %v6273 = vshrl.u32 %v6076, 16
  %v6275 = vor.u32 %v6273, %v6271
  %v6277 = vshll.u32 %v6077, 16
  %v6279 = vrot.slane %v6277, 1
  %v6280 = vsel %vm1813, %v6275, %v6279
  %v6281 = vshrl.u32 %v6077, 16
  %v6283 = vor.u32 %v6281, %v6279
  %v6285 = vshll.u32 %v6078, 16
  %v6287 = vrot.slane %v6285, 1
  %v6288 = vsel %vm1813, %v6283, %v6287
  %v6289 = vshrl.u32 %v6078, 16
  %v6291 = vor.u32 %v6289, %v6287
  %v6293 = vshll.u32 %v6079, 16
  %v6295 = vrot.slane %v6293, 1
  %v6296 = vsel %vm1813, %v6291, %v6295
  %v6297 = vshrl.u32 %v6079, 16
  %v6299 = vor.u32 %v6297, %v6295
  %v6301 = vshll.u32 %v6080, 16
  %v6303 = vrot.slane %v6301, 1
  %v6304 = vsel %vm1813, %v6299, %v6303
  %v6305 = vshrl.u32 %v6080, 16
  %v6307 = vor.u32 %v6305, %v6303
  %v6309 = vshll.u32 %v6081, 16
  %v6311 = vrot.slane %v6309, 1
  %v6312 = vsel %vm1813, %v6307, %v6311
  %v6313 = vshrl.u32 %v6081, 16
  %v6315 = vor.u32 %v6313, %v6311
  %v6317 = vshll.u32 %v6082, 16
  %v6319 = vrot.slane %v6317, 1
  %v6320 = vsel %vm1813, %v6315, %v6319
  %v6321 = vshrl.u32 %v6082, 16
  %v6323 = vor.u32 %v6321, %v6319
  %v6325 = vshll.u32 %v6083, 16
  %v6327 = vrot.slane %v6325, 1
  %v6328 = vsel %vm1813, %v6323, %v6327
  %v6329 = vshrl.u32 %v6083, 16
  %v6331 = vor.u32 %v6329, %v6327
  %v6333 = vshll.u32 %v6084, 16
  %v6335 = vrot.slane %v6333, 1
  %v6336 = vsel %vm1813, %v6331, %v6335
  %v6337 = vshrl.u32 %v6084, 16
  %v6339 = vor.u32 %v6337, %v6335
  %v6373 = vmul.bf16 %v5188, %v6088
  %v6374 = vmul.bf16 %v5189, %v6096
  %v6375 = vmul.bf16 %v5190, %v6104
  %v6376 = vmul.bf16 %v5191, %v6112
  %v6377 = vmul.bf16 %v5192, %v6120
  %v6378 = vmul.bf16 %v5193, %v6128
  %v6379 = vmul.bf16 %v5194, %v6136
  %v6380 = vmul.bf16 %v5195, %v6144
  %v6381 = vmul.bf16 %v5196, %v6152
  %v6382 = vmul.bf16 %v5197, %v6160
  %v6383 = vmul.bf16 %v5198, %v6168
  %v6384 = vmul.bf16 %v5199, %v6176
  %v6385 = vmul.bf16 %v5200, %v6184
  %v6386 = vmul.bf16 %v5201, %v6192
  %v6387 = vmul.bf16 %v5202, %v6200
  %v6388 = vmul.bf16 %v5203, %v6208
  %v6389 = vmul.bf16 %v5204, %v6216
  %v6390 = vmul.bf16 %v5205, %v6224
  %v6391 = vmul.bf16 %v5206, %v6232
  %v6392 = vmul.bf16 %v5207, %v6240
  %v6393 = vmul.bf16 %v5208, %v6248
  %v6394 = vmul.bf16 %v5209, %v6256
  %v6395 = vmul.bf16 %v5210, %v6264
  %v6396 = vmul.bf16 %v5211, %v6272
  %v6397 = vmul.bf16 %v5212, %v6280
  %v6398 = vmul.bf16 %v5213, %v6288
  %v6399 = vmul.bf16 %v5214, %v6296
  %v6400 = vmul.bf16 %v5215, %v6304
  %v6401 = vmul.bf16 %v5216, %v6312
  %v6402 = vmul.bf16 %v5217, %v6320
  %v6403 = vmul.bf16 %v5218, %v6328
  %v6404 = vmul.bf16 %v5219, %v6336
  %v6405 = vmul.bf16 %v5220, %v6339
  %v6407 = vshrl.u32 %v6373, 16
  %v6409 = vrot.slane %v6407, 7
  %v6411 = vshrl.u32 %v6374, 16
  %v6413 = vrot.slane %v6411, 7
  %v6414 = vshll.u32 %v6374, 16
  %v6416 = vor.u32 %v6413, %v6414
  %v6417 = vsel %vm2135, %v6409, %v6416
  %v6419 = vshrl.u32 %v6375, 16
  %v6421 = vrot.slane %v6419, 7
  %v6422 = vshll.u32 %v6375, 16
  %v6424 = vor.u32 %v6421, %v6422
  %v6425 = vsel %vm2135, %v6413, %v6424
  %v6427 = vshrl.u32 %v6376, 16
  %v6429 = vrot.slane %v6427, 7
  %v6430 = vshll.u32 %v6376, 16
  %v6432 = vor.u32 %v6429, %v6430
  %v6433 = vsel %vm2135, %v6421, %v6432
  %v6435 = vshrl.u32 %v6377, 16
  %v6437 = vrot.slane %v6435, 7
  %v6438 = vshll.u32 %v6377, 16
  %v6440 = vor.u32 %v6437, %v6438
  %v6441 = vsel %vm2135, %v6429, %v6440
  %v6443 = vshrl.u32 %v6378, 16
  %v6445 = vrot.slane %v6443, 7
  %v6446 = vshll.u32 %v6378, 16
  %v6448 = vor.u32 %v6445, %v6446
  %v6449 = vsel %vm2135, %v6437, %v6448
  %v6451 = vshrl.u32 %v6379, 16
  %v6453 = vrot.slane %v6451, 7
  %v6454 = vshll.u32 %v6379, 16
  %v6456 = vor.u32 %v6453, %v6454
  %v6457 = vsel %vm2135, %v6445, %v6456
  %v6459 = vshrl.u32 %v6380, 16
  %v6461 = vrot.slane %v6459, 7
  %v6462 = vshll.u32 %v6380, 16
  %v6464 = vor.u32 %v6461, %v6462
  %v6465 = vsel %vm2135, %v6453, %v6464
  %v6467 = vshrl.u32 %v6381, 16
  %v6469 = vrot.slane %v6467, 7
  %v6470 = vshll.u32 %v6381, 16
  %v6472 = vor.u32 %v6469, %v6470
  %v6473 = vsel %vm2135, %v6461, %v6472
  %v6475 = vshrl.u32 %v6382, 16
  %v6477 = vrot.slane %v6475, 7
  %v6478 = vshll.u32 %v6382, 16
  %v6480 = vor.u32 %v6477, %v6478
  %v6481 = vsel %vm2135, %v6469, %v6480
  %v6483 = vshrl.u32 %v6383, 16
  %v6485 = vrot.slane %v6483, 7
  %v6486 = vshll.u32 %v6383, 16
  %v6488 = vor.u32 %v6485, %v6486
  %v6489 = vsel %vm2135, %v6477, %v6488
  %v6491 = vshrl.u32 %v6384, 16
  %v6493 = vrot.slane %v6491, 7
  %v6494 = vshll.u32 %v6384, 16
  %v6496 = vor.u32 %v6493, %v6494
  %v6497 = vsel %vm2135, %v6485, %v6496
  %v6499 = vshrl.u32 %v6385, 16
  %v6501 = vrot.slane %v6499, 7
  %v6502 = vshll.u32 %v6385, 16
  %v6504 = vor.u32 %v6501, %v6502
  %v6505 = vsel %vm2135, %v6493, %v6504
  %v6507 = vshrl.u32 %v6386, 16
  %v6509 = vrot.slane %v6507, 7
  %v6510 = vshll.u32 %v6386, 16
  %v6512 = vor.u32 %v6509, %v6510
  %v6513 = vsel %vm2135, %v6501, %v6512
  %v6515 = vshrl.u32 %v6387, 16
  %v6517 = vrot.slane %v6515, 7
  %v6518 = vshll.u32 %v6387, 16
  %v6520 = vor.u32 %v6517, %v6518
  %v6521 = vsel %vm2135, %v6509, %v6520
  %v6523 = vshrl.u32 %v6388, 16
  %v6525 = vrot.slane %v6523, 7
  %v6526 = vshll.u32 %v6388, 16
  %v6528 = vor.u32 %v6525, %v6526
  %v6529 = vsel %vm2135, %v6517, %v6528
  %v6531 = vshrl.u32 %v6389, 16
  %v6533 = vrot.slane %v6531, 7
  %v6534 = vshll.u32 %v6389, 16
  %v6536 = vor.u32 %v6533, %v6534
  %v6537 = vsel %vm2135, %v6525, %v6536
  %v6539 = vshrl.u32 %v6390, 16
  %v6541 = vrot.slane %v6539, 7
  %v6542 = vshll.u32 %v6390, 16
  %v6544 = vor.u32 %v6541, %v6542
  %v6545 = vsel %vm2135, %v6533, %v6544
  %v6547 = vshrl.u32 %v6391, 16
  %v6549 = vrot.slane %v6547, 7
  %v6550 = vshll.u32 %v6391, 16
  %v6552 = vor.u32 %v6549, %v6550
  %v6553 = vsel %vm2135, %v6541, %v6552
  %v6555 = vshrl.u32 %v6392, 16
  %v6557 = vrot.slane %v6555, 7
  %v6558 = vshll.u32 %v6392, 16
  %v6560 = vor.u32 %v6557, %v6558
  %v6561 = vsel %vm2135, %v6549, %v6560
  %v6563 = vshrl.u32 %v6393, 16
  %v6565 = vrot.slane %v6563, 7
  %v6566 = vshll.u32 %v6393, 16
  %v6568 = vor.u32 %v6565, %v6566
  %v6569 = vsel %vm2135, %v6557, %v6568
  %v6571 = vshrl.u32 %v6394, 16
  %v6573 = vrot.slane %v6571, 7
  %v6574 = vshll.u32 %v6394, 16
  %v6576 = vor.u32 %v6573, %v6574
  %v6577 = vsel %vm2135, %v6565, %v6576
  %v6579 = vshrl.u32 %v6395, 16
  %v6581 = vrot.slane %v6579, 7
  %v6582 = vshll.u32 %v6395, 16
  %v6584 = vor.u32 %v6581, %v6582
  %v6585 = vsel %vm2135, %v6573, %v6584
  %v6587 = vshrl.u32 %v6396, 16
  %v6589 = vrot.slane %v6587, 7
  %v6590 = vshll.u32 %v6396, 16
  %v6592 = vor.u32 %v6589, %v6590
  %v6593 = vsel %vm2135, %v6581, %v6592
  %v6595 = vshrl.u32 %v6397, 16
  %v6597 = vrot.slane %v6595, 7
  %v6598 = vshll.u32 %v6397, 16
  %v6600 = vor.u32 %v6597, %v6598
  %v6601 = vsel %vm2135, %v6589, %v6600
  %v6603 = vshrl.u32 %v6398, 16
  %v6605 = vrot.slane %v6603, 7
  %v6606 = vshll.u32 %v6398, 16
  %v6608 = vor.u32 %v6605, %v6606
  %v6609 = vsel %vm2135, %v6597, %v6608
  %v6611 = vshrl.u32 %v6399, 16
  %v6613 = vrot.slane %v6611, 7
  %v6614 = vshll.u32 %v6399, 16
  %v6616 = vor.u32 %v6613, %v6614
  %v6617 = vsel %vm2135, %v6605, %v6616
  %v6619 = vshrl.u32 %v6400, 16
  %v6621 = vrot.slane %v6619, 7
  %v6622 = vshll.u32 %v6400, 16
  %v6624 = vor.u32 %v6621, %v6622
  %v6625 = vsel %vm2135, %v6613, %v6624
  %v6627 = vshrl.u32 %v6401, 16
  %v6629 = vrot.slane %v6627, 7
  %v6630 = vshll.u32 %v6401, 16
  %v6632 = vor.u32 %v6629, %v6630
  %v6633 = vsel %vm2135, %v6621, %v6632
  %v6635 = vshrl.u32 %v6402, 16
  %v6637 = vrot.slane %v6635, 7
  %v6638 = vshll.u32 %v6402, 16
  %v6640 = vor.u32 %v6637, %v6638
  %v6641 = vsel %vm2135, %v6629, %v6640
  %v6643 = vshrl.u32 %v6403, 16
  %v6645 = vrot.slane %v6643, 7
  %v6646 = vshll.u32 %v6403, 16
  %v6648 = vor.u32 %v6645, %v6646
  %v6649 = vsel %vm2135, %v6637, %v6648
  %v6651 = vshrl.u32 %v6404, 16
  %v6653 = vrot.slane %v6651, 7
  %v6654 = vshll.u32 %v6404, 16
  %v6656 = vor.u32 %v6653, %v6654
  %v6657 = vsel %vm2135, %v6645, %v6656
  %v6659 = vshrl.u32 %v6405, 16
  %v6661 = vrot.slane %v6659, 7
  %v6662 = vshll.u32 %v6405, 16
  %v6664 = vor.u32 %v6661, %v6662
  %v6665 = vsel %vm2135, %v6653, %v6664
  %6666 = vrot.lane.b32.xlu0 %v6417, 12
  %v6667 = vpop.permute.xlu0 %6666
  %6668 = vrot.lane.b32.xlu0 %v6425, 12
  %v6669 = vpop.permute.xlu0 %6668
  %6670 = vrot.lane.b32.xlu0 %v6433, 12
  %v6671 = vpop.permute.xlu0 %6670
  %6672 = vrot.lane.b32.xlu0 %v6441, 12
  %v6673 = vpop.permute.xlu0 %6672
  %6674 = vrot.lane.b32.xlu0 %v6449, 12
  %v6675 = vpop.permute.xlu0 %6674
  %6676 = vrot.lane.b32.xlu0 %v6457, 12
  %v6677 = vpop.permute.xlu0 %6676
  %6678 = vrot.lane.b32.xlu0 %v6465, 12
  %v6679 = vpop.permute.xlu0 %6678
  %6680 = vrot.lane.b32.xlu0 %v6473, 12
  %v6681 = vpop.permute.xlu0 %6680
  %6682 = vrot.lane.b32.xlu0 %v6481, 12
  %v6683 = vpop.permute.xlu0 %6682
  %6684 = vrot.lane.b32.xlu0 %v6489, 12
  %v6685 = vpop.permute.xlu0 %6684
  %6686 = vrot.lane.b32.xlu0 %v6497, 12
  %v6687 = vpop.permute.xlu0 %6686
  %6688 = vrot.lane.b32.xlu0 %v6505, 12
  %v6689 = vpop.permute.xlu0 %6688
  %6690 = vrot.lane.b32.xlu0 %v6513, 12
  %v6691 = vpop.permute.xlu0 %6690
  %6692 = vrot.lane.b32.xlu0 %v6521, 12
  %v6693 = vpop.permute.xlu0 %6692
  %6694 = vrot.lane.b32.xlu0 %v6529, 12
  %v6695 = vpop.permute.xlu0 %6694
  %6696 = vrot.lane.b32.xlu0 %v6537, 12
  %v6697 = vpop.permute.xlu0 %6696
  %6698 = vrot.lane.b32.xlu0 %v6545, 12
  %v6699 = vpop.permute.xlu0 %6698
  %6700 = vrot.lane.b32.xlu0 %v6553, 12
  %v6701 = vpop.permute.xlu0 %6700
  %6702 = vrot.lane.b32.xlu0 %v6561, 12
  %v6703 = vpop.permute.xlu0 %6702
  %6704 = vrot.lane.b32.xlu0 %v6569, 12
  %v6705 = vpop.permute.xlu0 %6704
  %6706 = vrot.lane.b32.xlu0 %v6577, 12
  %v6707 = vpop.permute.xlu0 %6706
  %6708 = vrot.lane.b32.xlu0 %v6585, 12
  %v6709 = vpop.permute.xlu0 %6708
  %6710 = vrot.lane.b32.xlu0 %v6593, 12
  %v6711 = vpop.permute.xlu0 %6710
  %6712 = vrot.lane.b32.xlu0 %v6601, 12
  %v6713 = vpop.permute.xlu0 %6712
  %6714 = vrot.lane.b32.xlu0 %v6609, 12
  %v6715 = vpop.permute.xlu0 %6714
  %6716 = vrot.lane.b32.xlu0 %v6617, 12
  %v6717 = vpop.permute.xlu0 %6716
  %6718 = vrot.lane.b32.xlu0 %v6625, 12
  %v6719 = vpop.permute.xlu0 %6718
  %6720 = vrot.lane.b32.xlu0 %v6633, 12
  %v6721 = vpop.permute.xlu0 %6720
  %6722 = vrot.lane.b32.xlu0 %v6641, 12
  %v6723 = vpop.permute.xlu0 %6722
  %6724 = vrot.lane.b32.xlu0 %v6649, 12
  %v6725 = vpop.permute.xlu0 %6724
  %6726 = vrot.lane.b32.xlu0 %v6657, 12
  %v6727 = vpop.permute.xlu0 %6726
  %6728 = vrot.lane.b32.xlu0 %v6665, 12
  %v6729 = vpop.permute.xlu0 %6728
  %vm6762 = vcmask 130144
  %6763 = vst.msk [vmem:[#allocation3] sm:$0xff] %vm6762, %v6667
  %6764 = vst.msk [vmem:[#allocation3 + $0x8] sm:$0xff] %vm6762, %v6669
  %6765 = vst.msk [vmem:[#allocation3 + $0x10] sm:$0xff] %vm6762, %v6671
  %6766 = vst.msk [vmem:[#allocation3 + $0x18] sm:$0xff] %vm6762, %v6673
  %6767 = vst.msk [vmem:[#allocation3 + $0x20] sm:$0xff] %vm6762, %v6675
  %6768 = vst.msk [vmem:[#allocation3 + $0x28] sm:$0xff] %vm6762, %v6677
  %6769 = vst.msk [vmem:[#allocation3 + $0x30] sm:$0xff] %vm6762, %v6679
  %6770 = vst.msk [vmem:[#allocation3 + $0x38] sm:$0xff] %vm6762, %v6681
  %6771 = vst.msk [vmem:[#allocation3 + $0x40] sm:$0xff] %vm6762, %v6683
  %6772 = vst.msk [vmem:[#allocation3 + $0x48] sm:$0xff] %vm6762, %v6685
  %6773 = vst.msk [vmem:[#allocation3 + $0x50] sm:$0xff] %vm6762, %v6687
  %6774 = vst.msk [vmem:[#allocation3 + $0x58] sm:$0xff] %vm6762, %v6689
  %6775 = vst.msk [vmem:[#allocation3 + $0x60] sm:$0xff] %vm6762, %v6691
  %6776 = vst.msk [vmem:[#allocation3 + $0x68] sm:$0xff] %vm6762, %v6693
  %6777 = vst.msk [vmem:[#allocation3 + $0x70] sm:$0xff] %vm6762, %v6695
  %6778 = vst.msk [vmem:[#allocation3 + $0x78] sm:$0xff] %vm6762, %v6697
  %6779 = vst.msk [vmem:[#allocation3 + $0x80] sm:$0xff] %vm6762, %v6699
  %6780 = vst.msk [vmem:[#allocation3 + $0x88] sm:$0xff] %vm6762, %v6701
  %6781 = vst.msk [vmem:[#allocation3 + $0x90] sm:$0xff] %vm6762, %v6703
  %6782 = vst.msk [vmem:[#allocation3 + $0x98] sm:$0xff] %vm6762, %v6705
  %6783 = vst.msk [vmem:[#allocation3 + $0xa0] sm:$0xff] %vm6762, %v6707
  %6784 = vst.msk [vmem:[#allocation3 + $0xa8] sm:$0xff] %vm6762, %v6709
  %6785 = vst.msk [vmem:[#allocation3 + $0xb0] sm:$0xff] %vm6762, %v6711
  %6786 = vst.msk [vmem:[#allocation3 + $0xb8] sm:$0xff] %vm6762, %v6713
  %6787 = vst.msk [vmem:[#allocation3 + $0xc0] sm:$0xff] %vm6762, %v6715
  %6788 = vst.msk [vmem:[#allocation3 + $0xc8] sm:$0xff] %vm6762, %v6717
  %6789 = vst.msk [vmem:[#allocation3 + $0xd0] sm:$0xff] %vm6762, %v6719
  %6790 = vst.msk [vmem:[#allocation3 + $0xd8] sm:$0xff] %vm6762, %v6721
  %6791 = vst.msk [vmem:[#allocation3 + $0xe0] sm:$0xff] %vm6762, %v6723
  %6792 = vst.msk [vmem:[#allocation3 + $0xe8] sm:$0xff] %vm6762, %v6725
  %6793 = vst.msk [vmem:[#allocation3 + $0xf0] sm:$0xff] %vm6762, %v6727
  %6794 = vst.msk [vmem:[#allocation3 + $0xf8] sm:$0xff] %vm6762, %v6729
  %v6795 = vld [vmem:[#allocation2 + $0x10] sm:$0xff]
  %v6796 = vld [vmem:[#allocation2 + $0x18] sm:$0xff]
  %v6797 = vld [vmem:[#allocation2 + $0x20] sm:$0xff]
  %v6798 = vld [vmem:[#allocation2 + $0x28] sm:$0xff]
  %v6799 = vld [vmem:[#allocation2 + $0x30] sm:$0xff]
  %v6800 = vld [vmem:[#allocation2 + $0x38] sm:$0xff]
  %v6801 = vld [vmem:[#allocation2 + $0x40] sm:$0xff]
  %v6802 = vld [vmem:[#allocation2 + $0x48] sm:$0xff]
  %v6803 = vld [vmem:[#allocation2 + $0x50] sm:$0xff]
  %v6804 = vld [vmem:[#allocation2 + $0x58] sm:$0xff]
  %v6805 = vld [vmem:[#allocation2 + $0x60] sm:$0xff]
  %v6806 = vld [vmem:[#allocation2 + $0x68] sm:$0xff]
  %v6807 = vld [vmem:[#allocation2 + $0x70] sm:$0xff]
  %v6808 = vld [vmem:[#allocation2 + $0x78] sm:$0xff]
  %v6809 = vld [vmem:[#allocation2 + $0x80] sm:$0xff]
  %v6810 = vld [vmem:[#allocation2 + $0x88] sm:$0xff]
  %v6811 = vld [vmem:[#allocation2 + $0x90] sm:$0xff]
  %v6812 = vld [vmem:[#allocation2 + $0x98] sm:$0xff]
  %v6813 = vld [vmem:[#allocation2 + $0xa0] sm:$0xff]
  %v6814 = vld [vmem:[#allocation2 + $0xa8] sm:$0xff]
  %v6815 = vld [vmem:[#allocation2 + $0xb0] sm:$0xff]
  %v6816 = vld [vmem:[#allocation2 + $0xb8] sm:$0xff]
  %v6817 = vld [vmem:[#allocation2 + $0xc0] sm:$0xff]
  %v6818 = vld [vmem:[#allocation2 + $0xc8] sm:$0xff]
  %v6819 = vld [vmem:[#allocation2 + $0xd0] sm:$0xff]
  %v6820 = vld [vmem:[#allocation2 + $0xd8] sm:$0xff]
  %v6821 = vld [vmem:[#allocation2 + $0xe0] sm:$0xff]
  %v6822 = vld [vmem:[#allocation2 + $0xe8] sm:$0xff]
  %v6823 = vld [vmem:[#allocation2 + $0xf0] sm:$0xff]
  %v6824 = vld [vmem:[#allocation2 + $0xf8] sm:$0xff]
  %v6825 = vld [vmem:[#allocation2 + $0x100] sm:$0xff]
  %v6826 = vld [vmem:[#allocation2 + $0x108] sm:$0xff]
  %6859 = vrot.lane.b32.xlu0 %v6795, 16
  %v6860 = vpop.permute.xlu0 %6859
  %6861 = vrot.lane.b32.xlu0 %v6796, 16
  %v6862 = vpop.permute.xlu0 %6861
  %6863 = vrot.lane.b32.xlu0 %v6797, 16
  %v6864 = vpop.permute.xlu0 %6863
  %6865 = vrot.lane.b32.xlu0 %v6798, 16
  %v6866 = vpop.permute.xlu0 %6865
  %6867 = vrot.lane.b32.xlu0 %v6799, 16
  %v6868 = vpop.permute.xlu0 %6867
  %6869 = vrot.lane.b32.xlu0 %v6800, 16
  %v6870 = vpop.permute.xlu0 %6869
  %6871 = vrot.lane.b32.xlu0 %v6801, 16
  %v6872 = vpop.permute.xlu0 %6871
  %6873 = vrot.lane.b32.xlu0 %v6802, 16
  %v6874 = vpop.permute.xlu0 %6873
  %6875 = vrot.lane.b32.xlu0 %v6803, 16
  %v6876 = vpop.permute.xlu0 %6875
  %6877 = vrot.lane.b32.xlu0 %v6804, 16
  %v6878 = vpop.permute.xlu0 %6877
  %6879 = vrot.lane.b32.xlu0 %v6805, 16
  %v6880 = vpop.permute.xlu0 %6879
  %6881 = vrot.lane.b32.xlu0 %v6806, 16
  %v6882 = vpop.permute.xlu0 %6881
  %6883 = vrot.lane.b32.xlu0 %v6807, 16
  %v6884 = vpop.permute.xlu0 %6883
  %6885 = vrot.lane.b32.xlu0 %v6808, 16
  %v6886 = vpop.permute.xlu0 %6885
  %6887 = vrot.lane.b32.xlu0 %v6809, 16
  %v6888 = vpop.permute.xlu0 %6887
  %6889 = vrot.lane.b32.xlu0 %v6810, 16
  %v6890 = vpop.permute.xlu0 %6889
  %6891 = vrot.lane.b32.xlu0 %v6811, 16
  %v6892 = vpop.permute.xlu0 %6891
  %6893 = vrot.lane.b32.xlu0 %v6812, 16
  %v6894 = vpop.permute.xlu0 %6893
  %6895 = vrot.lane.b32.xlu0 %v6813, 16
  %v6896 = vpop.permute.xlu0 %6895
  %6897 = vrot.lane.b32.xlu0 %v6814, 16
  %v6898 = vpop.permute.xlu0 %6897
  %6899 = vrot.lane.b32.xlu0 %v6815, 16
  %v6900 = vpop.permute.xlu0 %6899
  %6901 = vrot.lane.b32.xlu0 %v6816, 16
  %v6902 = vpop.permute.xlu0 %6901
  %6903 = vrot.lane.b32.xlu0 %v6817, 16
  %v6904 = vpop.permute.xlu0 %6903
  %6905 = vrot.lane.b32.xlu0 %v6818, 16
  %v6906 = vpop.permute.xlu0 %6905
  %6907 = vrot.lane.b32.xlu0 %v6819, 16
  %v6908 = vpop.permute.xlu0 %6907
  %6909 = vrot.lane.b32.xlu0 %v6820, 16
  %v6910 = vpop.permute.xlu0 %6909
  %6911 = vrot.lane.b32.xlu0 %v6821, 16
  %v6912 = vpop.permute.xlu0 %6911
  %6913 = vrot.lane.b32.xlu0 %v6822, 16
  %v6914 = vpop.permute.xlu0 %6913
  %6915 = vrot.lane.b32.xlu0 %v6823, 16
  %v6916 = vpop.permute.xlu0 %6915
  %6917 = vrot.lane.b32.xlu0 %v6824, 16
  %v6918 = vpop.permute.xlu0 %6917
  %6919 = vrot.lane.b32.xlu0 %v6825, 16
  %v6920 = vpop.permute.xlu0 %6919
  %6921 = vrot.lane.b32.xlu0 %v6826, 16
  %v6922 = vpop.permute.xlu0 %6921
  %vm6955 = vcmask 162944
  %6956 = vst.msk [vmem:[#allocation3] sm:$0xff] %vm6955, %v6860
  %6957 = vst.msk [vmem:[#allocation3 + $0x8] sm:$0xff] %vm6955, %v6862
  %6958 = vst.msk [vmem:[#allocation3 + $0x10] sm:$0xff] %vm6955, %v6864
  %6959 = vst.msk [vmem:[#allocation3 + $0x18] sm:$0xff] %vm6955, %v6866
  %6960 = vst.msk [vmem:[#allocation3 + $0x20] sm:$0xff] %vm6955, %v6868
  %6961 = vst.msk [vmem:[#allocation3 + $0x28] sm:$0xff] %vm6955, %v6870
  %6962 = vst.msk [vmem:[#allocation3 + $0x30] sm:$0xff] %vm6955, %v6872
  %6963 = vst.msk [vmem:[#allocation3 + $0x38] sm:$0xff] %vm6955, %v6874
  %6964 = vst.msk [vmem:[#allocation3 + $0x40] sm:$0xff] %vm6955, %v6876
  %6965 = vst.msk [vmem:[#allocation3 + $0x48] sm:$0xff] %vm6955, %v6878
  %6966 = vst.msk [vmem:[#allocation3 + $0x50] sm:$0xff] %vm6955, %v6880
  %6967 = vst.msk [vmem:[#allocation3 + $0x58] sm:$0xff] %vm6955, %v6882
  %6968 = vst.msk [vmem:[#allocation3 + $0x60] sm:$0xff] %vm6955, %v6884
  %6969 = vst.msk [vmem:[#allocation3 + $0x68] sm:$0xff] %vm6955, %v6886
  %6970 = vst.msk [vmem:[#allocation3 + $0x70] sm:$0xff] %vm6955, %v6888
  %6971 = vst.msk [vmem:[#allocation3 + $0x78] sm:$0xff] %vm6955, %v6890
  %6972 = vst.msk [vmem:[#allocation3 + $0x80] sm:$0xff] %vm6955, %v6892
  %6973 = vst.msk [vmem:[#allocation3 + $0x88] sm:$0xff] %vm6955, %v6894
  %6974 = vst.msk [vmem:[#allocation3 + $0x90] sm:$0xff] %vm6955, %v6896
  %6975 = vst.msk [vmem:[#allocation3 + $0x98] sm:$0xff] %vm6955, %v6898
  %6976 = vst.msk [vmem:[#allocation3 + $0xa0] sm:$0xff] %vm6955, %v6900
  %6977 = vst.msk [vmem:[#allocation3 + $0xa8] sm:$0xff] %vm6955, %v6902
  %6978 = vst.msk [vmem:[#allocation3 + $0xb0] sm:$0xff] %vm6955, %v6904
  %6979 = vst.msk [vmem:[#allocation3 + $0xb8] sm:$0xff] %vm6955, %v6906
  %6980 = vst.msk [vmem:[#allocation3 + $0xc0] sm:$0xff] %vm6955, %v6908
  %6981 = vst.msk [vmem:[#allocation3 + $0xc8] sm:$0xff] %vm6955, %v6910
  %6982 = vst.msk [vmem:[#allocation3 + $0xd0] sm:$0xff] %vm6955, %v6912
  %6983 = vst.msk [vmem:[#allocation3 + $0xd8] sm:$0xff] %vm6955, %v6914
  %6984 = vst.msk [vmem:[#allocation3 + $0xe0] sm:$0xff] %vm6955, %v6916
  %6985 = vst.msk [vmem:[#allocation3 + $0xe8] sm:$0xff] %vm6955, %v6918
  %6986 = vst.msk [vmem:[#allocation3 + $0xf0] sm:$0xff] %vm6955, %v6920
  %6987 = vst.msk [vmem:[#allocation3 + $0xf8] sm:$0xff] %vm6955, %v6922
  %v6988 = vld [vmem:[#allocation2 + $0x10] sm:$0xff]
  %v6989 = vld [vmem:[#allocation2 + $0x18] sm:$0xff]
  %v6990 = vld [vmem:[#allocation2 + $0x20] sm:$0xff]
  %v6991 = vld [vmem:[#allocation2 + $0x28] sm:$0xff]
  %v6992 = vld [vmem:[#allocation2 + $0x30] sm:$0xff]
  %v6993 = vld [vmem:[#allocation2 + $0x38] sm:$0xff]
  %v6994 = vld [vmem:[#allocation2 + $0x40] sm:$0xff]
  %v6995 = vld [vmem:[#allocation2 + $0x48] sm:$0xff]
  %v6996 = vld [vmem:[#allocation2 + $0x50] sm:$0xff]
  %v6997 = vld [vmem:[#allocation2 + $0x58] sm:$0xff]
  %v6998 = vld [vmem:[#allocation2 + $0x60] sm:$0xff]
  %v6999 = vld [vmem:[#allocation2 + $0x68] sm:$0xff]
  %v7000 = vld [vmem:[#allocation2 + $0x70] sm:$0xff]
  %v7001 = vld [vmem:[#allocation2 + $0x78] sm:$0xff]
  %v7002 = vld [vmem:[#allocation2 + $0x80] sm:$0xff]
  %v7003 = vld [vmem:[#allocation2 + $0x88] sm:$0xff]
  %v7004 = vld [vmem:[#allocation2 + $0x90] sm:$0xff]
  %v7005 = vld [vmem:[#allocation2 + $0x98] sm:$0xff]
  %v7006 = vld [vmem:[#allocation2 + $0xa0] sm:$0xff]
  %v7007 = vld [vmem:[#allocation2 + $0xa8] sm:$0xff]
  %v7008 = vld [vmem:[#allocation2 + $0xb0] sm:$0xff]
  %v7009 = vld [vmem:[#allocation2 + $0xb8] sm:$0xff]
  %v7010 = vld [vmem:[#allocation2 + $0xc0] sm:$0xff]
  %v7011 = vld [vmem:[#allocation2 + $0xc8] sm:$0xff]
  %v7012 = vld [vmem:[#allocation2 + $0xd0] sm:$0xff]
  %v7013 = vld [vmem:[#allocation2 + $0xd8] sm:$0xff]
  %v7014 = vld [vmem:[#allocation2 + $0xe0] sm:$0xff]
  %v7015 = vld [vmem:[#allocation2 + $0xe8] sm:$0xff]
  %v7016 = vld [vmem:[#allocation2 + $0xf0] sm:$0xff]
  %v7017 = vld [vmem:[#allocation2 + $0xf8] sm:$0xff]
  %v7018 = vld [vmem:[#allocation2 + $0x100] sm:$0xff]
  %v7019 = vld [vmem:[#allocation2 + $0x108] sm:$0xff]
  %v7020 = vld [vmem:[#allocation2 + $0x110] sm:$0x1]
  %7021 = vset.pattern.permute.xlu0 5
  %7022 = vperm.xlu0 %7021, %v788
  %v7023 = vpop.permute.xlu0 %7022
  %v7026 = vunpack.c.l.s4 839922192
  %v7027 = vunpack.c.0.s8 %v7026
  %v7028 = vlaneseq
  %v7029 = vshrl.u32 %v7028, 7
  %v7030 = vsub.s32 %v7027, %v7029
  %v7031 = vrot.slane %v7023, %v7030
  %7032 = vset.pattern.permute.xlu0 5
  %7033 = vperm.xlu0 %7032, %v789
  %v7034 = vpop.permute.xlu0 %7033
  %v7037 = vunpack.c.l.s4 839922192
  %v7038 = vunpack.c.0.s8 %v7037
  %v7039 = vlaneseq
  %v7040 = vshrl.u32 %v7039, 7
  %v7041 = vsub.s32 %v7038, %v7040
  %v7042 = vrot.slane %v7034, %v7041
  %7043 = vset.pattern.permute.xlu0 5
  %7044 = vperm.xlu0 %7043, %v790
  %v7045 = vpop.permute.xlu0 %7044
  %v7048 = vunpack.c.l.s4 839922192
  %v7049 = vunpack.c.0.s8 %v7048
  %v7050 = vlaneseq
  %v7051 = vshrl.u32 %v7050, 7
  %v7052 = vsub.s32 %v7049, %v7051
  %v7053 = vrot.slane %v7045, %v7052
  %7054 = vset.pattern.permute.xlu0 5
  %7055 = vperm.xlu0 %7054, %v791
  %v7056 = vpop.permute.xlu0 %7055
  %v7059 = vunpack.c.l.s4 839922192
  %v7060 = vunpack.c.0.s8 %v7059
  %v7061 = vlaneseq
  %v7062 = vshrl.u32 %v7061, 7
  %v7063 = vsub.s32 %v7060, %v7062
  %v7064 = vrot.slane %v7056, %v7063
  %7065 = vset.pattern.permute.xlu0 5
  %7066 = vperm.xlu0 %7065, %v792
  %v7067 = vpop.permute.xlu0 %7066
  %v7070 = vunpack.c.l.s4 839922192
  %v7071 = vunpack.c.0.s8 %v7070
  %v7072 = vlaneseq
  %v7073 = vshrl.u32 %v7072, 7
  %v7074 = vsub.s32 %v7071, %v7073
  %v7075 = vrot.slane %v7067, %v7074
  %7076 = vset.pattern.permute.xlu0 5
  %7077 = vperm.xlu0 %7076, %v793
  %v7078 = vpop.permute.xlu0 %7077
  %v7081 = vunpack.c.l.s4 839922192
  %v7082 = vunpack.c.0.s8 %v7081
  %v7083 = vlaneseq
  %v7084 = vshrl.u32 %v7083, 7
  %v7085 = vsub.s32 %v7082, %v7084
  %v7086 = vrot.slane %v7078, %v7085
  %7087 = vset.pattern.permute.xlu0 5
  %7088 = vperm.xlu0 %7087, %v794
  %v7089 = vpop.permute.xlu0 %7088
  %v7092 = vunpack.c.l.s4 839922192
  %v7093 = vunpack.c.0.s8 %v7092
  %v7094 = vlaneseq
  %v7095 = vshrl.u32 %v7094, 7
  %v7096 = vsub.s32 %v7093, %v7095
  %v7097 = vrot.slane %v7089, %v7096
  %7098 = vset.pattern.permute.xlu0 5
  %7099 = vperm.xlu0 %7098, %v795
  %v7100 = vpop.permute.xlu0 %7099
  %v7103 = vunpack.c.l.s4 839922192
  %v7104 = vunpack.c.0.s8 %v7103
  %v7105 = vlaneseq
  %v7106 = vshrl.u32 %v7105, 7
  %v7107 = vsub.s32 %v7104, %v7106
  %v7108 = vrot.slane %v7100, %v7107
  %7109 = vset.pattern.permute.xlu0 5
  %7110 = vperm.xlu0 %7109, %v796
  %v7111 = vpop.permute.xlu0 %7110
  %v7114 = vunpack.c.l.s4 839922192
  %v7115 = vunpack.c.0.s8 %v7114
  %v7116 = vlaneseq
  %v7117 = vshrl.u32 %v7116, 7
  %v7118 = vsub.s32 %v7115, %v7117
  %v7119 = vrot.slane %v7111, %v7118
  %7120 = vset.pattern.permute.xlu0 5
  %7121 = vperm.xlu0 %7120, %v797
  %v7122 = vpop.permute.xlu0 %7121
  %v7125 = vunpack.c.l.s4 839922192
  %v7126 = vunpack.c.0.s8 %v7125
  %v7127 = vlaneseq
  %v7128 = vshrl.u32 %v7127, 7
  %v7129 = vsub.s32 %v7126, %v7128
  %v7130 = vrot.slane %v7122, %v7129
  %7131 = vset.pattern.permute.xlu0 5
  %7132 = vperm.xlu0 %7131, %v798
  %v7133 = vpop.permute.xlu0 %7132
  %v7136 = vunpack.c.l.s4 839922192
  %v7137 = vunpack.c.0.s8 %v7136
  %v7138 = vlaneseq
  %v7139 = vshrl.u32 %v7138, 7
  %v7140 = vsub.s32 %v7137, %v7139
  %v7141 = vrot.slane %v7133, %v7140
  %7142 = vset.pattern.permute.xlu0 5
  %7143 = vperm.xlu0 %7142, %v799
  %v7144 = vpop.permute.xlu0 %7143
  %v7147 = vunpack.c.l.s4 839922192
  %v7148 = vunpack.c.0.s8 %v7147
  %v7149 = vlaneseq
  %v7150 = vshrl.u32 %v7149, 7
  %v7151 = vsub.s32 %v7148, %v7150
  %v7152 = vrot.slane %v7144, %v7151
  %7153 = vset.pattern.permute.xlu0 5
  %7154 = vperm.xlu0 %7153, %v800
  %v7155 = vpop.permute.xlu0 %7154
  %v7158 = vunpack.c.l.s4 839922192
  %v7159 = vunpack.c.0.s8 %v7158
  %v7160 = vlaneseq
  %v7161 = vshrl.u32 %v7160, 7
  %v7162 = vsub.s32 %v7159, %v7161
  %v7163 = vrot.slane %v7155, %v7162
  %7164 = vset.pattern.permute.xlu0 5
  %7165 = vperm.xlu0 %7164, %v801
  %v7166 = vpop.permute.xlu0 %7165
  %v7169 = vunpack.c.l.s4 839922192
  %v7170 = vunpack.c.0.s8 %v7169
  %v7171 = vlaneseq
  %v7172 = vshrl.u32 %v7171, 7
  %v7173 = vsub.s32 %v7170, %v7172
  %v7174 = vrot.slane %v7166, %v7173
  %7175 = vset.pattern.permute.xlu0 5
  %7176 = vperm.xlu0 %7175, %v802
  %v7177 = vpop.permute.xlu0 %7176
  %v7180 = vunpack.c.l.s4 839922192
  %v7181 = vunpack.c.0.s8 %v7180
  %v7182 = vlaneseq
  %v7183 = vshrl.u32 %v7182, 7
  %v7184 = vsub.s32 %v7181, %v7183
  %v7185 = vrot.slane %v7177, %v7184
  %7186 = vset.pattern.permute.xlu0 5
  %7187 = vperm.xlu0 %7186, %v803
  %v7188 = vpop.permute.xlu0 %7187
  %v7191 = vunpack.c.l.s4 839922192
  %v7192 = vunpack.c.0.s8 %v7191
  %v7193 = vlaneseq
  %v7194 = vshrl.u32 %v7193, 7
  %v7195 = vsub.s32 %v7192, %v7194
  %v7196 = vrot.slane %v7188, %v7195
  %7197 = vset.pattern.permute.xlu0 5
  %7198 = vperm.xlu0 %7197, %v804
  %v7199 = vpop.permute.xlu0 %7198
  %v7202 = vunpack.c.l.s4 839922192
  %v7203 = vunpack.c.0.s8 %v7202
  %v7204 = vlaneseq
  %v7205 = vshrl.u32 %v7204, 7
  %v7206 = vsub.s32 %v7203, %v7205
  %v7207 = vrot.slane %v7199, %v7206
  %7208 = vset.pattern.permute.xlu0 5
  %7209 = vperm.xlu0 %7208, %v805
  %v7210 = vpop.permute.xlu0 %7209
  %v7213 = vunpack.c.l.s4 839922192
  %v7214 = vunpack.c.0.s8 %v7213
  %v7215 = vlaneseq
  %v7216 = vshrl.u32 %v7215, 7
  %v7217 = vsub.s32 %v7214, %v7216
  %v7218 = vrot.slane %v7210, %v7217
  %7219 = vset.pattern.permute.xlu0 5
  %7220 = vperm.xlu0 %7219, %v806
  %v7221 = vpop.permute.xlu0 %7220
  %v7224 = vunpack.c.l.s4 839922192
  %v7225 = vunpack.c.0.s8 %v7224
  %v7226 = vlaneseq
  %v7227 = vshrl.u32 %v7226, 7
  %v7228 = vsub.s32 %v7225, %v7227
  %v7229 = vrot.slane %v7221, %v7228
  %7230 = vset.pattern.permute.xlu0 5
  %7231 = vperm.xlu0 %7230, %v807
  %v7232 = vpop.permute.xlu0 %7231
  %v7235 = vunpack.c.l.s4 839922192
  %v7236 = vunpack.c.0.s8 %v7235
  %v7237 = vlaneseq
  %v7238 = vshrl.u32 %v7237, 7
  %v7239 = vsub.s32 %v7236, %v7238
  %v7240 = vrot.slane %v7232, %v7239
  %7241 = vset.pattern.permute.xlu0 5
  %7242 = vperm.xlu0 %7241, %v808
  %v7243 = vpop.permute.xlu0 %7242
  %v7246 = vunpack.c.l.s4 839922192
  %v7247 = vunpack.c.0.s8 %v7246
  %v7248 = vlaneseq
  %v7249 = vshrl.u32 %v7248, 7
  %v7250 = vsub.s32 %v7247, %v7249
  %v7251 = vrot.slane %v7243, %v7250
  %7252 = vset.pattern.permute.xlu0 5
  %7253 = vperm.xlu0 %7252, %v809
  %v7254 = vpop.permute.xlu0 %7253
  %v7257 = vunpack.c.l.s4 839922192
  %v7258 = vunpack.c.0.s8 %v7257
  %v7259 = vlaneseq
  %v7260 = vshrl.u32 %v7259, 7
  %v7261 = vsub.s32 %v7258, %v7260
  %v7262 = vrot.slane %v7254, %v7261
  %7263 = vset.pattern.permute.xlu0 5
  %7264 = vperm.xlu0 %7263, %v810
  %v7265 = vpop.permute.xlu0 %7264
  %v7268 = vunpack.c.l.s4 839922192
  %v7269 = vunpack.c.0.s8 %v7268
  %v7270 = vlaneseq
  %v7271 = vshrl.u32 %v7270, 7
  %v7272 = vsub.s32 %v7269, %v7271
  %v7273 = vrot.slane %v7265, %v7272
  %7274 = vset.pattern.permute.xlu0 5
  %7275 = vperm.xlu0 %7274, %v811
  %v7276 = vpop.permute.xlu0 %7275
  %v7279 = vunpack.c.l.s4 839922192
  %v7280 = vunpack.c.0.s8 %v7279
  %v7281 = vlaneseq
  %v7282 = vshrl.u32 %v7281, 7
  %v7283 = vsub.s32 %v7280, %v7282
  %v7284 = vrot.slane %v7276, %v7283
  %7285 = vset.pattern.permute.xlu0 5
  %7286 = vperm.xlu0 %7285, %v812
  %v7287 = vpop.permute.xlu0 %7286
  %v7290 = vunpack.c.l.s4 839922192
  %v7291 = vunpack.c.0.s8 %v7290
  %v7292 = vlaneseq
  %v7293 = vshrl.u32 %v7292, 7
  %v7294 = vsub.s32 %v7291, %v7293
  %v7295 = vrot.slane %v7287, %v7294
  %7296 = vset.pattern.permute.xlu0 5
  %7297 = vperm.xlu0 %7296, %v813
  %v7298 = vpop.permute.xlu0 %7297
  %v7301 = vunpack.c.l.s4 839922192
  %v7302 = vunpack.c.0.s8 %v7301
  %v7303 = vlaneseq
  %v7304 = vshrl.u32 %v7303, 7
  %v7305 = vsub.s32 %v7302, %v7304
  %v7306 = vrot.slane %v7298, %v7305
  %7307 = vset.pattern.permute.xlu0 5
  %7308 = vperm.xlu0 %7307, %v814
  %v7309 = vpop.permute.xlu0 %7308
  %v7312 = vunpack.c.l.s4 839922192
  %v7313 = vunpack.c.0.s8 %v7312
  %v7314 = vlaneseq
  %v7315 = vshrl.u32 %v7314, 7
  %v7316 = vsub.s32 %v7313, %v7315
  %v7317 = vrot.slane %v7309, %v7316
  %7318 = vset.pattern.permute.xlu0 5
  %7319 = vperm.xlu0 %7318, %v815
  %v7320 = vpop.permute.xlu0 %7319
  %v7323 = vunpack.c.l.s4 839922192
  %v7324 = vunpack.c.0.s8 %v7323
  %v7325 = vlaneseq
  %v7326 = vshrl.u32 %v7325, 7
  %v7327 = vsub.s32 %v7324, %v7326
  %v7328 = vrot.slane %v7320, %v7327
  %7329 = vset.pattern.permute.xlu0 5
  %7330 = vperm.xlu0 %7329, %v816
  %v7331 = vpop.permute.xlu0 %7330
  %v7334 = vunpack.c.l.s4 839922192
  %v7335 = vunpack.c.0.s8 %v7334
  %v7336 = vlaneseq
  %v7337 = vshrl.u32 %v7336, 7
  %v7338 = vsub.s32 %v7335, %v7337
  %v7339 = vrot.slane %v7331, %v7338
  %7340 = vset.pattern.permute.xlu0 5
  %7341 = vperm.xlu0 %7340, %v817
  %v7342 = vpop.permute.xlu0 %7341
  %v7345 = vunpack.c.l.s4 839922192
  %v7346 = vunpack.c.0.s8 %v7345
  %v7347 = vlaneseq
  %v7348 = vshrl.u32 %v7347, 7
  %v7349 = vsub.s32 %v7346, %v7348
  %v7350 = vrot.slane %v7342, %v7349
  %7351 = vset.pattern.permute.xlu0 5
  %7352 = vperm.xlu0 %7351, %v818
  %v7353 = vpop.permute.xlu0 %7352
  %v7356 = vunpack.c.l.s4 839922192
  %v7357 = vunpack.c.0.s8 %v7356
  %v7358 = vlaneseq
  %v7359 = vshrl.u32 %v7358, 7
  %v7360 = vsub.s32 %v7357, %v7359
  %v7361 = vrot.slane %v7353, %v7360
  %7362 = vset.pattern.permute.xlu0 5
  %7363 = vperm.xlu0 %7362, %v819
  %v7364 = vpop.permute.xlu0 %7363
  %v7367 = vunpack.c.l.s4 839922192
  %v7368 = vunpack.c.0.s8 %v7367
  %v7369 = vlaneseq
  %v7370 = vshrl.u32 %v7369, 7
  %v7371 = vsub.s32 %v7368, %v7370
  %v7372 = vrot.slane %v7364, %v7371
  %7373 = vset.pattern.permute.xlu0 5
  %7374 = vperm.xlu0 %7373, %v820
  %v7375 = vpop.permute.xlu0 %7374
  %v7378 = vunpack.c.l.s4 839922192
  %v7379 = vunpack.c.0.s8 %v7378
  %v7380 = vlaneseq
  %v7381 = vshrl.u32 %v7380, 7
  %v7382 = vsub.s32 %v7379, %v7381
  %v7383 = vrot.slane %v7375, %v7382
  %7384 = vset.pattern.permute.xlu0 5
  %7385 = vperm.xlu0 %7384, %v821
  %v7386 = vpop.permute.xlu0 %7385
  %v7389 = vunpack.c.l.s4 839922192
  %v7390 = vunpack.c.0.s8 %v7389
  %v7391 = vlaneseq
  %v7392 = vshrl.u32 %v7391, 7
  %v7393 = vsub.s32 %v7390, %v7392
  %v7394 = vrot.slane %v7386, %v7393
  %7395 = vset.pattern.permute.xlu0 5
  %7396 = vperm.xlu0 %7395, %v822
  %v7397 = vpop.permute.xlu0 %7396
  %v7400 = vunpack.c.l.s4 839922192
  %v7401 = vunpack.c.0.s8 %v7400
  %v7402 = vlaneseq
  %v7403 = vshrl.u32 %v7402, 7
  %v7404 = vsub.s32 %v7401, %v7403
  %v7405 = vrot.slane %v7397, %v7404
  %7406 = vset.pattern.permute.xlu0 5
  %7407 = vperm.xlu0 %7406, %v823
  %v7408 = vpop.permute.xlu0 %7407
  %v7411 = vunpack.c.l.s4 839922192
  %v7412 = vunpack.c.0.s8 %v7411
  %v7413 = vlaneseq
  %v7414 = vshrl.u32 %v7413, 7
  %v7415 = vsub.s32 %v7412, %v7414
  %v7416 = vrot.slane %v7408, %v7415
  %7417 = vset.pattern.permute.xlu0 5
  %7418 = vperm.xlu0 %7417, %v824
  %v7419 = vpop.permute.xlu0 %7418
  %v7422 = vunpack.c.l.s4 839922192
  %v7423 = vunpack.c.0.s8 %v7422
  %v7424 = vlaneseq
  %v7425 = vshrl.u32 %v7424, 7
  %v7426 = vsub.s32 %v7423, %v7425
  %v7427 = vrot.slane %v7419, %v7426
  %7428 = vset.pattern.permute.xlu0 5
  %7429 = vperm.xlu0 %7428, %v825
  %v7430 = vpop.permute.xlu0 %7429
  %v7433 = vunpack.c.l.s4 839922192
  %v7434 = vunpack.c.0.s8 %v7433
  %v7435 = vlaneseq
  %v7436 = vshrl.u32 %v7435, 7
  %v7437 = vsub.s32 %v7434, %v7436
  %v7438 = vrot.slane %v7430, %v7437
  %7439 = vset.pattern.permute.xlu0 5
  %7440 = vperm.xlu0 %7439, %v826
  %v7441 = vpop.permute.xlu0 %7440
  %v7444 = vunpack.c.l.s4 839922192
  %v7445 = vunpack.c.0.s8 %v7444
  %v7446 = vlaneseq
  %v7447 = vshrl.u32 %v7446, 7
  %v7448 = vsub.s32 %v7445, %v7447
  %v7449 = vrot.slane %v7441, %v7448
  %7450 = vset.pattern.permute.xlu0 5
  %7451 = vperm.xlu0 %7450, %v827
  %v7452 = vpop.permute.xlu0 %7451
  %v7455 = vunpack.c.l.s4 839922192
  %v7456 = vunpack.c.0.s8 %v7455
  %v7457 = vlaneseq
  %v7458 = vshrl.u32 %v7457, 7
  %v7459 = vsub.s32 %v7456, %v7458
  %v7460 = vrot.slane %v7452, %v7459
  %7461 = vset.pattern.permute.xlu0 5
  %7462 = vperm.xlu0 %7461, %v828
  %v7463 = vpop.permute.xlu0 %7462
  %v7466 = vunpack.c.l.s4 839922192
  %v7467 = vunpack.c.0.s8 %v7466
  %v7468 = vlaneseq
  %v7469 = vshrl.u32 %v7468, 7
  %v7470 = vsub.s32 %v7467, %v7469
  %v7471 = vrot.slane %v7463, %v7470
  %7472 = vset.pattern.permute.xlu0 5
  %7473 = vperm.xlu0 %7472, %v829
  %v7474 = vpop.permute.xlu0 %7473
  %v7477 = vunpack.c.l.s4 839922192
  %v7478 = vunpack.c.0.s8 %v7477
  %v7479 = vlaneseq
  %v7480 = vshrl.u32 %v7479, 7
  %v7481 = vsub.s32 %v7478, %v7480
  %v7482 = vrot.slane %v7474, %v7481
  %7483 = vset.pattern.permute.xlu0 5
  %7484 = vperm.xlu0 %7483, %v830
  %v7485 = vpop.permute.xlu0 %7484
  %v7488 = vunpack.c.l.s4 839922192
  %v7489 = vunpack.c.0.s8 %v7488
  %v7490 = vlaneseq
  %v7491 = vshrl.u32 %v7490, 7
  %v7492 = vsub.s32 %v7489, %v7491
  %v7493 = vrot.slane %v7485, %v7492
  %7494 = vset.pattern.permute.xlu0 5
  %7495 = vperm.xlu0 %7494, %v831
  %v7496 = vpop.permute.xlu0 %7495
  %v7499 = vunpack.c.l.s4 839922192
  %v7500 = vunpack.c.0.s8 %v7499
  %v7501 = vlaneseq
  %v7502 = vshrl.u32 %v7501, 7
  %v7503 = vsub.s32 %v7500, %v7502
  %v7504 = vrot.slane %v7496, %v7503
  %7505 = vset.pattern.permute.xlu0 5
  %7506 = vperm.xlu0 %7505, %v832
  %v7507 = vpop.permute.xlu0 %7506
  %v7510 = vunpack.c.l.s4 839922192
  %v7511 = vunpack.c.0.s8 %v7510
  %v7512 = vlaneseq
  %v7513 = vshrl.u32 %v7512, 7
  %v7514 = vsub.s32 %v7511, %v7513
  %v7515 = vrot.slane %v7507, %v7514
  %7516 = vset.pattern.permute.xlu0 5
  %7517 = vperm.xlu0 %7516, %v833
  %v7518 = vpop.permute.xlu0 %7517
  %v7521 = vunpack.c.l.s4 839922192
  %v7522 = vunpack.c.0.s8 %v7521
  %v7523 = vlaneseq
  %v7524 = vshrl.u32 %v7523, 7
  %v7525 = vsub.s32 %v7522, %v7524
  %v7526 = vrot.slane %v7518, %v7525
  %7527 = vset.pattern.permute.xlu0 5
  %7528 = vperm.xlu0 %7527, %v834
  %v7529 = vpop.permute.xlu0 %7528
  %v7532 = vunpack.c.l.s4 839922192
  %v7533 = vunpack.c.0.s8 %v7532
  %v7534 = vlaneseq
  %v7535 = vshrl.u32 %v7534, 7
  %v7536 = vsub.s32 %v7533, %v7535
  %v7537 = vrot.slane %v7529, %v7536
  %7538 = vset.pattern.permute.xlu0 5
  %7539 = vperm.xlu0 %7538, %v835
  %v7540 = vpop.permute.xlu0 %7539
  %v7543 = vunpack.c.l.s4 839922192
  %v7544 = vunpack.c.0.s8 %v7543
  %v7545 = vlaneseq
  %v7546 = vshrl.u32 %v7545, 7
  %v7547 = vsub.s32 %v7544, %v7546
  %v7548 = vrot.slane %v7540, %v7547
  %7549 = vset.pattern.permute.xlu0 5
  %7550 = vperm.xlu0 %7549, %v836
  %v7551 = vpop.permute.xlu0 %7550
  %v7554 = vunpack.c.l.s4 839922192
  %v7555 = vunpack.c.0.s8 %v7554
  %v7556 = vlaneseq
  %v7557 = vshrl.u32 %v7556, 7
  %v7558 = vsub.s32 %v7555, %v7557
  %v7559 = vrot.slane %v7551, %v7558
  %7560 = vset.pattern.permute.xlu0 5
  %7561 = vperm.xlu0 %7560, %v837
  %v7562 = vpop.permute.xlu0 %7561
  %v7565 = vunpack.c.l.s4 839922192
  %v7566 = vunpack.c.0.s8 %v7565
  %v7567 = vlaneseq
  %v7568 = vshrl.u32 %v7567, 7
  %v7569 = vsub.s32 %v7566, %v7568
  %v7570 = vrot.slane %v7562, %v7569
  %7571 = vset.pattern.permute.xlu0 5
  %7572 = vperm.xlu0 %7571, %v838
  %v7573 = vpop.permute.xlu0 %7572
  %v7576 = vunpack.c.l.s4 839922192
  %v7577 = vunpack.c.0.s8 %v7576
  %v7578 = vlaneseq
  %v7579 = vshrl.u32 %v7578, 7
  %v7580 = vsub.s32 %v7577, %v7579
  %v7581 = vrot.slane %v7573, %v7580
  %7582 = vset.pattern.permute.xlu0 5
  %7583 = vperm.xlu0 %7582, %v839
  %v7584 = vpop.permute.xlu0 %7583
  %v7587 = vunpack.c.l.s4 839922192
  %v7588 = vunpack.c.0.s8 %v7587
  %v7589 = vlaneseq
  %v7590 = vshrl.u32 %v7589, 7
  %v7591 = vsub.s32 %v7588, %v7590
  %v7592 = vrot.slane %v7584, %v7591
  %7593 = vset.pattern.permute.xlu0 5
  %7594 = vperm.xlu0 %7593, %v840
  %v7595 = vpop.permute.xlu0 %7594
  %v7598 = vunpack.c.l.s4 839922192
  %v7599 = vunpack.c.0.s8 %v7598
  %v7600 = vlaneseq
  %v7601 = vshrl.u32 %v7600, 7
  %v7602 = vsub.s32 %v7599, %v7601
  %v7603 = vrot.slane %v7595, %v7602
  %7604 = vset.pattern.permute.xlu0 5
  %7605 = vperm.xlu0 %7604, %v841
  %v7606 = vpop.permute.xlu0 %7605
  %v7609 = vunpack.c.l.s4 839922192
  %v7610 = vunpack.c.0.s8 %v7609
  %v7611 = vlaneseq
  %v7612 = vshrl.u32 %v7611, 7
  %v7613 = vsub.s32 %v7610, %v7612
  %v7614 = vrot.slane %v7606, %v7613
  %7615 = vset.pattern.permute.xlu0 5
  %7616 = vperm.xlu0 %7615, %v842
  %v7617 = vpop.permute.xlu0 %7616
  %v7620 = vunpack.c.l.s4 839922192
  %v7621 = vunpack.c.0.s8 %v7620
  %v7622 = vlaneseq
  %v7623 = vshrl.u32 %v7622, 7
  %v7624 = vsub.s32 %v7621, %v7623
  %v7625 = vrot.slane %v7617, %v7624
  %7626 = vset.pattern.permute.xlu0 5
  %7627 = vperm.xlu0 %7626, %v843
  %v7628 = vpop.permute.xlu0 %7627
  %v7631 = vunpack.c.l.s4 839922192
  %v7632 = vunpack.c.0.s8 %v7631
  %v7633 = vlaneseq
  %v7634 = vshrl.u32 %v7633, 7
  %v7635 = vsub.s32 %v7632, %v7634
  %v7636 = vrot.slane %v7628, %v7635
  %7637 = vset.pattern.permute.xlu0 5
  %7638 = vperm.xlu0 %7637, %v844
  %v7639 = vpop.permute.xlu0 %7638
  %v7642 = vunpack.c.l.s4 839922192
  %v7643 = vunpack.c.0.s8 %v7642
  %v7644 = vlaneseq
  %v7645 = vshrl.u32 %v7644, 7
  %v7646 = vsub.s32 %v7643, %v7645
  %v7647 = vrot.slane %v7639, %v7646
  %7648 = vset.pattern.permute.xlu0 5
  %7649 = vperm.xlu0 %7648, %v845
  %v7650 = vpop.permute.xlu0 %7649
  %v7653 = vunpack.c.l.s4 839922192
  %v7654 = vunpack.c.0.s8 %v7653
  %v7655 = vlaneseq
  %v7656 = vshrl.u32 %v7655, 7
  %v7657 = vsub.s32 %v7654, %v7656
  %v7658 = vrot.slane %v7650, %v7657
  %7659 = vset.pattern.permute.xlu0 5
  %7660 = vperm.xlu0 %7659, %v846
  %v7661 = vpop.permute.xlu0 %7660
  %v7664 = vunpack.c.l.s4 839922192
  %v7665 = vunpack.c.0.s8 %v7664
  %v7666 = vlaneseq
  %v7667 = vshrl.u32 %v7666, 7
  %v7668 = vsub.s32 %v7665, %v7667
  %v7669 = vrot.slane %v7661, %v7668
  %7670 = vset.pattern.permute.xlu0 5
  %7671 = vperm.xlu0 %7670, %v847
  %v7672 = vpop.permute.xlu0 %7671
  %v7675 = vunpack.c.l.s4 839922192
  %v7676 = vunpack.c.0.s8 %v7675
  %v7677 = vlaneseq
  %v7678 = vshrl.u32 %v7677, 7
  %v7679 = vsub.s32 %v7676, %v7678
  %v7680 = vrot.slane %v7672, %v7679
  %7681 = vset.pattern.permute.xlu0 5
  %7682 = vperm.xlu0 %7681, %v848
  %v7683 = vpop.permute.xlu0 %7682
  %v7686 = vunpack.c.l.s4 839922192
  %v7687 = vunpack.c.0.s8 %v7686
  %v7688 = vlaneseq
  %v7689 = vshrl.u32 %v7688, 7
  %v7690 = vsub.s32 %v7687, %v7689
  %v7691 = vrot.slane %v7683, %v7690
  %7692 = vset.pattern.permute.xlu0 5
  %7693 = vperm.xlu0 %7692, %v849
  %v7694 = vpop.permute.xlu0 %7693
  %v7697 = vunpack.c.l.s4 839922192
  %v7698 = vunpack.c.0.s8 %v7697
  %v7699 = vlaneseq
  %v7700 = vshrl.u32 %v7699, 7
  %v7701 = vsub.s32 %v7698, %v7700
  %v7702 = vrot.slane %v7694, %v7701
  %7703 = vset.pattern.permute.xlu0 5
  %7704 = vperm.xlu0 %7703, %v850
  %v7705 = vpop.permute.xlu0 %7704
  %v7708 = vunpack.c.l.s4 839922192
  %v7709 = vunpack.c.0.s8 %v7708
  %v7710 = vlaneseq
  %v7711 = vshrl.u32 %v7710, 7
  %v7712 = vsub.s32 %v7709, %v7711
  %v7713 = vrot.slane %v7705, %v7712
  %7714 = vset.pattern.permute.xlu0 5
  %7715 = vperm.xlu0 %7714, %v851
  %v7716 = vpop.permute.xlu0 %7715
  %v7719 = vunpack.c.l.s4 839922192
  %v7720 = vunpack.c.0.s8 %v7719
  %v7721 = vlaneseq
  %v7722 = vshrl.u32 %v7721, 7
  %v7723 = vsub.s32 %v7720, %v7722
  %v7724 = vrot.slane %v7716, %v7723
  %v7789 = vunpack.c.l.b16 %v7031
  %v7790 = vunpack.c.l.b16 %v7042
  %v7791 = vunpack.c.l.b16 %v7053
  %v7792 = vunpack.c.l.b16 %v7064
  %v7793 = vunpack.c.l.b16 %v7075
  %v7794 = vunpack.c.l.b16 %v7086
  %v7795 = vunpack.c.l.b16 %v7097
  %v7796 = vunpack.c.l.b16 %v7108
  %v7797 = vunpack.c.l.b16 %v7119
  %v7798 = vunpack.c.l.b16 %v7130
  %v7799 = vunpack.c.l.b16 %v7141
  %v7800 = vunpack.c.l.b16 %v7152
  %v7801 = vunpack.c.l.b16 %v7163
  %v7802 = vunpack.c.l.b16 %v7174
  %v7803 = vunpack.c.l.b16 %v7185
  %v7804 = vunpack.c.l.b16 %v7196
  %v7805 = vunpack.c.l.b16 %v7207
  %v7806 = vunpack.c.l.b16 %v7218
  %v7807 = vunpack.c.l.b16 %v7229
  %v7808 = vunpack.c.l.b16 %v7240
  %v7809 = vunpack.c.l.b16 %v7251
  %v7810 = vunpack.c.l.b16 %v7262
  %v7811 = vunpack.c.l.b16 %v7273
  %v7812 = vunpack.c.l.b16 %v7284
  %v7813 = vunpack.c.l.b16 %v7295
  %v7814 = vunpack.c.l.b16 %v7306
  %v7815 = vunpack.c.l.b16 %v7317
  %v7816 = vunpack.c.l.b16 %v7328
  %v7817 = vunpack.c.l.b16 %v7339
  %v7818 = vunpack.c.l.b16 %v7350
  %v7819 = vunpack.c.l.b16 %v7361
  %v7820 = vunpack.c.l.b16 %v7372
  %v7821 = vunpack.c.l.b16 %v7383
  %v7822 = vunpack.c.l.b16 %v7394
  %v7823 = vunpack.c.l.b16 %v7405
  %v7824 = vunpack.c.l.b16 %v7416
  %v7825 = vunpack.c.l.b16 %v7427
  %v7826 = vunpack.c.l.b16 %v7438
  %v7827 = vunpack.c.l.b16 %v7449
  %v7828 = vunpack.c.l.b16 %v7460
  %v7829 = vunpack.c.l.b16 %v7471
  %v7830 = vunpack.c.l.b16 %v7482
  %v7831 = vunpack.c.l.b16 %v7493
  %v7832 = vunpack.c.l.b16 %v7504
  %v7833 = vunpack.c.l.b16 %v7515
  %v7834 = vunpack.c.l.b16 %v7526
  %v7835 = vunpack.c.l.b16 %v7537
  %v7836 = vunpack.c.l.b16 %v7548
  %v7837 = vunpack.c.l.b16 %v7559
  %v7838 = vunpack.c.l.b16 %v7570
  %v7839 = vunpack.c.l.b16 %v7581
  %v7840 = vunpack.c.l.b16 %v7592
  %v7841 = vunpack.c.l.b16 %v7603
  %v7842 = vunpack.c.l.b16 %v7614
  %v7843 = vunpack.c.l.b16 %v7625
  %v7844 = vunpack.c.l.b16 %v7636
  %v7845 = vunpack.c.l.b16 %v7647
  %v7846 = vunpack.c.l.b16 %v7658
  %v7847 = vunpack.c.l.b16 %v7669
  %v7848 = vunpack.c.l.b16 %v7680
  %v7849 = vunpack.c.l.b16 %v7691
  %v7850 = vunpack.c.l.b16 %v7702
  %v7851 = vunpack.c.l.b16 %v7713
  %v7852 = vunpack.c.l.b16 %v7724
  %v7853 = vpack.c.b16 %v7790, %v7789
  %v7854 = vpack.c.b16 %v7792, %v7791
  %v7855 = vpack.c.b16 %v7794, %v7793
  %v7856 = vpack.c.b16 %v7796, %v7795
  %v7857 = vpack.c.b16 %v7798, %v7797
  %v7858 = vpack.c.b16 %v7800, %v7799
  %v7859 = vpack.c.b16 %v7802, %v7801
  %v7860 = vpack.c.b16 %v7804, %v7803
  %v7861 = vpack.c.b16 %v7806, %v7805
  %v7862 = vpack.c.b16 %v7808, %v7807
  %v7863 = vpack.c.b16 %v7810, %v7809
  %v7864 = vpack.c.b16 %v7812, %v7811
  %v7865 = vpack.c.b16 %v7814, %v7813
  %v7866 = vpack.c.b16 %v7816, %v7815
  %v7867 = vpack.c.b16 %v7818, %v7817
  %v7868 = vpack.c.b16 %v7820, %v7819
  %v7869 = vpack.c.b16 %v7822, %v7821
  %v7870 = vpack.c.b16 %v7824, %v7823
  %v7871 = vpack.c.b16 %v7826, %v7825
  %v7872 = vpack.c.b16 %v7828, %v7827
  %v7873 = vpack.c.b16 %v7830, %v7829
  %v7874 = vpack.c.b16 %v7832, %v7831
  %v7875 = vpack.c.b16 %v7834, %v7833
  %v7876 = vpack.c.b16 %v7836, %v7835
  %v7877 = vpack.c.b16 %v7838, %v7837
  %v7878 = vpack.c.b16 %v7840, %v7839
  %v7879 = vpack.c.b16 %v7842, %v7841
  %v7880 = vpack.c.b16 %v7844, %v7843
  %v7881 = vpack.c.b16 %v7846, %v7845
  %v7882 = vpack.c.b16 %v7848, %v7847
  %v7883 = vpack.c.b16 %v7850, %v7849
  %v7884 = vpack.c.b16 %v7852, %v7851
  %v7886 = vshrl.u32 %v7853, 16
  %v7888 = vrot.slane %v7886, 7
  %v7889 = vshll.u32 %v7853, 16
  %v7891 = vor.u32 %v7888, %v7889
  %v7893 = vshrl.u32 %v7854, 16
  %v7895 = vrot.slane %v7893, 7
  %v7896 = vshll.u32 %v7854, 16
  %v7898 = vor.u32 %v7895, %v7896
  %v7899 = vsel %vm2135, %v7888, %v7898
  %v7901 = vshrl.u32 %v7855, 16
  %v7903 = vrot.slane %v7901, 7
  %v7904 = vshll.u32 %v7855, 16
  %v7906 = vor.u32 %v7903, %v7904
  %v7907 = vsel %vm2135, %v7895, %v7906
  %v7909 = vshrl.u32 %v7856, 16
  %v7911 = vrot.slane %v7909, 7
  %v7912 = vshll.u32 %v7856, 16
  %v7914 = vor.u32 %v7911, %v7912
  %v7915 = vsel %vm2135, %v7903, %v7914
  %v7917 = vshrl.u32 %v7857, 16
  %v7919 = vrot.slane %v7917, 7
  %v7920 = vshll.u32 %v7857, 16
  %v7922 = vor.u32 %v7919, %v7920
  %v7923 = vsel %vm2135, %v7911, %v7922
  %v7925 = vshrl.u32 %v7858, 16
  %v7927 = vrot.slane %v7925, 7
  %v7928 = vshll.u32 %v7858, 16
  %v7930 = vor.u32 %v7927, %v7928
  %v7931 = vsel %vm2135, %v7919, %v7930
  %v7933 = vshrl.u32 %v7859, 16
  %v7935 = vrot.slane %v7933, 7
  %v7936 = vshll.u32 %v7859, 16
  %v7938 = vor.u32 %v7935, %v7936
  %v7939 = vsel %vm2135, %v7927, %v7938
  %v7941 = vshrl.u32 %v7860, 16
  %v7943 = vrot.slane %v7941, 7
  %v7944 = vshll.u32 %v7860, 16
  %v7946 = vor.u32 %v7943, %v7944
  %v7947 = vsel %vm2135, %v7935, %v7946
  %v7949 = vshrl.u32 %v7861, 16
  %v7951 = vrot.slane %v7949, 7
  %v7952 = vshll.u32 %v7861, 16
  %v7954 = vor.u32 %v7951, %v7952
  %v7955 = vsel %vm2135, %v7943, %v7954
  %v7957 = vshrl.u32 %v7862, 16
  %v7959 = vrot.slane %v7957, 7
  %v7960 = vshll.u32 %v7862, 16
  %v7962 = vor.u32 %v7959, %v7960
  %v7963 = vsel %vm2135, %v7951, %v7962
  %v7965 = vshrl.u32 %v7863, 16
  %v7967 = vrot.slane %v7965, 7
  %v7968 = vshll.u32 %v7863, 16
  %v7970 = vor.u32 %v7967, %v7968
  %v7971 = vsel %vm2135, %v7959, %v7970
  %v7973 = vshrl.u32 %v7864, 16
  %v7975 = vrot.slane %v7973, 7
  %v7976 = vshll.u32 %v7864, 16
  %v7978 = vor.u32 %v7975, %v7976
  %v7979 = vsel %vm2135, %v7967, %v7978
  %v7981 = vshrl.u32 %v7865, 16
  %v7983 = vrot.slane %v7981, 7
  %v7984 = vshll.u32 %v7865, 16
  %v7986 = vor.u32 %v7983, %v7984
  %v7987 = vsel %vm2135, %v7975, %v7986
  %v7989 = vshrl.u32 %v7866, 16
  %v7991 = vrot.slane %v7989, 7
  %v7992 = vshll.u32 %v7866, 16
  %v7994 = vor.u32 %v7991, %v7992
  %v7995 = vsel %vm2135, %v7983, %v7994
  %v7997 = vshrl.u32 %v7867, 16
  %v7999 = vrot.slane %v7997, 7
  %v8000 = vshll.u32 %v7867, 16
  %v8002 = vor.u32 %v7999, %v8000
  %v8003 = vsel %vm2135, %v7991, %v8002
  %v8005 = vshrl.u32 %v7868, 16
  %v8007 = vrot.slane %v8005, 7
  %v8008 = vshll.u32 %v7868, 16
  %v8010 = vor.u32 %v8007, %v8008
  %v8011 = vsel %vm2135, %v7999, %v8010
  %v8013 = vshrl.u32 %v7869, 16
  %v8015 = vrot.slane %v8013, 7
  %v8016 = vshll.u32 %v7869, 16
  %v8018 = vor.u32 %v8015, %v8016
  %v8019 = vsel %vm2135, %v8007, %v8018
  %v8021 = vshrl.u32 %v7870, 16
  %v8023 = vrot.slane %v8021, 7
  %v8024 = vshll.u32 %v7870, 16
  %v8026 = vor.u32 %v8023, %v8024
  %v8027 = vsel %vm2135, %v8015, %v8026
  %v8029 = vshrl.u32 %v7871, 16
  %v8031 = vrot.slane %v8029, 7
  %v8032 = vshll.u32 %v7871, 16
  %v8034 = vor.u32 %v8031, %v8032
  %v8035 = vsel %vm2135, %v8023, %v8034
  %v8037 = vshrl.u32 %v7872, 16
  %v8039 = vrot.slane %v8037, 7
  %v8040 = vshll.u32 %v7872, 16
  %v8042 = vor.u32 %v8039, %v8040
  %v8043 = vsel %vm2135, %v8031, %v8042
  %v8045 = vshrl.u32 %v7873, 16
  %v8047 = vrot.slane %v8045, 7
  %v8048 = vshll.u32 %v7873, 16
  %v8050 = vor.u32 %v8047, %v8048
  %v8051 = vsel %vm2135, %v8039, %v8050
  %v8053 = vshrl.u32 %v7874, 16
  %v8055 = vrot.slane %v8053, 7
  %v8056 = vshll.u32 %v7874, 16
  %v8058 = vor.u32 %v8055, %v8056
  %v8059 = vsel %vm2135, %v8047, %v8058
  %v8061 = vshrl.u32 %v7875, 16
  %v8063 = vrot.slane %v8061, 7
  %v8064 = vshll.u32 %v7875, 16
  %v8066 = vor.u32 %v8063, %v8064
  %v8067 = vsel %vm2135, %v8055, %v8066
  %v8069 = vshrl.u32 %v7876, 16
  %v8071 = vrot.slane %v8069, 7
  %v8072 = vshll.u32 %v7876, 16
  %v8074 = vor.u32 %v8071, %v8072
  %v8075 = vsel %vm2135, %v8063, %v8074
  %v8077 = vshrl.u32 %v7877, 16
  %v8079 = vrot.slane %v8077, 7
  %v8080 = vshll.u32 %v7877, 16
  %v8082 = vor.u32 %v8079, %v8080
  %v8083 = vsel %vm2135, %v8071, %v8082
  %v8085 = vshrl.u32 %v7878, 16
  %v8087 = vrot.slane %v8085, 7
  %v8088 = vshll.u32 %v7878, 16
  %v8090 = vor.u32 %v8087, %v8088
  %v8091 = vsel %vm2135, %v8079, %v8090
  %v8093 = vshrl.u32 %v7879, 16
  %v8095 = vrot.slane %v8093, 7
  %v8096 = vshll.u32 %v7879, 16
  %v8098 = vor.u32 %v8095, %v8096
  %v8099 = vsel %vm2135, %v8087, %v8098
  %v8101 = vshrl.u32 %v7880, 16
  %v8103 = vrot.slane %v8101, 7
  %v8104 = vshll.u32 %v7880, 16
  %v8106 = vor.u32 %v8103, %v8104
  %v8107 = vsel %vm2135, %v8095, %v8106
  %v8109 = vshrl.u32 %v7881, 16
  %v8111 = vrot.slane %v8109, 7
  %v8112 = vshll.u32 %v7881, 16
  %v8114 = vor.u32 %v8111, %v8112
  %v8115 = vsel %vm2135, %v8103, %v8114
  %v8117 = vshrl.u32 %v7882, 16
  %v8119 = vrot.slane %v8117, 7
  %v8120 = vshll.u32 %v7882, 16
  %v8122 = vor.u32 %v8119, %v8120
  %v8123 = vsel %vm2135, %v8111, %v8122
  %v8125 = vshrl.u32 %v7883, 16
  %v8127 = vrot.slane %v8125, 7
  %v8128 = vshll.u32 %v7883, 16
  %v8130 = vor.u32 %v8127, %v8128
  %v8131 = vsel %vm2135, %v8119, %v8130
  %v8133 = vshrl.u32 %v7884, 16
  %v8135 = vrot.slane %v8133, 7
  %v8136 = vshll.u32 %v7884, 16
  %v8138 = vor.u32 %v8135, %v8136
  %v8139 = vsel %vm2135, %v8127, %v8138
  %v8173 = vmul.bf16 %v6988, %v7891
  %v8174 = vmul.bf16 %v6989, %v7899
  %v8175 = vmul.bf16 %v6990, %v7907
  %v8176 = vmul.bf16 %v6991, %v7915
  %v8177 = vmul.bf16 %v6992, %v7923
  %v8178 = vmul.bf16 %v6993, %v7931
  %v8179 = vmul.bf16 %v6994, %v7939
  %v8180 = vmul.bf16 %v6995, %v7947
  %v8181 = vmul.bf16 %v6996, %v7955
  %v8182 = vmul.bf16 %v6997, %v7963
  %v8183 = vmul.bf16 %v6998, %v7971
  %v8184 = vmul.bf16 %v6999, %v7979
  %v8185 = vmul.bf16 %v7000, %v7987
  %v8186 = vmul.bf16 %v7001, %v7995
  %v8187 = vmul.bf16 %v7002, %v8003
  %v8188 = vmul.bf16 %v7003, %v8011
  %v8189 = vmul.bf16 %v7004, %v8019
  %v8190 = vmul.bf16 %v7005, %v8027
  %v8191 = vmul.bf16 %v7006, %v8035
  %v8192 = vmul.bf16 %v7007, %v8043
  %v8193 = vmul.bf16 %v7008, %v8051
  %v8194 = vmul.bf16 %v7009, %v8059
  %v8195 = vmul.bf16 %v7010, %v8067
  %v8196 = vmul.bf16 %v7011, %v8075
  %v8197 = vmul.bf16 %v7012, %v8083
  %v8198 = vmul.bf16 %v7013, %v8091
  %v8199 = vmul.bf16 %v7014, %v8099
  %v8200 = vmul.bf16 %v7015, %v8107
  %v8201 = vmul.bf16 %v7016, %v8115
  %v8202 = vmul.bf16 %v7017, %v8123
  %v8203 = vmul.bf16 %v7018, %v8131
  %v8204 = vmul.bf16 %v7019, %v8139
  %v8205 = vmul.bf16 %v7020, %v8135
  %v8207 = vshrl.u32 %v8173, 16
  %v8209 = vshll.u32 %v8173, 16
  %v8211 = vrot.slane %v8209, 1
  %v8212 = vor.u32 %v8207, %v8211
  %v8214 = vshll.u32 %v8174, 16
  %v8216 = vrot.slane %v8214, 1
  %v8217 = vsel %vm1813, %v8212, %v8216
  %v8218 = vshrl.u32 %v8174, 16
  %v8220 = vor.u32 %v8218, %v8216
  %v8222 = vshll.u32 %v8175, 16
  %v8224 = vrot.slane %v8222, 1
  %v8225 = vsel %vm1813, %v8220, %v8224
  %v8226 = vshrl.u32 %v8175, 16
  %v8228 = vor.u32 %v8226, %v8224
  %v8230 = vshll.u32 %v8176, 16
  %v8232 = vrot.slane %v8230, 1
  %v8233 = vsel %vm1813, %v8228, %v8232
  %v8234 = vshrl.u32 %v8176, 16
  %v8236 = vor.u32 %v8234, %v8232
  %v8238 = vshll.u32 %v8177, 16
  %v8240 = vrot.slane %v8238, 1
  %v8241 = vsel %vm1813, %v8236, %v8240
  %v8242 = vshrl.u32 %v8177, 16
  %v8244 = vor.u32 %v8242, %v8240
  %v8246 = vshll.u32 %v8178, 16
  %v8248 = vrot.slane %v8246, 1
  %v8249 = vsel %vm1813, %v8244, %v8248
  %v8250 = vshrl.u32 %v8178, 16
  %v8252 = vor.u32 %v8250, %v8248
  %v8254 = vshll.u32 %v8179, 16
  %v8256 = vrot.slane %v8254, 1
  %v8257 = vsel %vm1813, %v8252, %v8256
  %v8258 = vshrl.u32 %v8179, 16
  %v8260 = vor.u32 %v8258, %v8256
  %v8262 = vshll.u32 %v8180, 16
  %v8264 = vrot.slane %v8262, 1
  %v8265 = vsel %vm1813, %v8260, %v8264
  %v8266 = vshrl.u32 %v8180, 16
  %v8268 = vor.u32 %v8266, %v8264
  %v8270 = vshll.u32 %v8181, 16
  %v8272 = vrot.slane %v8270, 1
  %v8273 = vsel %vm1813, %v8268, %v8272
  %v8274 = vshrl.u32 %v8181, 16
  %v8276 = vor.u32 %v8274, %v8272
  %v8278 = vshll.u32 %v8182, 16
  %v8280 = vrot.slane %v8278, 1
  %v8281 = vsel %vm1813, %v8276, %v8280
  %v8282 = vshrl.u32 %v8182, 16
  %v8284 = vor.u32 %v8282, %v8280
  %v8286 = vshll.u32 %v8183, 16
  %v8288 = vrot.slane %v8286, 1
  %v8289 = vsel %vm1813, %v8284, %v8288
  %v8290 = vshrl.u32 %v8183, 16
  %v8292 = vor.u32 %v8290, %v8288
  %v8294 = vshll.u32 %v8184, 16
  %v8296 = vrot.slane %v8294, 1
  %v8297 = vsel %vm1813, %v8292, %v8296
  %v8298 = vshrl.u32 %v8184, 16
  %v8300 = vor.u32 %v8298, %v8296
  %v8302 = vshll.u32 %v8185, 16
  %v8304 = vrot.slane %v8302, 1
  %v8305 = vsel %vm1813, %v8300, %v8304
  %v8306 = vshrl.u32 %v8185, 16
  %v8308 = vor.u32 %v8306, %v8304
  %v8310 = vshll.u32 %v8186, 16
  %v8312 = vrot.slane %v8310, 1
  %v8313 = vsel %vm1813, %v8308, %v8312
  %v8314 = vshrl.u32 %v8186, 16
  %v8316 = vor.u32 %v8314, %v8312
  %v8318 = vshll.u32 %v8187, 16
  %v8320 = vrot.slane %v8318, 1
  %v8321 = vsel %vm1813, %v8316, %v8320
  %v8322 = vshrl.u32 %v8187, 16
  %v8324 = vor.u32 %v8322, %v8320
  %v8326 = vshll.u32 %v8188, 16
  %v8328 = vrot.slane %v8326, 1
  %v8329 = vsel %vm1813, %v8324, %v8328
  %v8330 = vshrl.u32 %v8188, 16
  %v8332 = vor.u32 %v8330, %v8328
  %v8334 = vshll.u32 %v8189, 16
  %v8336 = vrot.slane %v8334, 1
  %v8337 = vsel %vm1813, %v8332, %v8336
  %v8338 = vshrl.u32 %v8189, 16
  %v8340 = vor.u32 %v8338, %v8336
  %v8342 = vshll.u32 %v8190, 16
  %v8344 = vrot.slane %v8342, 1
  %v8345 = vsel %vm1813, %v8340, %v8344
  %v8346 = vshrl.u32 %v8190, 16
  %v8348 = vor.u32 %v8346, %v8344
  %v8350 = vshll.u32 %v8191, 16
  %v8352 = vrot.slane %v8350, 1
  %v8353 = vsel %vm1813, %v8348, %v8352
  %v8354 = vshrl.u32 %v8191, 16
  %v8356 = vor.u32 %v8354, %v8352
  %v8358 = vshll.u32 %v8192, 16
  %v8360 = vrot.slane %v8358, 1
  %v8361 = vsel %vm1813, %v8356, %v8360
  %v8362 = vshrl.u32 %v8192, 16
  %v8364 = vor.u32 %v8362, %v8360
  %v8366 = vshll.u32 %v8193, 16
  %v8368 = vrot.slane %v8366, 1
  %v8369 = vsel %vm1813, %v8364, %v8368
  %v8370 = vshrl.u32 %v8193, 16
  %v8372 = vor.u32 %v8370, %v8368
  %v8374 = vshll.u32 %v8194, 16
  %v8376 = vrot.slane %v8374, 1
  %v8377 = vsel %vm1813, %v8372, %v8376
  %v8378 = vshrl.u32 %v8194, 16
  %v8380 = vor.u32 %v8378, %v8376
  %v8382 = vshll.u32 %v8195, 16
  %v8384 = vrot.slane %v8382, 1
  %v8385 = vsel %vm1813, %v8380, %v8384
  %v8386 = vshrl.u32 %v8195, 16
  %v8388 = vor.u32 %v8386, %v8384
  %v8390 = vshll.u32 %v8196, 16
  %v8392 = vrot.slane %v8390, 1
  %v8393 = vsel %vm1813, %v8388, %v8392
  %v8394 = vshrl.u32 %v8196, 16
  %v8396 = vor.u32 %v8394, %v8392
  %v8398 = vshll.u32 %v8197, 16
  %v8400 = vrot.slane %v8398, 1
  %v8401 = vsel %vm1813, %v8396, %v8400
  %v8402 = vshrl.u32 %v8197, 16
  %v8404 = vor.u32 %v8402, %v8400
  %v8406 = vshll.u32 %v8198, 16
  %v8408 = vrot.slane %v8406, 1
  %v8409 = vsel %vm1813, %v8404, %v8408
  %v8410 = vshrl.u32 %v8198, 16
  %v8412 = vor.u32 %v8410, %v8408
  %v8414 = vshll.u32 %v8199, 16
  %v8416 = vrot.slane %v8414, 1
  %v8417 = vsel %vm1813, %v8412, %v8416
  %v8418 = vshrl.u32 %v8199, 16
  %v8420 = vor.u32 %v8418, %v8416
  %v8422 = vshll.u32 %v8200, 16
  %v8424 = vrot.slane %v8422, 1
  %v8425 = vsel %vm1813, %v8420, %v8424
  %v8426 = vshrl.u32 %v8200, 16
  %v8428 = vor.u32 %v8426, %v8424
  %v8430 = vshll.u32 %v8201, 16
  %v8432 = vrot.slane %v8430, 1
  %v8433 = vsel %vm1813, %v8428, %v8432
  %v8434 = vshrl.u32 %v8201, 16
  %v8436 = vor.u32 %v8434, %v8432
  %v8438 = vshll.u32 %v8202, 16
  %v8440 = vrot.slane %v8438, 1
  %v8441 = vsel %vm1813, %v8436, %v8440
  %v8442 = vshrl.u32 %v8202, 16
  %v8444 = vor.u32 %v8442, %v8440
  %v8446 = vshll.u32 %v8203, 16
  %v8448 = vrot.slane %v8446, 1
  %v8449 = vsel %vm1813, %v8444, %v8448
  %v8450 = vshrl.u32 %v8203, 16
  %v8452 = vor.u32 %v8450, %v8448
  %v8454 = vshll.u32 %v8204, 16
  %v8456 = vrot.slane %v8454, 1
  %v8457 = vsel %vm1813, %v8452, %v8456
  %v8458 = vshrl.u32 %v8204, 16
  %v8460 = vor.u32 %v8458, %v8456
  %v8462 = vshll.u32 %v8205, 16
  %v8464 = vrot.slane %v8462, 1
  %v8465 = vsel %vm1813, %v8460, %v8464
  %8466 = vrot.lane.b32.xlu0 %v8217, 20
  %v8467 = vpop.permute.xlu0 %8466
  %8468 = vrot.lane.b32.xlu0 %v8225, 20
  %v8469 = vpop.permute.xlu0 %8468
  %8470 = vrot.lane.b32.xlu0 %v8233, 20
  %v8471 = vpop.permute.xlu0 %8470
  %8472 = vrot.lane.b32.xlu0 %v8241, 20
  %v8473 = vpop.permute.xlu0 %8472
  %8474 = vrot.lane.b32.xlu0 %v8249, 20
  %v8475 = vpop.permute.xlu0 %8474
  %8476 = vrot.lane.b32.xlu0 %v8257, 20
  %v8477 = vpop.permute.xlu0 %8476
  %8478 = vrot.lane.b32.xlu0 %v8265, 20
  %v8479 = vpop.permute.xlu0 %8478
  %8480 = vrot.lane.b32.xlu0 %v8273, 20
  %v8481 = vpop.permute.xlu0 %8480
  %8482 = vrot.lane.b32.xlu0 %v8281, 20
  %v8483 = vpop.permute.xlu0 %8482
  %8484 = vrot.lane.b32.xlu0 %v8289, 20
  %v8485 = vpop.permute.xlu0 %8484
  %8486 = vrot.lane.b32.xlu0 %v8297, 20
  %v8487 = vpop.permute.xlu0 %8486
  %8488 = vrot.lane.b32.xlu0 %v8305, 20
  %v8489 = vpop.permute.xlu0 %8488
  %8490 = vrot.lane.b32.xlu0 %v8313, 20
  %v8491 = vpop.permute.xlu0 %8490
  %8492 = vrot.lane.b32.xlu0 %v8321, 20
  %v8493 = vpop.permute.xlu0 %8492
  %8494 = vrot.lane.b32.xlu0 %v8329, 20
  %v8495 = vpop.permute.xlu0 %8494
  %8496 = vrot.lane.b32.xlu0 %v8337, 20
  %v8497 = vpop.permute.xlu0 %8496
  %8498 = vrot.lane.b32.xlu0 %v8345, 20
  %v8499 = vpop.permute.xlu0 %8498
  %8500 = vrot.lane.b32.xlu0 %v8353, 20
  %v8501 = vpop.permute.xlu0 %8500
  %8502 = vrot.lane.b32.xlu0 %v8361, 20
  %v8503 = vpop.permute.xlu0 %8502
  %8504 = vrot.lane.b32.xlu0 %v8369, 20
  %v8505 = vpop.permute.xlu0 %8504
  %8506 = vrot.lane.b32.xlu0 %v8377, 20
  %v8507 = vpop.permute.xlu0 %8506
  %8508 = vrot.lane.b32.xlu0 %v8385, 20
  %v8509 = vpop.permute.xlu0 %8508
  %8510 = vrot.lane.b32.xlu0 %v8393, 20
  %v8511 = vpop.permute.xlu0 %8510
  %8512 = vrot.lane.b32.xlu0 %v8401, 20
  %v8513 = vpop.permute.xlu0 %8512
  %8514 = vrot.lane.b32.xlu0 %v8409, 20
  %v8515 = vpop.permute.xlu0 %8514
  %8516 = vrot.lane.b32.xlu0 %v8417, 20
  %v8517 = vpop.permute.xlu0 %8516
  %8518 = vrot.lane.b32.xlu0 %v8425, 20
  %v8519 = vpop.permute.xlu0 %8518
  %8520 = vrot.lane.b32.xlu0 %v8433, 20
  %v8521 = vpop.permute.xlu0 %8520
  %8522 = vrot.lane.b32.xlu0 %v8441, 20
  %v8523 = vpop.permute.xlu0 %8522
  %8524 = vrot.lane.b32.xlu0 %v8449, 20
  %v8525 = vpop.permute.xlu0 %8524
  %8526 = vrot.lane.b32.xlu0 %v8457, 20
  %v8527 = vpop.permute.xlu0 %8526
  %8528 = vrot.lane.b32.xlu0 %v8465, 20
  %v8529 = vpop.permute.xlu0 %8528
  %vm8562 = vcmask 195744
  %8563 = vst.msk [vmem:[#allocation3] sm:$0xff] %vm8562, %v8467
  %8564 = vst.msk [vmem:[#allocation3 + $0x8] sm:$0xff] %vm8562, %v8469
  %8565 = vst.msk [vmem:[#allocation3 + $0x10] sm:$0xff] %vm8562, %v8471
  %8566 = vst.msk [vmem:[#allocation3 + $0x18] sm:$0xff] %vm8562, %v8473
  %8567 = vst.msk [vmem:[#allocation3 + $0x20] sm:$0xff] %vm8562, %v8475
  %8568 = vst.msk [vmem:[#allocation3 + $0x28] sm:$0xff] %vm8562, %v8477
  %8569 = vst.msk [vmem:[#allocation3 + $0x30] sm:$0xff] %vm8562, %v8479
  %8570 = vst.msk [vmem:[#allocation3 + $0x38] sm:$0xff] %vm8562, %v8481
  %8571 = vst.msk [vmem:[#allocation3 + $0x40] sm:$0xff] %vm8562, %v8483
  %8572 = vst.msk [vmem:[#allocation3 + $0x48] sm:$0xff] %vm8562, %v8485
  %8573 = vst.msk [vmem:[#allocation3 + $0x50] sm:$0xff] %vm8562, %v8487
  %8574 = vst.msk [vmem:[#allocation3 + $0x58] sm:$0xff] %vm8562, %v8489
  %8575 = vst.msk [vmem:[#allocation3 + $0x60] sm:$0xff] %vm8562, %v8491
  %8576 = vst.msk [vmem:[#allocation3 + $0x68] sm:$0xff] %vm8562, %v8493
  %8577 = vst.msk [vmem:[#allocation3 + $0x70] sm:$0xff] %vm8562, %v8495
  %8578 = vst.msk [vmem:[#allocation3 + $0x78] sm:$0xff] %vm8562, %v8497
  %8579 = vst.msk [vmem:[#allocation3 + $0x80] sm:$0xff] %vm8562, %v8499
  %8580 = vst.msk [vmem:[#allocation3 + $0x88] sm:$0xff] %vm8562, %v8501
  %8581 = vst.msk [vmem:[#allocation3 + $0x90] sm:$0xff] %vm8562, %v8503
  %8582 = vst.msk [vmem:[#allocation3 + $0x98] sm:$0xff] %vm8562, %v8505
  %8583 = vst.msk [vmem:[#allocation3 + $0xa0] sm:$0xff] %vm8562, %v8507
  %8584 = vst.msk [vmem:[#allocation3 + $0xa8] sm:$0xff] %vm8562, %v8509
  %8585 = vst.msk [vmem:[#allocation3 + $0xb0] sm:$0xff] %vm8562, %v8511
  %8586 = vst.msk [vmem:[#allocation3 + $0xb8] sm:$0xff] %vm8562, %v8513
  %8587 = vst.msk [vmem:[#allocation3 + $0xc0] sm:$0xff] %vm8562, %v8515
  %8588 = vst.msk [vmem:[#allocation3 + $0xc8] sm:$0xff] %vm8562, %v8517
  %8589 = vst.msk [vmem:[#allocation3 + $0xd0] sm:$0xff] %vm8562, %v8519
  %8590 = vst.msk [vmem:[#allocation3 + $0xd8] sm:$0xff] %vm8562, %v8521
  %8591 = vst.msk [vmem:[#allocation3 + $0xe0] sm:$0xff] %vm8562, %v8523
  %8592 = vst.msk [vmem:[#allocation3 + $0xe8] sm:$0xff] %vm8562, %v8525
  %8593 = vst.msk [vmem:[#allocation3 + $0xf0] sm:$0xff] %vm8562, %v8527
  %8594 = vst.msk [vmem:[#allocation3 + $0xf8] sm:$0xff] %vm8562, %v8529
  %v8595 = vld [vmem:[#allocation2 + $0x10] sm:$0x80]
  %v8596 = vld [vmem:[#allocation2 + $0x18] sm:$0xff]
  %v8597 = vld [vmem:[#allocation2 + $0x20] sm:$0xff]
  %v8598 = vld [vmem:[#allocation2 + $0x28] sm:$0xff]
  %v8599 = vld [vmem:[#allocation2 + $0x30] sm:$0xff]
  %v8600 = vld [vmem:[#allocation2 + $0x38] sm:$0xff]
  %v8601 = vld [vmem:[#allocation2 + $0x40] sm:$0xff]
  %v8602 = vld [vmem:[#allocation2 + $0x48] sm:$0xff]
  %v8603 = vld [vmem:[#allocation2 + $0x50] sm:$0xff]
  %v8604 = vld [vmem:[#allocation2 + $0x58] sm:$0xff]
  %v8605 = vld [vmem:[#allocation2 + $0x60] sm:$0xff]
  %v8606 = vld [vmem:[#allocation2 + $0x68] sm:$0xff]
  %v8607 = vld [vmem:[#allocation2 + $0x70] sm:$0xff]
  %v8608 = vld [vmem:[#allocation2 + $0x78] sm:$0xff]
  %v8609 = vld [vmem:[#allocation2 + $0x80] sm:$0xff]
  %v8610 = vld [vmem:[#allocation2 + $0x88] sm:$0xff]
  %v8611 = vld [vmem:[#allocation2 + $0x90] sm:$0xff]
  %v8612 = vld [vmem:[#allocation2 + $0x98] sm:$0xff]
  %v8613 = vld [vmem:[#allocation2 + $0xa0] sm:$0xff]
  %v8614 = vld [vmem:[#allocation2 + $0xa8] sm:$0xff]
  %v8615 = vld [vmem:[#allocation2 + $0xb0] sm:$0xff]
  %v8616 = vld [vmem:[#allocation2 + $0xb8] sm:$0xff]
  %v8617 = vld [vmem:[#allocation2 + $0xc0] sm:$0xff]
  %v8618 = vld [vmem:[#allocation2 + $0xc8] sm:$0xff]
  %v8619 = vld [vmem:[#allocation2 + $0xd0] sm:$0xff]
  %v8620 = vld [vmem:[#allocation2 + $0xd8] sm:$0xff]
  %v8621 = vld [vmem:[#allocation2 + $0xe0] sm:$0xff]
  %v8622 = vld [vmem:[#allocation2 + $0xe8] sm:$0xff]
  %v8623 = vld [vmem:[#allocation2 + $0xf0] sm:$0xff]
  %v8624 = vld [vmem:[#allocation2 + $0xf8] sm:$0xff]
  %v8625 = vld [vmem:[#allocation2 + $0x100] sm:$0xff]
  %v8626 = vld [vmem:[#allocation2 + $0x108] sm:$0xff]
  %v8627 = vld [vmem:[#allocation2 + $0x110] sm:$0xff]
  %8628 = vset.pattern.permute.xlu0 6
  %8629 = vperm.xlu0 %8628, %v788
  %v8630 = vpop.permute.xlu0 %8629
  %v8633 = vunpack.c.l.s4 839922192
  %v8634 = vunpack.c.0.s8 %v8633
  %v8635 = vlaneseq
  %v8636 = vshrl.u32 %v8635, 7
  %v8637 = vsub.s32 %v8634, %v8636
  %v8638 = vrot.slane %v8630, %v8637
  %8639 = vset.pattern.permute.xlu0 6
  %8640 = vperm.xlu0 %8639, %v789
  %v8641 = vpop.permute.xlu0 %8640
  %v8644 = vunpack.c.l.s4 839922192
  %v8645 = vunpack.c.0.s8 %v8644
  %v8646 = vlaneseq
  %v8647 = vshrl.u32 %v8646, 7
  %v8648 = vsub.s32 %v8645, %v8647
  %v8649 = vrot.slane %v8641, %v8648
  %8650 = vset.pattern.permute.xlu0 6
  %8651 = vperm.xlu0 %8650, %v790
  %v8652 = vpop.permute.xlu0 %8651
  %v8655 = vunpack.c.l.s4 839922192
  %v8656 = vunpack.c.0.s8 %v8655
  %v8657 = vlaneseq
  %v8658 = vshrl.u32 %v8657, 7
  %v8659 = vsub.s32 %v8656, %v8658
  %v8660 = vrot.slane %v8652, %v8659
  %8661 = vset.pattern.permute.xlu0 6
  %8662 = vperm.xlu0 %8661, %v791
  %v8663 = vpop.permute.xlu0 %8662
  %v8666 = vunpack.c.l.s4 839922192
  %v8667 = vunpack.c.0.s8 %v8666
  %v8668 = vlaneseq
  %v8669 = vshrl.u32 %v8668, 7
  %v8670 = vsub.s32 %v8667, %v8669
  %v8671 = vrot.slane %v8663, %v8670
  %8672 = vset.pattern.permute.xlu0 6
  %8673 = vperm.xlu0 %8672, %v792
  %v8674 = vpop.permute.xlu0 %8673
  %v8677 = vunpack.c.l.s4 839922192
  %v8678 = vunpack.c.0.s8 %v8677
  %v8679 = vlaneseq
  %v8680 = vshrl.u32 %v8679, 7
  %v8681 = vsub.s32 %v8678, %v8680
  %v8682 = vrot.slane %v8674, %v8681
  %8683 = vset.pattern.permute.xlu0 6
  %8684 = vperm.xlu0 %8683, %v793
  %v8685 = vpop.permute.xlu0 %8684
  %v8688 = vunpack.c.l.s4 839922192
  %v8689 = vunpack.c.0.s8 %v8688
  %v8690 = vlaneseq
  %v8691 = vshrl.u32 %v8690, 7
  %v8692 = vsub.s32 %v8689, %v8691
  %v8693 = vrot.slane %v8685, %v8692
  %8694 = vset.pattern.permute.xlu0 6
  %8695 = vperm.xlu0 %8694, %v794
  %v8696 = vpop.permute.xlu0 %8695
  %v8699 = vunpack.c.l.s4 839922192
  %v8700 = vunpack.c.0.s8 %v8699
  %v8701 = vlaneseq
  %v8702 = vshrl.u32 %v8701, 7
  %v8703 = vsub.s32 %v8700, %v8702
  %v8704 = vrot.slane %v8696, %v8703
  %8705 = vset.pattern.permute.xlu0 6
  %8706 = vperm.xlu0 %8705, %v795
  %v8707 = vpop.permute.xlu0 %8706
  %v8710 = vunpack.c.l.s4 839922192
  %v8711 = vunpack.c.0.s8 %v8710
  %v8712 = vlaneseq
  %v8713 = vshrl.u32 %v8712, 7
  %v8714 = vsub.s32 %v8711, %v8713
  %v8715 = vrot.slane %v8707, %v8714
  %8716 = vset.pattern.permute.xlu0 6
  %8717 = vperm.xlu0 %8716, %v796
  %v8718 = vpop.permute.xlu0 %8717
  %v8721 = vunpack.c.l.s4 839922192
  %v8722 = vunpack.c.0.s8 %v8721
  %v8723 = vlaneseq
  %v8724 = vshrl.u32 %v8723, 7
  %v8725 = vsub.s32 %v8722, %v8724
  %v8726 = vrot.slane %v8718, %v8725
  %8727 = vset.pattern.permute.xlu0 6
  %8728 = vperm.xlu0 %8727, %v797
  %v8729 = vpop.permute.xlu0 %8728
  %v8732 = vunpack.c.l.s4 839922192
  %v8733 = vunpack.c.0.s8 %v8732
  %v8734 = vlaneseq
  %v8735 = vshrl.u32 %v8734, 7
  %v8736 = vsub.s32 %v8733, %v8735
  %v8737 = vrot.slane %v8729, %v8736
  %8738 = vset.pattern.permute.xlu0 6
  %8739 = vperm.xlu0 %8738, %v798
  %v8740 = vpop.permute.xlu0 %8739
  %v8743 = vunpack.c.l.s4 839922192
  %v8744 = vunpack.c.0.s8 %v8743
  %v8745 = vlaneseq
  %v8746 = vshrl.u32 %v8745, 7
  %v8747 = vsub.s32 %v8744, %v8746
  %v8748 = vrot.slane %v8740, %v8747
  %8749 = vset.pattern.permute.xlu0 6
  %8750 = vperm.xlu0 %8749, %v799
  %v8751 = vpop.permute.xlu0 %8750
  %v8754 = vunpack.c.l.s4 839922192
  %v8755 = vunpack.c.0.s8 %v8754
  %v8756 = vlaneseq
  %v8757 = vshrl.u32 %v8756, 7
  %v8758 = vsub.s32 %v8755, %v8757
  %v8759 = vrot.slane %v8751, %v8758
  %8760 = vset.pattern.permute.xlu0 6
  %8761 = vperm.xlu0 %8760, %v800
  %v8762 = vpop.permute.xlu0 %8761
  %v8765 = vunpack.c.l.s4 839922192
  %v8766 = vunpack.c.0.s8 %v8765
  %v8767 = vlaneseq
  %v8768 = vshrl.u32 %v8767, 7
  %v8769 = vsub.s32 %v8766, %v8768
  %v8770 = vrot.slane %v8762, %v8769
  %8771 = vset.pattern.permute.xlu0 6
  %8772 = vperm.xlu0 %8771, %v801
  %v8773 = vpop.permute.xlu0 %8772
  %v8776 = vunpack.c.l.s4 839922192
  %v8777 = vunpack.c.0.s8 %v8776
  %v8778 = vlaneseq
  %v8779 = vshrl.u32 %v8778, 7
  %v8780 = vsub.s32 %v8777, %v8779
  %v8781 = vrot.slane %v8773, %v8780
  %8782 = vset.pattern.permute.xlu0 6
  %8783 = vperm.xlu0 %8782, %v802
  %v8784 = vpop.permute.xlu0 %8783
  %v8787 = vunpack.c.l.s4 839922192
  %v8788 = vunpack.c.0.s8 %v8787
  %v8789 = vlaneseq
  %v8790 = vshrl.u32 %v8789, 7
  %v8791 = vsub.s32 %v8788, %v8790
  %v8792 = vrot.slane %v8784, %v8791
  %8793 = vset.pattern.permute.xlu0 6
  %8794 = vperm.xlu0 %8793, %v803
  %v8795 = vpop.permute.xlu0 %8794
  %v8798 = vunpack.c.l.s4 839922192
  %v8799 = vunpack.c.0.s8 %v8798
  %v8800 = vlaneseq
  %v8801 = vshrl.u32 %v8800, 7
  %v8802 = vsub.s32 %v8799, %v8801
  %v8803 = vrot.slane %v8795, %v8802
  %8804 = vset.pattern.permute.xlu0 6
  %8805 = vperm.xlu0 %8804, %v804
  %v8806 = vpop.permute.xlu0 %8805
  %v8809 = vunpack.c.l.s4 839922192
  %v8810 = vunpack.c.0.s8 %v8809
  %v8811 = vlaneseq
  %v8812 = vshrl.u32 %v8811, 7
  %v8813 = vsub.s32 %v8810, %v8812
  %v8814 = vrot.slane %v8806, %v8813
  %8815 = vset.pattern.permute.xlu0 6
  %8816 = vperm.xlu0 %8815, %v805
  %v8817 = vpop.permute.xlu0 %8816
  %v8820 = vunpack.c.l.s4 839922192
  %v8821 = vunpack.c.0.s8 %v8820
  %v8822 = vlaneseq
  %v8823 = vshrl.u32 %v8822, 7
  %v8824 = vsub.s32 %v8821, %v8823
  %v8825 = vrot.slane %v8817, %v8824
  %8826 = vset.pattern.permute.xlu0 6
  %8827 = vperm.xlu0 %8826, %v806
  %v8828 = vpop.permute.xlu0 %8827
  %v8831 = vunpack.c.l.s4 839922192
  %v8832 = vunpack.c.0.s8 %v8831
  %v8833 = vlaneseq
  %v8834 = vshrl.u32 %v8833, 7
  %v8835 = vsub.s32 %v8832, %v8834
  %v8836 = vrot.slane %v8828, %v8835
  %8837 = vset.pattern.permute.xlu0 6
  %8838 = vperm.xlu0 %8837, %v807
  %v8839 = vpop.permute.xlu0 %8838
  %v8842 = vunpack.c.l.s4 839922192
  %v8843 = vunpack.c.0.s8 %v8842
  %v8844 = vlaneseq
  %v8845 = vshrl.u32 %v8844, 7
  %v8846 = vsub.s32 %v8843, %v8845
  %v8847 = vrot.slane %v8839, %v8846
  %8848 = vset.pattern.permute.xlu0 6
  %8849 = vperm.xlu0 %8848, %v808
  %v8850 = vpop.permute.xlu0 %8849
  %v8853 = vunpack.c.l.s4 839922192
  %v8854 = vunpack.c.0.s8 %v8853
  %v8855 = vlaneseq
  %v8856 = vshrl.u32 %v8855, 7
  %v8857 = vsub.s32 %v8854, %v8856
  %v8858 = vrot.slane %v8850, %v8857
  %8859 = vset.pattern.permute.xlu0 6
  %8860 = vperm.xlu0 %8859, %v809
  %v8861 = vpop.permute.xlu0 %8860
  %v8864 = vunpack.c.l.s4 839922192
  %v8865 = vunpack.c.0.s8 %v8864
  %v8866 = vlaneseq
  %v8867 = vshrl.u32 %v8866, 7
  %v8868 = vsub.s32 %v8865, %v8867
  %v8869 = vrot.slane %v8861, %v8868
  %8870 = vset.pattern.permute.xlu0 6
  %8871 = vperm.xlu0 %8870, %v810
  %v8872 = vpop.permute.xlu0 %8871
  %v8875 = vunpack.c.l.s4 839922192
  %v8876 = vunpack.c.0.s8 %v8875
  %v8877 = vlaneseq
  %v8878 = vshrl.u32 %v8877, 7
  %v8879 = vsub.s32 %v8876, %v8878
  %v8880 = vrot.slane %v8872, %v8879
  %8881 = vset.pattern.permute.xlu0 6
  %8882 = vperm.xlu0 %8881, %v811
  %v8883 = vpop.permute.xlu0 %8882
  %v8886 = vunpack.c.l.s4 839922192
  %v8887 = vunpack.c.0.s8 %v8886
  %v8888 = vlaneseq
  %v8889 = vshrl.u32 %v8888, 7
  %v8890 = vsub.s32 %v8887, %v8889
  %v8891 = vrot.slane %v8883, %v8890
  %8892 = vset.pattern.permute.xlu0 6
  %8893 = vperm.xlu0 %8892, %v812
  %v8894 = vpop.permute.xlu0 %8893
  %v8897 = vunpack.c.l.s4 839922192
  %v8898 = vunpack.c.0.s8 %v8897
  %v8899 = vlaneseq
  %v8900 = vshrl.u32 %v8899, 7
  %v8901 = vsub.s32 %v8898, %v8900
  %v8902 = vrot.slane %v8894, %v8901
  %8903 = vset.pattern.permute.xlu0 6
  %8904 = vperm.xlu0 %8903, %v813
  %v8905 = vpop.permute.xlu0 %8904
  %v8908 = vunpack.c.l.s4 839922192
  %v8909 = vunpack.c.0.s8 %v8908
  %v8910 = vlaneseq
  %v8911 = vshrl.u32 %v8910, 7
  %v8912 = vsub.s32 %v8909, %v8911
  %v8913 = vrot.slane %v8905, %v8912
  %8914 = vset.pattern.permute.xlu0 6
  %8915 = vperm.xlu0 %8914, %v814
  %v8916 = vpop.permute.xlu0 %8915
  %v8919 = vunpack.c.l.s4 839922192
  %v8920 = vunpack.c.0.s8 %v8919
  %v8921 = vlaneseq
  %v8922 = vshrl.u32 %v8921, 7
  %v8923 = vsub.s32 %v8920, %v8922
  %v8924 = vrot.slane %v8916, %v8923
  %8925 = vset.pattern.permute.xlu0 6
  %8926 = vperm.xlu0 %8925, %v815
  %v8927 = vpop.permute.xlu0 %8926
  %v8930 = vunpack.c.l.s4 839922192
  %v8931 = vunpack.c.0.s8 %v8930
  %v8932 = vlaneseq
  %v8933 = vshrl.u32 %v8932, 7
  %v8934 = vsub.s32 %v8931, %v8933
  %v8935 = vrot.slane %v8927, %v8934
  %8936 = vset.pattern.permute.xlu0 6
  %8937 = vperm.xlu0 %8936, %v816
  %v8938 = vpop.permute.xlu0 %8937
  %v8941 = vunpack.c.l.s4 839922192
  %v8942 = vunpack.c.0.s8 %v8941
  %v8943 = vlaneseq
  %v8944 = vshrl.u32 %v8943, 7
  %v8945 = vsub.s32 %v8942, %v8944
  %v8946 = vrot.slane %v8938, %v8945
  %8947 = vset.pattern.permute.xlu0 6
  %8948 = vperm.xlu0 %8947, %v817
  %v8949 = vpop.permute.xlu0 %8948
  %v8952 = vunpack.c.l.s4 839922192
  %v8953 = vunpack.c.0.s8 %v8952
  %v8954 = vlaneseq
  %v8955 = vshrl.u32 %v8954, 7
  %v8956 = vsub.s32 %v8953, %v8955
  %v8957 = vrot.slane %v8949, %v8956
  %8958 = vset.pattern.permute.xlu0 6
  %8959 = vperm.xlu0 %8958, %v818
  %v8960 = vpop.permute.xlu0 %8959
  %v8963 = vunpack.c.l.s4 839922192
  %v8964 = vunpack.c.0.s8 %v8963
  %v8965 = vlaneseq
  %v8966 = vshrl.u32 %v8965, 7
  %v8967 = vsub.s32 %v8964, %v8966
  %v8968 = vrot.slane %v8960, %v8967
  %8969 = vset.pattern.permute.xlu0 6
  %8970 = vperm.xlu0 %8969, %v819
  %v8971 = vpop.permute.xlu0 %8970
  %v8974 = vunpack.c.l.s4 839922192
  %v8975 = vunpack.c.0.s8 %v8974
  %v8976 = vlaneseq
  %v8977 = vshrl.u32 %v8976, 7
  %v8978 = vsub.s32 %v8975, %v8977
  %v8979 = vrot.slane %v8971, %v8978
  %8980 = vset.pattern.permute.xlu0 6
  %8981 = vperm.xlu0 %8980, %v820
  %v8982 = vpop.permute.xlu0 %8981
  %v8985 = vunpack.c.l.s4 839922192
  %v8986 = vunpack.c.0.s8 %v8985
  %v8987 = vlaneseq
  %v8988 = vshrl.u32 %v8987, 7
  %v8989 = vsub.s32 %v8986, %v8988
  %v8990 = vrot.slane %v8982, %v8989
  %8991 = vset.pattern.permute.xlu0 6
  %8992 = vperm.xlu0 %8991, %v821
  %v8993 = vpop.permute.xlu0 %8992
  %v8996 = vunpack.c.l.s4 839922192
  %v8997 = vunpack.c.0.s8 %v8996
  %v8998 = vlaneseq
  %v8999 = vshrl.u32 %v8998, 7
  %v9000 = vsub.s32 %v8997, %v8999
  %v9001 = vrot.slane %v8993, %v9000
  %9002 = vset.pattern.permute.xlu0 6
  %9003 = vperm.xlu0 %9002, %v822
  %v9004 = vpop.permute.xlu0 %9003
  %v9007 = vunpack.c.l.s4 839922192
  %v9008 = vunpack.c.0.s8 %v9007
  %v9009 = vlaneseq
  %v9010 = vshrl.u32 %v9009, 7
  %v9011 = vsub.s32 %v9008, %v9010
  %v9012 = vrot.slane %v9004, %v9011
  %9013 = vset.pattern.permute.xlu0 6
  %9014 = vperm.xlu0 %9013, %v823
  %v9015 = vpop.permute.xlu0 %9014
  %v9018 = vunpack.c.l.s4 839922192
  %v9019 = vunpack.c.0.s8 %v9018
  %v9020 = vlaneseq
  %v9021 = vshrl.u32 %v9020, 7
  %v9022 = vsub.s32 %v9019, %v9021
  %v9023 = vrot.slane %v9015, %v9022
  %9024 = vset.pattern.permute.xlu0 6
  %9025 = vperm.xlu0 %9024, %v824
  %v9026 = vpop.permute.xlu0 %9025
  %v9029 = vunpack.c.l.s4 839922192
  %v9030 = vunpack.c.0.s8 %v9029
  %v9031 = vlaneseq
  %v9032 = vshrl.u32 %v9031, 7
  %v9033 = vsub.s32 %v9030, %v9032
  %v9034 = vrot.slane %v9026, %v9033
  %9035 = vset.pattern.permute.xlu0 6
  %9036 = vperm.xlu0 %9035, %v825
  %v9037 = vpop.permute.xlu0 %9036
  %v9040 = vunpack.c.l.s4 839922192
  %v9041 = vunpack.c.0.s8 %v9040
  %v9042 = vlaneseq
  %v9043 = vshrl.u32 %v9042, 7
  %v9044 = vsub.s32 %v9041, %v9043
  %v9045 = vrot.slane %v9037, %v9044
  %9046 = vset.pattern.permute.xlu0 6
  %9047 = vperm.xlu0 %9046, %v826
  %v9048 = vpop.permute.xlu0 %9047
  %v9051 = vunpack.c.l.s4 839922192
  %v9052 = vunpack.c.0.s8 %v9051
  %v9053 = vlaneseq
  %v9054 = vshrl.u32 %v9053, 7
  %v9055 = vsub.s32 %v9052, %v9054
  %v9056 = vrot.slane %v9048, %v9055
  %9057 = vset.pattern.permute.xlu0 6
  %9058 = vperm.xlu0 %9057, %v827
  %v9059 = vpop.permute.xlu0 %9058
  %v9062 = vunpack.c.l.s4 839922192
  %v9063 = vunpack.c.0.s8 %v9062
  %v9064 = vlaneseq
  %v9065 = vshrl.u32 %v9064, 7
  %v9066 = vsub.s32 %v9063, %v9065
  %v9067 = vrot.slane %v9059, %v9066
  %9068 = vset.pattern.permute.xlu0 6
  %9069 = vperm.xlu0 %9068, %v828
  %v9070 = vpop.permute.xlu0 %9069
  %v9073 = vunpack.c.l.s4 839922192
  %v9074 = vunpack.c.0.s8 %v9073
  %v9075 = vlaneseq
  %v9076 = vshrl.u32 %v9075, 7
  %v9077 = vsub.s32 %v9074, %v9076
  %v9078 = vrot.slane %v9070, %v9077
  %9079 = vset.pattern.permute.xlu0 6
  %9080 = vperm.xlu0 %9079, %v829
  %v9081 = vpop.permute.xlu0 %9080
  %v9084 = vunpack.c.l.s4 839922192
  %v9085 = vunpack.c.0.s8 %v9084
  %v9086 = vlaneseq
  %v9087 = vshrl.u32 %v9086, 7
  %v9088 = vsub.s32 %v9085, %v9087
  %v9089 = vrot.slane %v9081, %v9088
  %9090 = vset.pattern.permute.xlu0 6
  %9091 = vperm.xlu0 %9090, %v830
  %v9092 = vpop.permute.xlu0 %9091
  %v9095 = vunpack.c.l.s4 839922192
  %v9096 = vunpack.c.0.s8 %v9095
  %v9097 = vlaneseq
  %v9098 = vshrl.u32 %v9097, 7
  %v9099 = vsub.s32 %v9096, %v9098
  %v9100 = vrot.slane %v9092, %v9099
  %9101 = vset.pattern.permute.xlu0 6
  %9102 = vperm.xlu0 %9101, %v831
  %v9103 = vpop.permute.xlu0 %9102
  %v9106 = vunpack.c.l.s4 839922192
  %v9107 = vunpack.c.0.s8 %v9106
  %v9108 = vlaneseq
  %v9109 = vshrl.u32 %v9108, 7
  %v9110 = vsub.s32 %v9107, %v9109
  %v9111 = vrot.slane %v9103, %v9110
  %9112 = vset.pattern.permute.xlu0 6
  %9113 = vperm.xlu0 %9112, %v832
  %v9114 = vpop.permute.xlu0 %9113
  %v9117 = vunpack.c.l.s4 839922192
  %v9118 = vunpack.c.0.s8 %v9117
  %v9119 = vlaneseq
  %v9120 = vshrl.u32 %v9119, 7
  %v9121 = vsub.s32 %v9118, %v9120
  %v9122 = vrot.slane %v9114, %v9121
  %9123 = vset.pattern.permute.xlu0 6
  %9124 = vperm.xlu0 %9123, %v833
  %v9125 = vpop.permute.xlu0 %9124
  %v9128 = vunpack.c.l.s4 839922192
  %v9129 = vunpack.c.0.s8 %v9128
  %v9130 = vlaneseq
  %v9131 = vshrl.u32 %v9130, 7
  %v9132 = vsub.s32 %v9129, %v9131
  %v9133 = vrot.slane %v9125, %v9132
  %9134 = vset.pattern.permute.xlu0 6
  %9135 = vperm.xlu0 %9134, %v834
  %v9136 = vpop.permute.xlu0 %9135
  %v9139 = vunpack.c.l.s4 839922192
  %v9140 = vunpack.c.0.s8 %v9139
  %v9141 = vlaneseq
  %v9142 = vshrl.u32 %v9141, 7
  %v9143 = vsub.s32 %v9140, %v9142
  %v9144 = vrot.slane %v9136, %v9143
  %9145 = vset.pattern.permute.xlu0 6
  %9146 = vperm.xlu0 %9145, %v835
  %v9147 = vpop.permute.xlu0 %9146
  %v9150 = vunpack.c.l.s4 839922192
  %v9151 = vunpack.c.0.s8 %v9150
  %v9152 = vlaneseq
  %v9153 = vshrl.u32 %v9152, 7
  %v9154 = vsub.s32 %v9151, %v9153
  %v9155 = vrot.slane %v9147, %v9154
  %9156 = vset.pattern.permute.xlu0 6
  %9157 = vperm.xlu0 %9156, %v836
  %v9158 = vpop.permute.xlu0 %9157
  %v9161 = vunpack.c.l.s4 839922192
  %v9162 = vunpack.c.0.s8 %v9161
  %v9163 = vlaneseq
  %v9164 = vshrl.u32 %v9163, 7
  %v9165 = vsub.s32 %v9162, %v9164
  %v9166 = vrot.slane %v9158, %v9165
  %9167 = vset.pattern.permute.xlu0 6
  %9168 = vperm.xlu0 %9167, %v837
  %v9169 = vpop.permute.xlu0 %9168
  %v9172 = vunpack.c.l.s4 839922192
  %v9173 = vunpack.c.0.s8 %v9172
  %v9174 = vlaneseq
  %v9175 = vshrl.u32 %v9174, 7
  %v9176 = vsub.s32 %v9173, %v9175
  %v9177 = vrot.slane %v9169, %v9176
  %9178 = vset.pattern.permute.xlu0 6
  %9179 = vperm.xlu0 %9178, %v838
  %v9180 = vpop.permute.xlu0 %9179
  %v9183 = vunpack.c.l.s4 839922192
  %v9184 = vunpack.c.0.s8 %v9183
  %v9185 = vlaneseq
  %v9186 = vshrl.u32 %v9185, 7
  %v9187 = vsub.s32 %v9184, %v9186
  %v9188 = vrot.slane %v9180, %v9187
  %9189 = vset.pattern.permute.xlu0 6
  %9190 = vperm.xlu0 %9189, %v839
  %v9191 = vpop.permute.xlu0 %9190
  %v9194 = vunpack.c.l.s4 839922192
  %v9195 = vunpack.c.0.s8 %v9194
  %v9196 = vlaneseq
  %v9197 = vshrl.u32 %v9196, 7
  %v9198 = vsub.s32 %v9195, %v9197
  %v9199 = vrot.slane %v9191, %v9198
  %9200 = vset.pattern.permute.xlu0 6
  %9201 = vperm.xlu0 %9200, %v840
  %v9202 = vpop.permute.xlu0 %9201
  %v9205 = vunpack.c.l.s4 839922192
  %v9206 = vunpack.c.0.s8 %v9205
  %v9207 = vlaneseq
  %v9208 = vshrl.u32 %v9207, 7
  %v9209 = vsub.s32 %v9206, %v9208
  %v9210 = vrot.slane %v9202, %v9209
  %9211 = vset.pattern.permute.xlu0 6
  %9212 = vperm.xlu0 %9211, %v841
  %v9213 = vpop.permute.xlu0 %9212
  %v9216 = vunpack.c.l.s4 839922192
  %v9217 = vunpack.c.0.s8 %v9216
  %v9218 = vlaneseq
  %v9219 = vshrl.u32 %v9218, 7
  %v9220 = vsub.s32 %v9217, %v9219
  %v9221 = vrot.slane %v9213, %v9220
  %9222 = vset.pattern.permute.xlu0 6
  %9223 = vperm.xlu0 %9222, %v842
  %v9224 = vpop.permute.xlu0 %9223
  %v9227 = vunpack.c.l.s4 839922192
  %v9228 = vunpack.c.0.s8 %v9227
  %v9229 = vlaneseq
  %v9230 = vshrl.u32 %v9229, 7
  %v9231 = vsub.s32 %v9228, %v9230
  %v9232 = vrot.slane %v9224, %v9231
  %9233 = vset.pattern.permute.xlu0 6
  %9234 = vperm.xlu0 %9233, %v843
  %v9235 = vpop.permute.xlu0 %9234
  %v9238 = vunpack.c.l.s4 839922192
  %v9239 = vunpack.c.0.s8 %v9238
  %v9240 = vlaneseq
  %v9241 = vshrl.u32 %v9240, 7
  %v9242 = vsub.s32 %v9239, %v9241
  %v9243 = vrot.slane %v9235, %v9242
  %9244 = vset.pattern.permute.xlu0 6
  %9245 = vperm.xlu0 %9244, %v844
  %v9246 = vpop.permute.xlu0 %9245
  %v9249 = vunpack.c.l.s4 839922192
  %v9250 = vunpack.c.0.s8 %v9249
  %v9251 = vlaneseq
  %v9252 = vshrl.u32 %v9251, 7
  %v9253 = vsub.s32 %v9250, %v9252
  %v9254 = vrot.slane %v9246, %v9253
  %9255 = vset.pattern.permute.xlu0 6
  %9256 = vperm.xlu0 %9255, %v845
  %v9257 = vpop.permute.xlu0 %9256
  %v9260 = vunpack.c.l.s4 839922192
  %v9261 = vunpack.c.0.s8 %v9260
  %v9262 = vlaneseq
  %v9263 = vshrl.u32 %v9262, 7
  %v9264 = vsub.s32 %v9261, %v9263
  %v9265 = vrot.slane %v9257, %v9264
  %9266 = vset.pattern.permute.xlu0 6
  %9267 = vperm.xlu0 %9266, %v846
  %v9268 = vpop.permute.xlu0 %9267
  %v9271 = vunpack.c.l.s4 839922192
  %v9272 = vunpack.c.0.s8 %v9271
  %v9273 = vlaneseq
  %v9274 = vshrl.u32 %v9273, 7
  %v9275 = vsub.s32 %v9272, %v9274
  %v9276 = vrot.slane %v9268, %v9275
  %9277 = vset.pattern.permute.xlu0 6
  %9278 = vperm.xlu0 %9277, %v847
  %v9279 = vpop.permute.xlu0 %9278
  %v9282 = vunpack.c.l.s4 839922192
  %v9283 = vunpack.c.0.s8 %v9282
  %v9284 = vlaneseq
  %v9285 = vshrl.u32 %v9284, 7
  %v9286 = vsub.s32 %v9283, %v9285
  %v9287 = vrot.slane %v9279, %v9286
  %9288 = vset.pattern.permute.xlu0 6
  %9289 = vperm.xlu0 %9288, %v848
  %v9290 = vpop.permute.xlu0 %9289
  %v9293 = vunpack.c.l.s4 839922192
  %v9294 = vunpack.c.0.s8 %v9293
  %v9295 = vlaneseq
  %v9296 = vshrl.u32 %v9295, 7
  %v9297 = vsub.s32 %v9294, %v9296
  %v9298 = vrot.slane %v9290, %v9297
  %9299 = vset.pattern.permute.xlu0 6
  %9300 = vperm.xlu0 %9299, %v849
  %v9301 = vpop.permute.xlu0 %9300
  %v9304 = vunpack.c.l.s4 839922192
  %v9305 = vunpack.c.0.s8 %v9304
  %v9306 = vlaneseq
  %v9307 = vshrl.u32 %v9306, 7
  %v9308 = vsub.s32 %v9305, %v9307
  %v9309 = vrot.slane %v9301, %v9308
  %9310 = vset.pattern.permute.xlu0 6
  %9311 = vperm.xlu0 %9310, %v850
  %v9312 = vpop.permute.xlu0 %9311
  %v9315 = vunpack.c.l.s4 839922192
  %v9316 = vunpack.c.0.s8 %v9315
  %v9317 = vlaneseq
  %v9318 = vshrl.u32 %v9317, 7
  %v9319 = vsub.s32 %v9316, %v9318
  %v9320 = vrot.slane %v9312, %v9319
  %9321 = vset.pattern.permute.xlu0 6
  %9322 = vperm.xlu0 %9321, %v851
  %v9323 = vpop.permute.xlu0 %9322
  %v9326 = vunpack.c.l.s4 839922192
  %v9327 = vunpack.c.0.s8 %v9326
  %v9328 = vlaneseq
  %v9329 = vshrl.u32 %v9328, 7
  %v9330 = vsub.s32 %v9327, %v9329
  %v9331 = vrot.slane %v9323, %v9330
  %v9396 = vunpack.c.l.b16 %v8638
  %v9397 = vunpack.c.l.b16 %v8649
  %v9398 = vunpack.c.l.b16 %v8660
  %v9399 = vunpack.c.l.b16 %v8671
  %v9400 = vunpack.c.l.b16 %v8682
  %v9401 = vunpack.c.l.b16 %v8693
  %v9402 = vunpack.c.l.b16 %v8704
  %v9403 = vunpack.c.l.b16 %v8715
  %v9404 = vunpack.c.l.b16 %v8726
  %v9405 = vunpack.c.l.b16 %v8737
  %v9406 = vunpack.c.l.b16 %v8748
  %v9407 = vunpack.c.l.b16 %v8759
  %v9408 = vunpack.c.l.b16 %v8770
  %v9409 = vunpack.c.l.b16 %v8781
  %v9410 = vunpack.c.l.b16 %v8792
  %v9411 = vunpack.c.l.b16 %v8803
  %v9412 = vunpack.c.l.b16 %v8814
  %v9413 = vunpack.c.l.b16 %v8825
  %v9414 = vunpack.c.l.b16 %v8836
  %v9415 = vunpack.c.l.b16 %v8847
  %v9416 = vunpack.c.l.b16 %v8858
  %v9417 = vunpack.c.l.b16 %v8869
  %v9418 = vunpack.c.l.b16 %v8880
  %v9419 = vunpack.c.l.b16 %v8891
  %v9420 = vunpack.c.l.b16 %v8902
  %v9421 = vunpack.c.l.b16 %v8913
  %v9422 = vunpack.c.l.b16 %v8924
  %v9423 = vunpack.c.l.b16 %v8935
  %v9424 = vunpack.c.l.b16 %v8946
  %v9425 = vunpack.c.l.b16 %v8957
  %v9426 = vunpack.c.l.b16 %v8968
  %v9427 = vunpack.c.l.b16 %v8979
  %v9428 = vunpack.c.l.b16 %v8990
  %v9429 = vunpack.c.l.b16 %v9001
  %v9430 = vunpack.c.l.b16 %v9012
  %v9431 = vunpack.c.l.b16 %v9023
  %v9432 = vunpack.c.l.b16 %v9034
  %v9433 = vunpack.c.l.b16 %v9045
  %v9434 = vunpack.c.l.b16 %v9056
  %v9435 = vunpack.c.l.b16 %v9067
  %v9436 = vunpack.c.l.b16 %v9078
  %v9437 = vunpack.c.l.b16 %v9089
  %v9438 = vunpack.c.l.b16 %v9100
  %v9439 = vunpack.c.l.b16 %v9111
  %v9440 = vunpack.c.l.b16 %v9122
  %v9441 = vunpack.c.l.b16 %v9133
  %v9442 = vunpack.c.l.b16 %v9144
  %v9443 = vunpack.c.l.b16 %v9155
  %v9444 = vunpack.c.l.b16 %v9166
  %v9445 = vunpack.c.l.b16 %v9177
  %v9446 = vunpack.c.l.b16 %v9188
  %v9447 = vunpack.c.l.b16 %v9199
  %v9448 = vunpack.c.l.b16 %v9210
  %v9449 = vunpack.c.l.b16 %v9221
  %v9450 = vunpack.c.l.b16 %v9232
  %v9451 = vunpack.c.l.b16 %v9243
  %v9452 = vunpack.c.l.b16 %v9254
  %v9453 = vunpack.c.l.b16 %v9265
  %v9454 = vunpack.c.l.b16 %v9276
  %v9455 = vunpack.c.l.b16 %v9287
  %v9456 = vunpack.c.l.b16 %v9298
  %v9457 = vunpack.c.l.b16 %v9309
  %v9458 = vunpack.c.l.b16 %v9320
  %v9459 = vunpack.c.l.b16 %v9331
  %v9460 = vpack.c.b16 %v9397, %v9396
  %v9461 = vpack.c.b16 %v9399, %v9398
  %v9462 = vpack.c.b16 %v9401, %v9400
  %v9463 = vpack.c.b16 %v9403, %v9402
  %v9464 = vpack.c.b16 %v9405, %v9404
  %v9465 = vpack.c.b16 %v9407, %v9406
  %v9466 = vpack.c.b16 %v9409, %v9408
  %v9467 = vpack.c.b16 %v9411, %v9410
  %v9468 = vpack.c.b16 %v9413, %v9412
  %v9469 = vpack.c.b16 %v9415, %v9414
  %v9470 = vpack.c.b16 %v9417, %v9416
  %v9471 = vpack.c.b16 %v9419, %v9418
  %v9472 = vpack.c.b16 %v9421, %v9420
  %v9473 = vpack.c.b16 %v9423, %v9422
  %v9474 = vpack.c.b16 %v9425, %v9424
  %v9475 = vpack.c.b16 %v9427, %v9426
  %v9476 = vpack.c.b16 %v9429, %v9428
  %v9477 = vpack.c.b16 %v9431, %v9430
  %v9478 = vpack.c.b16 %v9433, %v9432
  %v9479 = vpack.c.b16 %v9435, %v9434
  %v9480 = vpack.c.b16 %v9437, %v9436
  %v9481 = vpack.c.b16 %v9439, %v9438
  %v9482 = vpack.c.b16 %v9441, %v9440
  %v9483 = vpack.c.b16 %v9443, %v9442
  %v9484 = vpack.c.b16 %v9445, %v9444
  %v9485 = vpack.c.b16 %v9447, %v9446
  %v9486 = vpack.c.b16 %v9449, %v9448
  %v9487 = vpack.c.b16 %v9451, %v9450
  %v9488 = vpack.c.b16 %v9453, %v9452
  %v9489 = vpack.c.b16 %v9455, %v9454
  %v9490 = vpack.c.b16 %v9457, %v9456
  %v9491 = vpack.c.b16 %v9459, %v9458
  %v9493 = vshll.u32 %v9460, 16
  %v9495 = vrot.slane %v9493, 1
  %v9496 = vshrl.u32 %v9460, 16
  %v9498 = vor.u32 %v9496, %v9495
  %v9500 = vshll.u32 %v9461, 16
  %v9502 = vrot.slane %v9500, 1
  %v9503 = vsel %vm1813, %v9498, %v9502
  %v9504 = vshrl.u32 %v9461, 16
  %v9506 = vor.u32 %v9504, %v9502
  %v9508 = vshll.u32 %v9462, 16
  %v9510 = vrot.slane %v9508, 1
  %v9511 = vsel %vm1813, %v9506, %v9510
  %v9512 = vshrl.u32 %v9462, 16
  %v9514 = vor.u32 %v9512, %v9510
  %v9516 = vshll.u32 %v9463, 16
  %v9518 = vrot.slane %v9516, 1
  %v9519 = vsel %vm1813, %v9514, %v9518
  %v9520 = vshrl.u32 %v9463, 16
  %v9522 = vor.u32 %v9520, %v9518
  %v9524 = vshll.u32 %v9464, 16
  %v9526 = vrot.slane %v9524, 1
  %v9527 = vsel %vm1813, %v9522, %v9526
  %v9528 = vshrl.u32 %v9464, 16
  %v9530 = vor.u32 %v9528, %v9526
  %v9532 = vshll.u32 %v9465, 16
  %v9534 = vrot.slane %v9532, 1
  %v9535 = vsel %vm1813, %v9530, %v9534
  %v9536 = vshrl.u32 %v9465, 16
  %v9538 = vor.u32 %v9536, %v9534
  %v9540 = vshll.u32 %v9466, 16
  %v9542 = vrot.slane %v9540, 1
  %v9543 = vsel %vm1813, %v9538, %v9542
  %v9544 = vshrl.u32 %v9466, 16
  %v9546 = vor.u32 %v9544, %v9542
  %v9548 = vshll.u32 %v9467, 16
  %v9550 = vrot.slane %v9548, 1
  %v9551 = vsel %vm1813, %v9546, %v9550
  %v9552 = vshrl.u32 %v9467, 16
  %v9554 = vor.u32 %v9552, %v9550
  %v9556 = vshll.u32 %v9468, 16
  %v9558 = vrot.slane %v9556, 1
  %v9559 = vsel %vm1813, %v9554, %v9558
  %v9560 = vshrl.u32 %v9468, 16
  %v9562 = vor.u32 %v9560, %v9558
  %v9564 = vshll.u32 %v9469, 16
  %v9566 = vrot.slane %v9564, 1
  %v9567 = vsel %vm1813, %v9562, %v9566
  %v9568 = vshrl.u32 %v9469, 16
  %v9570 = vor.u32 %v9568, %v9566
  %v9572 = vshll.u32 %v9470, 16
  %v9574 = vrot.slane %v9572, 1
  %v9575 = vsel %vm1813, %v9570, %v9574
  %v9576 = vshrl.u32 %v9470, 16
  %v9578 = vor.u32 %v9576, %v9574
  %v9580 = vshll.u32 %v9471, 16
  %v9582 = vrot.slane %v9580, 1
  %v9583 = vsel %vm1813, %v9578, %v9582
  %v9584 = vshrl.u32 %v9471, 16
  %v9586 = vor.u32 %v9584, %v9582
  %v9588 = vshll.u32 %v9472, 16
  %v9590 = vrot.slane %v9588, 1
  %v9591 = vsel %vm1813, %v9586, %v9590
  %v9592 = vshrl.u32 %v9472, 16
  %v9594 = vor.u32 %v9592, %v9590
  %v9596 = vshll.u32 %v9473, 16
  %v9598 = vrot.slane %v9596, 1
  %v9599 = vsel %vm1813, %v9594, %v9598
  %v9600 = vshrl.u32 %v9473, 16
  %v9602 = vor.u32 %v9600, %v9598
  %v9604 = vshll.u32 %v9474, 16
  %v9606 = vrot.slane %v9604, 1
  %v9607 = vsel %vm1813, %v9602, %v9606
  %v9608 = vshrl.u32 %v9474, 16
  %v9610 = vor.u32 %v9608, %v9606
  %v9612 = vshll.u32 %v9475, 16
  %v9614 = vrot.slane %v9612, 1
  %v9615 = vsel %vm1813, %v9610, %v9614
  %v9616 = vshrl.u32 %v9475, 16
  %v9618 = vor.u32 %v9616, %v9614
  %v9620 = vshll.u32 %v9476, 16
  %v9622 = vrot.slane %v9620, 1
  %v9623 = vsel %vm1813, %v9618, %v9622
  %v9624 = vshrl.u32 %v9476, 16
  %v9626 = vor.u32 %v9624, %v9622
  %v9628 = vshll.u32 %v9477, 16
  %v9630 = vrot.slane %v9628, 1
  %v9631 = vsel %vm1813, %v9626, %v9630
  %v9632 = vshrl.u32 %v9477, 16
  %v9634 = vor.u32 %v9632, %v9630
  %v9636 = vshll.u32 %v9478, 16
  %v9638 = vrot.slane %v9636, 1
  %v9639 = vsel %vm1813, %v9634, %v9638
  %v9640 = vshrl.u32 %v9478, 16
  %v9642 = vor.u32 %v9640, %v9638
  %v9644 = vshll.u32 %v9479, 16
  %v9646 = vrot.slane %v9644, 1
  %v9647 = vsel %vm1813, %v9642, %v9646
  %v9648 = vshrl.u32 %v9479, 16
  %v9650 = vor.u32 %v9648, %v9646
  %v9652 = vshll.u32 %v9480, 16
  %v9654 = vrot.slane %v9652, 1
  %v9655 = vsel %vm1813, %v9650, %v9654
  %v9656 = vshrl.u32 %v9480, 16
  %v9658 = vor.u32 %v9656, %v9654
  %v9660 = vshll.u32 %v9481, 16
  %v9662 = vrot.slane %v9660, 1
  %v9663 = vsel %vm1813, %v9658, %v9662
  %v9664 = vshrl.u32 %v9481, 16
  %v9666 = vor.u32 %v9664, %v9662
  %v9668 = vshll.u32 %v9482, 16
  %v9670 = vrot.slane %v9668, 1
  %v9671 = vsel %vm1813, %v9666, %v9670
  %v9672 = vshrl.u32 %v9482, 16
  %v9674 = vor.u32 %v9672, %v9670
  %v9676 = vshll.u32 %v9483, 16
  %v9678 = vrot.slane %v9676, 1
  %v9679 = vsel %vm1813, %v9674, %v9678
  %v9680 = vshrl.u32 %v9483, 16
  %v9682 = vor.u32 %v9680, %v9678
  %v9684 = vshll.u32 %v9484, 16
  %v9686 = vrot.slane %v9684, 1
  %v9687 = vsel %vm1813, %v9682, %v9686
  %v9688 = vshrl.u32 %v9484, 16
  %v9690 = vor.u32 %v9688, %v9686
  %v9692 = vshll.u32 %v9485, 16
  %v9694 = vrot.slane %v9692, 1
  %v9695 = vsel %vm1813, %v9690, %v9694
  %v9696 = vshrl.u32 %v9485, 16
  %v9698 = vor.u32 %v9696, %v9694
  %v9700 = vshll.u32 %v9486, 16
  %v9702 = vrot.slane %v9700, 1
  %v9703 = vsel %vm1813, %v9698, %v9702
  %v9704 = vshrl.u32 %v9486, 16
  %v9706 = vor.u32 %v9704, %v9702
  %v9708 = vshll.u32 %v9487, 16
  %v9710 = vrot.slane %v9708, 1
  %v9711 = vsel %vm1813, %v9706, %v9710
  %v9712 = vshrl.u32 %v9487, 16
  %v9714 = vor.u32 %v9712, %v9710
  %v9716 = vshll.u32 %v9488, 16
  %v9718 = vrot.slane %v9716, 1
  %v9719 = vsel %vm1813, %v9714, %v9718
  %v9720 = vshrl.u32 %v9488, 16
  %v9722 = vor.u32 %v9720, %v9718
  %v9724 = vshll.u32 %v9489, 16
  %v9726 = vrot.slane %v9724, 1
  %v9727 = vsel %vm1813, %v9722, %v9726
  %v9728 = vshrl.u32 %v9489, 16
  %v9730 = vor.u32 %v9728, %v9726
  %v9732 = vshll.u32 %v9490, 16
  %v9734 = vrot.slane %v9732, 1
  %v9735 = vsel %vm1813, %v9730, %v9734
  %v9736 = vshrl.u32 %v9490, 16
  %v9738 = vor.u32 %v9736, %v9734
  %v9740 = vshll.u32 %v9491, 16
  %v9742 = vrot.slane %v9740, 1
  %v9743 = vsel %vm1813, %v9738, %v9742
  %v9744 = vshrl.u32 %v9491, 16
  %v9746 = vor.u32 %v9744, %v9742
  %v9780 = vmul.bf16 %v8595, %v9495
  %v9781 = vmul.bf16 %v8596, %v9503
  %v9782 = vmul.bf16 %v8597, %v9511
  %v9783 = vmul.bf16 %v8598, %v9519
  %v9784 = vmul.bf16 %v8599, %v9527
  %v9785 = vmul.bf16 %v8600, %v9535
  %v9786 = vmul.bf16 %v8601, %v9543
  %v9787 = vmul.bf16 %v8602, %v9551
  %v9788 = vmul.bf16 %v8603, %v9559
  %v9789 = vmul.bf16 %v8604, %v9567
  %v9790 = vmul.bf16 %v8605, %v9575
  %v9791 = vmul.bf16 %v8606, %v9583
  %v9792 = vmul.bf16 %v8607, %v9591
  %v9793 = vmul.bf16 %v8608, %v9599
  %v9794 = vmul.bf16 %v8609, %v9607
  %v9795 = vmul.bf16 %v8610, %v9615
  %v9796 = vmul.bf16 %v8611, %v9623
  %v9797 = vmul.bf16 %v8612, %v9631
  %v9798 = vmul.bf16 %v8613, %v9639
  %v9799 = vmul.bf16 %v8614, %v9647
  %v9800 = vmul.bf16 %v8615, %v9655
  %v9801 = vmul.bf16 %v8616, %v9663
  %v9802 = vmul.bf16 %v8617, %v9671
  %v9803 = vmul.bf16 %v8618, %v9679
  %v9804 = vmul.bf16 %v8619, %v9687
  %v9805 = vmul.bf16 %v8620, %v9695
  %v9806 = vmul.bf16 %v8621, %v9703
  %v9807 = vmul.bf16 %v8622, %v9711
  %v9808 = vmul.bf16 %v8623, %v9719
  %v9809 = vmul.bf16 %v8624, %v9727
  %v9810 = vmul.bf16 %v8625, %v9735
  %v9811 = vmul.bf16 %v8626, %v9743
  %v9812 = vmul.bf16 %v8627, %v9746
  %v9814 = vshrl.u32 %v9780, 16
  %v9816 = vrot.slane %v9814, 7
  %v9818 = vshrl.u32 %v9781, 16
  %v9820 = vrot.slane %v9818, 7
  %v9821 = vshll.u32 %v9781, 16
  %v9823 = vor.u32 %v9820, %v9821
  %v9824 = vsel %vm2135, %v9816, %v9823
  %v9826 = vshrl.u32 %v9782, 16
  %v9828 = vrot.slane %v9826, 7
  %v9829 = vshll.u32 %v9782, 16
  %v9831 = vor.u32 %v9828, %v9829
  %v9832 = vsel %vm2135, %v9820, %v9831
  %v9834 = vshrl.u32 %v9783, 16
  %v9836 = vrot.slane %v9834, 7
  %v9837 = vshll.u32 %v9783, 16
  %v9839 = vor.u32 %v9836, %v9837
  %v9840 = vsel %vm2135, %v9828, %v9839
  %v9842 = vshrl.u32 %v9784, 16
  %v9844 = vrot.slane %v9842, 7
  %v9845 = vshll.u32 %v9784, 16
  %v9847 = vor.u32 %v9844, %v9845
  %v9848 = vsel %vm2135, %v9836, %v9847
  %v9850 = vshrl.u32 %v9785, 16
  %v9852 = vrot.slane %v9850, 7
  %v9853 = vshll.u32 %v9785, 16
  %v9855 = vor.u32 %v9852, %v9853
  %v9856 = vsel %vm2135, %v9844, %v9855
  %v9858 = vshrl.u32 %v9786, 16
  %v9860 = vrot.slane %v9858, 7
  %v9861 = vshll.u32 %v9786, 16
  %v9863 = vor.u32 %v9860, %v9861
  %v9864 = vsel %vm2135, %v9852, %v9863
  %v9866 = vshrl.u32 %v9787, 16
  %v9868 = vrot.slane %v9866, 7
  %v9869 = vshll.u32 %v9787, 16
  %v9871 = vor.u32 %v9868, %v9869
  %v9872 = vsel %vm2135, %v9860, %v9871
  %v9874 = vshrl.u32 %v9788, 16
  %v9876 = vrot.slane %v9874, 7
  %v9877 = vshll.u32 %v9788, 16
  %v9879 = vor.u32 %v9876, %v9877
  %v9880 = vsel %vm2135, %v9868, %v9879
  %v9882 = vshrl.u32 %v9789, 16
  %v9884 = vrot.slane %v9882, 7
  %v9885 = vshll.u32 %v9789, 16
  %v9887 = vor.u32 %v9884, %v9885
  %v9888 = vsel %vm2135, %v9876, %v9887
  %v9890 = vshrl.u32 %v9790, 16
  %v9892 = vrot.slane %v9890, 7
  %v9893 = vshll.u32 %v9790, 16
  %v9895 = vor.u32 %v9892, %v9893
  %v9896 = vsel %vm2135, %v9884, %v9895
  %v9898 = vshrl.u32 %v9791, 16
  %v9900 = vrot.slane %v9898, 7
  %v9901 = vshll.u32 %v9791, 16
  %v9903 = vor.u32 %v9900, %v9901
  %v9904 = vsel %vm2135, %v9892, %v9903
  %v9906 = vshrl.u32 %v9792, 16
  %v9908 = vrot.slane %v9906, 7
  %v9909 = vshll.u32 %v9792, 16
  %v9911 = vor.u32 %v9908, %v9909
  %v9912 = vsel %vm2135, %v9900, %v9911
  %v9914 = vshrl.u32 %v9793, 16
  %v9916 = vrot.slane %v9914, 7
  %v9917 = vshll.u32 %v9793, 16
  %v9919 = vor.u32 %v9916, %v9917
  %v9920 = vsel %vm2135, %v9908, %v9919
  %v9922 = vshrl.u32 %v9794, 16
  %v9924 = vrot.slane %v9922, 7
  %v9925 = vshll.u32 %v9794, 16
  %v9927 = vor.u32 %v9924, %v9925
  %v9928 = vsel %vm2135, %v9916, %v9927
  %v9930 = vshrl.u32 %v9795, 16
  %v9932 = vrot.slane %v9930, 7
  %v9933 = vshll.u32 %v9795, 16
  %v9935 = vor.u32 %v9932, %v9933
  %v9936 = vsel %vm2135, %v9924, %v9935
  %v9938 = vshrl.u32 %v9796, 16
  %v9940 = vrot.slane %v9938, 7
  %v9941 = vshll.u32 %v9796, 16
  %v9943 = vor.u32 %v9940, %v9941
  %v9944 = vsel %vm2135, %v9932, %v9943
  %v9946 = vshrl.u32 %v9797, 16
  %v9948 = vrot.slane %v9946, 7
  %v9949 = vshll.u32 %v9797, 16
  %v9951 = vor.u32 %v9948, %v9949
  %v9952 = vsel %vm2135, %v9940, %v9951
  %v9954 = vshrl.u32 %v9798, 16
  %v9956 = vrot.slane %v9954, 7
  %v9957 = vshll.u32 %v9798, 16
  %v9959 = vor.u32 %v9956, %v9957
  %v9960 = vsel %vm2135, %v9948, %v9959
  %v9962 = vshrl.u32 %v9799, 16
  %v9964 = vrot.slane %v9962, 7
  %v9965 = vshll.u32 %v9799, 16
  %v9967 = vor.u32 %v9964, %v9965
  %v9968 = vsel %vm2135, %v9956, %v9967
  %v9970 = vshrl.u32 %v9800, 16
  %v9972 = vrot.slane %v9970, 7
  %v9973 = vshll.u32 %v9800, 16
  %v9975 = vor.u32 %v9972, %v9973
  %v9976 = vsel %vm2135, %v9964, %v9975
  %v9978 = vshrl.u32 %v9801, 16
  %v9980 = vrot.slane %v9978, 7
  %v9981 = vshll.u32 %v9801, 16
  %v9983 = vor.u32 %v9980, %v9981
  %v9984 = vsel %vm2135, %v9972, %v9983
  %v9986 = vshrl.u32 %v9802, 16
  %v9988 = vrot.slane %v9986, 7
  %v9989 = vshll.u32 %v9802, 16
  %v9991 = vor.u32 %v9988, %v9989
  %v9992 = vsel %vm2135, %v9980, %v9991
  %v9994 = vshrl.u32 %v9803, 16
  %v9996 = vrot.slane %v9994, 7
  %v9997 = vshll.u32 %v9803, 16
  %v9999 = vor.u32 %v9996, %v9997
  %v10000 = vsel %vm2135, %v9988, %v9999
  %v10002 = vshrl.u32 %v9804, 16
  %v10004 = vrot.slane %v10002, 7
  %v10005 = vshll.u32 %v9804, 16
  %v10007 = vor.u32 %v10004, %v10005
  %v10008 = vsel %vm2135, %v9996, %v10007
  %v10010 = vshrl.u32 %v9805, 16
  %v10012 = vrot.slane %v10010, 7
  %v10013 = vshll.u32 %v9805, 16
  %v10015 = vor.u32 %v10012, %v10013
  %v10016 = vsel %vm2135, %v10004, %v10015
  %v10018 = vshrl.u32 %v9806, 16
  %v10020 = vrot.slane %v10018, 7
  %v10021 = vshll.u32 %v9806, 16
  %v10023 = vor.u32 %v10020, %v10021
  %v10024 = vsel %vm2135, %v10012, %v10023
  %v10026 = vshrl.u32 %v9807, 16
  %v10028 = vrot.slane %v10026, 7
  %v10029 = vshll.u32 %v9807, 16
  %v10031 = vor.u32 %v10028, %v10029
  %v10032 = vsel %vm2135, %v10020, %v10031
  %v10034 = vshrl.u32 %v9808, 16
  %v10036 = vrot.slane %v10034, 7
  %v10037 = vshll.u32 %v9808, 16
  %v10039 = vor.u32 %v10036, %v10037
  %v10040 = vsel %vm2135, %v10028, %v10039
  %v10042 = vshrl.u32 %v9809, 16
  %v10044 = vrot.slane %v10042, 7
  %v10045 = vshll.u32 %v9809, 16
  %v10047 = vor.u32 %v10044, %v10045
  %v10048 = vsel %vm2135, %v10036, %v10047
  %v10050 = vshrl.u32 %v9810, 16
  %v10052 = vrot.slane %v10050, 7
  %v10053 = vshll.u32 %v9810, 16
  %v10055 = vor.u32 %v10052, %v10053
  %v10056 = vsel %vm2135, %v10044, %v10055
  %v10058 = vshrl.u32 %v9811, 16
  %v10060 = vrot.slane %v10058, 7
  %v10061 = vshll.u32 %v9811, 16
  %v10063 = vor.u32 %v10060, %v10061
  %v10064 = vsel %vm2135, %v10052, %v10063
  %v10066 = vshrl.u32 %v9812, 16
  %v10068 = vrot.slane %v10066, 7
  %v10069 = vshll.u32 %v9812, 16
  %v10071 = vor.u32 %v10068, %v10069
  %v10072 = vsel %vm2135, %v10060, %v10071
  %10073 = vrot.lane.b32.xlu0 %v9824, 24
  %v10074 = vpop.permute.xlu0 %10073
  %10075 = vrot.lane.b32.xlu0 %v9832, 24
  %v10076 = vpop.permute.xlu0 %10075
  %10077 = vrot.lane.b32.xlu0 %v9840, 24
  %v10078 = vpop.permute.xlu0 %10077
  %10079 = vrot.lane.b32.xlu0 %v9848, 24
  %v10080 = vpop.permute.xlu0 %10079
  %10081 = vrot.lane.b32.xlu0 %v9856, 24
  %v10082 = vpop.permute.xlu0 %10081
  %10083 = vrot.lane.b32.xlu0 %v9864, 24
  %v10084 = vpop.permute.xlu0 %10083
  %10085 = vrot.lane.b32.xlu0 %v9872, 24
  %v10086 = vpop.permute.xlu0 %10085
  %10087 = vrot.lane.b32.xlu0 %v9880, 24
  %v10088 = vpop.permute.xlu0 %10087
  %10089 = vrot.lane.b32.xlu0 %v9888, 24
  %v10090 = vpop.permute.xlu0 %10089
  %10091 = vrot.lane.b32.xlu0 %v9896, 24
  %v10092 = vpop.permute.xlu0 %10091
  %10093 = vrot.lane.b32.xlu0 %v9904, 24
  %v10094 = vpop.permute.xlu0 %10093
  %10095 = vrot.lane.b32.xlu0 %v9912, 24
  %v10096 = vpop.permute.xlu0 %10095
  %10097 = vrot.lane.b32.xlu0 %v9920, 24
  %v10098 = vpop.permute.xlu0 %10097
  %10099 = vrot.lane.b32.xlu0 %v9928, 24
  %v10100 = vpop.permute.xlu0 %10099
  %10101 = vrot.lane.b32.xlu0 %v9936, 24
  %v10102 = vpop.permute.xlu0 %10101
  %10103 = vrot.lane.b32.xlu0 %v9944, 24
  %v10104 = vpop.permute.xlu0 %10103
  %10105 = vrot.lane.b32.xlu0 %v9952, 24
  %v10106 = vpop.permute.xlu0 %10105
  %10107 = vrot.lane.b32.xlu0 %v9960, 24
  %v10108 = vpop.permute.xlu0 %10107
  %10109 = vrot.lane.b32.xlu0 %v9968, 24
  %v10110 = vpop.permute.xlu0 %10109
  %10111 = vrot.lane.b32.xlu0 %v9976, 24
  %v10112 = vpop.permute.xlu0 %10111
  %10113 = vrot.lane.b32.xlu0 %v9984, 24
  %v10114 = vpop.permute.xlu0 %10113
  %10115 = vrot.lane.b32.xlu0 %v9992, 24
  %v10116 = vpop.permute.xlu0 %10115
  %10117 = vrot.lane.b32.xlu0 %v10000, 24
  %v10118 = vpop.permute.xlu0 %10117
  %10119 = vrot.lane.b32.xlu0 %v10008, 24
  %v10120 = vpop.permute.xlu0 %10119
  %10121 = vrot.lane.b32.xlu0 %v10016, 24
  %v10122 = vpop.permute.xlu0 %10121
  %10123 = vrot.lane.b32.xlu0 %v10024, 24
  %v10124 = vpop.permute.xlu0 %10123
  %10125 = vrot.lane.b32.xlu0 %v10032, 24
  %v10126 = vpop.permute.xlu0 %10125
  %10127 = vrot.lane.b32.xlu0 %v10040, 24
  %v10128 = vpop.permute.xlu0 %10127
  %10129 = vrot.lane.b32.xlu0 %v10048, 24
  %v10130 = vpop.permute.xlu0 %10129
  %10131 = vrot.lane.b32.xlu0 %v10056, 24
  %v10132 = vpop.permute.xlu0 %10131
  %10133 = vrot.lane.b32.xlu0 %v10064, 24
  %v10134 = vpop.permute.xlu0 %10133
  %10135 = vrot.lane.b32.xlu0 %v10072, 24
  %v10136 = vpop.permute.xlu0 %10135
  %vm10169 = vcmask 228544
  %10170 = vst.msk [vmem:[#allocation3] sm:$0xff] %vm10169, %v10074
  %10171 = vst.msk [vmem:[#allocation3 + $0x8] sm:$0xff] %vm10169, %v10076
  %10172 = vst.msk [vmem:[#allocation3 + $0x10] sm:$0xff] %vm10169, %v10078
  %10173 = vst.msk [vmem:[#allocation3 + $0x18] sm:$0xff] %vm10169, %v10080
  %10174 = vst.msk [vmem:[#allocation3 + $0x20] sm:$0xff] %vm10169, %v10082
  %10175 = vst.msk [vmem:[#allocation3 + $0x28] sm:$0xff] %vm10169, %v10084
  %10176 = vst.msk [vmem:[#allocation3 + $0x30] sm:$0xff] %vm10169, %v10086
  %10177 = vst.msk [vmem:[#allocation3 + $0x38] sm:$0xff] %vm10169, %v10088
  %10178 = vst.msk [vmem:[#allocation3 + $0x40] sm:$0xff] %vm10169, %v10090
  %10179 = vst.msk [vmem:[#allocation3 + $0x48] sm:$0xff] %vm10169, %v10092
  %10180 = vst.msk [vmem:[#allocation3 + $0x50] sm:$0xff] %vm10169, %v10094
  %10181 = vst.msk [vmem:[#allocation3 + $0x58] sm:$0xff] %vm10169, %v10096
  %10182 = vst.msk [vmem:[#allocation3 + $0x60] sm:$0xff] %vm10169, %v10098
  %10183 = vst.msk [vmem:[#allocation3 + $0x68] sm:$0xff] %vm10169, %v10100
  %10184 = vst.msk [vmem:[#allocation3 + $0x70] sm:$0xff] %vm10169, %v10102
  %10185 = vst.msk [vmem:[#allocation3 + $0x78] sm:$0xff] %vm10169, %v10104
  %10186 = vst.msk [vmem:[#allocation3 + $0x80] sm:$0xff] %vm10169, %v10106
  %10187 = vst.msk [vmem:[#allocation3 + $0x88] sm:$0xff] %vm10169, %v10108
  %10188 = vst.msk [vmem:[#allocation3 + $0x90] sm:$0xff] %vm10169, %v10110
  %10189 = vst.msk [vmem:[#allocation3 + $0x98] sm:$0xff] %vm10169, %v10112
  %10190 = vst.msk [vmem:[#allocation3 + $0xa0] sm:$0xff] %vm10169, %v10114
  %10191 = vst.msk [vmem:[#allocation3 + $0xa8] sm:$0xff] %vm10169, %v10116
  %10192 = vst.msk [vmem:[#allocation3 + $0xb0] sm:$0xff] %vm10169, %v10118
  %10193 = vst.msk [vmem:[#allocation3 + $0xb8] sm:$0xff] %vm10169, %v10120
  %10194 = vst.msk [vmem:[#allocation3 + $0xc0] sm:$0xff] %vm10169, %v10122
  %10195 = vst.msk [vmem:[#allocation3 + $0xc8] sm:$0xff] %vm10169, %v10124
  %10196 = vst.msk [vmem:[#allocation3 + $0xd0] sm:$0xff] %vm10169, %v10126
  %10197 = vst.msk [vmem:[#allocation3 + $0xd8] sm:$0xff] %vm10169, %v10128
  %10198 = vst.msk [vmem:[#allocation3 + $0xe0] sm:$0xff] %vm10169, %v10130
  %10199 = vst.msk [vmem:[#allocation3 + $0xe8] sm:$0xff] %vm10169, %v10132
  %10200 = vst.msk [vmem:[#allocation3 + $0xf0] sm:$0xff] %vm10169, %v10134
  %10201 = vst.msk [vmem:[#allocation3 + $0xf8] sm:$0xff] %vm10169, %v10136
  %v10202 = vld [vmem:[#allocation2 + $0x18] sm:$0xff]
  %v10203 = vld [vmem:[#allocation2 + $0x20] sm:$0xff]
  %v10204 = vld [vmem:[#allocation2 + $0x28] sm:$0xff]
  %v10205 = vld [vmem:[#allocation2 + $0x30] sm:$0xff]
  %v10206 = vld [vmem:[#allocation2 + $0x38] sm:$0xff]
  %v10207 = vld [vmem:[#allocation2 + $0x40] sm:$0xff]
  %v10208 = vld [vmem:[#allocation2 + $0x48] sm:$0xff]
  %v10209 = vld [vmem:[#allocation2 + $0x50] sm:$0xff]
  %v10210 = vld [vmem:[#allocation2 + $0x58] sm:$0xff]
  %v10211 = vld [vmem:[#allocation2 + $0x60] sm:$0xff]
  %v10212 = vld [vmem:[#allocation2 + $0x68] sm:$0xff]
  %v10213 = vld [vmem:[#allocation2 + $0x70] sm:$0xff]
  %v10214 = vld [vmem:[#allocation2 + $0x78] sm:$0xff]
  %v10215 = vld [vmem:[#allocation2 + $0x80] sm:$0xff]
  %v10216 = vld [vmem:[#allocation2 + $0x88] sm:$0xff]
  %v10217 = vld [vmem:[#allocation2 + $0x90] sm:$0xff]
  %v10218 = vld [vmem:[#allocation2 + $0x98] sm:$0xff]
  %v10219 = vld [vmem:[#allocation2 + $0xa0] sm:$0xff]
  %v10220 = vld [vmem:[#allocation2 + $0xa8] sm:$0xff]
  %v10221 = vld [vmem:[#allocation2 + $0xb0] sm:$0xff]
  %v10222 = vld [vmem:[#allocation2 + $0xb8] sm:$0xff]
  %v10223 = vld [vmem:[#allocation2 + $0xc0] sm:$0xff]
  %v10224 = vld [vmem:[#allocation2 + $0xc8] sm:$0xff]
  %v10225 = vld [vmem:[#allocation2 + $0xd0] sm:$0xff]
  %v10226 = vld [vmem:[#allocation2 + $0xd8] sm:$0xff]
  %v10227 = vld [vmem:[#allocation2 + $0xe0] sm:$0xff]
  %v10228 = vld [vmem:[#allocation2 + $0xe8] sm:$0xff]
  %v10229 = vld [vmem:[#allocation2 + $0xf0] sm:$0xff]
  %v10230 = vld [vmem:[#allocation2 + $0xf8] sm:$0xff]
  %v10231 = vld [vmem:[#allocation2 + $0x100] sm:$0xff]
  %v10232 = vld [vmem:[#allocation2 + $0x108] sm:$0xff]
  %v10233 = vld [vmem:[#allocation2 + $0x110] sm:$0xff]
  %10234 = vset.pattern.permute.xlu0 7
  %10235 = vperm.xlu0 %10234, %v788
  %v10236 = vpop.permute.xlu0 %10235
  %v10239 = vunpack.c.l.s4 839922192
  %v10240 = vunpack.c.0.s8 %v10239
  %v10241 = vlaneseq
  %v10242 = vshrl.u32 %v10241, 7
  %v10243 = vsub.s32 %v10240, %v10242
  %v10244 = vrot.slane %v10236, %v10243
  %10245 = vset.pattern.permute.xlu0 7
  %10246 = vperm.xlu0 %10245, %v789
  %v10247 = vpop.permute.xlu0 %10246
  %v10250 = vunpack.c.l.s4 839922192
  %v10251 = vunpack.c.0.s8 %v10250
  %v10252 = vlaneseq
  %v10253 = vshrl.u32 %v10252, 7
  %v10254 = vsub.s32 %v10251, %v10253
  %v10255 = vrot.slane %v10247, %v10254
  %10256 = vset.pattern.permute.xlu0 7
  %10257 = vperm.xlu0 %10256, %v790
  %v10258 = vpop.permute.xlu0 %10257
  %v10261 = vunpack.c.l.s4 839922192
  %v10262 = vunpack.c.0.s8 %v10261
  %v10263 = vlaneseq
  %v10264 = vshrl.u32 %v10263, 7
  %v10265 = vsub.s32 %v10262, %v10264
  %v10266 = vrot.slane %v10258, %v10265
  %10267 = vset.pattern.permute.xlu0 7
  %10268 = vperm.xlu0 %10267, %v791
  %v10269 = vpop.permute.xlu0 %10268
  %v10272 = vunpack.c.l.s4 839922192
  %v10273 = vunpack.c.0.s8 %v10272
  %v10274 = vlaneseq
  %v10275 = vshrl.u32 %v10274, 7
  %v10276 = vsub.s32 %v10273, %v10275
  %v10277 = vrot.slane %v10269, %v10276
  %10278 = vset.pattern.permute.xlu0 7
  %10279 = vperm.xlu0 %10278, %v792
  %v10280 = vpop.permute.xlu0 %10279
  %v10283 = vunpack.c.l.s4 839922192
  %v10284 = vunpack.c.0.s8 %v10283
  %v10285 = vlaneseq
  %v10286 = vshrl.u32 %v10285, 7
  %v10287 = vsub.s32 %v10284, %v10286
  %v10288 = vrot.slane %v10280, %v10287
  %10289 = vset.pattern.permute.xlu0 7
  %10290 = vperm.xlu0 %10289, %v793
  %v10291 = vpop.permute.xlu0 %10290
  %v10294 = vunpack.c.l.s4 839922192
  %v10295 = vunpack.c.0.s8 %v10294
  %v10296 = vlaneseq
  %v10297 = vshrl.u32 %v10296, 7
  %v10298 = vsub.s32 %v10295, %v10297
  %v10299 = vrot.slane %v10291, %v10298
  %10300 = vset.pattern.permute.xlu0 7
  %10301 = vperm.xlu0 %10300, %v794
  %v10302 = vpop.permute.xlu0 %10301
  %v10305 = vunpack.c.l.s4 839922192
  %v10306 = vunpack.c.0.s8 %v10305
  %v10307 = vlaneseq
  %v10308 = vshrl.u32 %v10307, 7
  %v10309 = vsub.s32 %v10306, %v10308
  %v10310 = vrot.slane %v10302, %v10309
  %10311 = vset.pattern.permute.xlu0 7
  %10312 = vperm.xlu0 %10311, %v795
  %v10313 = vpop.permute.xlu0 %10312
  %v10316 = vunpack.c.l.s4 839922192
  %v10317 = vunpack.c.0.s8 %v10316
  %v10318 = vlaneseq
  %v10319 = vshrl.u32 %v10318, 7
  %v10320 = vsub.s32 %v10317, %v10319
  %v10321 = vrot.slane %v10313, %v10320
  %10322 = vset.pattern.permute.xlu0 7
  %10323 = vperm.xlu0 %10322, %v796
  %v10324 = vpop.permute.xlu0 %10323
  %v10327 = vunpack.c.l.s4 839922192
  %v10328 = vunpack.c.0.s8 %v10327
  %v10329 = vlaneseq
  %v10330 = vshrl.u32 %v10329, 7
  %v10331 = vsub.s32 %v10328, %v10330
  %v10332 = vrot.slane %v10324, %v10331
  %10333 = vset.pattern.permute.xlu0 7
  %10334 = vperm.xlu0 %10333, %v797
  %v10335 = vpop.permute.xlu0 %10334
  %v10338 = vunpack.c.l.s4 839922192
  %v10339 = vunpack.c.0.s8 %v10338
  %v10340 = vlaneseq
  %v10341 = vshrl.u32 %v10340, 7
  %v10342 = vsub.s32 %v10339, %v10341
  %v10343 = vrot.slane %v10335, %v10342
  %10344 = vset.pattern.permute.xlu0 7
  %10345 = vperm.xlu0 %10344, %v798
  %v10346 = vpop.permute.xlu0 %10345
  %v10349 = vunpack.c.l.s4 839922192
  %v10350 = vunpack.c.0.s8 %v10349
  %v10351 = vlaneseq
  %v10352 = vshrl.u32 %v10351, 7
  %v10353 = vsub.s32 %v10350, %v10352
  %v10354 = vrot.slane %v10346, %v10353
  %10355 = vset.pattern.permute.xlu0 7
  %10356 = vperm.xlu0 %10355, %v799
  %v10357 = vpop.permute.xlu0 %10356
  %v10360 = vunpack.c.l.s4 839922192
  %v10361 = vunpack.c.0.s8 %v10360
  %v10362 = vlaneseq
  %v10363 = vshrl.u32 %v10362, 7
  %v10364 = vsub.s32 %v10361, %v10363
  %v10365 = vrot.slane %v10357, %v10364
  %10366 = vset.pattern.permute.xlu0 7
  %10367 = vperm.xlu0 %10366, %v800
  %v10368 = vpop.permute.xlu0 %10367
  %v10371 = vunpack.c.l.s4 839922192
  %v10372 = vunpack.c.0.s8 %v10371
  %v10373 = vlaneseq
  %v10374 = vshrl.u32 %v10373, 7
  %v10375 = vsub.s32 %v10372, %v10374
  %v10376 = vrot.slane %v10368, %v10375
  %10377 = vset.pattern.permute.xlu0 7
  %10378 = vperm.xlu0 %10377, %v801
  %v10379 = vpop.permute.xlu0 %10378
  %v10382 = vunpack.c.l.s4 839922192
  %v10383 = vunpack.c.0.s8 %v10382
  %v10384 = vlaneseq
  %v10385 = vshrl.u32 %v10384, 7
  %v10386 = vsub.s32 %v10383, %v10385
  %v10387 = vrot.slane %v10379, %v10386
  %10388 = vset.pattern.permute.xlu0 7
  %10389 = vperm.xlu0 %10388, %v802
  %v10390 = vpop.permute.xlu0 %10389
  %v10393 = vunpack.c.l.s4 839922192
  %v10394 = vunpack.c.0.s8 %v10393
  %v10395 = vlaneseq
  %v10396 = vshrl.u32 %v10395, 7
  %v10397 = vsub.s32 %v10394, %v10396
  %v10398 = vrot.slane %v10390, %v10397
  %10399 = vset.pattern.permute.xlu0 7
  %10400 = vperm.xlu0 %10399, %v803
  %v10401 = vpop.permute.xlu0 %10400
  %v10404 = vunpack.c.l.s4 839922192
  %v10405 = vunpack.c.0.s8 %v10404
  %v10406 = vlaneseq
  %v10407 = vshrl.u32 %v10406, 7
  %v10408 = vsub.s32 %v10405, %v10407
  %v10409 = vrot.slane %v10401, %v10408
  %10410 = vset.pattern.permute.xlu0 7
  %10411 = vperm.xlu0 %10410, %v804
  %v10412 = vpop.permute.xlu0 %10411
  %v10415 = vunpack.c.l.s4 839922192
  %v10416 = vunpack.c.0.s8 %v10415
  %v10417 = vlaneseq
  %v10418 = vshrl.u32 %v10417, 7
  %v10419 = vsub.s32 %v10416, %v10418
  %v10420 = vrot.slane %v10412, %v10419
  %10421 = vset.pattern.permute.xlu0 7
  %10422 = vperm.xlu0 %10421, %v805
  %v10423 = vpop.permute.xlu0 %10422
  %v10426 = vunpack.c.l.s4 839922192
  %v10427 = vunpack.c.0.s8 %v10426
  %v10428 = vlaneseq
  %v10429 = vshrl.u32 %v10428, 7
  %v10430 = vsub.s32 %v10427, %v10429
  %v10431 = vrot.slane %v10423, %v10430
  %10432 = vset.pattern.permute.xlu0 7
  %10433 = vperm.xlu0 %10432, %v806
  %v10434 = vpop.permute.xlu0 %10433
  %v10437 = vunpack.c.l.s4 839922192
  %v10438 = vunpack.c.0.s8 %v10437
  %v10439 = vlaneseq
  %v10440 = vshrl.u32 %v10439, 7
  %v10441 = vsub.s32 %v10438, %v10440
  %v10442 = vrot.slane %v10434, %v10441
  %10443 = vset.pattern.permute.xlu0 7
  %10444 = vperm.xlu0 %10443, %v807
  %v10445 = vpop.permute.xlu0 %10444
  %v10448 = vunpack.c.l.s4 839922192
  %v10449 = vunpack.c.0.s8 %v10448
  %v10450 = vlaneseq
  %v10451 = vshrl.u32 %v10450, 7
  %v10452 = vsub.s32 %v10449, %v10451
  %v10453 = vrot.slane %v10445, %v10452
  %10454 = vset.pattern.permute.xlu0 7
  %10455 = vperm.xlu0 %10454, %v808
  %v10456 = vpop.permute.xlu0 %10455
  %v10459 = vunpack.c.l.s4 839922192
  %v10460 = vunpack.c.0.s8 %v10459
  %v10461 = vlaneseq
  %v10462 = vshrl.u32 %v10461, 7
  %v10463 = vsub.s32 %v10460, %v10462
  %v10464 = vrot.slane %v10456, %v10463
  %10465 = vset.pattern.permute.xlu0 7
  %10466 = vperm.xlu0 %10465, %v809
  %v10467 = vpop.permute.xlu0 %10466
  %v10470 = vunpack.c.l.s4 839922192
  %v10471 = vunpack.c.0.s8 %v10470
  %v10472 = vlaneseq
  %v10473 = vshrl.u32 %v10472, 7
  %v10474 = vsub.s32 %v10471, %v10473
  %v10475 = vrot.slane %v10467, %v10474
  %10476 = vset.pattern.permute.xlu0 7
  %10477 = vperm.xlu0 %10476, %v810
  %v10478 = vpop.permute.xlu0 %10477
  %v10481 = vunpack.c.l.s4 839922192
  %v10482 = vunpack.c.0.s8 %v10481
  %v10483 = vlaneseq
  %v10484 = vshrl.u32 %v10483, 7
  %v10485 = vsub.s32 %v10482, %v10484
  %v10486 = vrot.slane %v10478, %v10485
  %10487 = vset.pattern.permute.xlu0 7
  %10488 = vperm.xlu0 %10487, %v811
  %v10489 = vpop.permute.xlu0 %10488
  %v10492 = vunpack.c.l.s4 839922192
  %v10493 = vunpack.c.0.s8 %v10492
  %v10494 = vlaneseq
  %v10495 = vshrl.u32 %v10494, 7
  %v10496 = vsub.s32 %v10493, %v10495
  %v10497 = vrot.slane %v10489, %v10496
  %10498 = vset.pattern.permute.xlu0 7
  %10499 = vperm.xlu0 %10498, %v812
  %v10500 = vpop.permute.xlu0 %10499
  %v10503 = vunpack.c.l.s4 839922192
  %v10504 = vunpack.c.0.s8 %v10503
  %v10505 = vlaneseq
  %v10506 = vshrl.u32 %v10505, 7
  %v10507 = vsub.s32 %v10504, %v10506
  %v10508 = vrot.slane %v10500, %v10507
  %10509 = vset.pattern.permute.xlu0 7
  %10510 = vperm.xlu0 %10509, %v813
  %v10511 = vpop.permute.xlu0 %10510
  %v10514 = vunpack.c.l.s4 839922192
  %v10515 = vunpack.c.0.s8 %v10514
  %v10516 = vlaneseq
  %v10517 = vshrl.u32 %v10516, 7
  %v10518 = vsub.s32 %v10515, %v10517
  %v10519 = vrot.slane %v10511, %v10518
  %10520 = vset.pattern.permute.xlu0 7
  %10521 = vperm.xlu0 %10520, %v814
  %v10522 = vpop.permute.xlu0 %10521
  %v10525 = vunpack.c.l.s4 839922192
  %v10526 = vunpack.c.0.s8 %v10525
  %v10527 = vlaneseq
  %v10528 = vshrl.u32 %v10527, 7
  %v10529 = vsub.s32 %v10526, %v10528
  %v10530 = vrot.slane %v10522, %v10529
  %10531 = vset.pattern.permute.xlu0 7
  %10532 = vperm.xlu0 %10531, %v815
  %v10533 = vpop.permute.xlu0 %10532
  %v10536 = vunpack.c.l.s4 839922192
  %v10537 = vunpack.c.0.s8 %v10536
  %v10538 = vlaneseq
  %v10539 = vshrl.u32 %v10538, 7
  %v10540 = vsub.s32 %v10537, %v10539
  %v10541 = vrot.slane %v10533, %v10540
  %10542 = vset.pattern.permute.xlu0 7
  %10543 = vperm.xlu0 %10542, %v816
  %v10544 = vpop.permute.xlu0 %10543
  %v10547 = vunpack.c.l.s4 839922192
  %v10548 = vunpack.c.0.s8 %v10547
  %v10549 = vlaneseq
  %v10550 = vshrl.u32 %v10549, 7
  %v10551 = vsub.s32 %v10548, %v10550
  %v10552 = vrot.slane %v10544, %v10551
  %10553 = vset.pattern.permute.xlu0 7
  %10554 = vperm.xlu0 %10553, %v817
  %v10555 = vpop.permute.xlu0 %10554
  %v10558 = vunpack.c.l.s4 839922192
  %v10559 = vunpack.c.0.s8 %v10558
  %v10560 = vlaneseq
  %v10561 = vshrl.u32 %v10560, 7
  %v10562 = vsub.s32 %v10559, %v10561
  %v10563 = vrot.slane %v10555, %v10562
  %10564 = vset.pattern.permute.xlu0 7
  %10565 = vperm.xlu0 %10564, %v818
  %v10566 = vpop.permute.xlu0 %10565
  %v10569 = vunpack.c.l.s4 839922192
  %v10570 = vunpack.c.0.s8 %v10569
  %v10571 = vlaneseq
  %v10572 = vshrl.u32 %v10571, 7
  %v10573 = vsub.s32 %v10570, %v10572
  %v10574 = vrot.slane %v10566, %v10573
  %10575 = vset.pattern.permute.xlu0 7
  %10576 = vperm.xlu0 %10575, %v819
  %v10577 = vpop.permute.xlu0 %10576
  %v10580 = vunpack.c.l.s4 839922192
  %v10581 = vunpack.c.0.s8 %v10580
  %v10582 = vlaneseq
  %v10583 = vshrl.u32 %v10582, 7
  %v10584 = vsub.s32 %v10581, %v10583
  %v10585 = vrot.slane %v10577, %v10584
  %10586 = vset.pattern.permute.xlu0 7
  %10587 = vperm.xlu0 %10586, %v820
  %v10588 = vpop.permute.xlu0 %10587
  %v10591 = vunpack.c.l.s4 839922192
  %v10592 = vunpack.c.0.s8 %v10591
  %v10593 = vlaneseq
  %v10594 = vshrl.u32 %v10593, 7
  %v10595 = vsub.s32 %v10592, %v10594
  %v10596 = vrot.slane %v10588, %v10595
  %10597 = vset.pattern.permute.xlu0 7
  %10598 = vperm.xlu0 %10597, %v821
  %v10599 = vpop.permute.xlu0 %10598
  %v10602 = vunpack.c.l.s4 839922192
  %v10603 = vunpack.c.0.s8 %v10602
  %v10604 = vlaneseq
  %v10605 = vshrl.u32 %v10604, 7
  %v10606 = vsub.s32 %v10603, %v10605
  %v10607 = vrot.slane %v10599, %v10606
  %10608 = vset.pattern.permute.xlu0 7
  %10609 = vperm.xlu0 %10608, %v822
  %v10610 = vpop.permute.xlu0 %10609
  %v10613 = vunpack.c.l.s4 839922192
  %v10614 = vunpack.c.0.s8 %v10613
  %v10615 = vlaneseq
  %v10616 = vshrl.u32 %v10615, 7
  %v10617 = vsub.s32 %v10614, %v10616
  %v10618 = vrot.slane %v10610, %v10617
  %10619 = vset.pattern.permute.xlu0 7
  %10620 = vperm.xlu0 %10619, %v823
  %v10621 = vpop.permute.xlu0 %10620
  %v10624 = vunpack.c.l.s4 839922192
  %v10625 = vunpack.c.0.s8 %v10624
  %v10626 = vlaneseq
  %v10627 = vshrl.u32 %v10626, 7
  %v10628 = vsub.s32 %v10625, %v10627
  %v10629 = vrot.slane %v10621, %v10628
  %10630 = vset.pattern.permute.xlu0 7
  %10631 = vperm.xlu0 %10630, %v824
  %v10632 = vpop.permute.xlu0 %10631
  %v10635 = vunpack.c.l.s4 839922192
  %v10636 = vunpack.c.0.s8 %v10635
  %v10637 = vlaneseq
  %v10638 = vshrl.u32 %v10637, 7
  %v10639 = vsub.s32 %v10636, %v10638
  %v10640 = vrot.slane %v10632, %v10639
  %10641 = vset.pattern.permute.xlu0 7
  %10642 = vperm.xlu0 %10641, %v825
  %v10643 = vpop.permute.xlu0 %10642
  %v10646 = vunpack.c.l.s4 839922192
  %v10647 = vunpack.c.0.s8 %v10646
  %v10648 = vlaneseq
  %v10649 = vshrl.u32 %v10648, 7
  %v10650 = vsub.s32 %v10647, %v10649
  %v10651 = vrot.slane %v10643, %v10650
  %10652 = vset.pattern.permute.xlu0 7
  %10653 = vperm.xlu0 %10652, %v826
  %v10654 = vpop.permute.xlu0 %10653
  %v10657 = vunpack.c.l.s4 839922192
  %v10658 = vunpack.c.0.s8 %v10657
  %v10659 = vlaneseq
  %v10660 = vshrl.u32 %v10659, 7
  %v10661 = vsub.s32 %v10658, %v10660
  %v10662 = vrot.slane %v10654, %v10661
  %10663 = vset.pattern.permute.xlu0 7
  %10664 = vperm.xlu0 %10663, %v827
  %v10665 = vpop.permute.xlu0 %10664
  %v10668 = vunpack.c.l.s4 839922192
  %v10669 = vunpack.c.0.s8 %v10668
  %v10670 = vlaneseq
  %v10671 = vshrl.u32 %v10670, 7
  %v10672 = vsub.s32 %v10669, %v10671
  %v10673 = vrot.slane %v10665, %v10672
  %10674 = vset.pattern.permute.xlu0 7
  %10675 = vperm.xlu0 %10674, %v828
  %v10676 = vpop.permute.xlu0 %10675
  %v10679 = vunpack.c.l.s4 839922192
  %v10680 = vunpack.c.0.s8 %v10679
  %v10681 = vlaneseq
  %v10682 = vshrl.u32 %v10681, 7
  %v10683 = vsub.s32 %v10680, %v10682
  %v10684 = vrot.slane %v10676, %v10683
  %10685 = vset.pattern.permute.xlu0 7
  %10686 = vperm.xlu0 %10685, %v829
  %v10687 = vpop.permute.xlu0 %10686
  %v10690 = vunpack.c.l.s4 839922192
  %v10691 = vunpack.c.0.s8 %v10690
  %v10692 = vlaneseq
  %v10693 = vshrl.u32 %v10692, 7
  %v10694 = vsub.s32 %v10691, %v10693
  %v10695 = vrot.slane %v10687, %v10694
  %10696 = vset.pattern.permute.xlu0 7
  %10697 = vperm.xlu0 %10696, %v830
  %v10698 = vpop.permute.xlu0 %10697
  %v10701 = vunpack.c.l.s4 839922192
  %v10702 = vunpack.c.0.s8 %v10701
  %v10703 = vlaneseq
  %v10704 = vshrl.u32 %v10703, 7
  %v10705 = vsub.s32 %v10702, %v10704
  %v10706 = vrot.slane %v10698, %v10705
  %10707 = vset.pattern.permute.xlu0 7
  %10708 = vperm.xlu0 %10707, %v831
  %v10709 = vpop.permute.xlu0 %10708
  %v10712 = vunpack.c.l.s4 839922192
  %v10713 = vunpack.c.0.s8 %v10712
  %v10714 = vlaneseq
  %v10715 = vshrl.u32 %v10714, 7
  %v10716 = vsub.s32 %v10713, %v10715
  %v10717 = vrot.slane %v10709, %v10716
  %10718 = vset.pattern.permute.xlu0 7
  %10719 = vperm.xlu0 %10718, %v832
  %v10720 = vpop.permute.xlu0 %10719
  %v10723 = vunpack.c.l.s4 839922192
  %v10724 = vunpack.c.0.s8 %v10723
  %v10725 = vlaneseq
  %v10726 = vshrl.u32 %v10725, 7
  %v10727 = vsub.s32 %v10724, %v10726
  %v10728 = vrot.slane %v10720, %v10727
  %10729 = vset.pattern.permute.xlu0 7
  %10730 = vperm.xlu0 %10729, %v833
  %v10731 = vpop.permute.xlu0 %10730
  %v10734 = vunpack.c.l.s4 839922192
  %v10735 = vunpack.c.0.s8 %v10734
  %v10736 = vlaneseq
  %v10737 = vshrl.u32 %v10736, 7
  %v10738 = vsub.s32 %v10735, %v10737
  %v10739 = vrot.slane %v10731, %v10738
  %10740 = vset.pattern.permute.xlu0 7
  %10741 = vperm.xlu0 %10740, %v834
  %v10742 = vpop.permute.xlu0 %10741
  %v10745 = vunpack.c.l.s4 839922192
  %v10746 = vunpack.c.0.s8 %v10745
  %v10747 = vlaneseq
  %v10748 = vshrl.u32 %v10747, 7
  %v10749 = vsub.s32 %v10746, %v10748
  %v10750 = vrot.slane %v10742, %v10749
  %10751 = vset.pattern.permute.xlu0 7
  %10752 = vperm.xlu0 %10751, %v835
  %v10753 = vpop.permute.xlu0 %10752
  %v10756 = vunpack.c.l.s4 839922192
  %v10757 = vunpack.c.0.s8 %v10756
  %v10758 = vlaneseq
  %v10759 = vshrl.u32 %v10758, 7
  %v10760 = vsub.s32 %v10757, %v10759
  %v10761 = vrot.slane %v10753, %v10760
  %10762 = vset.pattern.permute.xlu0 7
  %10763 = vperm.xlu0 %10762, %v836
  %v10764 = vpop.permute.xlu0 %10763
  %v10767 = vunpack.c.l.s4 839922192
  %v10768 = vunpack.c.0.s8 %v10767
  %v10769 = vlaneseq
  %v10770 = vshrl.u32 %v10769, 7
  %v10771 = vsub.s32 %v10768, %v10770
  %v10772 = vrot.slane %v10764, %v10771
  %10773 = vset.pattern.permute.xlu0 7
  %10774 = vperm.xlu0 %10773, %v837
  %v10775 = vpop.permute.xlu0 %10774
  %v10778 = vunpack.c.l.s4 839922192
  %v10779 = vunpack.c.0.s8 %v10778
  %v10780 = vlaneseq
  %v10781 = vshrl.u32 %v10780, 7
  %v10782 = vsub.s32 %v10779, %v10781
  %v10783 = vrot.slane %v10775, %v10782
  %10784 = vset.pattern.permute.xlu0 7
  %10785 = vperm.xlu0 %10784, %v838
  %v10786 = vpop.permute.xlu0 %10785
  %v10789 = vunpack.c.l.s4 839922192
  %v10790 = vunpack.c.0.s8 %v10789
  %v10791 = vlaneseq
  %v10792 = vshrl.u32 %v10791, 7
  %v10793 = vsub.s32 %v10790, %v10792
  %v10794 = vrot.slane %v10786, %v10793
  %10795 = vset.pattern.permute.xlu0 7
  %10796 = vperm.xlu0 %10795, %v839
  %v10797 = vpop.permute.xlu0 %10796
  %v10800 = vunpack.c.l.s4 839922192
  %v10801 = vunpack.c.0.s8 %v10800
  %v10802 = vlaneseq
  %v10803 = vshrl.u32 %v10802, 7
  %v10804 = vsub.s32 %v10801, %v10803
  %v10805 = vrot.slane %v10797, %v10804
  %10806 = vset.pattern.permute.xlu0 7
  %10807 = vperm.xlu0 %10806, %v840
  %v10808 = vpop.permute.xlu0 %10807
  %v10811 = vunpack.c.l.s4 839922192
  %v10812 = vunpack.c.0.s8 %v10811
  %v10813 = vlaneseq
  %v10814 = vshrl.u32 %v10813, 7
  %v10815 = vsub.s32 %v10812, %v10814
  %v10816 = vrot.slane %v10808, %v10815
  %10817 = vset.pattern.permute.xlu0 7
  %10818 = vperm.xlu0 %10817, %v841
  %v10819 = vpop.permute.xlu0 %10818
  %v10822 = vunpack.c.l.s4 839922192
  %v10823 = vunpack.c.0.s8 %v10822
  %v10824 = vlaneseq
  %v10825 = vshrl.u32 %v10824, 7
  %v10826 = vsub.s32 %v10823, %v10825
  %v10827 = vrot.slane %v10819, %v10826
  %10828 = vset.pattern.permute.xlu0 7
  %10829 = vperm.xlu0 %10828, %v842
  %v10830 = vpop.permute.xlu0 %10829
  %v10833 = vunpack.c.l.s4 839922192
  %v10834 = vunpack.c.0.s8 %v10833
  %v10835 = vlaneseq
  %v10836 = vshrl.u32 %v10835, 7
  %v10837 = vsub.s32 %v10834, %v10836
  %v10838 = vrot.slane %v10830, %v10837
  %10839 = vset.pattern.permute.xlu0 7
  %10840 = vperm.xlu0 %10839, %v843
  %v10841 = vpop.permute.xlu0 %10840
  %v10844 = vunpack.c.l.s4 839922192
  %v10845 = vunpack.c.0.s8 %v10844
  %v10846 = vlaneseq
  %v10847 = vshrl.u32 %v10846, 7
  %v10848 = vsub.s32 %v10845, %v10847
  %v10849 = vrot.slane %v10841, %v10848
  %10850 = vset.pattern.permute.xlu0 7
  %10851 = vperm.xlu0 %10850, %v844
  %v10852 = vpop.permute.xlu0 %10851
  %v10855 = vunpack.c.l.s4 839922192
  %v10856 = vunpack.c.0.s8 %v10855
  %v10857 = vlaneseq
  %v10858 = vshrl.u32 %v10857, 7
  %v10859 = vsub.s32 %v10856, %v10858
  %v10860 = vrot.slane %v10852, %v10859
  %10861 = vset.pattern.permute.xlu0 7
  %10862 = vperm.xlu0 %10861, %v845
  %v10863 = vpop.permute.xlu0 %10862
  %v10866 = vunpack.c.l.s4 839922192
  %v10867 = vunpack.c.0.s8 %v10866
  %v10868 = vlaneseq
  %v10869 = vshrl.u32 %v10868, 7
  %v10870 = vsub.s32 %v10867, %v10869
  %v10871 = vrot.slane %v10863, %v10870
  %10872 = vset.pattern.permute.xlu0 7
  %10873 = vperm.xlu0 %10872, %v846
  %v10874 = vpop.permute.xlu0 %10873
  %v10877 = vunpack.c.l.s4 839922192
  %v10878 = vunpack.c.0.s8 %v10877
  %v10879 = vlaneseq
  %v10880 = vshrl.u32 %v10879, 7
  %v10881 = vsub.s32 %v10878, %v10880
  %v10882 = vrot.slane %v10874, %v10881
  %10883 = vset.pattern.permute.xlu0 7
  %10884 = vperm.xlu0 %10883, %v847
  %v10885 = vpop.permute.xlu0 %10884
  %v10888 = vunpack.c.l.s4 839922192
  %v10889 = vunpack.c.0.s8 %v10888
  %v10890 = vlaneseq
  %v10891 = vshrl.u32 %v10890, 7
  %v10892 = vsub.s32 %v10889, %v10891
  %v10893 = vrot.slane %v10885, %v10892
  %10894 = vset.pattern.permute.xlu0 7
  %10895 = vperm.xlu0 %10894, %v848
  %v10896 = vpop.permute.xlu0 %10895
  %v10899 = vunpack.c.l.s4 839922192
  %v10900 = vunpack.c.0.s8 %v10899
  %v10901 = vlaneseq
  %v10902 = vshrl.u32 %v10901, 7
  %v10903 = vsub.s32 %v10900, %v10902
  %v10904 = vrot.slane %v10896, %v10903
  %10905 = vset.pattern.permute.xlu0 7
  %10906 = vperm.xlu0 %10905, %v849
  %v10907 = vpop.permute.xlu0 %10906
  %v10910 = vunpack.c.l.s4 839922192
  %v10911 = vunpack.c.0.s8 %v10910
  %v10912 = vlaneseq
  %v10913 = vshrl.u32 %v10912, 7
  %v10914 = vsub.s32 %v10911, %v10913
  %v10915 = vrot.slane %v10907, %v10914
  %10916 = vset.pattern.permute.xlu0 7
  %10917 = vperm.xlu0 %10916, %v850
  %v10918 = vpop.permute.xlu0 %10917
  %v10921 = vunpack.c.l.s4 839922192
  %v10922 = vunpack.c.0.s8 %v10921
  %v10923 = vlaneseq
  %v10924 = vshrl.u32 %v10923, 7
  %v10925 = vsub.s32 %v10922, %v10924
  %v10926 = vrot.slane %v10918, %v10925
  %10927 = vset.pattern.permute.xlu0 7
  %10928 = vperm.xlu0 %10927, %v851
  %v10929 = vpop.permute.xlu0 %10928
  %v10932 = vunpack.c.l.s4 839922192
  %v10933 = vunpack.c.0.s8 %v10932
  %v10934 = vlaneseq
  %v10935 = vshrl.u32 %v10934, 7
  %v10936 = vsub.s32 %v10933, %v10935
  %v10937 = vrot.slane %v10929, %v10936
  %v11002 = vunpack.c.l.b16 %v10244
  %v11003 = vunpack.c.l.b16 %v10255
  %v11004 = vunpack.c.l.b16 %v10266
  %v11005 = vunpack.c.l.b16 %v10277
  %v11006 = vunpack.c.l.b16 %v10288
  %v11007 = vunpack.c.l.b16 %v10299
  %v11008 = vunpack.c.l.b16 %v10310
  %v11009 = vunpack.c.l.b16 %v10321
  %v11010 = vunpack.c.l.b16 %v10332
  %v11011 = vunpack.c.l.b16 %v10343
  %v11012 = vunpack.c.l.b16 %v10354
  %v11013 = vunpack.c.l.b16 %v10365
  %v11014 = vunpack.c.l.b16 %v10376
  %v11015 = vunpack.c.l.b16 %v10387
  %v11016 = vunpack.c.l.b16 %v10398
  %v11017 = vunpack.c.l.b16 %v10409
  %v11018 = vunpack.c.l.b16 %v10420
  %v11019 = vunpack.c.l.b16 %v10431
  %v11020 = vunpack.c.l.b16 %v10442
  %v11021 = vunpack.c.l.b16 %v10453
  %v11022 = vunpack.c.l.b16 %v10464
  %v11023 = vunpack.c.l.b16 %v10475
  %v11024 = vunpack.c.l.b16 %v10486
  %v11025 = vunpack.c.l.b16 %v10497
  %v11026 = vunpack.c.l.b16 %v10508
  %v11027 = vunpack.c.l.b16 %v10519
  %v11028 = vunpack.c.l.b16 %v10530
  %v11029 = vunpack.c.l.b16 %v10541
  %v11030 = vunpack.c.l.b16 %v10552
  %v11031 = vunpack.c.l.b16 %v10563
  %v11032 = vunpack.c.l.b16 %v10574
  %v11033 = vunpack.c.l.b16 %v10585
  %v11034 = vunpack.c.l.b16 %v10596
  %v11035 = vunpack.c.l.b16 %v10607
  %v11036 = vunpack.c.l.b16 %v10618
  %v11037 = vunpack.c.l.b16 %v10629
  %v11038 = vunpack.c.l.b16 %v10640
  %v11039 = vunpack.c.l.b16 %v10651
  %v11040 = vunpack.c.l.b16 %v10662
  %v11041 = vunpack.c.l.b16 %v10673
  %v11042 = vunpack.c.l.b16 %v10684
  %v11043 = vunpack.c.l.b16 %v10695
  %v11044 = vunpack.c.l.b16 %v10706
  %v11045 = vunpack.c.l.b16 %v10717
  %v11046 = vunpack.c.l.b16 %v10728
  %v11047 = vunpack.c.l.b16 %v10739
  %v11048 = vunpack.c.l.b16 %v10750
  %v11049 = vunpack.c.l.b16 %v10761
  %v11050 = vunpack.c.l.b16 %v10772
  %v11051 = vunpack.c.l.b16 %v10783
  %v11052 = vunpack.c.l.b16 %v10794
  %v11053 = vunpack.c.l.b16 %v10805
  %v11054 = vunpack.c.l.b16 %v10816
  %v11055 = vunpack.c.l.b16 %v10827
  %v11056 = vunpack.c.l.b16 %v10838
  %v11057 = vunpack.c.l.b16 %v10849
  %v11058 = vunpack.c.l.b16 %v10860
  %v11059 = vunpack.c.l.b16 %v10871
  %v11060 = vunpack.c.l.b16 %v10882
  %v11061 = vunpack.c.l.b16 %v10893
  %v11062 = vunpack.c.l.b16 %v10904
  %v11063 = vunpack.c.l.b16 %v10915
  %v11064 = vunpack.c.l.b16 %v10926
  %v11065 = vunpack.c.l.b16 %v10937
  %v11066 = vpack.c.b16 %v11003, %v11002
  %v11067 = vpack.c.b16 %v11005, %v11004
  %v11068 = vpack.c.b16 %v11007, %v11006
  %v11069 = vpack.c.b16 %v11009, %v11008
  %v11070 = vpack.c.b16 %v11011, %v11010
  %v11071 = vpack.c.b16 %v11013, %v11012
  %v11072 = vpack.c.b16 %v11015, %v11014
  %v11073 = vpack.c.b16 %v11017, %v11016
  %v11074 = vpack.c.b16 %v11019, %v11018
  %v11075 = vpack.c.b16 %v11021, %v11020
  %v11076 = vpack.c.b16 %v11023, %v11022
  %v11077 = vpack.c.b16 %v11025, %v11024
  %v11078 = vpack.c.b16 %v11027, %v11026
  %v11079 = vpack.c.b16 %v11029, %v11028
  %v11080 = vpack.c.b16 %v11031, %v11030
  %v11081 = vpack.c.b16 %v11033, %v11032
  %v11082 = vpack.c.b16 %v11035, %v11034
  %v11083 = vpack.c.b16 %v11037, %v11036
  %v11084 = vpack.c.b16 %v11039, %v11038
  %v11085 = vpack.c.b16 %v11041, %v11040
  %v11086 = vpack.c.b16 %v11043, %v11042
  %v11087 = vpack.c.b16 %v11045, %v11044
  %v11088 = vpack.c.b16 %v11047, %v11046
  %v11089 = vpack.c.b16 %v11049, %v11048
  %v11090 = vpack.c.b16 %v11051, %v11050
  %v11091 = vpack.c.b16 %v11053, %v11052
  %v11092 = vpack.c.b16 %v11055, %v11054
  %v11093 = vpack.c.b16 %v11057, %v11056
  %v11094 = vpack.c.b16 %v11059, %v11058
  %v11095 = vpack.c.b16 %v11061, %v11060
  %v11096 = vpack.c.b16 %v11063, %v11062
  %v11097 = vpack.c.b16 %v11065, %v11064
  %v11130 = vmul.bf16 %v10202, %v11066
  %v11131 = vmul.bf16 %v10203, %v11067
  %v11132 = vmul.bf16 %v10204, %v11068
  %v11133 = vmul.bf16 %v10205, %v11069
  %v11134 = vmul.bf16 %v10206, %v11070
  %v11135 = vmul.bf16 %v10207, %v11071
  %v11136 = vmul.bf16 %v10208, %v11072
  %v11137 = vmul.bf16 %v10209, %v11073
  %v11138 = vmul.bf16 %v10210, %v11074
  %v11139 = vmul.bf16 %v10211, %v11075
  %v11140 = vmul.bf16 %v10212, %v11076
  %v11141 = vmul.bf16 %v10213, %v11077
  %v11142 = vmul.bf16 %v10214, %v11078
  %v11143 = vmul.bf16 %v10215, %v11079
  %v11144 = vmul.bf16 %v10216, %v11080
  %v11145 = vmul.bf16 %v10217, %v11081
  %v11146 = vmul.bf16 %v10218, %v11082
  %v11147 = vmul.bf16 %v10219, %v11083
  %v11148 = vmul.bf16 %v10220, %v11084
  %v11149 = vmul.bf16 %v10221, %v11085
  %v11150 = vmul.bf16 %v10222, %v11086
  %v11151 = vmul.bf16 %v10223, %v11087
  %v11152 = vmul.bf16 %v10224, %v11088
  %v11153 = vmul.bf16 %v10225, %v11089
  %v11154 = vmul.bf16 %v10226, %v11090
  %v11155 = vmul.bf16 %v10227, %v11091
  %v11156 = vmul.bf16 %v10228, %v11092
  %v11157 = vmul.bf16 %v10229, %v11093
  %v11158 = vmul.bf16 %v10230, %v11094
  %v11159 = vmul.bf16 %v10231, %v11095
  %v11160 = vmul.bf16 %v10232, %v11096
  %v11161 = vmul.bf16 %v10233, %v11097
  %11194 = vrot.lane.b32.xlu0 %v11130, 28
  %v11195 = vpop.permute.xlu0 %11194
  %11196 = vrot.lane.b32.xlu0 %v11131, 28
  %v11197 = vpop.permute.xlu0 %11196
  %11198 = vrot.lane.b32.xlu0 %v11132, 28
  %v11199 = vpop.permute.xlu0 %11198
  %11200 = vrot.lane.b32.xlu0 %v11133, 28
  %v11201 = vpop.permute.xlu0 %11200
  %11202 = vrot.lane.b32.xlu0 %v11134, 28
  %v11203 = vpop.permute.xlu0 %11202
  %11204 = vrot.lane.b32.xlu0 %v11135, 28
  %v11205 = vpop.permute.xlu0 %11204
  %11206 = vrot.lane.b32.xlu0 %v11136, 28
  %v11207 = vpop.permute.xlu0 %11206
  %11208 = vrot.lane.b32.xlu0 %v11137, 28
  %v11209 = vpop.permute.xlu0 %11208
  %11210 = vrot.lane.b32.xlu0 %v11138, 28
  %v11211 = vpop.permute.xlu0 %11210
  %11212 = vrot.lane.b32.xlu0 %v11139, 28
  %v11213 = vpop.permute.xlu0 %11212
  %11214 = vrot.lane.b32.xlu0 %v11140, 28
  %v11215 = vpop.permute.xlu0 %11214
  %11216 = vrot.lane.b32.xlu0 %v11141, 28
  %v11217 = vpop.permute.xlu0 %11216
  %11218 = vrot.lane.b32.xlu0 %v11142, 28
  %v11219 = vpop.permute.xlu0 %11218
  %11220 = vrot.lane.b32.xlu0 %v11143, 28
  %v11221 = vpop.permute.xlu0 %11220
  %11222 = vrot.lane.b32.xlu0 %v11144, 28
  %v11223 = vpop.permute.xlu0 %11222
  %11224 = vrot.lane.b32.xlu0 %v11145, 28
  %v11225 = vpop.permute.xlu0 %11224
  %11226 = vrot.lane.b32.xlu0 %v11146, 28
  %v11227 = vpop.permute.xlu0 %11226
  %11228 = vrot.lane.b32.xlu0 %v11147, 28
  %v11229 = vpop.permute.xlu0 %11228
  %11230 = vrot.lane.b32.xlu0 %v11148, 28
  %v11231 = vpop.permute.xlu0 %11230
  %11232 = vrot.lane.b32.xlu0 %v11149, 28
  %v11233 = vpop.permute.xlu0 %11232
  %11234 = vrot.lane.b32.xlu0 %v11150, 28
  %v11235 = vpop.permute.xlu0 %11234
  %11236 = vrot.lane.b32.xlu0 %v11151, 28
  %v11237 = vpop.permute.xlu0 %11236
  %11238 = vrot.lane.b32.xlu0 %v11152, 28
  %v11239 = vpop.permute.xlu0 %11238
  %11240 = vrot.lane.b32.xlu0 %v11153, 28
  %v11241 = vpop.permute.xlu0 %11240
  %11242 = vrot.lane.b32.xlu0 %v11154, 28
  %v11243 = vpop.permute.xlu0 %11242
  %11244 = vrot.lane.b32.xlu0 %v11155, 28
  %v11245 = vpop.permute.xlu0 %11244
  %11246 = vrot.lane.b32.xlu0 %v11156, 28
  %v11247 = vpop.permute.xlu0 %11246
  %11248 = vrot.lane.b32.xlu0 %v11157, 28
  %v11249 = vpop.permute.xlu0 %11248
  %11250 = vrot.lane.b32.xlu0 %v11158, 28
  %v11251 = vpop.permute.xlu0 %11250
  %11252 = vrot.lane.b32.xlu0 %v11159, 28
  %v11253 = vpop.permute.xlu0 %11252
  %11254 = vrot.lane.b32.xlu0 %v11160, 28
  %v11255 = vpop.permute.xlu0 %11254
  %11256 = vrot.lane.b32.xlu0 %v11161, 28
  %v11257 = vpop.permute.xlu0 %11256
  %vm11290 = vcmask 261344
  %11291 = vst.msk [vmem:[#allocation3] sm:$0xff] %vm11290, %v11195
  %11292 = vst.msk [vmem:[#allocation3 + $0x8] sm:$0xff] %vm11290, %v11197
  %11293 = vst.msk [vmem:[#allocation3 + $0x10] sm:$0xff] %vm11290, %v11199
  %11294 = vst.msk [vmem:[#allocation3 + $0x18] sm:$0xff] %vm11290, %v11201
  %11295 = vst.msk [vmem:[#allocation3 + $0x20] sm:$0xff] %vm11290, %v11203
  %11296 = vst.msk [vmem:[#allocation3 + $0x28] sm:$0xff] %vm11290, %v11205
  %11297 = vst.msk [vmem:[#allocation3 + $0x30] sm:$0xff] %vm11290, %v11207
  %11298 = vst.msk [vmem:[#allocation3 + $0x38] sm:$0xff] %vm11290, %v11209
  %11299 = vst.msk [vmem:[#allocation3 + $0x40] sm:$0xff] %vm11290, %v11211
  %11300 = vst.msk [vmem:[#allocation3 + $0x48] sm:$0xff] %vm11290, %v11213
  %11301 = vst.msk [vmem:[#allocation3 + $0x50] sm:$0xff] %vm11290, %v11215
  %11302 = vst.msk [vmem:[#allocation3 + $0x58] sm:$0xff] %vm11290, %v11217
  %11303 = vst.msk [vmem:[#allocation3 + $0x60] sm:$0xff] %vm11290, %v11219
  %11304 = vst.msk [vmem:[#allocation3 + $0x68] sm:$0xff] %vm11290, %v11221
  %11305 = vst.msk [vmem:[#allocation3 + $0x70] sm:$0xff] %vm11290, %v11223
  %11306 = vst.msk [vmem:[#allocation3 + $0x78] sm:$0xff] %vm11290, %v11225
  %11307 = vst.msk [vmem:[#allocation3 + $0x80] sm:$0xff] %vm11290, %v11227
  %11308 = vst.msk [vmem:[#allocation3 + $0x88] sm:$0xff] %vm11290, %v11229
  %11309 = vst.msk [vmem:[#allocation3 + $0x90] sm:$0xff] %vm11290, %v11231
  %11310 = vst.msk [vmem:[#allocation3 + $0x98] sm:$0xff] %vm11290, %v11233
  %11311 = vst.msk [vmem:[#allocation3 + $0xa0] sm:$0xff] %vm11290, %v11235
  %11312 = vst.msk [vmem:[#allocation3 + $0xa8] sm:$0xff] %vm11290, %v11237
  %11313 = vst.msk [vmem:[#allocation3 + $0xb0] sm:$0xff] %vm11290, %v11239
  %11314 = vst.msk [vmem:[#allocation3 + $0xb8] sm:$0xff] %vm11290, %v11241
  %11315 = vst.msk [vmem:[#allocation3 + $0xc0] sm:$0xff] %vm11290, %v11243
  %11316 = vst.msk [vmem:[#allocation3 + $0xc8] sm:$0xff] %vm11290, %v11245
  %11317 = vst.msk [vmem:[#allocation3 + $0xd0] sm:$0xff] %vm11290, %v11247
  %11318 = vst.msk [vmem:[#allocation3 + $0xd8] sm:$0xff] %vm11290, %v11249
  %11319 = vst.msk [vmem:[#allocation3 + $0xe0] sm:$0xff] %vm11290, %v11251
  %11320 = vst.msk [vmem:[#allocation3 + $0xe8] sm:$0xff] %vm11290, %v11253
  %11321 = vst.msk [vmem:[#allocation3 + $0xf0] sm:$0xff] %vm11290, %v11255
  %11322 = vst.msk [vmem:[#allocation3 + $0xf8] sm:$0xff] %vm11290, %v11257
  %v11323 = vld [vmem:[#allocation2 + $0x18] sm:$0xff]
  %v11324 = vld [vmem:[#allocation2 + $0x20] sm:$0xff]
  %v11325 = vld [vmem:[#allocation2 + $0x28] sm:$0xff]
  %v11326 = vld [vmem:[#allocation2 + $0x30] sm:$0xff]
  %v11327 = vld [vmem:[#allocation2 + $0x38] sm:$0xff]
  %v11328 = vld [vmem:[#allocation2 + $0x40] sm:$0xff]
  %v11329 = vld [vmem:[#allocation2 + $0x48] sm:$0xff]
  %v11330 = vld [vmem:[#allocation2 + $0x50] sm:$0xff]
  %v11331 = vld [vmem:[#allocation2 + $0x58] sm:$0xff]
  %v11332 = vld [vmem:[#allocation2 + $0x60] sm:$0xff]
  %v11333 = vld [vmem:[#allocation2 + $0x68] sm:$0xff]
  %v11334 = vld [vmem:[#allocation2 + $0x70] sm:$0xff]
  %v11335 = vld [vmem:[#allocation2 + $0x78] sm:$0xff]
  %v11336 = vld [vmem:[#allocation2 + $0x80] sm:$0xff]
  %v11337 = vld [vmem:[#allocation2 + $0x88] sm:$0xff]
  %v11338 = vld [vmem:[#allocation2 + $0x90] sm:$0xff]
  %v11339 = vld [vmem:[#allocation2 + $0x98] sm:$0xff]
  %v11340 = vld [vmem:[#allocation2 + $0xa0] sm:$0xff]
  %v11341 = vld [vmem:[#allocation2 + $0xa8] sm:$0xff]
  %v11342 = vld [vmem:[#allocation2 + $0xb0] sm:$0xff]
  %v11343 = vld [vmem:[#allocation2 + $0xb8] sm:$0xff]
  %v11344 = vld [vmem:[#allocation2 + $0xc0] sm:$0xff]
  %v11345 = vld [vmem:[#allocation2 + $0xc8] sm:$0xff]
  %v11346 = vld [vmem:[#allocation2 + $0xd0] sm:$0xff]
  %v11347 = vld [vmem:[#allocation2 + $0xd8] sm:$0xff]
  %v11348 = vld [vmem:[#allocation2 + $0xe0] sm:$0xff]
  %v11349 = vld [vmem:[#allocation2 + $0xe8] sm:$0xff]
  %v11350 = vld [vmem:[#allocation2 + $0xf0] sm:$0xff]
  %v11351 = vld [vmem:[#allocation2 + $0xf8] sm:$0xff]
  %v11352 = vld [vmem:[#allocation2 + $0x100] sm:$0xff]
  %v11353 = vld [vmem:[#allocation2 + $0x108] sm:$0xff]
  %v11354 = vld [vmem:[#allocation2 + $0x110] sm:$0xff]
  %v11355 = vld [vmem:[#allocation2 + $0x118] sm:$0x1]
  %11356 = vset.pattern.permute.xlu0 8
  %11357 = vperm.xlu0 %11356, %v788
  %v11358 = vpop.permute.xlu0 %11357
  %v11361 = vunpack.c.l.s4 839922192
  %v11362 = vunpack.c.0.s8 %v11361
  %v11363 = vlaneseq
  %v11364 = vshrl.u32 %v11363, 7
  %v11365 = vsub.s32 %v11362, %v11364
  %v11366 = vrot.slane %v11358, %v11365
  %11367 = vset.pattern.permute.xlu0 8
  %11368 = vperm.xlu0 %11367, %v789
  %v11369 = vpop.permute.xlu0 %11368
  %v11372 = vunpack.c.l.s4 839922192
  %v11373 = vunpack.c.0.s8 %v11372
  %v11374 = vlaneseq
  %v11375 = vshrl.u32 %v11374, 7
  %v11376 = vsub.s32 %v11373, %v11375
  %v11377 = vrot.slane %v11369, %v11376
  %11378 = vset.pattern.permute.xlu0 8
  %11379 = vperm.xlu0 %11378, %v790
  %v11380 = vpop.permute.xlu0 %11379
  %v11383 = vunpack.c.l.s4 839922192
  %v11384 = vunpack.c.0.s8 %v11383
  %v11385 = vlaneseq
  %v11386 = vshrl.u32 %v11385, 7
  %v11387 = vsub.s32 %v11384, %v11386
  %v11388 = vrot.slane %v11380, %v11387
  %11389 = vset.pattern.permute.xlu0 8
  %11390 = vperm.xlu0 %11389, %v791
  %v11391 = vpop.permute.xlu0 %11390
  %v11394 = vunpack.c.l.s4 839922192
  %v11395 = vunpack.c.0.s8 %v11394
  %v11396 = vlaneseq
  %v11397 = vshrl.u32 %v11396, 7
  %v11398 = vsub.s32 %v11395, %v11397
  %v11399 = vrot.slane %v11391, %v11398
  %11400 = vset.pattern.permute.xlu0 8
  %11401 = vperm.xlu0 %11400, %v792
  %v11402 = vpop.permute.xlu0 %11401
  %v11405 = vunpack.c.l.s4 839922192
  %v11406 = vunpack.c.0.s8 %v11405
  %v11407 = vlaneseq
  %v11408 = vshrl.u32 %v11407, 7
  %v11409 = vsub.s32 %v11406, %v11408
  %v11410 = vrot.slane %v11402, %v11409
  %11411 = vset.pattern.permute.xlu0 8
  %11412 = vperm.xlu0 %11411, %v793
  %v11413 = vpop.permute.xlu0 %11412
  %v11416 = vunpack.c.l.s4 839922192
  %v11417 = vunpack.c.0.s8 %v11416
  %v11418 = vlaneseq
  %v11419 = vshrl.u32 %v11418, 7
  %v11420 = vsub.s32 %v11417, %v11419
  %v11421 = vrot.slane %v11413, %v11420
  %11422 = vset.pattern.permute.xlu0 8
  %11423 = vperm.xlu0 %11422, %v794
  %v11424 = vpop.permute.xlu0 %11423
  %v11427 = vunpack.c.l.s4 839922192
  %v11428 = vunpack.c.0.s8 %v11427
  %v11429 = vlaneseq
  %v11430 = vshrl.u32 %v11429, 7
  %v11431 = vsub.s32 %v11428, %v11430
  %v11432 = vrot.slane %v11424, %v11431
  %11433 = vset.pattern.permute.xlu0 8
  %11434 = vperm.xlu0 %11433, %v795
  %v11435 = vpop.permute.xlu0 %11434
  %v11438 = vunpack.c.l.s4 839922192
  %v11439 = vunpack.c.0.s8 %v11438
  %v11440 = vlaneseq
  %v11441 = vshrl.u32 %v11440, 7
  %v11442 = vsub.s32 %v11439, %v11441
  %v11443 = vrot.slane %v11435, %v11442
  %11444 = vset.pattern.permute.xlu0 8
  %11445 = vperm.xlu0 %11444, %v796
  %v11446 = vpop.permute.xlu0 %11445
  %v11449 = vunpack.c.l.s4 839922192
  %v11450 = vunpack.c.0.s8 %v11449
  %v11451 = vlaneseq
  %v11452 = vshrl.u32 %v11451, 7
  %v11453 = vsub.s32 %v11450, %v11452
  %v11454 = vrot.slane %v11446, %v11453
  %11455 = vset.pattern.permute.xlu0 8
  %11456 = vperm.xlu0 %11455, %v797
  %v11457 = vpop.permute.xlu0 %11456
  %v11460 = vunpack.c.l.s4 839922192
  %v11461 = vunpack.c.0.s8 %v11460
  %v11462 = vlaneseq
  %v11463 = vshrl.u32 %v11462, 7
  %v11464 = vsub.s32 %v11461, %v11463
  %v11465 = vrot.slane %v11457, %v11464
  %11466 = vset.pattern.permute.xlu0 8
  %11467 = vperm.xlu0 %11466, %v798
  %v11468 = vpop.permute.xlu0 %11467
  %v11471 = vunpack.c.l.s4 839922192
  %v11472 = vunpack.c.0.s8 %v11471
  %v11473 = vlaneseq
  %v11474 = vshrl.u32 %v11473, 7
  %v11475 = vsub.s32 %v11472, %v11474
  %v11476 = vrot.slane %v11468, %v11475
  %11477 = vset.pattern.permute.xlu0 8
  %11478 = vperm.xlu0 %11477, %v799
  %v11479 = vpop.permute.xlu0 %11478
  %v11482 = vunpack.c.l.s4 839922192
  %v11483 = vunpack.c.0.s8 %v11482
  %v11484 = vlaneseq
  %v11485 = vshrl.u32 %v11484, 7
  %v11486 = vsub.s32 %v11483, %v11485
  %v11487 = vrot.slane %v11479, %v11486
  %11488 = vset.pattern.permute.xlu0 8
  %11489 = vperm.xlu0 %11488, %v800
  %v11490 = vpop.permute.xlu0 %11489
  %v11493 = vunpack.c.l.s4 839922192
  %v11494 = vunpack.c.0.s8 %v11493
  %v11495 = vlaneseq
  %v11496 = vshrl.u32 %v11495, 7
  %v11497 = vsub.s32 %v11494, %v11496
  %v11498 = vrot.slane %v11490, %v11497
  %11499 = vset.pattern.permute.xlu0 8
  %11500 = vperm.xlu0 %11499, %v801
  %v11501 = vpop.permute.xlu0 %11500
  %v11504 = vunpack.c.l.s4 839922192
  %v11505 = vunpack.c.0.s8 %v11504
  %v11506 = vlaneseq
  %v11507 = vshrl.u32 %v11506, 7
  %v11508 = vsub.s32 %v11505, %v11507
  %v11509 = vrot.slane %v11501, %v11508
  %11510 = vset.pattern.permute.xlu0 8
  %11511 = vperm.xlu0 %11510, %v802
  %v11512 = vpop.permute.xlu0 %11511
  %v11515 = vunpack.c.l.s4 839922192
  %v11516 = vunpack.c.0.s8 %v11515
  %v11517 = vlaneseq
  %v11518 = vshrl.u32 %v11517, 7
  %v11519 = vsub.s32 %v11516, %v11518
  %v11520 = vrot.slane %v11512, %v11519
  %11521 = vset.pattern.permute.xlu0 8
  %11522 = vperm.xlu0 %11521, %v803
  %v11523 = vpop.permute.xlu0 %11522
  %v11526 = vunpack.c.l.s4 839922192
  %v11527 = vunpack.c.0.s8 %v11526
  %v11528 = vlaneseq
  %v11529 = vshrl.u32 %v11528, 7
  %v11530 = vsub.s32 %v11527, %v11529
  %v11531 = vrot.slane %v11523, %v11530
  %11532 = vset.pattern.permute.xlu0 8
  %11533 = vperm.xlu0 %11532, %v804
  %v11534 = vpop.permute.xlu0 %11533
  %v11537 = vunpack.c.l.s4 839922192
  %v11538 = vunpack.c.0.s8 %v11537
  %v11539 = vlaneseq
  %v11540 = vshrl.u32 %v11539, 7
  %v11541 = vsub.s32 %v11538, %v11540
  %v11542 = vrot.slane %v11534, %v11541
  %11543 = vset.pattern.permute.xlu0 8
  %11544 = vperm.xlu0 %11543, %v805
  %v11545 = vpop.permute.xlu0 %11544
  %v11548 = vunpack.c.l.s4 839922192
  %v11549 = vunpack.c.0.s8 %v11548
  %v11550 = vlaneseq
  %v11551 = vshrl.u32 %v11550, 7
  %v11552 = vsub.s32 %v11549, %v11551
  %v11553 = vrot.slane %v11545, %v11552
  %11554 = vset.pattern.permute.xlu0 8
  %11555 = vperm.xlu0 %11554, %v806
  %v11556 = vpop.permute.xlu0 %11555
  %v11559 = vunpack.c.l.s4 839922192
  %v11560 = vunpack.c.0.s8 %v11559
  %v11561 = vlaneseq
  %v11562 = vshrl.u32 %v11561, 7
  %v11563 = vsub.s32 %v11560, %v11562
  %v11564 = vrot.slane %v11556, %v11563
  %11565 = vset.pattern.permute.xlu0 8
  %11566 = vperm.xlu0 %11565, %v807
  %v11567 = vpop.permute.xlu0 %11566
  %v11570 = vunpack.c.l.s4 839922192
  %v11571 = vunpack.c.0.s8 %v11570
  %v11572 = vlaneseq
  %v11573 = vshrl.u32 %v11572, 7
  %v11574 = vsub.s32 %v11571, %v11573
  %v11575 = vrot.slane %v11567, %v11574
  %11576 = vset.pattern.permute.xlu0 8
  %11577 = vperm.xlu0 %11576, %v808
  %v11578 = vpop.permute.xlu0 %11577
  %v11581 = vunpack.c.l.s4 839922192
  %v11582 = vunpack.c.0.s8 %v11581
  %v11583 = vlaneseq
  %v11584 = vshrl.u32 %v11583, 7
  %v11585 = vsub.s32 %v11582, %v11584
  %v11586 = vrot.slane %v11578, %v11585
  %11587 = vset.pattern.permute.xlu0 8
  %11588 = vperm.xlu0 %11587, %v809
  %v11589 = vpop.permute.xlu0 %11588
  %v11592 = vunpack.c.l.s4 839922192
  %v11593 = vunpack.c.0.s8 %v11592
  %v11594 = vlaneseq
  %v11595 = vshrl.u32 %v11594, 7
  %v11596 = vsub.s32 %v11593, %v11595
  %v11597 = vrot.slane %v11589, %v11596
  %11598 = vset.pattern.permute.xlu0 8
  %11599 = vperm.xlu0 %11598, %v810
  %v11600 = vpop.permute.xlu0 %11599
  %v11603 = vunpack.c.l.s4 839922192
  %v11604 = vunpack.c.0.s8 %v11603
  %v11605 = vlaneseq
  %v11606 = vshrl.u32 %v11605, 7
  %v11607 = vsub.s32 %v11604, %v11606
  %v11608 = vrot.slane %v11600, %v11607
  %11609 = vset.pattern.permute.xlu0 8
  %11610 = vperm.xlu0 %11609, %v811
  %v11611 = vpop.permute.xlu0 %11610
  %v11614 = vunpack.c.l.s4 839922192
  %v11615 = vunpack.c.0.s8 %v11614
  %v11616 = vlaneseq
  %v11617 = vshrl.u32 %v11616, 7
  %v11618 = vsub.s32 %v11615, %v11617
  %v11619 = vrot.slane %v11611, %v11618
  %11620 = vset.pattern.permute.xlu0 8
  %11621 = vperm.xlu0 %11620, %v812
  %v11622 = vpop.permute.xlu0 %11621
  %v11625 = vunpack.c.l.s4 839922192
  %v11626 = vunpack.c.0.s8 %v11625
  %v11627 = vlaneseq
  %v11628 = vshrl.u32 %v11627, 7
  %v11629 = vsub.s32 %v11626, %v11628
  %v11630 = vrot.slane %v11622, %v11629
  %11631 = vset.pattern.permute.xlu0 8
  %11632 = vperm.xlu0 %11631, %v813
  %v11633 = vpop.permute.xlu0 %11632
  %v11636 = vunpack.c.l.s4 839922192
  %v11637 = vunpack.c.0.s8 %v11636
  %v11638 = vlaneseq
  %v11639 = vshrl.u32 %v11638, 7
  %v11640 = vsub.s32 %v11637, %v11639
  %v11641 = vrot.slane %v11633, %v11640
  %11642 = vset.pattern.permute.xlu0 8
  %11643 = vperm.xlu0 %11642, %v814
  %v11644 = vpop.permute.xlu0 %11643
  %v11647 = vunpack.c.l.s4 839922192
  %v11648 = vunpack.c.0.s8 %v11647
  %v11649 = vlaneseq
  %v11650 = vshrl.u32 %v11649, 7
  %v11651 = vsub.s32 %v11648, %v11650
  %v11652 = vrot.slane %v11644, %v11651
  %11653 = vset.pattern.permute.xlu0 8
  %11654 = vperm.xlu0 %11653, %v815
  %v11655 = vpop.permute.xlu0 %11654
  %v11658 = vunpack.c.l.s4 839922192
  %v11659 = vunpack.c.0.s8 %v11658
  %v11660 = vlaneseq
  %v11661 = vshrl.u32 %v11660, 7
  %v11662 = vsub.s32 %v11659, %v11661
  %v11663 = vrot.slane %v11655, %v11662
  %11664 = vset.pattern.permute.xlu0 8
  %11665 = vperm.xlu0 %11664, %v816
  %v11666 = vpop.permute.xlu0 %11665
  %v11669 = vunpack.c.l.s4 839922192
  %v11670 = vunpack.c.0.s8 %v11669
  %v11671 = vlaneseq
  %v11672 = vshrl.u32 %v11671, 7
  %v11673 = vsub.s32 %v11670, %v11672
  %v11674 = vrot.slane %v11666, %v11673
  %11675 = vset.pattern.permute.xlu0 8
  %11676 = vperm.xlu0 %11675, %v817
  %v11677 = vpop.permute.xlu0 %11676
  %v11680 = vunpack.c.l.s4 839922192
  %v11681 = vunpack.c.0.s8 %v11680
  %v11682 = vlaneseq
  %v11683 = vshrl.u32 %v11682, 7
  %v11684 = vsub.s32 %v11681, %v11683
  %v11685 = vrot.slane %v11677, %v11684
  %11686 = vset.pattern.permute.xlu0 8
  %11687 = vperm.xlu0 %11686, %v818
  %v11688 = vpop.permute.xlu0 %11687
  %v11691 = vunpack.c.l.s4 839922192
  %v11692 = vunpack.c.0.s8 %v11691
  %v11693 = vlaneseq
  %v11694 = vshrl.u32 %v11693, 7
  %v11695 = vsub.s32 %v11692, %v11694
  %v11696 = vrot.slane %v11688, %v11695
  %11697 = vset.pattern.permute.xlu0 8
  %11698 = vperm.xlu0 %11697, %v819
  %v11699 = vpop.permute.xlu0 %11698
  %v11702 = vunpack.c.l.s4 839922192
  %v11703 = vunpack.c.0.s8 %v11702
  %v11704 = vlaneseq
  %v11705 = vshrl.u32 %v11704, 7
  %v11706 = vsub.s32 %v11703, %v11705
  %v11707 = vrot.slane %v11699, %v11706
  %11708 = vset.pattern.permute.xlu0 8
  %11709 = vperm.xlu0 %11708, %v820
  %v11710 = vpop.permute.xlu0 %11709
  %v11713 = vunpack.c.l.s4 839922192
  %v11714 = vunpack.c.0.s8 %v11713
  %v11715 = vlaneseq
  %v11716 = vshrl.u32 %v11715, 7
  %v11717 = vsub.s32 %v11714, %v11716
  %v11718 = vrot.slane %v11710, %v11717
  %11719 = vset.pattern.permute.xlu0 8
  %11720 = vperm.xlu0 %11719, %v821
  %v11721 = vpop.permute.xlu0 %11720
  %v11724 = vunpack.c.l.s4 839922192
  %v11725 = vunpack.c.0.s8 %v11724
  %v11726 = vlaneseq
  %v11727 = vshrl.u32 %v11726, 7
  %v11728 = vsub.s32 %v11725, %v11727
  %v11729 = vrot.slane %v11721, %v11728
  %11730 = vset.pattern.permute.xlu0 8
  %11731 = vperm.xlu0 %11730, %v822
  %v11732 = vpop.permute.xlu0 %11731
  %v11735 = vunpack.c.l.s4 839922192
  %v11736 = vunpack.c.0.s8 %v11735
  %v11737 = vlaneseq
  %v11738 = vshrl.u32 %v11737, 7
  %v11739 = vsub.s32 %v11736, %v11738
  %v11740 = vrot.slane %v11732, %v11739
  %11741 = vset.pattern.permute.xlu0 8
  %11742 = vperm.xlu0 %11741, %v823
  %v11743 = vpop.permute.xlu0 %11742
  %v11746 = vunpack.c.l.s4 839922192
  %v11747 = vunpack.c.0.s8 %v11746
  %v11748 = vlaneseq
  %v11749 = vshrl.u32 %v11748, 7
  %v11750 = vsub.s32 %v11747, %v11749
  %v11751 = vrot.slane %v11743, %v11750
  %11752 = vset.pattern.permute.xlu0 8
  %11753 = vperm.xlu0 %11752, %v824
  %v11754 = vpop.permute.xlu0 %11753
  %v11757 = vunpack.c.l.s4 839922192
  %v11758 = vunpack.c.0.s8 %v11757
  %v11759 = vlaneseq
  %v11760 = vshrl.u32 %v11759, 7
  %v11761 = vsub.s32 %v11758, %v11760
  %v11762 = vrot.slane %v11754, %v11761
  %11763 = vset.pattern.permute.xlu0 8
  %11764 = vperm.xlu0 %11763, %v825
  %v11765 = vpop.permute.xlu0 %11764
  %v11768 = vunpack.c.l.s4 839922192
  %v11769 = vunpack.c.0.s8 %v11768
  %v11770 = vlaneseq
  %v11771 = vshrl.u32 %v11770, 7
  %v11772 = vsub.s32 %v11769, %v11771
  %v11773 = vrot.slane %v11765, %v11772
  %11774 = vset.pattern.permute.xlu0 8
  %11775 = vperm.xlu0 %11774, %v826
  %v11776 = vpop.permute.xlu0 %11775
  %v11779 = vunpack.c.l.s4 839922192
  %v11780 = vunpack.c.0.s8 %v11779
  %v11781 = vlaneseq
  %v11782 = vshrl.u32 %v11781, 7
  %v11783 = vsub.s32 %v11780, %v11782
  %v11784 = vrot.slane %v11776, %v11783
  %11785 = vset.pattern.permute.xlu0 8
  %11786 = vperm.xlu0 %11785, %v827
  %v11787 = vpop.permute.xlu0 %11786
  %v11790 = vunpack.c.l.s4 839922192
  %v11791 = vunpack.c.0.s8 %v11790
  %v11792 = vlaneseq
  %v11793 = vshrl.u32 %v11792, 7
  %v11794 = vsub.s32 %v11791, %v11793
  %v11795 = vrot.slane %v11787, %v11794
  %11796 = vset.pattern.permute.xlu0 8
  %11797 = vperm.xlu0 %11796, %v828
  %v11798 = vpop.permute.xlu0 %11797
  %v11801 = vunpack.c.l.s4 839922192
  %v11802 = vunpack.c.0.s8 %v11801
  %v11803 = vlaneseq
  %v11804 = vshrl.u32 %v11803, 7
  %v11805 = vsub.s32 %v11802, %v11804
  %v11806 = vrot.slane %v11798, %v11805
  %11807 = vset.pattern.permute.xlu0 8
  %11808 = vperm.xlu0 %11807, %v829
  %v11809 = vpop.permute.xlu0 %11808
  %v11812 = vunpack.c.l.s4 839922192
  %v11813 = vunpack.c.0.s8 %v11812
  %v11814 = vlaneseq
  %v11815 = vshrl.u32 %v11814, 7
  %v11816 = vsub.s32 %v11813, %v11815
  %v11817 = vrot.slane %v11809, %v11816
  %11818 = vset.pattern.permute.xlu0 8
  %11819 = vperm.xlu0 %11818, %v830
  %v11820 = vpop.permute.xlu0 %11819
  %v11823 = vunpack.c.l.s4 839922192
  %v11824 = vunpack.c.0.s8 %v11823
  %v11825 = vlaneseq
  %v11826 = vshrl.u32 %v11825, 7
  %v11827 = vsub.s32 %v11824, %v11826
  %v11828 = vrot.slane %v11820, %v11827
  %11829 = vset.pattern.permute.xlu0 8
  %11830 = vperm.xlu0 %11829, %v831
  %v11831 = vpop.permute.xlu0 %11830
  %v11834 = vunpack.c.l.s4 839922192
  %v11835 = vunpack.c.0.s8 %v11834
  %v11836 = vlaneseq
  %v11837 = vshrl.u32 %v11836, 7
  %v11838 = vsub.s32 %v11835, %v11837
  %v11839 = vrot.slane %v11831, %v11838
  %11840 = vset.pattern.permute.xlu0 8
  %11841 = vperm.xlu0 %11840, %v832
  %v11842 = vpop.permute.xlu0 %11841
  %v11845 = vunpack.c.l.s4 839922192
  %v11846 = vunpack.c.0.s8 %v11845
  %v11847 = vlaneseq
  %v11848 = vshrl.u32 %v11847, 7
  %v11849 = vsub.s32 %v11846, %v11848
  %v11850 = vrot.slane %v11842, %v11849
  %11851 = vset.pattern.permute.xlu0 8
  %11852 = vperm.xlu0 %11851, %v833
  %v11853 = vpop.permute.xlu0 %11852
  %v11856 = vunpack.c.l.s4 839922192
  %v11857 = vunpack.c.0.s8 %v11856
  %v11858 = vlaneseq
  %v11859 = vshrl.u32 %v11858, 7
  %v11860 = vsub.s32 %v11857, %v11859
  %v11861 = vrot.slane %v11853, %v11860
  %11862 = vset.pattern.permute.xlu0 8
  %11863 = vperm.xlu0 %11862, %v834
  %v11864 = vpop.permute.xlu0 %11863
  %v11867 = vunpack.c.l.s4 839922192
  %v11868 = vunpack.c.0.s8 %v11867
  %v11869 = vlaneseq
  %v11870 = vshrl.u32 %v11869, 7
  %v11871 = vsub.s32 %v11868, %v11870
  %v11872 = vrot.slane %v11864, %v11871
  %11873 = vset.pattern.permute.xlu0 8
  %11874 = vperm.xlu0 %11873, %v835
  %v11875 = vpop.permute.xlu0 %11874
  %v11878 = vunpack.c.l.s4 839922192
  %v11879 = vunpack.c.0.s8 %v11878
  %v11880 = vlaneseq
  %v11881 = vshrl.u32 %v11880, 7
  %v11882 = vsub.s32 %v11879, %v11881
  %v11883 = vrot.slane %v11875, %v11882
  %11884 = vset.pattern.permute.xlu0 8
  %11885 = vperm.xlu0 %11884, %v836
  %v11886 = vpop.permute.xlu0 %11885
  %v11889 = vunpack.c.l.s4 839922192
  %v11890 = vunpack.c.0.s8 %v11889
  %v11891 = vlaneseq
  %v11892 = vshrl.u32 %v11891, 7
  %v11893 = vsub.s32 %v11890, %v11892
  %v11894 = vrot.slane %v11886, %v11893
  %11895 = vset.pattern.permute.xlu0 8
  %11896 = vperm.xlu0 %11895, %v837
  %v11897 = vpop.permute.xlu0 %11896
  %v11900 = vunpack.c.l.s4 839922192
  %v11901 = vunpack.c.0.s8 %v11900
  %v11902 = vlaneseq
  %v11903 = vshrl.u32 %v11902, 7
  %v11904 = vsub.s32 %v11901, %v11903
  %v11905 = vrot.slane %v11897, %v11904
  %11906 = vset.pattern.permute.xlu0 8
  %11907 = vperm.xlu0 %11906, %v838
  %v11908 = vpop.permute.xlu0 %11907
  %v11911 = vunpack.c.l.s4 839922192
  %v11912 = vunpack.c.0.s8 %v11911
  %v11913 = vlaneseq
  %v11914 = vshrl.u32 %v11913, 7
  %v11915 = vsub.s32 %v11912, %v11914
  %v11916 = vrot.slane %v11908, %v11915
  %11917 = vset.pattern.permute.xlu0 8
  %11918 = vperm.xlu0 %11917, %v839
  %v11919 = vpop.permute.xlu0 %11918
  %v11922 = vunpack.c.l.s4 839922192
  %v11923 = vunpack.c.0.s8 %v11922
  %v11924 = vlaneseq
  %v11925 = vshrl.u32 %v11924, 7
  %v11926 = vsub.s32 %v11923, %v11925
  %v11927 = vrot.slane %v11919, %v11926
  %11928 = vset.pattern.permute.xlu0 8
  %11929 = vperm.xlu0 %11928, %v840
  %v11930 = vpop.permute.xlu0 %11929
  %v11933 = vunpack.c.l.s4 839922192
  %v11934 = vunpack.c.0.s8 %v11933
  %v11935 = vlaneseq
  %v11936 = vshrl.u32 %v11935, 7
  %v11937 = vsub.s32 %v11934, %v11936
  %v11938 = vrot.slane %v11930, %v11937
  %11939 = vset.pattern.permute.xlu0 8
  %11940 = vperm.xlu0 %11939, %v841
  %v11941 = vpop.permute.xlu0 %11940
  %v11944 = vunpack.c.l.s4 839922192
  %v11945 = vunpack.c.0.s8 %v11944
  %v11946 = vlaneseq
  %v11947 = vshrl.u32 %v11946, 7
  %v11948 = vsub.s32 %v11945, %v11947
  %v11949 = vrot.slane %v11941, %v11948
  %11950 = vset.pattern.permute.xlu0 8
  %11951 = vperm.xlu0 %11950, %v842
  %v11952 = vpop.permute.xlu0 %11951
  %v11955 = vunpack.c.l.s4 839922192
  %v11956 = vunpack.c.0.s8 %v11955
  %v11957 = vlaneseq
  %v11958 = vshrl.u32 %v11957, 7
  %v11959 = vsub.s32 %v11956, %v11958
  %v11960 = vrot.slane %v11952, %v11959
  %11961 = vset.pattern.permute.xlu0 8
  %11962 = vperm.xlu0 %11961, %v843
  %v11963 = vpop.permute.xlu0 %11962
  %v11966 = vunpack.c.l.s4 839922192
  %v11967 = vunpack.c.0.s8 %v11966
  %v11968 = vlaneseq
  %v11969 = vshrl.u32 %v11968, 7
  %v11970 = vsub.s32 %v11967, %v11969
  %v11971 = vrot.slane %v11963, %v11970
  %11972 = vset.pattern.permute.xlu0 8
  %11973 = vperm.xlu0 %11972, %v844
  %v11974 = vpop.permute.xlu0 %11973
  %v11977 = vunpack.c.l.s4 839922192
  %v11978 = vunpack.c.0.s8 %v11977
  %v11979 = vlaneseq
  %v11980 = vshrl.u32 %v11979, 7
  %v11981 = vsub.s32 %v11978, %v11980
  %v11982 = vrot.slane %v11974, %v11981
  %11983 = vset.pattern.permute.xlu0 8
  %11984 = vperm.xlu0 %11983, %v845
  %v11985 = vpop.permute.xlu0 %11984
  %v11988 = vunpack.c.l.s4 839922192
  %v11989 = vunpack.c.0.s8 %v11988
  %v11990 = vlaneseq
  %v11991 = vshrl.u32 %v11990, 7
  %v11992 = vsub.s32 %v11989, %v11991
  %v11993 = vrot.slane %v11985, %v11992
  %11994 = vset.pattern.permute.xlu0 8
  %11995 = vperm.xlu0 %11994, %v846
  %v11996 = vpop.permute.xlu0 %11995
  %v11999 = vunpack.c.l.s4 839922192
  %v12000 = vunpack.c.0.s8 %v11999
  %v12001 = vlaneseq
  %v12002 = vshrl.u32 %v12001, 7
  %v12003 = vsub.s32 %v12000, %v12002
  %v12004 = vrot.slane %v11996, %v12003
  %12005 = vset.pattern.permute.xlu0 8
  %12006 = vperm.xlu0 %12005, %v847
  %v12007 = vpop.permute.xlu0 %12006
  %v12010 = vunpack.c.l.s4 839922192
  %v12011 = vunpack.c.0.s8 %v12010
  %v12012 = vlaneseq
  %v12013 = vshrl.u32 %v12012, 7
  %v12014 = vsub.s32 %v12011, %v12013
  %v12015 = vrot.slane %v12007, %v12014
  %12016 = vset.pattern.permute.xlu0 8
  %12017 = vperm.xlu0 %12016, %v848
  %v12018 = vpop.permute.xlu0 %12017
  %v12021 = vunpack.c.l.s4 839922192
  %v12022 = vunpack.c.0.s8 %v12021
  %v12023 = vlaneseq
  %v12024 = vshrl.u32 %v12023, 7
  %v12025 = vsub.s32 %v12022, %v12024
  %v12026 = vrot.slane %v12018, %v12025
  %12027 = vset.pattern.permute.xlu0 8
  %12028 = vperm.xlu0 %12027, %v849
  %v12029 = vpop.permute.xlu0 %12028
  %v12032 = vunpack.c.l.s4 839922192
  %v12033 = vunpack.c.0.s8 %v12032
  %v12034 = vlaneseq
  %v12035 = vshrl.u32 %v12034, 7
  %v12036 = vsub.s32 %v12033, %v12035
  %v12037 = vrot.slane %v12029, %v12036
  %12038 = vset.pattern.permute.xlu0 8
  %12039 = vperm.xlu0 %12038, %v850
  %v12040 = vpop.permute.xlu0 %12039
  %v12043 = vunpack.c.l.s4 839922192
  %v12044 = vunpack.c.0.s8 %v12043
  %v12045 = vlaneseq
  %v12046 = vshrl.u32 %v12045, 7
  %v12047 = vsub.s32 %v12044, %v12046
  %v12048 = vrot.slane %v12040, %v12047
  %12049 = vset.pattern.permute.xlu0 8
  %12050 = vperm.xlu0 %12049, %v851
  %v12051 = vpop.permute.xlu0 %12050
  %v12054 = vunpack.c.l.s4 839922192
  %v12055 = vunpack.c.0.s8 %v12054
  %v12056 = vlaneseq
  %v12057 = vshrl.u32 %v12056, 7
  %v12058 = vsub.s32 %v12055, %v12057
  %v12059 = vrot.slane %v12051, %v12058
  %v12124 = vunpack.c.l.b16 %v11366
  %v12125 = vunpack.c.l.b16 %v11377
  %v12126 = vunpack.c.l.b16 %v11388
  %v12127 = vunpack.c.l.b16 %v11399
  %v12128 = vunpack.c.l.b16 %v11410
  %v12129 = vunpack.c.l.b16 %v11421
  %v12130 = vunpack.c.l.b16 %v11432
  %v12131 = vunpack.c.l.b16 %v11443
  %v12132 = vunpack.c.l.b16 %v11454
  %v12133 = vunpack.c.l.b16 %v11465
  %v12134 = vunpack.c.l.b16 %v11476
  %v12135 = vunpack.c.l.b16 %v11487
  %v12136 = vunpack.c.l.b16 %v11498
  %v12137 = vunpack.c.l.b16 %v11509
  %v12138 = vunpack.c.l.b16 %v11520
  %v12139 = vunpack.c.l.b16 %v11531
  %v12140 = vunpack.c.l.b16 %v11542
  %v12141 = vunpack.c.l.b16 %v11553
  %v12142 = vunpack.c.l.b16 %v11564
  %v12143 = vunpack.c.l.b16 %v11575
  %v12144 = vunpack.c.l.b16 %v11586
  %v12145 = vunpack.c.l.b16 %v11597
  %v12146 = vunpack.c.l.b16 %v11608
  %v12147 = vunpack.c.l.b16 %v11619
  %v12148 = vunpack.c.l.b16 %v11630
  %v12149 = vunpack.c.l.b16 %v11641
  %v12150 = vunpack.c.l.b16 %v11652
  %v12151 = vunpack.c.l.b16 %v11663
  %v12152 = vunpack.c.l.b16 %v11674
  %v12153 = vunpack.c.l.b16 %v11685
  %v12154 = vunpack.c.l.b16 %v11696
  %v12155 = vunpack.c.l.b16 %v11707
  %v12156 = vunpack.c.l.b16 %v11718
  %v12157 = vunpack.c.l.b16 %v11729
  %v12158 = vunpack.c.l.b16 %v11740
  %v12159 = vunpack.c.l.b16 %v11751
  %v12160 = vunpack.c.l.b16 %v11762
  %v12161 = vunpack.c.l.b16 %v11773
  %v12162 = vunpack.c.l.b16 %v11784
  %v12163 = vunpack.c.l.b16 %v11795
  %v12164 = vunpack.c.l.b16 %v11806
  %v12165 = vunpack.c.l.b16 %v11817
  %v12166 = vunpack.c.l.b16 %v11828
  %v12167 = vunpack.c.l.b16 %v11839
  %v12168 = vunpack.c.l.b16 %v11850
  %v12169 = vunpack.c.l.b16 %v11861
  %v12170 = vunpack.c.l.b16 %v11872
  %v12171 = vunpack.c.l.b16 %v11883
  %v12172 = vunpack.c.l.b16 %v11894
  %v12173 = vunpack.c.l.b16 %v11905
  %v12174 = vunpack.c.l.b16 %v11916
  %v12175 = vunpack.c.l.b16 %v11927
  %v12176 = vunpack.c.l.b16 %v11938
  %v12177 = vunpack.c.l.b16 %v11949
  %v12178 = vunpack.c.l.b16 %v11960
  %v12179 = vunpack.c.l.b16 %v11971
  %v12180 = vunpack.c.l.b16 %v11982
  %v12181 = vunpack.c.l.b16 %v11993
  %v12182 = vunpack.c.l.b16 %v12004
  %v12183 = vunpack.c.l.b16 %v12015
  %v12184 = vunpack.c.l.b16 %v12026
  %v12185 = vunpack.c.l.b16 %v12037
  %v12186 = vunpack.c.l.b16 %v12048
  %v12187 = vunpack.c.l.b16 %v12059
  %v12188 = vpack.c.b16 %v12125, %v12124
  %v12189 = vpack.c.b16 %v12127, %v12126
  %v12190 = vpack.c.b16 %v12129, %v12128
  %v12191 = vpack.c.b16 %v12131, %v12130
  %v12192 = vpack.c.b16 %v12133, %v12132
  %v12193 = vpack.c.b16 %v12135, %v12134
  %v12194 = vpack.c.b16 %v12137, %v12136
  %v12195 = vpack.c.b16 %v12139, %v12138
  %v12196 = vpack.c.b16 %v12141, %v12140
  %v12197 = vpack.c.b16 %v12143, %v12142
  %v12198 = vpack.c.b16 %v12145, %v12144
  %v12199 = vpack.c.b16 %v12147, %v12146
  %v12200 = vpack.c.b16 %v12149, %v12148
  %v12201 = vpack.c.b16 %v12151, %v12150
  %v12202 = vpack.c.b16 %v12153, %v12152
  %v12203 = vpack.c.b16 %v12155, %v12154
  %v12204 = vpack.c.b16 %v12157, %v12156
  %v12205 = vpack.c.b16 %v12159, %v12158
  %v12206 = vpack.c.b16 %v12161, %v12160
  %v12207 = vpack.c.b16 %v12163, %v12162
  %v12208 = vpack.c.b16 %v12165, %v12164
  %v12209 = vpack.c.b16 %v12167, %v12166
  %v12210 = vpack.c.b16 %v12169, %v12168
  %v12211 = vpack.c.b16 %v12171, %v12170
  %v12212 = vpack.c.b16 %v12173, %v12172
  %v12213 = vpack.c.b16 %v12175, %v12174
  %v12214 = vpack.c.b16 %v12177, %v12176
  %v12215 = vpack.c.b16 %v12179, %v12178
  %v12216 = vpack.c.b16 %v12181, %v12180
  %v12217 = vpack.c.b16 %v12183, %v12182
  %v12218 = vpack.c.b16 %v12185, %v12184
  %v12219 = vpack.c.b16 %v12187, %v12186
  %v12221 = vshrl.u32 %v12188, 16
  %v12223 = vrot.slane %v12221, 7
  %v12224 = vshll.u32 %v12188, 16
  %v12226 = vor.u32 %v12223, %v12224
  %v12228 = vshrl.u32 %v12189, 16
  %v12230 = vrot.slane %v12228, 7
  %v12231 = vshll.u32 %v12189, 16
  %v12233 = vor.u32 %v12230, %v12231
  %v12234 = vsel %vm2135, %v12223, %v12233
  %v12236 = vshrl.u32 %v12190, 16
  %v12238 = vrot.slane %v12236, 7
  %v12239 = vshll.u32 %v12190, 16
  %v12241 = vor.u32 %v12238, %v12239
  %v12242 = vsel %vm2135, %v12230, %v12241
  %v12244 = vshrl.u32 %v12191, 16
  %v12246 = vrot.slane %v12244, 7
  %v12247 = vshll.u32 %v12191, 16
  %v12249 = vor.u32 %v12246, %v12247
  %v12250 = vsel %vm2135, %v12238, %v12249
  %v12252 = vshrl.u32 %v12192, 16
  %v12254 = vrot.slane %v12252, 7
  %v12255 = vshll.u32 %v12192, 16
  %v12257 = vor.u32 %v12254, %v12255
  %v12258 = vsel %vm2135, %v12246, %v12257
  %v12260 = vshrl.u32 %v12193, 16
  %v12262 = vrot.slane %v12260, 7
  %v12263 = vshll.u32 %v12193, 16
  %v12265 = vor.u32 %v12262, %v12263
  %v12266 = vsel %vm2135, %v12254, %v12265
  %v12268 = vshrl.u32 %v12194, 16
  %v12270 = vrot.slane %v12268, 7
  %v12271 = vshll.u32 %v12194, 16
  %v12273 = vor.u32 %v12270, %v12271
  %v12274 = vsel %vm2135, %v12262, %v12273
  %v12276 = vshrl.u32 %v12195, 16
  %v12278 = vrot.slane %v12276, 7
  %v12279 = vshll.u32 %v12195, 16
  %v12281 = vor.u32 %v12278, %v12279
  %v12282 = vsel %vm2135, %v12270, %v12281
  %v12284 = vshrl.u32 %v12196, 16
  %v12286 = vrot.slane %v12284, 7
  %v12287 = vshll.u32 %v12196, 16
  %v12289 = vor.u32 %v12286, %v12287
  %v12290 = vsel %vm2135, %v12278, %v12289
  %v12292 = vshrl.u32 %v12197, 16
  %v12294 = vrot.slane %v12292, 7
  %v12295 = vshll.u32 %v12197, 16
  %v12297 = vor.u32 %v12294, %v12295
  %v12298 = vsel %vm2135, %v12286, %v12297
  %v12300 = vshrl.u32 %v12198, 16
  %v12302 = vrot.slane %v12300, 7
  %v12303 = vshll.u32 %v12198, 16
  %v12305 = vor.u32 %v12302, %v12303
  %v12306 = vsel %vm2135, %v12294, %v12305
  %v12308 = vshrl.u32 %v12199, 16
  %v12310 = vrot.slane %v12308, 7
  %v12311 = vshll.u32 %v12199, 16
  %v12313 = vor.u32 %v12310, %v12311
  %v12314 = vsel %vm2135, %v12302, %v12313
  %v12316 = vshrl.u32 %v12200, 16
  %v12318 = vrot.slane %v12316, 7
  %v12319 = vshll.u32 %v12200, 16
  %v12321 = vor.u32 %v12318, %v12319
  %v12322 = vsel %vm2135, %v12310, %v12321
  %v12324 = vshrl.u32 %v12201, 16
  %v12326 = vrot.slane %v12324, 7
  %v12327 = vshll.u32 %v12201, 16
  %v12329 = vor.u32 %v12326, %v12327
  %v12330 = vsel %vm2135, %v12318, %v12329
  %v12332 = vshrl.u32 %v12202, 16
  %v12334 = vrot.slane %v12332, 7
  %v12335 = vshll.u32 %v12202, 16
  %v12337 = vor.u32 %v12334, %v12335
  %v12338 = vsel %vm2135, %v12326, %v12337
  %v12340 = vshrl.u32 %v12203, 16
  %v12342 = vrot.slane %v12340, 7
  %v12343 = vshll.u32 %v12203, 16
  %v12345 = vor.u32 %v12342, %v12343
  %v12346 = vsel %vm2135, %v12334, %v12345
  %v12348 = vshrl.u32 %v12204, 16
  %v12350 = vrot.slane %v12348, 7
  %v12351 = vshll.u32 %v12204, 16
  %v12353 = vor.u32 %v12350, %v12351
  %v12354 = vsel %vm2135, %v12342, %v12353
  %v12356 = vshrl.u32 %v12205, 16
  %v12358 = vrot.slane %v12356, 7
  %v12359 = vshll.u32 %v12205, 16
  %v12361 = vor.u32 %v12358, %v12359
  %v12362 = vsel %vm2135, %v12350, %v12361
  %v12364 = vshrl.u32 %v12206, 16
  %v12366 = vrot.slane %v12364, 7
  %v12367 = vshll.u32 %v12206, 16
  %v12369 = vor.u32 %v12366, %v12367
  %v12370 = vsel %vm2135, %v12358, %v12369
  %v12372 = vshrl.u32 %v12207, 16
  %v12374 = vrot.slane %v12372, 7
  %v12375 = vshll.u32 %v12207, 16
  %v12377 = vor.u32 %v12374, %v12375
  %v12378 = vsel %vm2135, %v12366, %v12377
  %v12380 = vshrl.u32 %v12208, 16
  %v12382 = vrot.slane %v12380, 7
  %v12383 = vshll.u32 %v12208, 16
  %v12385 = vor.u32 %v12382, %v12383
  %v12386 = vsel %vm2135, %v12374, %v12385
  %v12388 = vshrl.u32 %v12209, 16
  %v12390 = vrot.slane %v12388, 7
  %v12391 = vshll.u32 %v12209, 16
  %v12393 = vor.u32 %v12390, %v12391
  %v12394 = vsel %vm2135, %v12382, %v12393
  %v12396 = vshrl.u32 %v12210, 16
  %v12398 = vrot.slane %v12396, 7
  %v12399 = vshll.u32 %v12210, 16
  %v12401 = vor.u32 %v12398, %v12399
  %v12402 = vsel %vm2135, %v12390, %v12401
  %v12404 = vshrl.u32 %v12211, 16
  %v12406 = vrot.slane %v12404, 7
  %v12407 = vshll.u32 %v12211, 16
  %v12409 = vor.u32 %v12406, %v12407
  %v12410 = vsel %vm2135, %v12398, %v12409
  %v12412 = vshrl.u32 %v12212, 16
  %v12414 = vrot.slane %v12412, 7
  %v12415 = vshll.u32 %v12212, 16
  %v12417 = vor.u32 %v12414, %v12415
  %v12418 = vsel %vm2135, %v12406, %v12417
  %v12420 = vshrl.u32 %v12213, 16
  %v12422 = vrot.slane %v12420, 7
  %v12423 = vshll.u32 %v12213, 16
  %v12425 = vor.u32 %v12422, %v12423
  %v12426 = vsel %vm2135, %v12414, %v12425
  %v12428 = vshrl.u32 %v12214, 16
  %v12430 = vrot.slane %v12428, 7
  %v12431 = vshll.u32 %v12214, 16
  %v12433 = vor.u32 %v12430, %v12431
  %v12434 = vsel %vm2135, %v12422, %v12433
  %v12436 = vshrl.u32 %v12215, 16
  %v12438 = vrot.slane %v12436, 7
  %v12439 = vshll.u32 %v12215, 16
  %v12441 = vor.u32 %v12438, %v12439
  %v12442 = vsel %vm2135, %v12430, %v12441
  %v12444 = vshrl.u32 %v12216, 16
  %v12446 = vrot.slane %v12444, 7
  %v12447 = vshll.u32 %v12216, 16
  %v12449 = vor.u32 %v12446, %v12447
  %v12450 = vsel %vm2135, %v12438, %v12449
  %v12452 = vshrl.u32 %v12217, 16
  %v12454 = vrot.slane %v12452, 7
  %v12455 = vshll.u32 %v12217, 16
  %v12457 = vor.u32 %v12454, %v12455
  %v12458 = vsel %vm2135, %v12446, %v12457
  %v12460 = vshrl.u32 %v12218, 16
  %v12462 = vrot.slane %v12460, 7
  %v12463 = vshll.u32 %v12218, 16
  %v12465 = vor.u32 %v12462, %v12463
  %v12466 = vsel %vm2135, %v12454, %v12465
  %v12468 = vshrl.u32 %v12219, 16
  %v12470 = vrot.slane %v12468, 7
  %v12471 = vshll.u32 %v12219, 16
  %v12473 = vor.u32 %v12470, %v12471
  %v12474 = vsel %vm2135, %v12462, %v12473
  %v12508 = vmul.bf16 %v11323, %v12226
  %v12509 = vmul.bf16 %v11324, %v12234
  %v12510 = vmul.bf16 %v11325, %v12242
  %v12511 = vmul.bf16 %v11326, %v12250
  %v12512 = vmul.bf16 %v11327, %v12258
  %v12513 = vmul.bf16 %v11328, %v12266
  %v12514 = vmul.bf16 %v11329, %v12274
  %v12515 = vmul.bf16 %v11330, %v12282
  %v12516 = vmul.bf16 %v11331, %v12290
  %v12517 = vmul.bf16 %v11332, %v12298
  %v12518 = vmul.bf16 %v11333, %v12306
  %v12519 = vmul.bf16 %v11334, %v12314
  %v12520 = vmul.bf16 %v11335, %v12322
  %v12521 = vmul.bf16 %v11336, %v12330
  %v12522 = vmul.bf16 %v11337, %v12338
  %v12523 = vmul.bf16 %v11338, %v12346
  %v12524 = vmul.bf16 %v11339, %v12354
  %v12525 = vmul.bf16 %v11340, %v12362
  %v12526 = vmul.bf16 %v11341, %v12370
  %v12527 = vmul.bf16 %v11342, %v12378
  %v12528 = vmul.bf16 %v11343, %v12386
  %v12529 = vmul.bf16 %v11344, %v12394
  %v12530 = vmul.bf16 %v11345, %v12402
  %v12531 = vmul.bf16 %v11346, %v12410
  %v12532 = vmul.bf16 %v11347, %v12418
  %v12533 = vmul.bf16 %v11348, %v12426
  %v12534 = vmul.bf16 %v11349, %v12434
  %v12535 = vmul.bf16 %v11350, %v12442
  %v12536 = vmul.bf16 %v11351, %v12450
  %v12537 = vmul.bf16 %v11352, %v12458
  %v12538 = vmul.bf16 %v11353, %v12466
  %v12539 = vmul.bf16 %v11354, %v12474
  %v12540 = vmul.bf16 %v11355, %v12470
  %v12542 = vshrl.u32 %v12508, 16
  %v12544 = vshll.u32 %v12508, 16
  %v12546 = vrot.slane %v12544, 1
  %v12547 = vor.u32 %v12542, %v12546
  %v12549 = vshll.u32 %v12509, 16
  %v12551 = vrot.slane %v12549, 1
  %v12552 = vsel %vm1813, %v12547, %v12551
  %v12553 = vshrl.u32 %v12509, 16
  %v12555 = vor.u32 %v12553, %v12551
  %v12557 = vshll.u32 %v12510, 16
  %v12559 = vrot.slane %v12557, 1
  %v12560 = vsel %vm1813, %v12555, %v12559
  %v12561 = vshrl.u32 %v12510, 16
  %v12563 = vor.u32 %v12561, %v12559
  %v12565 = vshll.u32 %v12511, 16
  %v12567 = vrot.slane %v12565, 1
  %v12568 = vsel %vm1813, %v12563, %v12567
  %v12569 = vshrl.u32 %v12511, 16
  %v12571 = vor.u32 %v12569, %v12567
  %v12573 = vshll.u32 %v12512, 16
  %v12575 = vrot.slane %v12573, 1
  %v12576 = vsel %vm1813, %v12571, %v12575
  %v12577 = vshrl.u32 %v12512, 16
  %v12579 = vor.u32 %v12577, %v12575
  %v12581 = vshll.u32 %v12513, 16
  %v12583 = vrot.slane %v12581, 1
  %v12584 = vsel %vm1813, %v12579, %v12583
  %v12585 = vshrl.u32 %v12513, 16
  %v12587 = vor.u32 %v12585, %v12583
  %v12589 = vshll.u32 %v12514, 16
  %v12591 = vrot.slane %v12589, 1
  %v12592 = vsel %vm1813, %v12587, %v12591
  %v12593 = vshrl.u32 %v12514, 16
  %v12595 = vor.u32 %v12593, %v12591
  %v12597 = vshll.u32 %v12515, 16
  %v12599 = vrot.slane %v12597, 1
  %v12600 = vsel %vm1813, %v12595, %v12599
  %v12601 = vshrl.u32 %v12515, 16
  %v12603 = vor.u32 %v12601, %v12599
  %v12605 = vshll.u32 %v12516, 16
  %v12607 = vrot.slane %v12605, 1
  %v12608 = vsel %vm1813, %v12603, %v12607
  %v12609 = vshrl.u32 %v12516, 16
  %v12611 = vor.u32 %v12609, %v12607
  %v12613 = vshll.u32 %v12517, 16
  %v12615 = vrot.slane %v12613, 1
  %v12616 = vsel %vm1813, %v12611, %v12615
  %v12617 = vshrl.u32 %v12517, 16
  %v12619 = vor.u32 %v12617, %v12615
  %v12621 = vshll.u32 %v12518, 16
  %v12623 = vrot.slane %v12621, 1
  %v12624 = vsel %vm1813, %v12619, %v12623
  %v12625 = vshrl.u32 %v12518, 16
  %v12627 = vor.u32 %v12625, %v12623
  %v12629 = vshll.u32 %v12519, 16
  %v12631 = vrot.slane %v12629, 1
  %v12632 = vsel %vm1813, %v12627, %v12631
  %v12633 = vshrl.u32 %v12519, 16
  %v12635 = vor.u32 %v12633, %v12631
  %v12637 = vshll.u32 %v12520, 16
  %v12639 = vrot.slane %v12637, 1
  %v12640 = vsel %vm1813, %v12635, %v12639
  %v12641 = vshrl.u32 %v12520, 16
  %v12643 = vor.u32 %v12641, %v12639
  %v12645 = vshll.u32 %v12521, 16
  %v12647 = vrot.slane %v12645, 1
  %v12648 = vsel %vm1813, %v12643, %v12647
  %v12649 = vshrl.u32 %v12521, 16
  %v12651 = vor.u32 %v12649, %v12647
  %v12653 = vshll.u32 %v12522, 16
  %v12655 = vrot.slane %v12653, 1
  %v12656 = vsel %vm1813, %v12651, %v12655
  %v12657 = vshrl.u32 %v12522, 16
  %v12659 = vor.u32 %v12657, %v12655
  %v12661 = vshll.u32 %v12523, 16
  %v12663 = vrot.slane %v12661, 1
  %v12664 = vsel %vm1813, %v12659, %v12663
  %v12665 = vshrl.u32 %v12523, 16
  %v12667 = vor.u32 %v12665, %v12663
  %v12669 = vshll.u32 %v12524, 16
  %v12671 = vrot.slane %v12669, 1
  %v12672 = vsel %vm1813, %v12667, %v12671
  %v12673 = vshrl.u32 %v12524, 16
  %v12675 = vor.u32 %v12673, %v12671
  %v12677 = vshll.u32 %v12525, 16
  %v12679 = vrot.slane %v12677, 1
  %v12680 = vsel %vm1813, %v12675, %v12679
  %v12681 = vshrl.u32 %v12525, 16
  %v12683 = vor.u32 %v12681, %v12679
  %v12685 = vshll.u32 %v12526, 16
  %v12687 = vrot.slane %v12685, 1
  %v12688 = vsel %vm1813, %v12683, %v12687
  %v12689 = vshrl.u32 %v12526, 16
  %v12691 = vor.u32 %v12689, %v12687
  %v12693 = vshll.u32 %v12527, 16
  %v12695 = vrot.slane %v12693, 1
  %v12696 = vsel %vm1813, %v12691, %v12695
  %v12697 = vshrl.u32 %v12527, 16
  %v12699 = vor.u32 %v12697, %v12695
  %v12701 = vshll.u32 %v12528, 16
  %v12703 = vrot.slane %v12701, 1
  %v12704 = vsel %vm1813, %v12699, %v12703
  %v12705 = vshrl.u32 %v12528, 16
  %v12707 = vor.u32 %v12705, %v12703
  %v12709 = vshll.u32 %v12529, 16
  %v12711 = vrot.slane %v12709, 1
  %v12712 = vsel %vm1813, %v12707, %v12711
  %v12713 = vshrl.u32 %v12529, 16
  %v12715 = vor.u32 %v12713, %v12711
  %v12717 = vshll.u32 %v12530, 16
  %v12719 = vrot.slane %v12717, 1
  %v12720 = vsel %vm1813, %v12715, %v12719
  %v12721 = vshrl.u32 %v12530, 16
  %v12723 = vor.u32 %v12721, %v12719
  %v12725 = vshll.u32 %v12531, 16
  %v12727 = vrot.slane %v12725, 1
  %v12728 = vsel %vm1813, %v12723, %v12727
  %v12729 = vshrl.u32 %v12531, 16
  %v12731 = vor.u32 %v12729, %v12727
  %v12733 = vshll.u32 %v12532, 16
  %v12735 = vrot.slane %v12733, 1
  %v12736 = vsel %vm1813, %v12731, %v12735
  %v12737 = vshrl.u32 %v12532, 16
  %v12739 = vor.u32 %v12737, %v12735
  %v12741 = vshll.u32 %v12533, 16
  %v12743 = vrot.slane %v12741, 1
  %v12744 = vsel %vm1813, %v12739, %v12743
  %v12745 = vshrl.u32 %v12533, 16
  %v12747 = vor.u32 %v12745, %v12743
  %v12749 = vshll.u32 %v12534, 16
  %v12751 = vrot.slane %v12749, 1
  %v12752 = vsel %vm1813, %v12747, %v12751
  %v12753 = vshrl.u32 %v12534, 16
  %v12755 = vor.u32 %v12753, %v12751
  %v12757 = vshll.u32 %v12535, 16
  %v12759 = vrot.slane %v12757, 1
  %v12760 = vsel %vm1813, %v12755, %v12759
  %v12761 = vshrl.u32 %v12535, 16
  %v12763 = vor.u32 %v12761, %v12759
  %v12765 = vshll.u32 %v12536, 16
  %v12767 = vrot.slane %v12765, 1
  %v12768 = vsel %vm1813, %v12763, %v12767
  %v12769 = vshrl.u32 %v12536, 16
  %v12771 = vor.u32 %v12769, %v12767
  %v12773 = vshll.u32 %v12537, 16
  %v12775 = vrot.slane %v12773, 1
  %v12776 = vsel %vm1813, %v12771, %v12775
  %v12777 = vshrl.u32 %v12537, 16
  %v12779 = vor.u32 %v12777, %v12775
  %v12781 = vshll.u32 %v12538, 16
  %v12783 = vrot.slane %v12781, 1
  %v12784 = vsel %vm1813, %v12779, %v12783
  %v12785 = vshrl.u32 %v12538, 16
  %v12787 = vor.u32 %v12785, %v12783
  %v12789 = vshll.u32 %v12539, 16
  %v12791 = vrot.slane %v12789, 1
  %v12792 = vsel %vm1813, %v12787, %v12791
  %v12793 = vshrl.u32 %v12539, 16
  %v12795 = vor.u32 %v12793, %v12791
  %v12797 = vshll.u32 %v12540, 16
  %v12799 = vrot.slane %v12797, 1
  %v12800 = vsel %vm1813, %v12795, %v12799
  %12801 = vrot.lane.b32.xlu0 %v12552, 32
  %v12802 = vpop.permute.xlu0 %12801
  %12803 = vrot.lane.b32.xlu0 %v12560, 32
  %v12804 = vpop.permute.xlu0 %12803
  %12805 = vrot.lane.b32.xlu0 %v12568, 32
  %v12806 = vpop.permute.xlu0 %12805
  %12807 = vrot.lane.b32.xlu0 %v12576, 32
  %v12808 = vpop.permute.xlu0 %12807
  %12809 = vrot.lane.b32.xlu0 %v12584, 32
  %v12810 = vpop.permute.xlu0 %12809
  %12811 = vrot.lane.b32.xlu0 %v12592, 32
  %v12812 = vpop.permute.xlu0 %12811
  %12813 = vrot.lane.b32.xlu0 %v12600, 32
  %v12814 = vpop.permute.xlu0 %12813
  %12815 = vrot.lane.b32.xlu0 %v12608, 32
  %v12816 = vpop.permute.xlu0 %12815
  %12817 = vrot.lane.b32.xlu0 %v12616, 32
  %v12818 = vpop.permute.xlu0 %12817
  %12819 = vrot.lane.b32.xlu0 %v12624, 32
  %v12820 = vpop.permute.xlu0 %12819
  %12821 = vrot.lane.b32.xlu0 %v12632, 32
  %v12822 = vpop.permute.xlu0 %12821
  %12823 = vrot.lane.b32.xlu0 %v12640, 32
  %v12824 = vpop.permute.xlu0 %12823
  %12825 = vrot.lane.b32.xlu0 %v12648, 32
  %v12826 = vpop.permute.xlu0 %12825
  %12827 = vrot.lane.b32.xlu0 %v12656, 32
  %v12828 = vpop.permute.xlu0 %12827
  %12829 = vrot.lane.b32.xlu0 %v12664, 32
  %v12830 = vpop.permute.xlu0 %12829
  %12831 = vrot.lane.b32.xlu0 %v12672, 32
  %v12832 = vpop.permute.xlu0 %12831
  %12833 = vrot.lane.b32.xlu0 %v12680, 32
  %v12834 = vpop.permute.xlu0 %12833
  %12835 = vrot.lane.b32.xlu0 %v12688, 32
  %v12836 = vpop.permute.xlu0 %12835
  %12837 = vrot.lane.b32.xlu0 %v12696, 32
  %v12838 = vpop.permute.xlu0 %12837
  %12839 = vrot.lane.b32.xlu0 %v12704, 32
  %v12840 = vpop.permute.xlu0 %12839
  %12841 = vrot.lane.b32.xlu0 %v12712, 32
  %v12842 = vpop.permute.xlu0 %12841
  %12843 = vrot.lane.b32.xlu0 %v12720, 32
  %v12844 = vpop.permute.xlu0 %12843
  %12845 = vrot.lane.b32.xlu0 %v12728, 32
  %v12846 = vpop.permute.xlu0 %12845
  %12847 = vrot.lane.b32.xlu0 %v12736, 32
  %v12848 = vpop.permute.xlu0 %12847
  %12849 = vrot.lane.b32.xlu0 %v12744, 32
  %v12850 = vpop.permute.xlu0 %12849
  %12851 = vrot.lane.b32.xlu0 %v12752, 32
  %v12852 = vpop.permute.xlu0 %12851
  %12853 = vrot.lane.b32.xlu0 %v12760, 32
  %v12854 = vpop.permute.xlu0 %12853
  %12855 = vrot.lane.b32.xlu0 %v12768, 32
  %v12856 = vpop.permute.xlu0 %12855
  %12857 = vrot.lane.b32.xlu0 %v12776, 32
  %v12858 = vpop.permute.xlu0 %12857
  %12859 = vrot.lane.b32.xlu0 %v12784, 32
  %v12860 = vpop.permute.xlu0 %12859
  %12861 = vrot.lane.b32.xlu0 %v12792, 32
  %v12862 = vpop.permute.xlu0 %12861
  %12863 = vrot.lane.b32.xlu0 %v12800, 32
  %v12864 = vpop.permute.xlu0 %12863
  %vm12897 = vcmask 294144
  %12898 = vst.msk [vmem:[#allocation3] sm:$0xff] %vm12897, %v12802
  %12899 = vst.msk [vmem:[#allocation3 + $0x8] sm:$0xff] %vm12897, %v12804
  %12900 = vst.msk [vmem:[#allocation3 + $0x10] sm:$0xff] %vm12897, %v12806
  %12901 = vst.msk [vmem:[#allocation3 + $0x18] sm:$0xff] %vm12897, %v12808
  %12902 = vst.msk [vmem:[#allocation3 + $0x20] sm:$0xff] %vm12897, %v12810
  %12903 = vst.msk [vmem:[#allocation3 + $0x28] sm:$0xff] %vm12897, %v12812
  %12904 = vst.msk [vmem:[#allocation3 + $0x30] sm:$0xff] %vm12897, %v12814
  %12905 = vst.msk [vmem:[#allocation3 + $0x38] sm:$0xff] %vm12897, %v12816
  %12906 = vst.msk [vmem:[#allocation3 + $0x40] sm:$0xff] %vm12897, %v12818
  %12907 = vst.msk [vmem:[#allocation3 + $0x48] sm:$0xff] %vm12897, %v12820
  %12908 = vst.msk [vmem:[#allocation3 + $0x50] sm:$0xff] %vm12897, %v12822
  %12909 = vst.msk [vmem:[#allocation3 + $0x58] sm:$0xff] %vm12897, %v12824
  %12910 = vst.msk [vmem:[#allocation3 + $0x60] sm:$0xff] %vm12897, %v12826
  %12911 = vst.msk [vmem:[#allocation3 + $0x68] sm:$0xff] %vm12897, %v12828
  %12912 = vst.msk [vmem:[#allocation3 + $0x70] sm:$0xff] %vm12897, %v12830
  %12913 = vst.msk [vmem:[#allocation3 + $0x78] sm:$0xff] %vm12897, %v12832
  %12914 = vst.msk [vmem:[#allocation3 + $0x80] sm:$0xff] %vm12897, %v12834
  %12915 = vst.msk [vmem:[#allocation3 + $0x88] sm:$0xff] %vm12897, %v12836
  %12916 = vst.msk [vmem:[#allocation3 + $0x90] sm:$0xff] %vm12897, %v12838
  %12917 = vst.msk [vmem:[#allocation3 + $0x98] sm:$0xff] %vm12897, %v12840
  %12918 = vst.msk [vmem:[#allocation3 + $0xa0] sm:$0xff] %vm12897, %v12842
  %12919 = vst.msk [vmem:[#allocation3 + $0xa8] sm:$0xff] %vm12897, %v12844
  %12920 = vst.msk [vmem:[#allocation3 + $0xb0] sm:$0xff] %vm12897, %v12846
  %12921 = vst.msk [vmem:[#allocation3 + $0xb8] sm:$0xff] %vm12897, %v12848
  %12922 = vst.msk [vmem:[#allocation3 + $0xc0] sm:$0xff] %vm12897, %v12850
  %12923 = vst.msk [vmem:[#allocation3 + $0xc8] sm:$0xff] %vm12897, %v12852
  %12924 = vst.msk [vmem:[#allocation3 + $0xd0] sm:$0xff] %vm12897, %v12854
  %12925 = vst.msk [vmem:[#allocation3 + $0xd8] sm:$0xff] %vm12897, %v12856
  %12926 = vst.msk [vmem:[#allocation3 + $0xe0] sm:$0xff] %vm12897, %v12858
  %12927 = vst.msk [vmem:[#allocation3 + $0xe8] sm:$0xff] %vm12897, %v12860
  %12928 = vst.msk [vmem:[#allocation3 + $0xf0] sm:$0xff] %vm12897, %v12862
  %12929 = vst.msk [vmem:[#allocation3 + $0xf8] sm:$0xff] %vm12897, %v12864
  %v12930 = vld [vmem:[#allocation3] sm:$0xff]
  %v12931 = vld [vmem:[#allocation3 + $0x8] sm:$0xff]
  %v12932 = vld [vmem:[#allocation3 + $0x10] sm:$0xff]
  %v12933 = vld [vmem:[#allocation3 + $0x18] sm:$0xff]
  %v12934 = vld [vmem:[#allocation3 + $0x20] sm:$0xff]
  %v12935 = vld [vmem:[#allocation3 + $0x28] sm:$0xff]
  %v12936 = vld [vmem:[#allocation3 + $0x30] sm:$0xff]
  %v12937 = vld [vmem:[#allocation3 + $0x38] sm:$0xff]
  %v12938 = vld [vmem:[#allocation3 + $0x40] sm:$0xff]
  %v12939 = vld [vmem:[#allocation3 + $0x48] sm:$0xff]
  %v12940 = vld [vmem:[#allocation3 + $0x50] sm:$0xff]
  %v12941 = vld [vmem:[#allocation3 + $0x58] sm:$0xff]
  %v12942 = vld [vmem:[#allocation3 + $0x60] sm:$0xff]
  %v12943 = vld [vmem:[#allocation3 + $0x68] sm:$0xff]
  %v12944 = vld [vmem:[#allocation3 + $0x70] sm:$0xff]
  %v12945 = vld [vmem:[#allocation3 + $0x78] sm:$0xff]
  %v12946 = vld [vmem:[#allocation3 + $0x80] sm:$0xff]
  %v12947 = vld [vmem:[#allocation3 + $0x88] sm:$0xff]
  %v12948 = vld [vmem:[#allocation3 + $0x90] sm:$0xff]
  %v12949 = vld [vmem:[#allocation3 + $0x98] sm:$0xff]
  %v12950 = vld [vmem:[#allocation3 + $0xa0] sm:$0xff]
  %v12951 = vld [vmem:[#allocation3 + $0xa8] sm:$0xff]
  %v12952 = vld [vmem:[#allocation3 + $0xb0] sm:$0xff]
  %v12953 = vld [vmem:[#allocation3 + $0xb8] sm:$0xff]
  %v12954 = vld [vmem:[#allocation3 + $0xc0] sm:$0xff]
  %v12955 = vld [vmem:[#allocation3 + $0xc8] sm:$0xff]
  %v12956 = vld [vmem:[#allocation3 + $0xd0] sm:$0xff]
  %v12957 = vld [vmem:[#allocation3 + $0xd8] sm:$0xff]
  %v12958 = vld [vmem:[#allocation3 + $0xe0] sm:$0xff]
  %v12959 = vld [vmem:[#allocation3 + $0xe8] sm:$0xff]
  %v12960 = vld [vmem:[#allocation3 + $0xf0] sm:$0xff]
  %v12961 = vld [vmem:[#allocation3 + $0xf8] sm:$0xff]
  %v12962 = vld [vmem:[%s4] sm:$0xf]
  %v12963 = vld [vmem:[%s4 + $0x4] sm:$0xf]
  %v12964 = vld [vmem:[%s4 + $0x8] sm:$0xf]
  %v12965 = vld [vmem:[%s4 + $0xc] sm:$0xf]
  %v12966 = vld [vmem:[%s4 + $0x10] sm:$0x3]
  %v12967 = vld [vmem:[%s5] sm:$0x1]
  %v12969 = vlaneseq
  %v12970 = vshrl.u32 %v12969, 7
  %v12971 = vsub.s32 0, %v12970
  %v12972 = vrot.slane %v12967, %v12971
  %v12979 = vunpack.c.l.b16 %v12962
  %v12980 = vunpack.c.l.b16 %v12963
  %v12981 = vunpack.c.l.b16 %v12964
  %v12982 = vunpack.c.l.b16 %v12965
  %v12983 = vunpack.c.l.b16 %v12966
  %v12984 = vpack.c.b16 %v12980, %v12979
  %v12985 = vpack.c.b16 %v12982, %v12981
  %v12986 = vpack.c.b16 %v12983, %v12983
  %vm12989 = vcmask 293888
  %v12991 = vsel %vm12989, %v12930, 0
  %v12994 = vsel %vm12989, %v12931, 0
  %v12997 = vsel %vm12989, %v12932, 0
  %v13000 = vsel %vm12989, %v12933, 0
  %v13003 = vsel %vm12989, %v12934, 0
  %v13006 = vsel %vm12989, %v12935, 0
  %v13009 = vsel %vm12989, %v12936, 0
  %v13012 = vsel %vm12989, %v12937, 0
  %v13015 = vsel %vm12989, %v12938, 0
  %v13018 = vsel %vm12989, %v12939, 0
  %v13021 = vsel %vm12989, %v12940, 0
  %v13024 = vsel %vm12989, %v12941, 0
  %v13027 = vsel %vm12989, %v12942, 0
  %v13030 = vsel %vm12989, %v12943, 0
  %v13033 = vsel %vm12989, %v12944, 0
  %v13036 = vsel %vm12989, %v12945, 0
  %v13039 = vsel %vm12989, %v12946, 0
  %v13042 = vsel %vm12989, %v12947, 0
  %v13045 = vsel %vm12989, %v12948, 0
  %v13048 = vsel %vm12989, %v12949, 0
  %v13051 = vsel %vm12989, %v12950, 0
  %v13054 = vsel %vm12989, %v12951, 0
  %v13057 = vsel %vm12989, %v12952, 0
  %v13060 = vsel %vm12989, %v12953, 0
  %v13063 = vsel %vm12989, %v12954, 0
  %v13066 = vsel %vm12989, %v12955, 0
  %v13069 = vsel %vm12989, %v12956, 0
  %v13072 = vsel %vm12989, %v12957, 0
  %v13075 = vsel %vm12989, %v12958, 0
  %v13078 = vsel %vm12989, %v12959, 0
  %v13081 = vsel %vm12989, %v12960, 0
  %v13084 = vsel %vm12989, %v12961, 0
  %vm13086 = vcmask 1041408
  %v13088 = vsel %vm13086, %v12986, 0
  %13090 = vmatprep.subr.bf16.mxu0 0
  %13091 = vmatpush1.bf16.msra.mxu0 %v12984
  %13092 = vmatprep.subr.bf16.mxu0 0
  %13093 = vmatpush1.bf16.msra.mxu0 %v12985
  %13094 = vmatprep.subr.bf16.mxu0 0
  %13095 = vmatpush1.bf16.msra.mxu0 %v13088
  %13096 = vmatprep.subr.bf16.mxu0 0
  %13097 = vmatpush1.bf16.msra.mxu0 0
  %13098 = vmatprep.subr.bf16.mxu0 0
  %13099 = vmatpush1.bf16.msra.mxu0 0
  %13100 = vmatprep.subr.bf16.mxu0 0
  %13101 = vmatpush1.bf16.msra.mxu0 0
  %13102 = vmatprep.subr.bf16.mxu0 0
  %13103 = vmatpush1.bf16.msra.mxu0 0
  %13104 = vmatprep.subr.bf16.mxu0 0
  %13105 = vmatpush1.bf16.msra.mxu0 0
  %13106 = vmatprep.subr.bf16.mxu0 0
  %13107 = vmatpush1.bf16.msra.mxu0 0
  %13108 = vmatprep.subr.bf16.mxu0 0
  %13109 = vmatpush1.bf16.msra.mxu0 0
  %13110 = vmatprep.subr.bf16.mxu0 0
  %13111 = vmatpush1.bf16.msra.mxu0 0
  %13112 = vmatprep.subr.bf16.mxu0 0
  %13113 = vmatpush1.bf16.msra.mxu0 0
  %13114 = vmatprep.subr.bf16.mxu0 0
  %13115 = vmatpush1.bf16.msra.mxu0 0
  %13116 = vmatprep.subr.bf16.mxu0 0
  %13117 = vmatpush1.bf16.msra.mxu0 0
  %13118 = vmatprep.subr.bf16.mxu0 0
  %13119 = vmatpush1.bf16.msra.mxu0 0
  %13120 = vmatprep.subr.bf16.mxu0 0
  %13121 = vmatpush1.bf16.msra.mxu0 0
  %13122 = vmatprep.mubr.bf16.mxu0 0
  %13123 = vmatmul.mubr.bf16.gmra.mrb[0].mxu0 %v12991
  %v13124 = vpop.f32.mrb[0].mxu0
  %v13125 = vadd.f32 %v12972, %v13124
  %v13126 = vpop.f32.mrb[0].mxu0
  %v13127 = vpop.f32.mrb[0].mxu0
  %v13128 = vadd.f32 %v12972, %v13127
  %v13129 = vpop.f32.mrb[0].mxu0
  %13130 = vmatprep.mubr.bf16.mxu0 0
  %13131 = vmatmul.mubr.bf16.gmra.mrb[0].mxu0 %v12994
  %v13132 = vpop.f32.mrb[0].mxu0
  %v13133 = vadd.f32 %v12972, %v13132
  %v13134 = vpop.f32.mrb[0].mxu0
  %v13135 = vpop.f32.mrb[0].mxu0
  %v13136 = vadd.f32 %v12972, %v13135
  %v13137 = vpop.f32.mrb[0].mxu0
  %13138 = vmatprep.mubr.bf16.mxu0 0
  %13139 = vmatmul.mubr.bf16.gmra.mrb[0].mxu0 %v12997
  %v13140 = vpop.f32.mrb[0].mxu0
  %v13141 = vadd.f32 %v12972, %v13140
  %v13142 = vpop.f32.mrb[0].mxu0
  %v13143 = vpop.f32.mrb[0].mxu0
  %v13144 = vadd.f32 %v12972, %v13143
  %v13145 = vpop.f32.mrb[0].mxu0
  %13146 = vmatprep.mubr.bf16.mxu0 0
  %13147 = vmatmul.mubr.bf16.gmra.mrb[0].mxu0 %v13000
  %v13148 = vpop.f32.mrb[0].mxu0
  %v13149 = vadd.f32 %v12972, %v13148
  %v13150 = vpop.f32.mrb[0].mxu0
  %v13151 = vpop.f32.mrb[0].mxu0
  %v13152 = vadd.f32 %v12972, %v13151
  %v13153 = vpop.f32.mrb[0].mxu0
  %13154 = vmatprep.mubr.bf16.mxu0 0
  %13155 = vmatmul.mubr.bf16.gmra.mrb[0].mxu0 %v13003
  %v13156 = vpop.f32.mrb[0].mxu0
  %v13157 = vadd.f32 %v12972, %v13156
  %v13158 = vpop.f32.mrb[0].mxu0
  %v13159 = vpop.f32.mrb[0].mxu0
  %v13160 = vadd.f32 %v12972, %v13159
  %v13161 = vpop.f32.mrb[0].mxu0
  %13162 = vmatprep.mubr.bf16.mxu0 0
  %13163 = vmatmul.mubr.bf16.gmra.mrb[0].mxu0 %v13006
  %v13164 = vpop.f32.mrb[0].mxu0
  %v13165 = vadd.f32 %v12972, %v13164
  %v13166 = vpop.f32.mrb[0].mxu0
  %v13167 = vpop.f32.mrb[0].mxu0
  %v13168 = vadd.f32 %v12972, %v13167
  %v13169 = vpop.f32.mrb[0].mxu0
  %13170 = vmatprep.mubr.bf16.mxu0 0
  %13171 = vmatmul.mubr.bf16.gmra.mrb[0].mxu0 %v13009
  %v13172 = vpop.f32.mrb[0].mxu0
  %v13173 = vadd.f32 %v12972, %v13172
  %v13174 = vpop.f32.mrb[0].mxu0
  %v13175 = vpop.f32.mrb[0].mxu0
  %v13176 = vadd.f32 %v12972, %v13175
  %v13177 = vpop.f32.mrb[0].mxu0
  %13178 = vmatprep.mubr.bf16.mxu0 0
  %13179 = vmatmul.mubr.bf16.gmra.mrb[0].mxu0 %v13012
  %v13180 = vpop.f32.mrb[0].mxu0
  %v13181 = vadd.f32 %v12972, %v13180
  %v13182 = vpop.f32.mrb[0].mxu0
  %v13183 = vpop.f32.mrb[0].mxu0
  %v13184 = vadd.f32 %v12972, %v13183
  %v13185 = vpop.f32.mrb[0].mxu0
  %13186 = vmatprep.mubr.bf16.mxu0 0
  %13187 = vmatmul.mubr.bf16.gmra.mrb[0].mxu0 %v13015
  %v13188 = vpop.f32.mrb[0].mxu0
  %v13189 = vadd.f32 %v12972, %v13188
  %v13190 = vpop.f32.mrb[0].mxu0
  %v13191 = vpop.f32.mrb[0].mxu0
  %v13192 = vadd.f32 %v12972, %v13191
  %v13193 = vpop.f32.mrb[0].mxu0
  %13194 = vmatprep.mubr.bf16.mxu0 0
  %13195 = vmatmul.mubr.bf16.gmra.mrb[0].mxu0 %v13018
  %v13196 = vpop.f32.mrb[0].mxu0
  %v13197 = vadd.f32 %v12972, %v13196
  %v13198 = vpop.f32.mrb[0].mxu0
  %v13199 = vpop.f32.mrb[0].mxu0
  %v13200 = vadd.f32 %v12972, %v13199
  %v13201 = vpop.f32.mrb[0].mxu0
  %13202 = vmatprep.mubr.bf16.mxu0 0
  %13203 = vmatmul.mubr.bf16.gmra.mrb[0].mxu0 %v13021
  %v13204 = vpop.f32.mrb[0].mxu0
  %v13205 = vadd.f32 %v12972, %v13204
  %v13206 = vpop.f32.mrb[0].mxu0
  %v13207 = vpop.f32.mrb[0].mxu0
  %v13208 = vadd.f32 %v12972, %v13207
  %v13209 = vpop.f32.mrb[0].mxu0
  %13210 = vmatprep.mubr.bf16.mxu0 0
  %13211 = vmatmul.mubr.bf16.gmra.mrb[0].mxu0 %v13024
  %v13212 = vpop.f32.mrb[0].mxu0
  %v13213 = vadd.f32 %v12972, %v13212
  %v13214 = vpop.f32.mrb[0].mxu0
  %v13215 = vpop.f32.mrb[0].mxu0
  %v13216 = vadd.f32 %v12972, %v13215
  %v13217 = vpop.f32.mrb[0].mxu0
  %13218 = vmatprep.mubr.bf16.mxu0 0
  %13219 = vmatmul.mubr.bf16.gmra.mrb[0].mxu0 %v13027
  %v13220 = vpop.f32.mrb[0].mxu0
  %v13221 = vadd.f32 %v12972, %v13220
  %v13222 = vpop.f32.mrb[0].mxu0
  %v13223 = vpop.f32.mrb[0].mxu0
  %v13224 = vadd.f32 %v12972, %v13223
  %v13225 = vpop.f32.mrb[0].mxu0
  %13226 = vmatprep.mubr.bf16.mxu0 0
  %13227 = vmatmul.mubr.bf16.gmra.mrb[0].mxu0 %v13030
  %v13228 = vpop.f32.mrb[0].mxu0
  %v13229 = vadd.f32 %v12972, %v13228
  %v13230 = vpop.f32.mrb[0].mxu0
  %v13231 = vpop.f32.mrb[0].mxu0
  %v13232 = vadd.f32 %v12972, %v13231
  %v13233 = vpop.f32.mrb[0].mxu0
  %13234 = vmatprep.mubr.bf16.mxu0 0
  %13235 = vmatmul.mubr.bf16.gmra.mrb[0].mxu0 %v13033
  %v13236 = vpop.f32.mrb[0].mxu0
  %v13237 = vadd.f32 %v12972, %v13236
  %v13238 = vpop.f32.mrb[0].mxu0
  %v13239 = vpop.f32.mrb[0].mxu0
  %v13240 = vadd.f32 %v12972, %v13239
  %v13241 = vpop.f32.mrb[0].mxu0
  %13242 = vmatprep.mubr.bf16.mxu0 0
  %13243 = vmatmul.mubr.bf16.gmra.mrb[0].mxu0 %v13036
  %v13244 = vpop.f32.mrb[0].mxu0
  %v13245 = vadd.f32 %v12972, %v13244
  %v13246 = vpop.f32.mrb[0].mxu0
  %v13247 = vpop.f32.mrb[0].mxu0
  %v13248 = vadd.f32 %v12972, %v13247
  %v13249 = vpop.f32.mrb[0].mxu0
  %13250 = vmatprep.mubr.bf16.mxu0 0
  %13251 = vmatmul.mubr.bf16.gmra.mrb[0].mxu0 %v13039
  %v13252 = vpop.f32.mrb[0].mxu0
  %v13253 = vadd.f32 %v12972, %v13252
  %v13254 = vpop.f32.mrb[0].mxu0
  %v13255 = vpop.f32.mrb[0].mxu0
  %v13256 = vadd.f32 %v12972, %v13255
  %v13257 = vpop.f32.mrb[0].mxu0
  %13258 = vmatprep.mubr.bf16.mxu0 0
  %13259 = vmatmul.mubr.bf16.gmra.mrb[0].mxu0 %v13042
  %v13260 = vpop.f32.mrb[0].mxu0
  %v13261 = vadd.f32 %v12972, %v13260
  %v13262 = vpop.f32.mrb[0].mxu0
  %v13263 = vpop.f32.mrb[0].mxu0
  %v13264 = vadd.f32 %v12972, %v13263
  %v13265 = vpop.f32.mrb[0].mxu0
  %13266 = vmatprep.mubr.bf16.mxu0 0
  %13267 = vmatmul.mubr.bf16.gmra.mrb[0].mxu0 %v13045
  %v13268 = vpop.f32.mrb[0].mxu0
  %v13269 = vadd.f32 %v12972, %v13268
  %v13270 = vpop.f32.mrb[0].mxu0
  %v13271 = vpop.f32.mrb[0].mxu0
  %v13272 = vadd.f32 %v12972, %v13271
  %v13273 = vpop.f32.mrb[0].mxu0
  %13274 = vmatprep.mubr.bf16.mxu0 0
  %13275 = vmatmul.mubr.bf16.gmra.mrb[0].mxu0 %v13048
  %v13276 = vpop.f32.mrb[0].mxu0
  %v13277 = vadd.f32 %v12972, %v13276
  %v13278 = vpop.f32.mrb[0].mxu0
  %v13279 = vpop.f32.mrb[0].mxu0
  %v13280 = vadd.f32 %v12972, %v13279
  %v13281 = vpop.f32.mrb[0].mxu0
  %13282 = vmatprep.mubr.bf16.mxu0 0
  %13283 = vmatmul.mubr.bf16.gmra.mrb[0].mxu0 %v13051
  %v13284 = vpop.f32.mrb[0].mxu0
  %v13285 = vadd.f32 %v12972, %v13284
  %v13286 = vpop.f32.mrb[0].mxu0
  %v13287 = vpop.f32.mrb[0].mxu0
  %v13288 = vadd.f32 %v12972, %v13287
  %v13289 = vpop.f32.mrb[0].mxu0
  %13290 = vmatprep.mubr.bf16.mxu0 0
  %13291 = vmatmul.mubr.bf16.gmra.mrb[0].mxu0 %v13054
  %v13292 = vpop.f32.mrb[0].mxu0
  %v13293 = vadd.f32 %v12972, %v13292
  %v13294 = vpop.f32.mrb[0].mxu0
  %v13295 = vpop.f32.mrb[0].mxu0
  %v13296 = vadd.f32 %v12972, %v13295
  %v13297 = vpop.f32.mrb[0].mxu0
  %13298 = vmatprep.mubr.bf16.mxu0 0
  %13299 = vmatmul.mubr.bf16.gmra.mrb[0].mxu0 %v13057
  %v13300 = vpop.f32.mrb[0].mxu0
  %v13301 = vadd.f32 %v12972, %v13300
  %v13302 = vpop.f32.mrb[0].mxu0
  %v13303 = vpop.f32.mrb[0].mxu0
  %v13304 = vadd.f32 %v12972, %v13303
  %v13305 = vpop.f32.mrb[0].mxu0
  %13306 = vmatprep.mubr.bf16.mxu0 0
  %13307 = vmatmul.mubr.bf16.gmra.mrb[0].mxu0 %v13060
  %v13308 = vpop.f32.mrb[0].mxu0
  %v13309 = vadd.f32 %v12972, %v13308
  %v13310 = vpop.f32.mrb[0].mxu0
  %v13311 = vpop.f32.mrb[0].mxu0
  %v13312 = vadd.f32 %v12972, %v13311
  %v13313 = vpop.f32.mrb[0].mxu0
  %13314 = vmatprep.mubr.bf16.mxu0 0
  %13315 = vmatmul.mubr.bf16.gmra.mrb[0].mxu0 %v13063
  %v13316 = vpop.f32.mrb[0].mxu0
  %v13317 = vadd.f32 %v12972, %v13316
  %v13318 = vpop.f32.mrb[0].mxu0
  %v13319 = vpop.f32.mrb[0].mxu0
  %v13320 = vadd.f32 %v12972, %v13319
  %v13321 = vpop.f32.mrb[0].mxu0
  %13322 = vmatprep.mubr.bf16.mxu0 0
  %13323 = vmatmul.mubr.bf16.gmra.mrb[0].mxu0 %v13066
  %v13324 = vpop.f32.mrb[0].mxu0
  %v13325 = vadd.f32 %v12972, %v13324
  %v13326 = vpop.f32.mrb[0].mxu0
  %v13327 = vpop.f32.mrb[0].mxu0
  %v13328 = vadd.f32 %v12972, %v13327
  %v13329 = vpop.f32.mrb[0].mxu0
  %13330 = vmatprep.mubr.bf16.mxu0 0
  %13331 = vmatmul.mubr.bf16.gmra.mrb[0].mxu0 %v13069
  %v13332 = vpop.f32.mrb[0].mxu0
  %v13333 = vadd.f32 %v12972, %v13332
  %v13334 = vpop.f32.mrb[0].mxu0
  %v13335 = vpop.f32.mrb[0].mxu0
  %v13336 = vadd.f32 %v12972, %v13335
  %v13337 = vpop.f32.mrb[0].mxu0
  %13338 = vmatprep.mubr.bf16.mxu0 0
  %13339 = vmatmul.mubr.bf16.gmra.mrb[0].mxu0 %v13072
  %v13340 = vpop.f32.mrb[0].mxu0
  %v13341 = vadd.f32 %v12972, %v13340
  %v13342 = vpop.f32.mrb[0].mxu0
  %v13343 = vpop.f32.mrb[0].mxu0
  %v13344 = vadd.f32 %v12972, %v13343
  %v13345 = vpop.f32.mrb[0].mxu0
  %13346 = vmatprep.mubr.bf16.mxu0 0
  %13347 = vmatmul.mubr.bf16.gmra.mrb[0].mxu0 %v13075
  %v13348 = vpop.f32.mrb[0].mxu0
  %v13349 = vadd.f32 %v12972, %v13348
  %v13350 = vpop.f32.mrb[0].mxu0
  %v13351 = vpop.f32.mrb[0].mxu0
  %v13352 = vadd.f32 %v12972, %v13351
  %v13353 = vpop.f32.mrb[0].mxu0
  %13354 = vmatprep.mubr.bf16.mxu0 0
  %13355 = vmatmul.mubr.bf16.gmra.mrb[0].mxu0 %v13078
  %v13356 = vpop.f32.mrb[0].mxu0
  %v13357 = vadd.f32 %v12972, %v13356
  %v13358 = vpop.f32.mrb[0].mxu0
  %v13359 = vpop.f32.mrb[0].mxu0
  %v13360 = vadd.f32 %v12972, %v13359
  %v13361 = vpop.f32.mrb[0].mxu0
  %13362 = vmatprep.mubr.bf16.mxu0 0
  %13363 = vmatmul.mubr.bf16.gmra.mrb[0].mxu0 %v13081
  %v13364 = vpop.f32.mrb[0].mxu0
  %v13365 = vadd.f32 %v12972, %v13364
  %v13366 = vpop.f32.mrb[0].mxu0
  %v13367 = vpop.f32.mrb[0].mxu0
  %v13368 = vadd.f32 %v12972, %v13367
  %v13369 = vpop.f32.mrb[0].mxu0
  %13370 = vmatprep.mubr.bf16.mxu0 0
  %13371 = vmatmul.mubr.bf16.gmra.mrb[0].mxu0 %v13084
  %v13372 = vpop.f32.mrb[0].mxu0
  %v13373 = vadd.f32 %v12972, %v13372
  %v13374 = vpop.f32.mrb[0].mxu0
  %v13375 = vpop.f32.mrb[0].mxu0
  %v13376 = vadd.f32 %v12972, %v13375
  %v13377 = vpop.f32.mrb[0].mxu0
  %13378 = vdwg.mxu0
  %v13379 = vmax.f32 %v13125, 0.0
  %v13380 = vmax.f32 %v13128, 0.0
  %v13381 = vmax.f32 %v13133, 0.0
  %v13382 = vmax.f32 %v13136, 0.0
  %v13383 = vmax.f32 %v13141, 0.0
  %v13384 = vmax.f32 %v13144, 0.0
  %v13385 = vmax.f32 %v13149, 0.0
  %v13386 = vmax.f32 %v13152, 0.0
  %v13387 = vmax.f32 %v13157, 0.0
  %v13388 = vmax.f32 %v13160, 0.0
  %v13389 = vmax.f32 %v13165, 0.0
  %v13390 = vmax.f32 %v13168, 0.0
  %v13391 = vmax.f32 %v13173, 0.0
  %v13392 = vmax.f32 %v13176, 0.0
  %v13393 = vmax.f32 %v13181, 0.0
  %v13394 = vmax.f32 %v13184, 0.0
  %v13395 = vmax.f32 %v13189, 0.0
  %v13396 = vmax.f32 %v13192, 0.0
  %v13397 = vmax.f32 %v13197, 0.0
  %v13398 = vmax.f32 %v13200, 0.0
  %v13399 = vmax.f32 %v13205, 0.0
  %v13400 = vmax.f32 %v13208, 0.0
  %v13401 = vmax.f32 %v13213, 0.0
  %v13402 = vmax.f32 %v13216, 0.0
  %v13403 = vmax.f32 %v13221, 0.0
  %v13404 = vmax.f32 %v13224, 0.0
  %v13405 = vmax.f32 %v13229, 0.0
  %v13406 = vmax.f32 %v13232, 0.0
  %v13407 = vmax.f32 %v13237, 0.0
  %v13408 = vmax.f32 %v13240, 0.0
  %v13409 = vmax.f32 %v13245, 0.0
  %v13410 = vmax.f32 %v13248, 0.0
  %v13411 = vmax.f32 %v13253, 0.0
  %v13412 = vmax.f32 %v13256, 0.0
  %v13413 = vmax.f32 %v13261, 0.0
  %v13414 = vmax.f32 %v13264, 0.0
  %v13415 = vmax.f32 %v13269, 0.0
  %v13416 = vmax.f32 %v13272, 0.0
  %v13417 = vmax.f32 %v13277, 0.0
  %v13418 = vmax.f32 %v13280, 0.0
  %v13419 = vmax.f32 %v13285, 0.0
  %v13420 = vmax.f32 %v13288, 0.0
  %v13421 = vmax.f32 %v13293, 0.0
  %v13422 = vmax.f32 %v13296, 0.0
  %v13423 = vmax.f32 %v13301, 0.0
  %v13424 = vmax.f32 %v13304, 0.0
  %v13425 = vmax.f32 %v13309, 0.0
  %v13426 = vmax.f32 %v13312, 0.0
  %v13427 = vmax.f32 %v13317, 0.0
  %v13428 = vmax.f32 %v13320, 0.0
  %v13429 = vmax.f32 %v13325, 0.0
  %v13430 = vmax.f32 %v13328, 0.0
  %v13431 = vmax.f32 %v13333, 0.0
  %v13432 = vmax.f32 %v13336, 0.0
  %v13433 = vmax.f32 %v13341, 0.0
  %v13434 = vmax.f32 %v13344, 0.0
  %v13435 = vmax.f32 %v13349, 0.0
  %v13436 = vmax.f32 %v13352, 0.0
  %v13437 = vmax.f32 %v13357, 0.0
  %v13438 = vmax.f32 %v13360, 0.0
  %v13439 = vmax.f32 %v13365, 0.0
  %v13440 = vmax.f32 %v13368, 0.0
  %v13441 = vmax.f32 %v13373, 0.0
  %v13442 = vmax.f32 %v13376, 0.0
  %v13443 = vpack.c.bf16 %v13380, %v13379
  %v13444 = vpack.c.bf16 %v13382, %v13381
  %v13445 = vpack.c.bf16 %v13384, %v13383
  %v13446 = vpack.c.bf16 %v13386, %v13385
  %v13447 = vpack.c.bf16 %v13388, %v13387
  %v13448 = vpack.c.bf16 %v13390, %v13389
  %v13449 = vpack.c.bf16 %v13392, %v13391
  %v13450 = vpack.c.bf16 %v13394, %v13393
  %v13451 = vpack.c.bf16 %v13396, %v13395
  %v13452 = vpack.c.bf16 %v13398, %v13397
  %v13453 = vpack.c.bf16 %v13400, %v13399
  %v13454 = vpack.c.bf16 %v13402, %v13401
  %v13455 = vpack.c.bf16 %v13404, %v13403
  %v13456 = vpack.c.bf16 %v13406, %v13405
  %v13457 = vpack.c.bf16 %v13408, %v13407
  %v13458 = vpack.c.bf16 %v13410, %v13409
  %v13459 = vpack.c.bf16 %v13412, %v13411
  %v13460 = vpack.c.bf16 %v13414, %v13413
  %v13461 = vpack.c.bf16 %v13416, %v13415
  %v13462 = vpack.c.bf16 %v13418, %v13417
  %v13463 = vpack.c.bf16 %v13420, %v13419
  %v13464 = vpack.c.bf16 %v13422, %v13421
  %v13465 = vpack.c.bf16 %v13424, %v13423
  %v13466 = vpack.c.bf16 %v13426, %v13425
  %v13467 = vpack.c.bf16 %v13428, %v13427
  %v13468 = vpack.c.bf16 %v13430, %v13429
  %v13469 = vpack.c.bf16 %v13432, %v13431
  %v13470 = vpack.c.bf16 %v13434, %v13433
  %v13471 = vpack.c.bf16 %v13436, %v13435
  %v13472 = vpack.c.bf16 %v13438, %v13437
  %v13473 = vpack.c.bf16 %v13440, %v13439
  %v13474 = vpack.c.bf16 %v13442, %v13441
  %v13475 = vld [vmem:[%s6] sm:$0x3]
  %v13476 = vld [vmem:[%s7] sm:$0x1]
  %v13478 = vlaneseq
  %v13479 = vshrl.u32 %v13478, 7
  %v13480 = vsub.s32 0, %v13479
  %v13481 = vrot.slane %v13476, %v13480
  %v13484 = vsel %vm751, %v13443, 0
  %v13487 = vsel %vm751, %v13444, 0
  %v13490 = vsel %vm751, %v13445, 0
  %v13493 = vsel %vm751, %v13446, 0
  %v13496 = vsel %vm751, %v13447, 0
  %v13499 = vsel %vm751, %v13448, 0
  %v13502 = vsel %vm751, %v13449, 0
  %v13505 = vsel %vm751, %v13450, 0
  %v13508 = vsel %vm751, %v13451, 0
  %v13511 = vsel %vm751, %v13452, 0
  %v13514 = vsel %vm751, %v13453, 0
  %v13517 = vsel %vm751, %v13454, 0
  %v13520 = vsel %vm751, %v13455, 0
  %v13523 = vsel %vm751, %v13456, 0
  %v13526 = vsel %vm751, %v13457, 0
  %v13529 = vsel %vm751, %v13458, 0
  %v13532 = vsel %vm751, %v13459, 0
  %v13535 = vsel %vm751, %v13460, 0
  %v13538 = vsel %vm751, %v13461, 0
  %v13541 = vsel %vm751, %v13462, 0
  %v13544 = vsel %vm751, %v13463, 0
  %v13547 = vsel %vm751, %v13464, 0
  %v13550 = vsel %vm751, %v13465, 0
  %v13553 = vsel %vm751, %v13466, 0
  %v13556 = vsel %vm751, %v13467, 0
  %v13559 = vsel %vm751, %v13468, 0
  %v13562 = vsel %vm751, %v13469, 0
  %v13565 = vsel %vm751, %v13470, 0
  %v13568 = vsel %vm751, %v13471, 0
  %v13571 = vsel %vm751, %v13472, 0
  %v13574 = vsel %vm751, %v13473, 0
  %v13577 = vsel %vm751, %v13474, 0
  %v13580 = vsel %vm13086, %v13475, 0
  %13582 = vmatprep.subr.bf16.mxu0 0
  %13583 = vmatpush1.bf16.msra.mxu0 %v13580
  %13584 = vmatprep.subr.bf16.mxu0 0
  %13585 = vmatpush1.bf16.msra.mxu0 0
  %13586 = vmatprep.subr.bf16.mxu0 0
  %13587 = vmatpush1.bf16.msra.mxu0 0
  %13588 = vmatprep.subr.bf16.mxu0 0
  %13589 = vmatpush1.bf16.msra.mxu0 0
  %13590 = vmatprep.subr.bf16.mxu0 0
  %13591 = vmatpush1.bf16.msra.mxu0 0
  %13592 = vmatprep.subr.bf16.mxu0 0
  %13593 = vmatpush1.bf16.msra.mxu0 0
  %13594 = vmatprep.subr.bf16.mxu0 0
  %13595 = vmatpush1.bf16.msra.mxu0 0
  %13596 = vmatprep.subr.bf16.mxu0 0
  %13597 = vmatpush1.bf16.msra.mxu0 0
  %13598 = vmatprep.subr.bf16.mxu0 0
  %13599 = vmatpush1.bf16.msra.mxu0 0
  %13600 = vmatprep.subr.bf16.mxu0 0
  %13601 = vmatpush1.bf16.msra.mxu0 0
  %13602 = vmatprep.subr.bf16.mxu0 0
  %13603 = vmatpush1.bf16.msra.mxu0 0
  %13604 = vmatprep.subr.bf16.mxu0 0
  %13605 = vmatpush1.bf16.msra.mxu0 0
  %13606 = vmatprep.subr.bf16.mxu0 0
  %13607 = vmatpush1.bf16.msra.mxu0 0
  %13608 = vmatprep.subr.bf16.mxu0 0
  %13609 = vmatpush1.bf16.msra.mxu0 0
  %13610 = vmatprep.subr.bf16.mxu0 0
  %13611 = vmatpush1.bf16.msra.mxu0 0
  %13612 = vmatprep.subr.bf16.mxu0 0
  %13613 = vmatpush1.bf16.msra.mxu0 0
  %13614 = vmatprep.mubr.bf16.mxu0 0
  %13615 = vmatmul.mubr.bf16.gmra.mrb[0].mxu0 %v13484
  %v13616 = vpop.f32.mrb[0].mxu0
  %v13617 = vadd.f32 %v13481, %v13616
  %v13618 = vpop.f32.mrb[0].mxu0
  %v13619 = vpop.f32.mrb[0].mxu0
  %v13620 = vadd.f32 %v13481, %v13619
  %v13621 = vpop.f32.mrb[0].mxu0
  %13622 = vmatprep.mubr.bf16.mxu0 0
  %13623 = vmatmul.mubr.bf16.gmra.mrb[0].mxu0 %v13487
  %v13624 = vpop.f32.mrb[0].mxu0
  %v13625 = vadd.f32 %v13481, %v13624
  %v13626 = vpop.f32.mrb[0].mxu0
  %v13627 = vpop.f32.mrb[0].mxu0
  %v13628 = vadd.f32 %v13481, %v13627
  %v13629 = vpop.f32.mrb[0].mxu0
  %13630 = vmatprep.mubr.bf16.mxu0 0
  %13631 = vmatmul.mubr.bf16.gmra.mrb[0].mxu0 %v13490
  %v13632 = vpop.f32.mrb[0].mxu0
  %v13633 = vadd.f32 %v13481, %v13632
  %v13634 = vpop.f32.mrb[0].mxu0
  %v13635 = vpop.f32.mrb[0].mxu0
  %v13636 = vadd.f32 %v13481, %v13635
  %v13637 = vpop.f32.mrb[0].mxu0
  %13638 = vmatprep.mubr.bf16.mxu0 0
  %13639 = vmatmul.mubr.bf16.gmra.mrb[0].mxu0 %v13493
  %v13640 = vpop.f32.mrb[0].mxu0
  %v13641 = vadd.f32 %v13481, %v13640
  %v13642 = vpop.f32.mrb[0].mxu0
  %v13643 = vpop.f32.mrb[0].mxu0
  %v13644 = vadd.f32 %v13481, %v13643
  %v13645 = vpop.f32.mrb[0].mxu0
  %13646 = vmatprep.mubr.bf16.mxu0 0
  %13647 = vmatmul.mubr.bf16.gmra.mrb[0].mxu0 %v13496
  %v13648 = vpop.f32.mrb[0].mxu0
  %v13649 = vadd.f32 %v13481, %v13648
  %v13650 = vpop.f32.mrb[0].mxu0
  %v13651 = vpop.f32.mrb[0].mxu0
  %v13652 = vadd.f32 %v13481, %v13651
  %v13653 = vpop.f32.mrb[0].mxu0
  %13654 = vmatprep.mubr.bf16.mxu0 0
  %13655 = vmatmul.mubr.bf16.gmra.mrb[0].mxu0 %v13499
  %v13656 = vpop.f32.mrb[0].mxu0
  %v13657 = vadd.f32 %v13481, %v13656
  %v13658 = vpop.f32.mrb[0].mxu0
  %v13659 = vpop.f32.mrb[0].mxu0
  %v13660 = vadd.f32 %v13481, %v13659
  %v13661 = vpop.f32.mrb[0].mxu0
  %13662 = vmatprep.mubr.bf16.mxu0 0
  %13663 = vmatmul.mubr.bf16.gmra.mrb[0].mxu0 %v13502
  %v13664 = vpop.f32.mrb[0].mxu0
  %v13665 = vadd.f32 %v13481, %v13664
  %v13666 = vpop.f32.mrb[0].mxu0
  %v13667 = vpop.f32.mrb[0].mxu0
  %v13668 = vadd.f32 %v13481, %v13667
  %v13669 = vpop.f32.mrb[0].mxu0
  %13670 = vmatprep.mubr.bf16.mxu0 0
  %13671 = vmatmul.mubr.bf16.gmra.mrb[0].mxu0 %v13505
  %v13672 = vpop.f32.mrb[0].mxu0
  %v13673 = vadd.f32 %v13481, %v13672
  %v13674 = vpop.f32.mrb[0].mxu0
  %v13675 = vpop.f32.mrb[0].mxu0
  %v13676 = vadd.f32 %v13481, %v13675
  %v13677 = vpop.f32.mrb[0].mxu0
  %13678 = vmatprep.mubr.bf16.mxu0 0
  %13679 = vmatmul.mubr.bf16.gmra.mrb[0].mxu0 %v13508
  %v13680 = vpop.f32.mrb[0].mxu0
  %v13681 = vadd.f32 %v13481, %v13680
  %v13682 = vpop.f32.mrb[0].mxu0
  %v13683 = vpop.f32.mrb[0].mxu0
  %v13684 = vadd.f32 %v13481, %v13683
  %v13685 = vpop.f32.mrb[0].mxu0
  %13686 = vmatprep.mubr.bf16.mxu0 0
  %13687 = vmatmul.mubr.bf16.gmra.mrb[0].mxu0 %v13511
  %v13688 = vpop.f32.mrb[0].mxu0
  %v13689 = vadd.f32 %v13481, %v13688
  %v13690 = vpop.f32.mrb[0].mxu0
  %v13691 = vpop.f32.mrb[0].mxu0
  %v13692 = vadd.f32 %v13481, %v13691
  %v13693 = vpop.f32.mrb[0].mxu0
  %13694 = vmatprep.mubr.bf16.mxu0 0
  %13695 = vmatmul.mubr.bf16.gmra.mrb[0].mxu0 %v13514
  %v13696 = vpop.f32.mrb[0].mxu0
  %v13697 = vadd.f32 %v13481, %v13696
  %v13698 = vpop.f32.mrb[0].mxu0
  %v13699 = vpop.f32.mrb[0].mxu0
  %v13700 = vadd.f32 %v13481, %v13699
  %v13701 = vpop.f32.mrb[0].mxu0
  %13702 = vmatprep.mubr.bf16.mxu0 0
  %13703 = vmatmul.mubr.bf16.gmra.mrb[0].mxu0 %v13517
  %v13704 = vpop.f32.mrb[0].mxu0
  %v13705 = vadd.f32 %v13481, %v13704
  %v13706 = vpop.f32.mrb[0].mxu0
  %v13707 = vpop.f32.mrb[0].mxu0
  %v13708 = vadd.f32 %v13481, %v13707
  %v13709 = vpop.f32.mrb[0].mxu0
  %13710 = vmatprep.mubr.bf16.mxu0 0
  %13711 = vmatmul.mubr.bf16.gmra.mrb[0].mxu0 %v13520
  %v13712 = vpop.f32.mrb[0].mxu0
  %v13713 = vadd.f32 %v13481, %v13712
  %v13714 = vpop.f32.mrb[0].mxu0
  %v13715 = vpop.f32.mrb[0].mxu0
  %v13716 = vadd.f32 %v13481, %v13715
  %v13717 = vpop.f32.mrb[0].mxu0
  %13718 = vmatprep.mubr.bf16.mxu0 0
  %13719 = vmatmul.mubr.bf16.gmra.mrb[0].mxu0 %v13523
  %v13720 = vpop.f32.mrb[0].mxu0
  %v13721 = vadd.f32 %v13481, %v13720
  %v13722 = vpop.f32.mrb[0].mxu0
  %v13723 = vpop.f32.mrb[0].mxu0
  %v13724 = vadd.f32 %v13481, %v13723
  %v13725 = vpop.f32.mrb[0].mxu0
  %13726 = vmatprep.mubr.bf16.mxu0 0
  %13727 = vmatmul.mubr.bf16.gmra.mrb[0].mxu0 %v13526
  %v13728 = vpop.f32.mrb[0].mxu0
  %v13729 = vadd.f32 %v13481, %v13728
  %v13730 = vpop.f32.mrb[0].mxu0
  %v13731 = vpop.f32.mrb[0].mxu0
  %v13732 = vadd.f32 %v13481, %v13731
  %v13733 = vpop.f32.mrb[0].mxu0
  %13734 = vmatprep.mubr.bf16.mxu0 0
  %13735 = vmatmul.mubr.bf16.gmra.mrb[0].mxu0 %v13529
  %v13736 = vpop.f32.mrb[0].mxu0
  %v13737 = vadd.f32 %v13481, %v13736
  %v13738 = vpop.f32.mrb[0].mxu0
  %v13739 = vpop.f32.mrb[0].mxu0
  %v13740 = vadd.f32 %v13481, %v13739
  %v13741 = vpop.f32.mrb[0].mxu0
  %13742 = vmatprep.mubr.bf16.mxu0 0
  %13743 = vmatmul.mubr.bf16.gmra.mrb[0].mxu0 %v13532
  %v13744 = vpop.f32.mrb[0].mxu0
  %v13745 = vadd.f32 %v13481, %v13744
  %v13746 = vpop.f32.mrb[0].mxu0
  %v13747 = vpop.f32.mrb[0].mxu0
  %v13748 = vadd.f32 %v13481, %v13747
  %v13749 = vpop.f32.mrb[0].mxu0
  %13750 = vmatprep.mubr.bf16.mxu0 0
  %13751 = vmatmul.mubr.bf16.gmra.mrb[0].mxu0 %v13535
  %v13752 = vpop.f32.mrb[0].mxu0
  %v13753 = vadd.f32 %v13481, %v13752
  %v13754 = vpop.f32.mrb[0].mxu0
  %v13755 = vpop.f32.mrb[0].mxu0
  %v13756 = vadd.f32 %v13481, %v13755
  %v13757 = vpop.f32.mrb[0].mxu0
  %13758 = vmatprep.mubr.bf16.mxu0 0
  %13759 = vmatmul.mubr.bf16.gmra.mrb[0].mxu0 %v13538
  %v13760 = vpop.f32.mrb[0].mxu0
  %v13761 = vadd.f32 %v13481, %v13760
  %v13762 = vpop.f32.mrb[0].mxu0
  %v13763 = vpop.f32.mrb[0].mxu0
  %v13764 = vadd.f32 %v13481, %v13763
  %v13765 = vpop.f32.mrb[0].mxu0
  %13766 = vmatprep.mubr.bf16.mxu0 0
  %13767 = vmatmul.mubr.bf16.gmra.mrb[0].mxu0 %v13541
  %v13768 = vpop.f32.mrb[0].mxu0
  %v13769 = vadd.f32 %v13481, %v13768
  %v13770 = vpop.f32.mrb[0].mxu0
  %v13771 = vpop.f32.mrb[0].mxu0
  %v13772 = vadd.f32 %v13481, %v13771
  %v13773 = vpop.f32.mrb[0].mxu0
  %13774 = vmatprep.mubr.bf16.mxu0 0
  %13775 = vmatmul.mubr.bf16.gmra.mrb[0].mxu0 %v13544
  %v13776 = vpop.f32.mrb[0].mxu0
  %v13777 = vadd.f32 %v13481, %v13776
  %v13778 = vpop.f32.mrb[0].mxu0
  %v13779 = vpop.f32.mrb[0].mxu0
  %v13780 = vadd.f32 %v13481, %v13779
  %v13781 = vpop.f32.mrb[0].mxu0
  %13782 = vmatprep.mubr.bf16.mxu0 0
  %13783 = vmatmul.mubr.bf16.gmra.mrb[0].mxu0 %v13547
  %v13784 = vpop.f32.mrb[0].mxu0
  %v13785 = vadd.f32 %v13481, %v13784
  %v13786 = vpop.f32.mrb[0].mxu0
  %v13787 = vpop.f32.mrb[0].mxu0
  %v13788 = vadd.f32 %v13481, %v13787
  %v13789 = vpop.f32.mrb[0].mxu0
  %13790 = vmatprep.mubr.bf16.mxu0 0
  %13791 = vmatmul.mubr.bf16.gmra.mrb[0].mxu0 %v13550
  %v13792 = vpop.f32.mrb[0].mxu0
  %v13793 = vadd.f32 %v13481, %v13792
  %v13794 = vpop.f32.mrb[0].mxu0
  %v13795 = vpop.f32.mrb[0].mxu0
  %v13796 = vadd.f32 %v13481, %v13795
  %v13797 = vpop.f32.mrb[0].mxu0
  %13798 = vmatprep.mubr.bf16.mxu0 0
  %13799 = vmatmul.mubr.bf16.gmra.mrb[0].mxu0 %v13553
  %v13800 = vpop.f32.mrb[0].mxu0
  %v13801 = vadd.f32 %v13481, %v13800
  %v13802 = vpop.f32.mrb[0].mxu0
  %v13803 = vpop.f32.mrb[0].mxu0
  %v13804 = vadd.f32 %v13481, %v13803
  %v13805 = vpop.f32.mrb[0].mxu0
  %13806 = vmatprep.mubr.bf16.mxu0 0
  %13807 = vmatmul.mubr.bf16.gmra.mrb[0].mxu0 %v13556
  %v13808 = vpop.f32.mrb[0].mxu0
  %v13809 = vadd.f32 %v13481, %v13808
  %v13810 = vpop.f32.mrb[0].mxu0
  %v13811 = vpop.f32.mrb[0].mxu0
  %v13812 = vadd.f32 %v13481, %v13811
  %v13813 = vpop.f32.mrb[0].mxu0
  %13814 = vmatprep.mubr.bf16.mxu0 0
  %13815 = vmatmul.mubr.bf16.gmra.mrb[0].mxu0 %v13559
  %v13816 = vpop.f32.mrb[0].mxu0
  %v13817 = vadd.f32 %v13481, %v13816
  %v13818 = vpop.f32.mrb[0].mxu0
  %v13819 = vpop.f32.mrb[0].mxu0
  %v13820 = vadd.f32 %v13481, %v13819
  %v13821 = vpop.f32.mrb[0].mxu0
  %13822 = vmatprep.mubr.bf16.mxu0 0
  %13823 = vmatmul.mubr.bf16.gmra.mrb[0].mxu0 %v13562
  %v13824 = vpop.f32.mrb[0].mxu0
  %v13825 = vadd.f32 %v13481, %v13824
  %v13826 = vpop.f32.mrb[0].mxu0
  %v13827 = vpop.f32.mrb[0].mxu0
  %v13828 = vadd.f32 %v13481, %v13827
  %v13829 = vpop.f32.mrb[0].mxu0
  %13830 = vmatprep.mubr.bf16.mxu0 0
  %13831 = vmatmul.mubr.bf16.gmra.mrb[0].mxu0 %v13565
  %v13832 = vpop.f32.mrb[0].mxu0
  %v13833 = vadd.f32 %v13481, %v13832
  %v13834 = vpop.f32.mrb[0].mxu0
  %v13835 = vpop.f32.mrb[0].mxu0
  %v13836 = vadd.f32 %v13481, %v13835
  %v13837 = vpop.f32.mrb[0].mxu0
  %13838 = vmatprep.mubr.bf16.mxu0 0
  %13839 = vmatmul.mubr.bf16.gmra.mrb[0].mxu0 %v13568
  %v13840 = vpop.f32.mrb[0].mxu0
  %v13841 = vadd.f32 %v13481, %v13840
  %v13842 = vpop.f32.mrb[0].mxu0
  %v13843 = vpop.f32.mrb[0].mxu0
  %v13844 = vadd.f32 %v13481, %v13843
  %v13845 = vpop.f32.mrb[0].mxu0
  %13846 = vmatprep.mubr.bf16.mxu0 0
  %13847 = vmatmul.mubr.bf16.gmra.mrb[0].mxu0 %v13571
  %v13848 = vpop.f32.mrb[0].mxu0
  %v13849 = vadd.f32 %v13481, %v13848
  %v13850 = vpop.f32.mrb[0].mxu0
  %v13851 = vpop.f32.mrb[0].mxu0
  %v13852 = vadd.f32 %v13481, %v13851
  %v13853 = vpop.f32.mrb[0].mxu0
  %13854 = vmatprep.mubr.bf16.mxu0 0
  %13855 = vmatmul.mubr.bf16.gmra.mrb[0].mxu0 %v13574
  %v13856 = vpop.f32.mrb[0].mxu0
  %v13857 = vadd.f32 %v13481, %v13856
  %v13858 = vpop.f32.mrb[0].mxu0
  %v13859 = vpop.f32.mrb[0].mxu0
  %v13860 = vadd.f32 %v13481, %v13859
  %v13861 = vpop.f32.mrb[0].mxu0
  %13862 = vmatprep.mubr.bf16.mxu0 0
  %13863 = vmatmul.mubr.bf16.gmra.mrb[0].mxu0 %v13577
  %v13864 = vpop.f32.mrb[0].mxu0
  %v13865 = vadd.f32 %v13481, %v13864
  %v13866 = vpop.f32.mrb[0].mxu0
  %v13867 = vpop.f32.mrb[0].mxu0
  %v13868 = vadd.f32 %v13481, %v13867
  %v13869 = vpop.f32.mrb[0].mxu0
  %13870 = vdwg.mxu0
  %v13871 = vunpack.c.l.bf16 %v30
  %v13872 = vunpack.c.l.bf16 %v31
  %v13873 = vunpack.c.l.bf16 %v32
  %v13874 = vunpack.c.l.bf16 %v33
  %v13875 = vunpack.c.l.bf16 %v34
  %v13876 = vunpack.c.l.bf16 %v35
  %v13877 = vunpack.c.l.bf16 %v36
  %v13878 = vunpack.c.l.bf16 %v37
  %v13879 = vunpack.c.l.bf16 %v38
  %v13880 = vunpack.c.l.bf16 %v39
  %v13881 = vunpack.c.l.bf16 %v40
  %v13882 = vunpack.c.l.bf16 %v41
  %v13883 = vunpack.c.l.bf16 %v42
  %v13884 = vunpack.c.l.bf16 %v43
  %v13885 = vunpack.c.l.bf16 %v44
  %v13886 = vunpack.c.l.bf16 %v45
  %v13887 = vunpack.c.l.bf16 %v46
  %v13888 = vunpack.c.l.bf16 %v47
  %v13889 = vunpack.c.l.bf16 %v48
  %v13890 = vunpack.c.l.bf16 %v49
  %v13891 = vunpack.c.l.bf16 %v50
  %v13892 = vunpack.c.l.bf16 %v51
  %v13893 = vunpack.c.l.bf16 %v52
  %v13894 = vunpack.c.l.bf16 %v53
  %v13895 = vunpack.c.l.bf16 %v54
  %v13896 = vunpack.c.l.bf16 %v55
  %v13897 = vunpack.c.l.bf16 %v56
  %v13898 = vunpack.c.l.bf16 %v57
  %v13899 = vunpack.c.l.bf16 %v58
  %v13900 = vunpack.c.l.bf16 %v59
  %v13901 = vunpack.c.l.bf16 %v60
  %v13902 = vunpack.c.l.bf16 %v61
  %v13903 = vunpack.c.l.bf16 %v62
  %v13904 = vunpack.c.l.bf16 %v63
  %v13905 = vunpack.c.l.bf16 %v64
  %v13906 = vunpack.c.l.bf16 %v65
  %v13907 = vunpack.c.l.bf16 %v66
  %v13908 = vunpack.c.l.bf16 %v67
  %v13909 = vunpack.c.l.bf16 %v68
  %v13910 = vunpack.c.l.bf16 %v69
  %v13911 = vunpack.c.l.bf16 %v70
  %v13912 = vunpack.c.l.bf16 %v71
  %v13913 = vunpack.c.l.bf16 %v72
  %v13914 = vunpack.c.l.bf16 %v73
  %v13915 = vunpack.c.l.bf16 %v74
  %v13916 = vunpack.c.l.bf16 %v75
  %v13917 = vunpack.c.l.bf16 %v76
  %v13918 = vunpack.c.l.bf16 %v77
  %v13919 = vunpack.c.l.bf16 %v78
  %v13920 = vunpack.c.l.bf16 %v79
  %v13921 = vunpack.c.l.bf16 %v80
  %v13922 = vunpack.c.l.bf16 %v81
  %v13923 = vunpack.c.l.bf16 %v82
  %v13924 = vunpack.c.l.bf16 %v83
  %v13925 = vunpack.c.l.bf16 %v84
  %v13926 = vunpack.c.l.bf16 %v85
  %v13927 = vunpack.c.l.bf16 %v86
  %v13928 = vunpack.c.l.bf16 %v87
  %v13929 = vunpack.c.l.bf16 %v88
  %v13930 = vunpack.c.l.bf16 %v89
  %v13931 = vunpack.c.l.bf16 %v90
  %v13932 = vunpack.c.l.bf16 %v91
  %v13933 = vunpack.c.l.bf16 %v92
  %v13934 = vunpack.c.l.bf16 %v93
  %v13935 = vadd.f32 %v13617, %v13871
  %v13936 = vadd.f32 %v13620, %v13872
  %v13937 = vadd.f32 %v13625, %v13873
  %v13938 = vadd.f32 %v13628, %v13874
  %v13939 = vadd.f32 %v13633, %v13875
  %v13940 = vadd.f32 %v13636, %v13876
  %v13941 = vadd.f32 %v13641, %v13877
  %v13942 = vadd.f32 %v13644, %v13878
  %v13943 = vadd.f32 %v13649, %v13879
  %v13944 = vadd.f32 %v13652, %v13880
  %v13945 = vadd.f32 %v13657, %v13881
  %v13946 = vadd.f32 %v13660, %v13882
  %v13947 = vadd.f32 %v13665, %v13883
  %v13948 = vadd.f32 %v13668, %v13884
  %v13949 = vadd.f32 %v13673, %v13885
  %v13950 = vadd.f32 %v13676, %v13886
  %v13951 = vadd.f32 %v13681, %v13887
  %v13952 = vadd.f32 %v13684, %v13888
  %v13953 = vadd.f32 %v13689, %v13889
  %v13954 = vadd.f32 %v13692, %v13890
  %v13955 = vadd.f32 %v13697, %v13891
  %v13956 = vadd.f32 %v13700, %v13892
  %v13957 = vadd.f32 %v13705, %v13893
  %v13958 = vadd.f32 %v13708, %v13894
  %v13959 = vadd.f32 %v13713, %v13895
  %v13960 = vadd.f32 %v13716, %v13896
  %v13961 = vadd.f32 %v13721, %v13897
  %v13962 = vadd.f32 %v13724, %v13898
  %v13963 = vadd.f32 %v13729, %v13899
  %v13964 = vadd.f32 %v13732, %v13900
  %v13965 = vadd.f32 %v13737, %v13901
  %v13966 = vadd.f32 %v13740, %v13902
  %v13967 = vadd.f32 %v13745, %v13903
  %v13968 = vadd.f32 %v13748, %v13904
  %v13969 = vadd.f32 %v13753, %v13905
  %v13970 = vadd.f32 %v13756, %v13906
  %v13971 = vadd.f32 %v13761, %v13907
  %v13972 = vadd.f32 %v13764, %v13908
  %v13973 = vadd.f32 %v13769, %v13909
  %v13974 = vadd.f32 %v13772, %v13910
  %v13975 = vadd.f32 %v13777, %v13911
  %v13976 = vadd.f32 %v13780, %v13912
  %v13977 = vadd.f32 %v13785, %v13913
  %v13978 = vadd.f32 %v13788, %v13914
  %v13979 = vadd.f32 %v13793, %v13915
  %v13980 = vadd.f32 %v13796, %v13916
  %v13981 = vadd.f32 %v13801, %v13917
  %v13982 = vadd.f32 %v13804, %v13918
  %v13983 = vadd.f32 %v13809, %v13919
  %v13984 = vadd.f32 %v13812, %v13920
  %v13985 = vadd.f32 %v13817, %v13921
  %v13986 = vadd.f32 %v13820, %v13922
  %v13987 = vadd.f32 %v13825, %v13923
  %v13988 = vadd.f32 %v13828, %v13924
  %v13989 = vadd.f32 %v13833, %v13925
  %v13990 = vadd.f32 %v13836, %v13926
  %v13991 = vadd.f32 %v13841, %v13927
  %v13992 = vadd.f32 %v13844, %v13928
  %v13993 = vadd.f32 %v13849, %v13929
  %v13994 = vadd.f32 %v13852, %v13930
  %v13995 = vadd.f32 %v13857, %v13931
  %v13996 = vadd.f32 %v13860, %v13932
  %v13997 = vadd.f32 %v13865, %v13933
  %v13998 = vadd.f32 %v13868, %v13934
  %v13999 = vmax.f32 %v13935, 0.0
  %v14000 = vmax.f32 %v13936, 0.0
  %v14001 = vmax.f32 %v13937, 0.0
  %v14002 = vmax.f32 %v13938, 0.0
  %v14003 = vmax.f32 %v13939, 0.0
  %v14004 = vmax.f32 %v13940, 0.0
  %v14005 = vmax.f32 %v13941, 0.0
  %v14006 = vmax.f32 %v13942, 0.0
  %v14007 = vmax.f32 %v13943, 0.0
  %v14008 = vmax.f32 %v13944, 0.0
  %v14009 = vmax.f32 %v13945, 0.0
  %v14010 = vmax.f32 %v13946, 0.0
  %v14011 = vmax.f32 %v13947, 0.0
  %v14012 = vmax.f32 %v13948, 0.0
  %v14013 = vmax.f32 %v13949, 0.0
  %v14014 = vmax.f32 %v13950, 0.0
  %v14015 = vmax.f32 %v13951, 0.0
  %v14016 = vmax.f32 %v13952, 0.0
  %v14017 = vmax.f32 %v13953, 0.0
  %v14018 = vmax.f32 %v13954, 0.0
  %v14019 = vmax.f32 %v13955, 0.0
  %v14020 = vmax.f32 %v13956, 0.0
  %v14021 = vmax.f32 %v13957, 0.0
  %v14022 = vmax.f32 %v13958, 0.0
  %v14023 = vmax.f32 %v13959, 0.0
  %v14024 = vmax.f32 %v13960, 0.0
  %v14025 = vmax.f32 %v13961, 0.0
  %v14026 = vmax.f32 %v13962, 0.0
  %v14027 = vmax.f32 %v13963, 0.0
  %v14028 = vmax.f32 %v13964, 0.0
  %v14029 = vmax.f32 %v13965, 0.0
  %v14030 = vmax.f32 %v13966, 0.0
  %v14031 = vmax.f32 %v13967, 0.0
  %v14032 = vmax.f32 %v13968, 0.0
  %v14033 = vmax.f32 %v13969, 0.0
  %v14034 = vmax.f32 %v13970, 0.0
  %v14035 = vmax.f32 %v13971, 0.0
  %v14036 = vmax.f32 %v13972, 0.0
  %v14037 = vmax.f32 %v13973, 0.0
  %v14038 = vmax.f32 %v13974, 0.0
  %v14039 = vmax.f32 %v13975, 0.0
  %v14040 = vmax.f32 %v13976, 0.0
  %v14041 = vmax.f32 %v13977, 0.0
  %v14042 = vmax.f32 %v13978, 0.0
  %v14043 = vmax.f32 %v13979, 0.0
  %v14044 = vmax.f32 %v13980, 0.0
  %v14045 = vmax.f32 %v13981, 0.0
  %v14046 = vmax.f32 %v13982, 0.0
  %v14047 = vmax.f32 %v13983, 0.0
  %v14048 = vmax.f32 %v13984, 0.0
  %v14049 = vmax.f32 %v13985, 0.0
  %v14050 = vmax.f32 %v13986, 0.0
  %v14051 = vmax.f32 %v13987, 0.0
  %v14052 = vmax.f32 %v13988, 0.0
  %v14053 = vmax.f32 %v13989, 0.0
  %v14054 = vmax.f32 %v13990, 0.0
  %v14055 = vmax.f32 %v13991, 0.0
  %v14056 = vmax.f32 %v13992, 0.0
  %v14057 = vmax.f32 %v13993, 0.0
  %v14058 = vmax.f32 %v13994, 0.0
  %v14059 = vmax.f32 %v13995, 0.0
  %v14060 = vmax.f32 %v13996, 0.0
  %v14061 = vmax.f32 %v13997, 0.0
  %v14062 = vmax.f32 %v13998, 0.0
  %14063 = vst.msk [vmem:[%s8] sm:$0xff] %vm269, %v13999
  %14064 = vst.msk [vmem:[%s8 + $0x8] sm:$0xff] %vm269, %v14000
  %14065 = vst.msk [vmem:[%s8 + $0x10] sm:$0xff] %vm269, %v14001
  %14066 = vst.msk [vmem:[%s8 + $0x18] sm:$0xff] %vm269, %v14002
  %14067 = vst.msk [vmem:[%s8 + $0x20] sm:$0xff] %vm269, %v14003
  %14068 = vst.msk [vmem:[%s8 + $0x28] sm:$0xff] %vm269, %v14004
  %14069 = vst.msk [vmem:[%s8 + $0x30] sm:$0xff] %vm269, %v14005
  %14070 = vst.msk [vmem:[%s8 + $0x38] sm:$0xff] %vm269, %v14006
  %14071 = vst.msk [vmem:[%s8 + $0x40] sm:$0xff] %vm269, %v14007
  %14072 = vst.msk [vmem:[%s8 + $0x48] sm:$0xff] %vm269, %v14008
  %14073 = vst.msk [vmem:[%s8 + $0x50] sm:$0xff] %vm269, %v14009
  %14074 = vst.msk [vmem:[%s8 + $0x58] sm:$0xff] %vm269, %v14010
  %14075 = vst.msk [vmem:[%s8 + $0x60] sm:$0xff] %vm269, %v14011
  %14076 = vst.msk [vmem:[%s8 + $0x68] sm:$0xff] %vm269, %v14012
  %14077 = vst.msk [vmem:[%s8 + $0x70] sm:$0xff] %vm269, %v14013
  %14078 = vst.msk [vmem:[%s8 + $0x78] sm:$0xff] %vm269, %v14014
  %14079 = vst.msk [vmem:[%s8 + $0x80] sm:$0xff] %vm269, %v14015
  %14080 = vst.msk [vmem:[%s8 + $0x88] sm:$0xff] %vm269, %v14016
  %14081 = vst.msk [vmem:[%s8 + $0x90] sm:$0xff] %vm269, %v14017
  %14082 = vst.msk [vmem:[%s8 + $0x98] sm:$0xff] %vm269, %v14018
  %14083 = vst.msk [vmem:[%s8 + $0xa0] sm:$0xff] %vm269, %v14019
  %14084 = vst.msk [vmem:[%s8 + $0xa8] sm:$0xff] %vm269, %v14020
  %14085 = vst.msk [vmem:[%s8 + $0xb0] sm:$0xff] %vm269, %v14021
  %14086 = vst.msk [vmem:[%s8 + $0xb8] sm:$0xff] %vm269, %v14022
  %14087 = vst.msk [vmem:[%s8 + $0xc0] sm:$0xff] %vm269, %v14023
  %14088 = vst.msk [vmem:[%s8 + $0xc8] sm:$0xff] %vm269, %v14024
  %14089 = vst.msk [vmem:[%s8 + $0xd0] sm:$0xff] %vm269, %v14025
  %14090 = vst.msk [vmem:[%s8 + $0xd8] sm:$0xff] %vm269, %v14026
  %14091 = vst.msk [vmem:[%s8 + $0xe0] sm:$0xff] %vm269, %v14027
  %14092 = vst.msk [vmem:[%s8 + $0xe8] sm:$0xff] %vm269, %v14028
  %14093 = vst.msk [vmem:[%s8 + $0xf0] sm:$0xff] %vm269, %v14029
  %14094 = vst.msk [vmem:[%s8 + $0xf8] sm:$0xff] %vm269, %v14030
  %14095 = vst.msk [vmem:[%s8 + $0x100] sm:$0xff] %vm269, %v14031
  %14096 = vst.msk [vmem:[%s8 + $0x108] sm:$0xff] %vm269, %v14032
  %14097 = vst.msk [vmem:[%s8 + $0x110] sm:$0xff] %vm269, %v14033
  %14098 = vst.msk [vmem:[%s8 + $0x118] sm:$0xff] %vm269, %v14034
  %14099 = vst.msk [vmem:[%s8 + $0x120] sm:$0xff] %vm269, %v14035
  %14100 = vst.msk [vmem:[%s8 + $0x128] sm:$0xff] %vm269, %v14036
  %14101 = vst.msk [vmem:[%s8 + $0x130] sm:$0xff] %vm269, %v14037
  %14102 = vst.msk [vmem:[%s8 + $0x138] sm:$0xff] %vm269, %v14038
  %14103 = vst.msk [vmem:[%s8 + $0x140] sm:$0xff] %vm269, %v14039
  %14104 = vst.msk [vmem:[%s8 + $0x148] sm:$0xff] %vm269, %v14040
  %14105 = vst.msk [vmem:[%s8 + $0x150] sm:$0xff] %vm269, %v14041
  %14106 = vst.msk [vmem:[%s8 + $0x158] sm:$0xff] %vm269, %v14042
  %14107 = vst.msk [vmem:[%s8 + $0x160] sm:$0xff] %vm269, %v14043
  %14108 = vst.msk [vmem:[%s8 + $0x168] sm:$0xff] %vm269, %v14044
  %14109 = vst.msk [vmem:[%s8 + $0x170] sm:$0xff] %vm269, %v14045
  %14110 = vst.msk [vmem:[%s8 + $0x178] sm:$0xff] %vm269, %v14046
  %14111 = vst.msk [vmem:[%s8 + $0x180] sm:$0xff] %vm269, %v14047
  %14112 = vst.msk [vmem:[%s8 + $0x188] sm:$0xff] %vm269, %v14048
  %14113 = vst.msk [vmem:[%s8 + $0x190] sm:$0xff] %vm269, %v14049
  %14114 = vst.msk [vmem:[%s8 + $0x198] sm:$0xff] %vm269, %v14050
  %14115 = vst.msk [vmem:[%s8 + $0x1a0] sm:$0xff] %vm269, %v14051
  %14116 = vst.msk [vmem:[%s8 + $0x1a8] sm:$0xff] %vm269, %v14052
  %14117 = vst.msk [vmem:[%s8 + $0x1b0] sm:$0xff] %vm269, %v14053
  %14118 = vst.msk [vmem:[%s8 + $0x1b8] sm:$0xff] %vm269, %v14054
  %14119 = vst.msk [vmem:[%s8 + $0x1c0] sm:$0xff] %vm269, %v14055
  %14120 = vst.msk [vmem:[%s8 + $0x1c8] sm:$0xff] %vm269, %v14056
  %14121 = vst.msk [vmem:[%s8 + $0x1d0] sm:$0xff] %vm269, %v14057
  %14122 = vst.msk [vmem:[%s8 + $0x1d8] sm:$0xff] %vm269, %v14058
  %14123 = vst.msk [vmem:[%s8 + $0x1e0] sm:$0xff] %vm269, %v14059
  %14124 = vst.msk [vmem:[%s8 + $0x1e8] sm:$0xff] %vm269, %v14060
  %14125 = vst.msk [vmem:[%s8 + $0x1f0] sm:$0xff] %vm269, %v14061
  %14126 = vst.msk [vmem:[%s8 + $0x1f8] sm:$0xff] %vm269, %v14062
  // Predicated region
  $region34: #{bottleneck_forward.1} parent=0 // pred_check
    _
  $region35: #{bottleneck_forward.1} parent=0 // pred_check_branch
    %14128 = sbr.rel (0) target = $region37
  $region36: #{bottleneck_forward.1} parent=0 // pred_region
    _
  $region37: #{bottleneck_forward.1} parent=0 // pred_fallthru
    _
  // Predicated region
  $region38: #{bottleneck_forward.1} parent=0 // pred_check
    _
  $region39: #{bottleneck_forward.1} parent=0 // pred_check_branch
    %14130 = sbr.rel (0) target = $region41
  $region40: #{bottleneck_forward.1} parent=0 // pred_region
    _
  $region41: #{bottleneck_forward.1} parent=0 // pred_fallthru
    _

</llo_original>
